<compile_context>
chip_gen: v5e
topology: v5e:2x2
jax: 0.10.0
libtpu: 0.0.40
codegen_flags: <defaults>
</compile_context>

<pallas_src>
import functools

import jax
import jax.numpy as jnp
from jax.experimental import pallas as pl
from jax.experimental.pallas import tpu as pltpu

# ---------------- config (mirrors SIFModel.__init__ defaults, small demo) ----
NUM_INSTANCES = 4
LATENT_DIM = 32
TRACING_STEPS = 10          # unused, see TODO on ray marcher below
OUT_CHANNELS = 3
IMG_SIDELENGTH = 16
OUTPUT_SIDELENGTH = 16
HIDDEN = 256                # num_hidden_units_phi
PHI_LAYER_DIMS = [(3, HIDDEN), (HIDDEN, HIDDEN), (HIDDEN, HIDDEN), (HIDDEN, HIDDEN)]
LN_EPS = 1e-5
TILE = 512                  # pixel tile per grid step (clamped to N)
RGB_PAD = 128               # lane-dense width of the final in-kernel matmul


# ------------------------------ Pallas kernel --------------------------------
def _ln_relu_bf16(x_f32):
    """LayerNorm (no affine, eps=1e-5) + ReLU over the feature axis, -> bf16.

    Two-pass (x - mu)^2 variance in f32 for parity with torch LayerNorm; the
    bf16 down-cast is fused into the final expression so no f32 [tile,256]
    intermediate is written back and re-read just to cast for the next matmul.
    """
    mu = jnp.mean(x_f32, axis=-1, keepdims=True)
    xc = x_f32 - mu
    var = jnp.mean(xc * xc, axis=-1, keepdims=True)
    return jnp.maximum(xc * jax.lax.rsqrt(var + LN_EPS), 0.0).astype(jnp.bfloat16)


def phi_render_kernel(pts_ref,
                      w1_ref, b1_ref, w2_ref, b2_ref,
                      w3_ref, b3_ref, w4_ref, b4_ref,
                      r1_ref, rb1_ref, r2_ref, rb2_ref,
                      rgb_ref):
    """Fused per-batch-weight phi MLP + pixel generator on one pixel tile.

    Weights w2..w4 / r1 / r2 are bf16 MXU operands; biases and all LayerNorm
    math are f32.  The phi feature `v` is consumed in-kernel (never stored).
    The tile is split into two independent half-tiles so layer-k matmuls of one
    half overlap layer-k LayerNorms of the other.
    """
    x = pts_ref[0]                                  # [tile, 3] f32
    tile = x.shape[0]
    half = tile // 2
    w1 = w1_ref[0]                                  # [3, 256] f32 (VPU layer)
    b1 = b1_ref[0]                                  # [1, 256] f32

    # ---- layer 1 (3 -> 256): VPU broadcast FMAs, keeps the MXU free --------
    def layer1(xh):
        h = (xh[:, 0:1] * w1[0:1, :]
             + xh[:, 1:2] * w1[1:2, :]
             + xh[:, 2:3] * w1[2:3, :]
             + b1)
        return _ln_relu_bf16(h)

    hs = [layer1(x[0:half, :]), layer1(x[half:tile, :])]

    # ---- layers 2..4 (256 -> 256, bf16 MXU, f32 accum + LN) -----------------
    def layer(hs, w_ref, b_ref):
        lin = [jnp.dot(h, w_ref[0], preferred_element_type=jnp.float32) + b_ref[0]
               for h in hs]                          # independent MXU chains
        return [_ln_relu_bf16(y) for y in lin]

    hs = layer(hs, w2_ref, b2_ref)
    hs = layer(hs, w3_ref, b3_ref)
    hs = layer(hs, w4_ref, b4_ref)                   # phi features v (bf16)

    # ---- SIFRenderer pixel generator: 256 -> 256 ReLU -> OUT_CHANNELS -------
    def render(v):
        r = jnp.maximum(
            jnp.dot(v, r1_ref[...], preferred_element_type=jnp.float32) + rb1_ref[...],
            0.0).astype(jnp.bfloat16)
        # lane-dense (128-wide, zero-padded) matmul; only the first
        # OUT_CHANNELS columns are stored to HBM.
        return jnp.dot(r, r2_ref[...], preferred_element_type=jnp.float32) + rb2_ref[...]

    out_a = render(hs[0])                            # [half, RGB_PAD] f32
    out_b = render(hs[1])
    rgb_ref[0, 0:half, :] = out_a[:, :OUT_CHANNELS]
    rgb_ref[0, half:tile, :] = out_b[:, :OUT_CHANNELS]


def phi_and_render(points, phi_Ws, phi_bs, render_params, *, tile=TILE):
    """points: [B, N, 3] f32; phi_Ws[l]: [B, in_l, out_l]; phi_bs[l]: [B, 1, out_l].

    Returns the rendered pixels [B, N, OUT_CHANNELS] (f32).
    """
    B, N, _ = points.shape
    tile = min(tile, N)
    assert N % tile == 0, f"N={N} must be divisible by tile={tile}"
    assert tile % 2 == 0 and (tile // 2) % 8 == 0, f"tile={tile} half-tiles must be sublane-aligned"

    W1 = phi_Ws[0]                                           # f32: consumed on the VPU
    W2, W3, W4 = [w.astype(jnp.bfloat16) for w in phi_Ws[1:]]  # bf16 MXU operands
    b1, b2, b3, b4 = phi_bs                                  # f32 biases
    R1, rb1, R2, rb2 = render_params
    C = R2.shape[-1]
    assert C == OUT_CHANNELS and C <= RGB_PAD

    # Lane-dense final projection inside the kernel (zero-padded to RGB_PAD
    # columns); only the first C columns ever reach HBM.
    R1b = R1.astype(jnp.bfloat16)
    R2p = jnp.zeros((HIDDEN, RGB_PAD), jnp.bfloat16).at[:, :C].set(R2.astype(jnp.bfloat16))
    rb2p = jnp.zeros((1, RGB_PAD), jnp.float32).at[:, :C].set(rb2)

    per_batch = lambda a: pl.BlockSpec((1,) + a.shape[1:], lambda b, i: (b, 0, 0))
    shared = lambda a: pl.BlockSpec(a.shape, lambda b, i: (0, 0))

    # Advisory cost hint for XLA's scheduler around the custom call.
    flops = 2 * B * N * (3 * HIDDEN + 3 * HIDDEN * HIDDEN + HIDDEN * HIDDEN + HIDDEN * RGB_PAD)
    bytes_accessed = (
        points.size * 4 + B * N * C * 4
        + W1.size * 4 + W2.size * 2 + W3.size * 2 + W4.size * 2
        + sum(b.size * 4 for b in phi_bs)
        + R1b.size * 2 + R2p.size * 2 + rb1.size * 4 + rb2p.size * 4)
    cost = pl.CostEstimate(flops=flops, transcendentals=4 * B * N,
                           bytes_accessed=bytes_accessed)

    rgb = pl.pallas_call(
        phi_render_kernel,
        out_shape=jax.ShapeDtypeStruct((B, N, C), jnp.float32),
        grid=(B, N // tile),
        in_specs=[
            pl.BlockSpec((1, tile, 3), lambda b, i: (b, i, 0)),       # points
            per_batch(W1), per_batch(b1),
            per_batch(W2), per_batch(b2),
            per_batch(W3), per_batch(b3),
            per_batch(W4), per_batch(b4),
            shared(R1b), shared(rb1), shared(R2p), shared(rb2p),
        ],
        out_specs=pl.BlockSpec((1, tile, C), lambda b, i: (b, i, 0)),
        compiler_params=pltpu.CompilerParams(
            # pixel tiles are fully independent -> shard both axes across
            # TensorCores (matters on v7x's 2 TCs, harmless on v5e/v6e).
            dimension_semantics=("parallel", "parallel")),
        cost_estimate=cost,
    )(points, W1, b1, W2, b2, W3, b3, W4, b4, R1b, rb1, R2p, rb2p)

    return rgb


# --------------------------- hypernetwork (glue, plain JAX) -------------------
def init_params(key):
    """Deterministic synthetic init: HyperFC hypernetworks + SIFRenderer MLP."""
    params = {"hyper": [], "render": None}
    for (fi, fo) in PHI_LAYER_DIMS:
        key, k1, k2, k3 = jax.random.split(key, 4)
        n_out = fi * fo + fo
        params["hyper"].append({
            "H1": (1.0 / jnp.sqrt(LATENT_DIM)) *
                  jax.random.normal(k1, (LATENT_DIM, LATENT_DIM), jnp.float32),
            "hb1": jnp.zeros((LATENT_DIM,), jnp.float32),
            "H2": (1.0 / jnp.sqrt(LATENT_DIM)) *
                  jax.random.normal(k2, (LATENT_DIM, LATENT_DIM), jnp.float32),
            "hb2": jnp.zeros((LATENT_DIM,), jnp.float32),
            "Hout": (1.0 / (jnp.sqrt(LATENT_DIM) * jnp.sqrt(fi))) *
                    jax.random.normal(k3, (LATENT_DIM, n_out), jnp.float32),
            "hbout": jnp.zeros((n_out,), jnp.float32),
        })
    key, kr1, kr2 = jax.random.split(key, 3)
    params["render"] = (
        (1.0 / jnp.sqrt(HIDDEN)) * jax.random.normal(kr1, (HIDDEN, HIDDEN), jnp.float32),
        jnp.zeros((1, HIDDEN), jnp.float32),
        (1.0 / jnp.sqrt(HIDDEN)) * jax.random.normal(kr2, (HIDDEN, OUT_CHANNELS), jnp.float32),
        jnp.zeros((1, OUT_CHANNELS), jnp.float32),
    )
    return params


def _ln_relu_host(x):
    mu = jnp.mean(x, axis=-1, keepdims=True)
    var = jnp.mean((x - mu) ** 2, axis=-1, keepdims=True)
    return jnp.maximum((x - mu) * jax.lax.rsqrt(var + LN_EPS), 0.0)


def hyper_phi(z, hyper_params):
    """HyperFC: per-instance code z -> weights/biases of the phi MLP."""
    Ws, bs = [], []
    B = z.shape[0]
    for (fi, fo), p in zip(PHI_LAYER_DIMS, hyper_params):
        h = _ln_relu_host(z @ p["H1"] + p["hb1"])
        h = _ln_relu_host(h @ p["H2"] + p["hb2"])
        out = h @ p["Hout"] + p["hbout"]                            # [B, fi*fo + fo]
        # PyTorch nn.Linear stores weight as (out_features, in_features) row-major;
        # transpose to [B, fi, fo] so the kernel computes x @ W.
        W = out[:, :fi * fo].reshape(B, fo, fi).transpose(0, 2, 1)  # [B, fi, fo]
        b = out[:, fi * fo:].reshape(B, 1, fo)
        Ws.append(W)
        bs.append(b)
    return Ws, bs


# ------------------------------ geometry (glue) -------------------------------
def world_from_uv_depth(uv, depth, intrinsics, cam2world):
    """Unproject pixel coords at given depth into world space (SRN convention)."""
    # NOTE: kept in plain JAX; it is a handful of VPU FMAs on a tiny (B,N,3)
    # tensor and is not on the kernel's critical path for these sizes.
    fx = intrinsics[:, 0:1, 0:1]
    fy = intrinsics[:, 1:2, 1:2]
    cx = intrinsics[:, 0:1, 2:3]
    cy = intrinsics[:, 1:2, 2:3]
    x = (uv[..., 0:1] - cx) / fx * depth
    y = (uv[..., 1:2] - cy) / fy * depth
    pts_cam = jnp.concatenate([x, y, depth, jnp.ones_like(depth)], axis=-1)   # [B,N,4]
    pts_world = jnp.einsum("bij,bnj->bni", cam2world, pts_cam)[..., :3]
    return pts_world


# ------------------------------ forward ---------------------------------------
def sif_forward(params, pose, z, intrinsics, uv):
    # latent_reg_loss = mean(z ** 2)
    latent_reg_loss = jnp.mean(z ** 2)

    # phi = hyper_phi(z)
    phi_Ws, phi_bs = hyper_phi(z, params["hyper"])

    B, N, _ = uv.shape
    # TODO(synk): self.ray_marcher (LSTM differentiable ray marcher, tracing_steps)
    # is never constructed in the provided __init__; depth is fixed at the initial value.
    depth_maps = jnp.ones((B, N, 1), jnp.float32)
    points_xyz = world_from_uv_depth(uv, depth_maps, intrinsics, pose)

    # v = phi(points_xyz); novel_views = pixel_generator(v)  -> fused Pallas kernel
    # (phi features v are consumed in-kernel and never written to HBM)
    novel_views = phi_and_render(points_xyz, phi_Ws, phi_bs, params["render"])

    if OUTPUT_SIDELENGTH != IMG_SIDELENGTH:
        # mirrors F.interpolate(..., mode='bilinear', align_corners=False) on NCHW
        img = novel_views.transpose(0, 2, 1).reshape(
            B, OUT_CHANNELS, IMG_SIDELENGTH, IMG_SIDELENGTH)
        img = jax.image.resize(
            img, (B, OUT_CHANNELS, OUTPUT_SIDELENGTH, OUTPUT_SIDELENGTH), method="bilinear")
        novel_views = img.reshape(B, OUT_CHANNELS, -1).transpose(0, 2, 1)

    return novel_views, depth_maps, latent_reg_loss


# ------------------------------ demo -------------------------------------------
if __name__ == "__main__":
    key = jax.random.PRNGKey(0)
    kp, kz = jax.random.split(key)
    params = init_params(kp)

    B = 2
    S = IMG_SIDELENGTH
    N = S * S

    # z ~ Embedding init: normal(mean=0, std=0.01)
    z = 0.01 * jax.random.normal(kz, (B, LATENT_DIM), jnp.float32)

    # cam2world pose: identity rotation, camera pulled back along -z
    pose = jnp.tile(jnp.eye(4, dtype=jnp.float32)[None], (B, 1, 1))
    pose = pose.at[:, 2, 3].set(-2.0)

    # pinhole intrinsics
    intrinsics = jnp.tile(
        jnp.array([[float(S), 0.0, S / 2.0],
                   [0.0, float(S), S / 2.0],
                   [0.0, 0.0, 1.0]], jnp.float32)[None], (B, 1, 1))

    # uv pixel grid, flattened row-major
    ys, xs = jnp.meshgrid(jnp.arange(S), jnp.arange(S), indexing="ij")
    uv = jnp.stack([xs, ys], axis=-1).reshape(1, N, 2).astype(jnp.float32)
    uv = jnp.tile(uv, (B, 1, 1))

    fwd = jax.jit(functools.partial(sif_forward, params))
    novel_views, depth_maps, reg_loss = fwd(pose, z, intrinsics, uv)
    jax.block_until_ready((novel_views, depth_maps, reg_loss))

    assert novel_views.shape == (B, OUTPUT_SIDELENGTH ** 2, OUT_CHANNELS)
    assert depth_maps.shape == (B, N, 1)
    assert bool(jnp.all(jnp.isfinite(novel_views)))
    print("KERNEL_OK")
</pallas_src>

<mosaic_0001>
module attributes {stable_mosaic.version = 11 : i64} {
  func.func @phi_render_kernel(%arg0: i32, %arg1: i32, %arg2: memref<1x256x3xf32, #tpu.memory_space<vmem>>, %arg3: memref<1x3x256xf32, #tpu.memory_space<vmem>>, %arg4: memref<1x1x256xf32, #tpu.memory_space<vmem>>, %arg5: memref<1x256x256xbf16, #tpu.memory_space<vmem>>, %arg6: memref<1x1x256xf32, #tpu.memory_space<vmem>>, %arg7: memref<1x256x256xbf16, #tpu.memory_space<vmem>>, %arg8: memref<1x1x256xf32, #tpu.memory_space<vmem>>, %arg9: memref<1x256x256xbf16, #tpu.memory_space<vmem>>, %arg10: memref<1x1x256xf32, #tpu.memory_space<vmem>>, %arg11: memref<256x256xbf16, #tpu.memory_space<vmem>>, %arg12: memref<1x256xf32, #tpu.memory_space<vmem>>, %arg13: memref<256x128xbf16, #tpu.memory_space<vmem>>, %arg14: memref<1x128xf32, #tpu.memory_space<vmem>>, %arg15: memref<1x256x3xf32, #tpu.memory_space<vmem>>) attributes {dimension_semantics = [#tpu.dimension_semantics<parallel>, #tpu.dimension_semantics<parallel>], iteration_bounds = array<i64: 2, 1>, scalar_prefetch = 0 : i64, scratch_operands = 0 : i64, tpu.core_type = #tpu.core_type<tc>, window_params = [{transform_indices = @transform_0, window_bounds = array<i64: 1, 256, 3>}, {transform_indices = @transform_1, window_bounds = array<i64: 1, 3, 256>}, {transform_indices = @transform_2, window_bounds = array<i64: 1, 1, 256>}, {transform_indices = @transform_3, window_bounds = array<i64: 1, 256, 256>}, {transform_indices = @transform_4, window_bounds = array<i64: 1, 1, 256>}, {transform_indices = @transform_5, window_bounds = array<i64: 1, 256, 256>}, {transform_indices = @transform_6, window_bounds = array<i64: 1, 1, 256>}, {transform_indices = @transform_7, window_bounds = array<i64: 1, 256, 256>}, {transform_indices = @transform_8, window_bounds = array<i64: 1, 1, 256>}, {pipeline_mode = #tpu.pipeline_mode<synchronous>, transform_indices = @transform_9, window_bounds = array<i64: 256, 256>}, {pipeline_mode = #tpu.pipeline_mode<synchronous>, transform_indices = @transform_10, window_bounds = array<i64: 1, 256>}, {pipeline_mode = #tpu.pipeline_mode<synchronous>, transform_indices = @transform_11, window_bounds = array<i64: 256, 128>}, {pipeline_mode = #tpu.pipeline_mode<synchronous>, transform_indices = @transform_12, window_bounds = array<i64: 1, 128>}, {transform_indices = @transform_13, window_bounds = array<i64: 1, 256, 3>}]} {
    %c0 = arith.constant 0 : index
    %c0_0 = arith.constant 0 : index
    %c0_1 = arith.constant 0 : index
    %0 = vector.load %arg2[%c0, %c0_0, %c0_1] : memref<1x256x3xf32, #tpu.memory_space<vmem>>, vector<1x256x3xf32>
    %1 = vector.shape_cast %0 : vector<1x256x3xf32> to vector<256x3xf32>
    %c0_2 = arith.constant 0 : index
    %c0_3 = arith.constant 0 : index
    %c0_4 = arith.constant 0 : index
    %2 = vector.load %arg3[%c0_2, %c0_3, %c0_4] : memref<1x3x256xf32, #tpu.memory_space<vmem>>, vector<1x3x256xf32>
    %3 = vector.shape_cast %2 : vector<1x3x256xf32> to vector<3x256xf32>
    %c0_5 = arith.constant 0 : index
    %c0_6 = arith.constant 0 : index
    %c0_7 = arith.constant 0 : index
    %4 = vector.load %arg4[%c0_5, %c0_6, %c0_7] : memref<1x1x256xf32, #tpu.memory_space<vmem>>, vector<1x1x256xf32>
    %5 = vector.shape_cast %4 : vector<1x1x256xf32> to vector<1x256xf32>
    %6 = vector.extract_strided_slice %1 {offsets = [0, 0], sizes = [128, 3], strides = [1, 1]} : vector<256x3xf32> to vector<128x3xf32>
    %7 = vector.extract_strided_slice %6 {offsets = [0, 0], sizes = [128, 1], strides = [1, 1]} : vector<128x3xf32> to vector<128x1xf32>
    %8 = vector.extract_strided_slice %3 {offsets = [0, 0], sizes = [1, 256], strides = [1, 1]} : vector<3x256xf32> to vector<1x256xf32>
    %9 = vector.broadcast %7 : vector<128x1xf32> to vector<128x256xf32>
    %10 = vector.broadcast %8 : vector<1x256xf32> to vector<128x256xf32>
    %11 = arith.mulf %9, %10 : vector<128x256xf32>
    %12 = vector.extract_strided_slice %6 {offsets = [0, 1], sizes = [128, 1], strides = [1, 1]} : vector<128x3xf32> to vector<128x1xf32>
    %13 = vector.extract_strided_slice %3 {offsets = [1, 0], sizes = [1, 256], strides = [1, 1]} : vector<3x256xf32> to vector<1x256xf32>
    %14 = vector.broadcast %12 : vector<128x1xf32> to vector<128x256xf32>
    %15 = vector.broadcast %13 : vector<1x256xf32> to vector<128x256xf32>
    %16 = arith.mulf %14, %15 : vector<128x256xf32>
    %17 = arith.addf %11, %16 : vector<128x256xf32>
    %18 = vector.extract_strided_slice %6 {offsets = [0, 2], sizes = [128, 1], strides = [1, 1]} : vector<128x3xf32> to vector<128x1xf32>
    %19 = vector.extract_strided_slice %3 {offsets = [2, 0], sizes = [1, 256], strides = [1, 1]} : vector<3x256xf32> to vector<1x256xf32>
    %20 = vector.broadcast %18 : vector<128x1xf32> to vector<128x256xf32>
    %21 = vector.broadcast %19 : vector<1x256xf32> to vector<128x256xf32>
    %22 = arith.mulf %20, %21 : vector<128x256xf32>
    %23 = arith.addf %17, %22 : vector<128x256xf32>
    %24 = vector.broadcast %5 : vector<1x256xf32> to vector<128x256xf32>
    %25 = arith.addf %23, %24 : vector<128x256xf32>
    %cst = arith.constant dense<0.000000e+00> : vector<128xf32>
    %26 = vector.multi_reduction <add>, %25, %cst [1] : vector<128x256xf32> to vector<128xf32>
    %27 = vector.shape_cast %26 : vector<128xf32> to vector<128x1xf32>
    %cst_8 = arith.constant 2.560000e+02 : f32
    %28 = vector.broadcast %cst_8 : f32 to vector<128x1xf32>
    %29 = arith.divf %27, %28 : vector<128x1xf32>
    %30 = vector.broadcast %29 : vector<128x1xf32> to vector<128x256xf32>
    %31 = arith.subf %25, %30 : vector<128x256xf32>
    %32 = arith.mulf %31, %31 : vector<128x256xf32>
    %cst_9 = arith.constant dense<0.000000e+00> : vector<128xf32>
    %33 = vector.multi_reduction <add>, %32, %cst_9 [1] : vector<128x256xf32> to vector<128xf32>
    %34 = vector.shape_cast %33 : vector<128xf32> to vector<128x1xf32>
    %cst_10 = arith.constant 2.560000e+02 : f32
    %35 = vector.broadcast %cst_10 : f32 to vector<128x1xf32>
    %36 = arith.divf %34, %35 : vector<128x1xf32>
    %cst_11 = arith.constant 9.99999974E-6 : f32
    %37 = vector.broadcast %cst_11 : f32 to vector<128x1xf32>
    %38 = arith.addf %36, %37 : vector<128x1xf32>
    %39 = math.rsqrt %38 : vector<128x1xf32>
    %40 = vector.broadcast %39 : vector<128x1xf32> to vector<128x256xf32>
    %41 = arith.mulf %31, %40 : vector<128x256xf32>
    %cst_12 = arith.constant 0.000000e+00 : f32
    %42 = vector.broadcast %cst_12 : f32 to vector<128x256xf32>
    %43 = arith.maximumf %41, %42 : vector<128x256xf32>
    %44 = arith.truncf %43 : vector<128x256xf32> to vector<128x256xbf16>
    %45 = vector.extract_strided_slice %1 {offsets = [128, 0], sizes = [128, 3], strides = [1, 1]} : vector<256x3xf32> to vector<128x3xf32>
    %46 = vector.extract_strided_slice %45 {offsets = [0, 0], sizes = [128, 1], strides = [1, 1]} : vector<128x3xf32> to vector<128x1xf32>
    %47 = vector.extract_strided_slice %3 {offsets = [0, 0], sizes = [1, 256], strides = [1, 1]} : vector<3x256xf32> to vector<1x256xf32>
    %48 = vector.broadcast %46 : vector<128x1xf32> to vector<128x256xf32>
    %49 = vector.broadcast %47 : vector<1x256xf32> to vector<128x256xf32>
    %50 = arith.mulf %48, %49 : vector<128x256xf32>
    %51 = vector.extract_strided_slice %45 {offsets = [0, 1], sizes = [128, 1], strides = [1, 1]} : vector<128x3xf32> to vector<128x1xf32>
    %52 = vector.extract_strided_slice %3 {offsets = [1, 0], sizes = [1, 256], strides = [1, 1]} : vector<3x256xf32> to vector<1x256xf32>
    %53 = vector.broadcast %51 : vector<128x1xf32> to vector<128x256xf32>
    %54 = vector.broadcast %52 : vector<1x256xf32> to vector<128x256xf32>
    %55 = arith.mulf %53, %54 : vector<128x256xf32>
    %56 = arith.addf %50, %55 : vector<128x256xf32>
    %57 = vector.extract_strided_slice %45 {offsets = [0, 2], sizes = [128, 1], strides = [1, 1]} : vector<128x3xf32> to vector<128x1xf32>
    %58 = vector.extract_strided_slice %3 {offsets = [2, 0], sizes = [1, 256], strides = [1, 1]} : vector<3x256xf32> to vector<1x256xf32>
    %59 = vector.broadcast %57 : vector<128x1xf32> to vector<128x256xf32>
    %60 = vector.broadcast %58 : vector<1x256xf32> to vector<128x256xf32>
    %61 = arith.mulf %59, %60 : vector<128x256xf32>
    %62 = arith.addf %56, %61 : vector<128x256xf32>
    %63 = vector.broadcast %5 : vector<1x256xf32> to vector<128x256xf32>
    %64 = arith.addf %62, %63 : vector<128x256xf32>
    %cst_13 = arith.constant dense<0.000000e+00> : vector<128xf32>
    %65 = vector.multi_reduction <add>, %64, %cst_13 [1] : vector<128x256xf32> to vector<128xf32>
    %66 = vector.shape_cast %65 : vector<128xf32> to vector<128x1xf32>
    %cst_14 = arith.constant 2.560000e+02 : f32
    %67 = vector.broadcast %cst_14 : f32 to vector<128x1xf32>
    %68 = arith.divf %66, %67 : vector<128x1xf32>
    %69 = vector.broadcast %68 : vector<128x1xf32> to vector<128x256xf32>
    %70 = arith.subf %64, %69 : vector<128x256xf32>
    %71 = arith.mulf %70, %70 : vector<128x256xf32>
    %cst_15 = arith.constant dense<0.000000e+00> : vector<128xf32>
    %72 = vector.multi_reduction <add>, %71, %cst_15 [1] : vector<128x256xf32> to vector<128xf32>
    %73 = vector.shape_cast %72 : vector<128xf32> to vector<128x1xf32>
    %cst_16 = arith.constant 2.560000e+02 : f32
    %74 = vector.broadcast %cst_16 : f32 to vector<128x1xf32>
    %75 = arith.divf %73, %74 : vector<128x1xf32>
    %cst_17 = arith.constant 9.99999974E-6 : f32
    %76 = vector.broadcast %cst_17 : f32 to vector<128x1xf32>
    %77 = arith.addf %75, %76 : vector<128x1xf32>
    %78 = math.rsqrt %77 : vector<128x1xf32>
    %79 = vector.broadcast %78 : vector<128x1xf32> to vector<128x256xf32>
    %80 = arith.mulf %70, %79 : vector<128x256xf32>
    %cst_18 = arith.constant 0.000000e+00 : f32
    %81 = vector.broadcast %cst_18 : f32 to vector<128x256xf32>
    %82 = arith.maximumf %80, %81 : vector<128x256xf32>
    %83 = arith.truncf %82 : vector<128x256xf32> to vector<128x256xbf16>
    %c0_19 = arith.constant 0 : index
    %c0_20 = arith.constant 0 : index
    %c0_21 = arith.constant 0 : index
    %84 = vector.load %arg5[%c0_19, %c0_20, %c0_21] : memref<1x256x256xbf16, #tpu.memory_space<vmem>>, vector<1x256x256xbf16>
    %85 = vector.shape_cast %84 : vector<1x256x256xbf16> to vector<256x256xbf16>
    %cst_22 = arith.constant dense<0.000000e+00> : vector<128x256xf32>
    %86 = tpu.matmul %44, %85, %cst_22 {dimension_numbers = #tpu.dot_dimension_numbers<[1], [0], [0], [1], [0, 0, 1, 1], [], []>} : vector<128x256xbf16>, vector<256x256xbf16>, vector<128x256xf32> -> vector<128x256xf32>
    %c0_23 = arith.constant 0 : index
    %c0_24 = arith.constant 0 : index
    %c0_25 = arith.constant 0 : index
    %87 = vector.load %arg6[%c0_23, %c0_24, %c0_25] : memref<1x1x256xf32, #tpu.memory_space<vmem>>, vector<1x1x256xf32>
    %88 = vector.shape_cast %87 : vector<1x1x256xf32> to vector<1x256xf32>
    %89 = vector.broadcast %88 : vector<1x256xf32> to vector<128x256xf32>
    %90 = arith.addf %86, %89 : vector<128x256xf32>
    %c0_26 = arith.constant 0 : index
    %c0_27 = arith.constant 0 : index
    %c0_28 = arith.constant 0 : index
    %91 = vector.load %arg5[%c0_26, %c0_27, %c0_28] : memref<1x256x256xbf16, #tpu.memory_space<vmem>>, vector<1x256x256xbf16>
    %92 = vector.shape_cast %91 : vector<1x256x256xbf16> to vector<256x256xbf16>
    %cst_29 = arith.constant dense<0.000000e+00> : vector<128x256xf32>
    %93 = tpu.matmul %83, %92, %cst_29 {dimension_numbers = #tpu.dot_dimension_numbers<[1], [0], [0], [1], [0, 0, 1, 1], [], []>} : vector<128x256xbf16>, vector<256x256xbf16>, vector<128x256xf32> -> vector<128x256xf32>
    %c0_30 = arith.constant 0 : index
    %c0_31 = arith.constant 0 : index
    %c0_32 = arith.constant 0 : index
    %94 = vector.load %arg6[%c0_30, %c0_31, %c0_32] : memref<1x1x256xf32, #tpu.memory_space<vmem>>, vector<1x1x256xf32>
    %95 = vector.shape_cast %94 : vector<1x1x256xf32> to vector<1x256xf32>
    %96 = vector.broadcast %95 : vector<1x256xf32> to vector<128x256xf32>
    %97 = arith.addf %93, %96 : vector<128x256xf32>
    %cst_33 = arith.constant dense<0.000000e+00> : vector<128xf32>
    %98 = vector.multi_reduction <add>, %90, %cst_33 [1] : vector<128x256xf32> to vector<128xf32>
    %99 = vector.shape_cast %98 : vector<128xf32> to vector<128x1xf32>
    %cst_34 = arith.constant 2.560000e+02 : f32
    %100 = vector.broadcast %cst_34 : f32 to vector<128x1xf32>
    %101 = arith.divf %99, %100 : vector<128x1xf32>
    %102 = vector.broadcast %101 : vector<128x1xf32> to vector<128x256xf32>
    %103 = arith.subf %90, %102 : vector<128x256xf32>
    %104 = arith.mulf %103, %103 : vector<128x256xf32>
    %cst_35 = arith.constant dense<0.000000e+00> : vector<128xf32>
    %105 = vector.multi_reduction <add>, %104, %cst_35 [1] : vector<128x256xf32> to vector<128xf32>
    %106 = vector.shape_cast %105 : vector<128xf32> to vector<128x1xf32>
    %cst_36 = arith.constant 2.560000e+02 : f32
    %107 = vector.broadcast %cst_36 : f32 to vector<128x1xf32>
    %108 = arith.divf %106, %107 : vector<128x1xf32>
    %cst_37 = arith.constant 9.99999974E-6 : f32
    %109 = vector.broadcast %cst_37 : f32 to vector<128x1xf32>
    %110 = arith.addf %108, %109 : vector<128x1xf32>
    %111 = math.rsqrt %110 : vector<128x1xf32>
    %112 = vector.broadcast %111 : vector<128x1xf32> to vector<128x256xf32>
    %113 = arith.mulf %103, %112 : vector<128x256xf32>
    %cst_38 = arith.constant 0.000000e+00 : f32
    %114 = vector.broadcast %cst_38 : f32 to vector<128x256xf32>
    %115 = arith.maximumf %113, %114 : vector<128x256xf32>
    %116 = arith.truncf %115 : vector<128x256xf32> to vector<128x256xbf16>
    %cst_39 = arith.constant dense<0.000000e+00> : vector<128xf32>
    %117 = vector.multi_reduction <add>, %97, %cst_39 [1] : vector<128x256xf32> to vector<128xf32>
    %118 = vector.shape_cast %117 : vector<128xf32> to vector<128x1xf32>
    %cst_40 = arith.constant 2.560000e+02 : f32
    %119 = vector.broadcast %cst_40 : f32 to vector<128x1xf32>
    %120 = arith.divf %118, %119 : vector<128x1xf32>
    %121 = vector.broadcast %120 : vector<128x1xf32> to vector<128x256xf32>
    %122 = arith.subf %97, %121 : vector<128x256xf32>
    %123 = arith.mulf %122, %122 : vector<128x256xf32>
    %cst_41 = arith.constant dense<0.000000e+00> : vector<128xf32>
    %124 = vector.multi_reduction <add>, %123, %cst_41 [1] : vector<128x256xf32> to vector<128xf32>
    %125 = vector.shape_cast %124 : vector<128xf32> to vector<128x1xf32>
    %cst_42 = arith.constant 2.560000e+02 : f32
    %126 = vector.broadcast %cst_42 : f32 to vector<128x1xf32>
    %127 = arith.divf %125, %126 : vector<128x1xf32>
    %cst_43 = arith.constant 9.99999974E-6 : f32
    %128 = vector.broadcast %cst_43 : f32 to vector<128x1xf32>
    %129 = arith.addf %127, %128 : vector<128x1xf32>
    %130 = math.rsqrt %129 : vector<128x1xf32>
    %131 = vector.broadcast %130 : vector<128x1xf32> to vector<128x256xf32>
    %132 = arith.mulf %122, %131 : vector<128x256xf32>
    %cst_44 = arith.constant 0.000000e+00 : f32
    %133 = vector.broadcast %cst_44 : f32 to vector<128x256xf32>
    %134 = arith.maximumf %132, %133 : vector<128x256xf32>
    %135 = arith.truncf %134 : vector<128x256xf32> to vector<128x256xbf16>
    %c0_45 = arith.constant 0 : index
    %c0_46 = arith.constant 0 : index
    %c0_47 = arith.constant 0 : index
    %136 = vector.load %arg7[%c0_45, %c0_46, %c0_47] : memref<1x256x256xbf16, #tpu.memory_space<vmem>>, vector<1x256x256xbf16>
    %137 = vector.shape_cast %136 : vector<1x256x256xbf16> to vector<256x256xbf16>
    %cst_48 = arith.constant dense<0.000000e+00> : vector<128x256xf32>
    %138 = tpu.matmul %116, %137, %cst_48 {dimension_numbers = #tpu.dot_dimension_numbers<[1], [0], [0], [1], [0, 0, 1, 1], [], []>} : vector<128x256xbf16>, vector<256x256xbf16>, vector<128x256xf32> -> vector<128x256xf32>
    %c0_49 = arith.constant 0 : index
    %c0_50 = arith.constant 0 : index
    %c0_51 = arith.constant 0 : index
    %139 = vector.load %arg8[%c0_49, %c0_50, %c0_51] : memref<1x1x256xf32, #tpu.memory_space<vmem>>, vector<1x1x256xf32>
    %140 = vector.shape_cast %139 : vector<1x1x256xf32> to vector<1x256xf32>
    %141 = vector.broadcast %140 : vector<1x256xf32> to vector<128x256xf32>
    %142 = arith.addf %138, %141 : vector<128x256xf32>
    %c0_52 = arith.constant 0 : index
    %c0_53 = arith.constant 0 : index
    %c0_54 = arith.constant 0 : index
    %143 = vector.load %arg7[%c0_52, %c0_53, %c0_54] : memref<1x256x256xbf16, #tpu.memory_space<vmem>>, vector<1x256x256xbf16>
    %144 = vector.shape_cast %143 : vector<1x256x256xbf16> to vector<256x256xbf16>
    %cst_55 = arith.constant dense<0.000000e+00> : vector<128x256xf32>
    %145 = tpu.matmul %135, %144, %cst_55 {dimension_numbers = #tpu.dot_dimension_numbers<[1], [0], [0], [1], [0, 0, 1, 1], [], []>} : vector<128x256xbf16>, vector<256x256xbf16>, vector<128x256xf32> -> vector<128x256xf32>
    %c0_56 = arith.constant 0 : index
    %c0_57 = arith.constant 0 : index
    %c0_58 = arith.constant 0 : index
    %146 = vector.load %arg8[%c0_56, %c0_57, %c0_58] : memref<1x1x256xf32, #tpu.memory_space<vmem>>, vector<1x1x256xf32>
    %147 = vector.shape_cast %146 : vector<1x1x256xf32> to vector<1x256xf32>
    %148 = vector.broadcast %147 : vector<1x256xf32> to vector<128x256xf32>
    %149 = arith.addf %145, %148 : vector<128x256xf32>
    %cst_59 = arith.constant dense<0.000000e+00> : vector<128xf32>
    %150 = vector.multi_reduction <add>, %142, %cst_59 [1] : vector<128x256xf32> to vector<128xf32>
    %151 = vector.shape_cast %150 : vector<128xf32> to vector<128x1xf32>
    %cst_60 = arith.constant 2.560000e+02 : f32
    %152 = vector.broadcast %cst_60 : f32 to vector<128x1xf32>
    %153 = arith.divf %151, %152 : vector<128x1xf32>
    %154 = vector.broadcast %153 : vector<128x1xf32> to vector<128x256xf32>
    %155 = arith.subf %142, %154 : vector<128x256xf32>
    %156 = arith.mulf %155, %155 : vector<128x256xf32>
    %cst_61 = arith.constant dense<0.000000e+00> : vector<128xf32>
    %157 = vector.multi_reduction <add>, %156, %cst_61 [1] : vector<128x256xf32> to vector<128xf32>
    %158 = vector.shape_cast %157 : vector<128xf32> to vector<128x1xf32>
    %cst_62 = arith.constant 2.560000e+02 : f32
    %159 = vector.broadcast %cst_62 : f32 to vector<128x1xf32>
    %160 = arith.divf %158, %159 : vector<128x1xf32>
    %cst_63 = arith.constant 9.99999974E-6 : f32
    %161 = vector.broadcast %cst_63 : f32 to vector<128x1xf32>
    %162 = arith.addf %160, %161 : vector<128x1xf32>
    %163 = math.rsqrt %162 : vector<128x1xf32>
    %164 = vector.broadcast %163 : vector<128x1xf32> to vector<128x256xf32>
    %165 = arith.mulf %155, %164 : vector<128x256xf32>
    %cst_64 = arith.constant 0.000000e+00 : f32
    %166 = vector.broadcast %cst_64 : f32 to vector<128x256xf32>
    %167 = arith.maximumf %165, %166 : vector<128x256xf32>
    %168 = arith.truncf %167 : vector<128x256xf32> to vector<128x256xbf16>
    %cst_65 = arith.constant dense<0.000000e+00> : vector<128xf32>
    %169 = vector.multi_reduction <add>, %149, %cst_65 [1] : vector<128x256xf32> to vector<128xf32>
    %170 = vector.shape_cast %169 : vector<128xf32> to vector<128x1xf32>
    %cst_66 = arith.constant 2.560000e+02 : f32
    %171 = vector.broadcast %cst_66 : f32 to vector<128x1xf32>
    %172 = arith.divf %170, %171 : vector<128x1xf32>
    %173 = vector.broadcast %172 : vector<128x1xf32> to vector<128x256xf32>
    %174 = arith.subf %149, %173 : vector<128x256xf32>
    %175 = arith.mulf %174, %174 : vector<128x256xf32>
    %cst_67 = arith.constant dense<0.000000e+00> : vector<128xf32>
    %176 = vector.multi_reduction <add>, %175, %cst_67 [1] : vector<128x256xf32> to vector<128xf32>
    %177 = vector.shape_cast %176 : vector<128xf32> to vector<128x1xf32>
    %cst_68 = arith.constant 2.560000e+02 : f32
    %178 = vector.broadcast %cst_68 : f32 to vector<128x1xf32>
    %179 = arith.divf %177, %178 : vector<128x1xf32>
    %cst_69 = arith.constant 9.99999974E-6 : f32
    %180 = vector.broadcast %cst_69 : f32 to vector<128x1xf32>
    %181 = arith.addf %179, %180 : vector<128x1xf32>
    %182 = math.rsqrt %181 : vector<128x1xf32>
    %183 = vector.broadcast %182 : vector<128x1xf32> to vector<128x256xf32>
    %184 = arith.mulf %174, %183 : vector<128x256xf32>
    %cst_70 = arith.constant 0.000000e+00 : f32
    %185 = vector.broadcast %cst_70 : f32 to vector<128x256xf32>
    %186 = arith.maximumf %184, %185 : vector<128x256xf32>
    %187 = arith.truncf %186 : vector<128x256xf32> to vector<128x256xbf16>
    %c0_71 = arith.constant 0 : index
    %c0_72 = arith.constant 0 : index
    %c0_73 = arith.constant 0 : index
    %188 = vector.load %arg9[%c0_71, %c0_72, %c0_73] : memref<1x256x256xbf16, #tpu.memory_space<vmem>>, vector<1x256x256xbf16>
    %189 = vector.shape_cast %188 : vector<1x256x256xbf16> to vector<256x256xbf16>
    %cst_74 = arith.constant dense<0.000000e+00> : vector<128x256xf32>
    %190 = tpu.matmul %168, %189, %cst_74 {dimension_numbers = #tpu.dot_dimension_numbers<[1], [0], [0], [1], [0, 0, 1, 1], [], []>} : vector<128x256xbf16>, vector<256x256xbf16>, vector<128x256xf32> -> vector<128x256xf32>
    %c0_75 = arith.constant 0 : index
    %c0_76 = arith.constant 0 : index
    %c0_77 = arith.constant 0 : index
    %191 = vector.load %arg10[%c0_75, %c0_76, %c0_77] : memref<1x1x256xf32, #tpu.memory_space<vmem>>, vector<1x1x256xf32>
    %192 = vector.shape_cast %191 : vector<1x1x256xf32> to vector<1x256xf32>
    %193 = vector.broadcast %192 : vector<1x256xf32> to vector<128x256xf32>
    %194 = arith.addf %190, %193 : vector<128x256xf32>
    %c0_78 = arith.constant 0 : index
    %c0_79 = arith.constant 0 : index
    %c0_80 = arith.constant 0 : index
    %195 = vector.load %arg9[%c0_78, %c0_79, %c0_80] : memref<1x256x256xbf16, #tpu.memory_space<vmem>>, vector<1x256x256xbf16>
    %196 = vector.shape_cast %195 : vector<1x256x256xbf16> to vector<256x256xbf16>
    %cst_81 = arith.constant dense<0.000000e+00> : vector<128x256xf32>
    %197 = tpu.matmul %187, %196, %cst_81 {dimension_numbers = #tpu.dot_dimension_numbers<[1], [0], [0], [1], [0, 0, 1, 1], [], []>} : vector<128x256xbf16>, vector<256x256xbf16>, vector<128x256xf32> -> vector<128x256xf32>
    %c0_82 = arith.constant 0 : index
    %c0_83 = arith.constant 0 : index
    %c0_84 = arith.constant 0 : index
    %198 = vector.load %arg10[%c0_82, %c0_83, %c0_84] : memref<1x1x256xf32, #tpu.memory_space<vmem>>, vector<1x1x256xf32>
    %199 = vector.shape_cast %198 : vector<1x1x256xf32> to vector<1x256xf32>
    %200 = vector.broadcast %199 : vector<1x256xf32> to vector<128x256xf32>
    %201 = arith.addf %197, %200 : vector<128x256xf32>
    %cst_85 = arith.constant dense<0.000000e+00> : vector<128xf32>
    %202 = vector.multi_reduction <add>, %194, %cst_85 [1] : vector<128x256xf32> to vector<128xf32>
    %203 = vector.shape_cast %202 : vector<128xf32> to vector<128x1xf32>
    %cst_86 = arith.constant 2.560000e+02 : f32
    %204 = vector.broadcast %cst_86 : f32 to vector<128x1xf32>
    %205 = arith.divf %203, %204 : vector<128x1xf32>
    %206 = vector.broadcast %205 : vector<128x1xf32> to vector<128x256xf32>
    %207 = arith.subf %194, %206 : vector<128x256xf32>
    %208 = arith.mulf %207, %207 : vector<128x256xf32>
    %cst_87 = arith.constant dense<0.000000e+00> : vector<128xf32>
    %209 = vector.multi_reduction <add>, %208, %cst_87 [1] : vector<128x256xf32> to vector<128xf32>
    %210 = vector.shape_cast %209 : vector<128xf32> to vector<128x1xf32>
    %cst_88 = arith.constant 2.560000e+02 : f32
    %211 = vector.broadcast %cst_88 : f32 to vector<128x1xf32>
    %212 = arith.divf %210, %211 : vector<128x1xf32>
    %cst_89 = arith.constant 9.99999974E-6 : f32
    %213 = vector.broadcast %cst_89 : f32 to vector<128x1xf32>
    %214 = arith.addf %212, %213 : vector<128x1xf32>
    %215 = math.rsqrt %214 : vector<128x1xf32>
    %216 = vector.broadcast %215 : vector<128x1xf32> to vector<128x256xf32>
    %217 = arith.mulf %207, %216 : vector<128x256xf32>
    %cst_90 = arith.constant 0.000000e+00 : f32
    %218 = vector.broadcast %cst_90 : f32 to vector<128x256xf32>
    %219 = arith.maximumf %217, %218 : vector<128x256xf32>
    %220 = arith.truncf %219 : vector<128x256xf32> to vector<128x256xbf16>
    %cst_91 = arith.constant dense<0.000000e+00> : vector<128xf32>
    %221 = vector.multi_reduction <add>, %201, %cst_91 [1] : vector<128x256xf32> to vector<128xf32>
    %222 = vector.shape_cast %221 : vector<128xf32> to vector<128x1xf32>
    %cst_92 = arith.constant 2.560000e+02 : f32
    %223 = vector.broadcast %cst_92 : f32 to vector<128x1xf32>
    %224 = arith.divf %222, %223 : vector<128x1xf32>
    %225 = vector.broadcast %224 : vector<128x1xf32> to vector<128x256xf32>
    %226 = arith.subf %201, %225 : vector<128x256xf32>
    %227 = arith.mulf %226, %226 : vector<128x256xf32>
    %cst_93 = arith.constant dense<0.000000e+00> : vector<128xf32>
    %228 = vector.multi_reduction <add>, %227, %cst_93 [1] : vector<128x256xf32> to vector<128xf32>
    %229 = vector.shape_cast %228 : vector<128xf32> to vector<128x1xf32>
    %cst_94 = arith.constant 2.560000e+02 : f32
    %230 = vector.broadcast %cst_94 : f32 to vector<128x1xf32>
    %231 = arith.divf %229, %230 : vector<128x1xf32>
    %cst_95 = arith.constant 9.99999974E-6 : f32
    %232 = vector.broadcast %cst_95 : f32 to vector<128x1xf32>
    %233 = arith.addf %231, %232 : vector<128x1xf32>
    %234 = math.rsqrt %233 : vector<128x1xf32>
    %235 = vector.broadcast %234 : vector<128x1xf32> to vector<128x256xf32>
    %236 = arith.mulf %226, %235 : vector<128x256xf32>
    %cst_96 = arith.constant 0.000000e+00 : f32
    %237 = vector.broadcast %cst_96 : f32 to vector<128x256xf32>
    %238 = arith.maximumf %236, %237 : vector<128x256xf32>
    %239 = arith.truncf %238 : vector<128x256xf32> to vector<128x256xbf16>
    %c0_97 = arith.constant 0 : index
    %c0_98 = arith.constant 0 : index
    %240 = vector.load %arg11[%c0_97, %c0_98] : memref<256x256xbf16, #tpu.memory_space<vmem>>, vector<256x256xbf16>
    %cst_99 = arith.constant dense<0.000000e+00> : vector<128x256xf32>
    %241 = tpu.matmul %220, %240, %cst_99 {dimension_numbers = #tpu.dot_dimension_numbers<[1], [0], [0], [1], [0, 0, 1, 1], [], []>} : vector<128x256xbf16>, vector<256x256xbf16>, vector<128x256xf32> -> vector<128x256xf32>
    %c0_100 = arith.constant 0 : index
    %c0_101 = arith.constant 0 : index
    %242 = vector.load %arg12[%c0_100, %c0_101] : memref<1x256xf32, #tpu.memory_space<vmem>>, vector<1x256xf32>
    %243 = vector.broadcast %242 : vector<1x256xf32> to vector<128x256xf32>
    %244 = arith.addf %241, %243 : vector<128x256xf32>
    %cst_102 = arith.constant 0.000000e+00 : f32
    %245 = vector.broadcast %cst_102 : f32 to vector<128x256xf32>
    %246 = arith.maximumf %244, %245 : vector<128x256xf32>
    %247 = arith.truncf %246 : vector<128x256xf32> to vector<128x256xbf16>
    %c0_103 = arith.constant 0 : index
    %c0_104 = arith.constant 0 : index
    %248 = vector.load %arg13[%c0_103, %c0_104] : memref<256x128xbf16, #tpu.memory_space<vmem>>, vector<256x128xbf16>
    %cst_105 = arith.constant dense<0.000000e+00> : vector<128x128xf32>
    %249 = tpu.matmul %247, %248, %cst_105 {dimension_numbers = #tpu.dot_dimension_numbers<[1], [0], [0], [1], [0, 0, 1, 1], [], []>} : vector<128x256xbf16>, vector<256x128xbf16>, vector<128x128xf32> -> vector<128x128xf32>
    %c0_106 = arith.constant 0 : index
    %c0_107 = arith.constant 0 : index
    %250 = vector.load %arg14[%c0_106, %c0_107] : memref<1x128xf32, #tpu.memory_space<vmem>>, vector<1x128xf32>
    %251 = vector.broadcast %250 : vector<1x128xf32> to vector<128x128xf32>
    %252 = arith.addf %249, %251 : vector<128x128xf32>
    %c0_108 = arith.constant 0 : index
    %c0_109 = arith.constant 0 : index
    %253 = vector.load %arg11[%c0_108, %c0_109] : memref<256x256xbf16, #tpu.memory_space<vmem>>, vector<256x256xbf16>
    %cst_110 = arith.constant dense<0.000000e+00> : vector<128x256xf32>
    %254 = tpu.matmul %239, %253, %cst_110 {dimension_numbers = #tpu.dot_dimension_numbers<[1], [0], [0], [1], [0, 0, 1, 1], [], []>} : vector<128x256xbf16>, vector<256x256xbf16>, vector<128x256xf32> -> vector<128x256xf32>
    %c0_111 = arith.constant 0 : index
    %c0_112 = arith.constant 0 : index
    %255 = vector.load %arg12[%c0_111, %c0_112] : memref<1x256xf32, #tpu.memory_space<vmem>>, vector<1x256xf32>
    %256 = vector.broadcast %255 : vector<1x256xf32> to vector<128x256xf32>
    %257 = arith.addf %254, %256 : vector<128x256xf32>
    %cst_113 = arith.constant 0.000000e+00 : f32
    %258 = vector.broadcast %cst_113 : f32 to vector<128x256xf32>
    %259 = arith.maximumf %257, %258 : vector<128x256xf32>
    %260 = arith.truncf %259 : vector<128x256xf32> to vector<128x256xbf16>
    %c0_114 = arith.constant 0 : index
    %c0_115 = arith.constant 0 : index
    %261 = vector.load %arg13[%c0_114, %c0_115] : memref<256x128xbf16, #tpu.memory_space<vmem>>, vector<256x128xbf16>
    %cst_116 = arith.constant dense<0.000000e+00> : vector<128x128xf32>
    %262 = tpu.matmul %260, %261, %cst_116 {dimension_numbers = #tpu.dot_dimension_numbers<[1], [0], [0], [1], [0, 0, 1, 1], [], []>} : vector<128x256xbf16>, vector<256x128xbf16>, vector<128x128xf32> -> vector<128x128xf32>
    %c0_117 = arith.constant 0 : index
    %c0_118 = arith.constant 0 : index
    %263 = vector.load %arg14[%c0_117, %c0_118] : memref<1x128xf32, #tpu.memory_space<vmem>>, vector<1x128xf32>
    %264 = vector.broadcast %263 : vector<1x128xf32> to vector<128x128xf32>
    %265 = arith.addf %262, %264 : vector<128x128xf32>
    %266 = vector.extract_strided_slice %252 {offsets = [0, 0], sizes = [128, 3], strides = [1, 1]} : vector<128x128xf32> to vector<128x3xf32>
    %c0_119 = arith.constant 0 : index
    %c0_120 = arith.constant 0 : index
    %c0_121 = arith.constant 0 : index
    %267 = vector.load %arg15[%c0_119, %c0_120, %c0_121] : memref<1x256x3xf32, #tpu.memory_space<vmem>>, vector<1x128x3xf32>
    %268 = vector.shape_cast %267 : vector<1x128x3xf32> to vector<128x3xf32>
    %269 = vector.shape_cast %266 : vector<128x3xf32> to vector<1x128x3xf32>
    tpu.vector_store %arg15[%c0_119, %c0_120, %c0_121], %269 {strides = array<i32>} : memref<1x256x3xf32, #tpu.memory_space<vmem>>, vector<1x128x3xf32>,
    %270 = vector.extract_strided_slice %265 {offsets = [0, 0], sizes = [128, 3], strides = [1, 1]} : vector<128x128xf32> to vector<128x3xf32>
    %c0_122 = arith.constant 0 : index
    %c128 = arith.constant 128 : index
    %c0_123 = arith.constant 0 : index
    %271 = vector.load %arg15[%c0_122, %c128, %c0_123] : memref<1x256x3xf32, #tpu.memory_space<vmem>>, vector<1x128x3xf32>
    %272 = vector.shape_cast %271 : vector<1x128x3xf32> to vector<128x3xf32>
    %273 = vector.shape_cast %270 : vector<128x3xf32> to vector<1x128x3xf32>
    tpu.vector_store %arg15[%c0_122, %c128, %c0_123], %273 {strides = array<i32>} : memref<1x256x3xf32, #tpu.memory_space<vmem>>, vector<1x128x3xf32>,
    return
  }
  func.func @transform_0(%arg0: i32, %arg1: i32) -> (i32, i32, i32) {
    %c0_i32 = arith.constant 0 : i32
    %c0_i32_0 = arith.constant 0 : i32
    return %arg0, %arg1, %c0_i32 : i32, i32, i32
  }
  func.func @transform_1(%arg0: i32, %arg1: i32) -> (i32, i32, i32) {
    %c0_i32 = arith.constant 0 : i32
    %c0_i32_0 = arith.constant 0 : i32
    %c0_i32_1 = arith.constant 0 : i32
    return %arg0, %c0_i32, %c0_i32_0 : i32, i32, i32
  }
  func.func @transform_2(%arg0: i32, %arg1: i32) -> (i32, i32, i32) {
    %c0_i32 = arith.constant 0 : i32
    %c0_i32_0 = arith.constant 0 : i32
    %c0_i32_1 = arith.constant 0 : i32
    return %arg0, %c0_i32, %c0_i32_0 : i32, i32, i32
  }
  func.func @transform_3(%arg0: i32, %arg1: i32) -> (i32, i32, i32) {
    %c0_i32 = arith.constant 0 : i32
    %c0_i32_0 = arith.constant 0 : i32
    %c0_i32_1 = arith.constant 0 : i32
    return %arg0, %c0_i32, %c0_i32_0 : i32, i32, i32
  }
  func.func @transform_4(%arg0: i32, %arg1: i32) -> (i32, i32, i32) {
    %c0_i32 = arith.constant 0 : i32
    %c0_i32_0 = arith.constant 0 : i32
    %c0_i32_1 = arith.constant 0 : i32
    return %arg0, %c0_i32, %c0_i32_0 : i32, i32, i32
  }
  func.func @transform_5(%arg0: i32, %arg1: i32) -> (i32, i32, i32) {
    %c0_i32 = arith.constant 0 : i32
    %c0_i32_0 = arith.constant 0 : i32
    %c0_i32_1 = arith.constant 0 : i32
    return %arg0, %c0_i32, %c0_i32_0 : i32, i32, i32
  }
  func.func @transform_6(%arg0: i32, %arg1: i32) -> (i32, i32, i32) {
    %c0_i32 = arith.constant 0 : i32
    %c0_i32_0 = arith.constant 0 : i32
    %c0_i32_1 = arith.constant 0 : i32
    return %arg0, %c0_i32, %c0_i32_0 : i32, i32, i32
  }
  func.func @transform_7(%arg0: i32, %arg1: i32) -> (i32, i32, i32) {
    %c0_i32 = arith.constant 0 : i32
    %c0_i32_0 = arith.constant 0 : i32
    %c0_i32_1 = arith.constant 0 : i32
    return %arg0, %c0_i32, %c0_i32_0 : i32, i32, i32
  }
  func.func @transform_8(%arg0: i32, %arg1: i32) -> (i32, i32, i32) {
    %c0_i32 = arith.constant 0 : i32
    %c0_i32_0 = arith.constant 0 : i32
    %c0_i32_1 = arith.constant 0 : i32
    return %arg0, %c0_i32, %c0_i32_0 : i32, i32, i32
  }
  func.func @transform_9(%arg0: i32, %arg1: i32) -> (i32, i32) {
    %c0_i32 = arith.constant 0 : i32
    %c0_i32_0 = arith.constant 0 : i32
    %c0_i32_1 = arith.constant 0 : i32
    return %c0_i32, %c0_i32_0 : i32, i32
  }
  func.func @transform_10(%arg0: i32, %arg1: i32) -> (i32, i32) {
    %c0_i32 = arith.constant 0 : i32
    %c0_i32_0 = arith.constant 0 : i32
    %c0_i32_1 = arith.constant 0 : i32
    return %c0_i32, %c0_i32_0 : i32, i32
  }
  func.func @transform_11(%arg0: i32, %arg1: i32) -> (i32, i32) {
    %c0_i32 = arith.constant 0 : i32
    %c0_i32_0 = arith.constant 0 : i32
    %c0_i32_1 = arith.constant 0 : i32
    return %c0_i32, %c0_i32_0 : i32, i32
  }
  func.func @transform_12(%arg0: i32, %arg1: i32) -> (i32, i32) {
    %c0_i32 = arith.constant 0 : i32
    %c0_i32_0 = arith.constant 0 : i32
    %c0_i32_1 = arith.constant 0 : i32
    return %c0_i32, %c0_i32_0 : i32, i32
  }
  func.func @transform_13(%arg0: i32, %arg1: i32) -> (i32, i32, i32) {
    %c0_i32 = arith.constant 0 : i32
    %c0_i32_0 = arith.constant 0 : i32
    return %arg0, %arg1, %c0_i32 : i32, i32, i32
  }
}

</mosaic_0001>

<llo_original>
// kernel: sif_forward.1
$region0: #{sif_forward.1}
  #allocation0 [shape = 'u32[]', space=smem, size = 0x4, offset = 0x4, fixed_abs, tag = 'smem constant byte address 0x4 - core index']
  #allocation1 [shape = 'u32[72,128]{1,0:T(1,128)}', space=vmem, size = 0x9000, scoped, tag = 'internal scratch']
  %s0 = inlined_call_operand.vmem [shape: f32[2,256,3], index: 0, kind: input, shape index: {}]
  %s1 = inlined_call_operand.vmem [shape: f32[2,3,256], index: 1, kind: input, shape index: {}]
  %s2 = inlined_call_operand.vmem [shape: f32[2,1,256], index: 2, kind: input, shape index: {}]
  %s3 = inlined_call_operand.vmem [shape: bf16[2,256,256], index: 3, kind: input, shape index: {}]
  %s4 = inlined_call_operand.vmem [shape: f32[2,1,256], index: 4, kind: input, shape index: {}]
  %s5 = inlined_call_operand.vmem [shape: bf16[2,256,256], index: 5, kind: input, shape index: {}]
  %s6 = inlined_call_operand.vmem [shape: f32[2,1,256], index: 6, kind: input, shape index: {}]
  %s7 = inlined_call_operand.vmem [shape: bf16[2,256,256], index: 7, kind: input, shape index: {}]
  %s8 = inlined_call_operand.vmem [shape: f32[2,1,256], index: 8, kind: input, shape index: {}]
  %s9 = inlined_call_operand.vmem [shape: bf16[256,256], index: 9, kind: input, shape index: {}]
  %s10 = inlined_call_operand.vmem [shape: f32[1,256], index: 10, kind: input, shape index: {}]
  %s11 = inlined_call_operand.vmem [shape: bf16[256,128], index: 11, kind: input, shape index: {}]
  %s12 = inlined_call_operand.vmem [shape: f32[1,128], index: 12, kind: input, shape index: {}]
  %s13 = inlined_call_operand.vmem [shape: f32[2,256,3], index: 13, kind: output, shape index: {}]
  %s14 = sld [smem:[#allocation0]]
  $region85: #{sif_forward.1} parent=0
    _
  %s16 = ssub.s32 1, %s14
  %s17 = scalar_select 0, %s16, %s14
  loop: start=0, step=1, limit=4
  $region2: #{sif_forward.1} parent=0 // loop_pre_header
    _
  $region3: #{sif_forward.1} parent=0 // loop_header
    %s19 = sphi 0, %s23
    %p20 = scmp.ge.s32.totalorder %s19, 4
    %s26 = sphi 0, %s38
    %s27 = sphi 0, %s34
    %s28 = sphi 0, %s26
    %s29 = sphi 0, %s27
    %s30 = sphi 0, %s28
    %s31 = sphi 0, %s29
    %s43 = sphi 0, %s45
    %s46 = sphi 0, %s43
    %s47 = sphi 0, %s46
    %s63 = sphi 0, %s47
    %s69 = sphi 0, %s71
    %s72 = sphi 0, %s69
    %s73 = sphi 0, %s72
    %s89 = sphi 0, %s73
    %s95 = sphi 0, %s97
    %s98 = sphi 0, %s95
    %s99 = sphi 0, %s98
    %s115 = sphi 0, %s99
    %s121 = sphi 0, %s123
    %s124 = sphi 0, %s121
    %s125 = sphi 0, %s124
    %s141 = sphi 0, %s125
    %s147 = sphi 0, %s149
    %s150 = sphi 0, %s147
    %s151 = sphi 0, %s150
    %s167 = sphi 0, %s151
    %s173 = sphi 0, %s175
    %s176 = sphi 0, %s173
    %s177 = sphi 0, %s176
    %s193 = sphi 0, %s177
    %s199 = sphi 0, %s201
    %s202 = sphi 0, %s199
    %s203 = sphi 0, %s202
    %s219 = sphi 0, %s203
    %s225 = sphi 0, %s227
    %s228 = sphi 0, %s225
    %s229 = sphi 0, %s228
    %s245 = sphi 0, %s229
    %s251 = sphi 0, %s253
    %s254 = sphi 0, %s251
    %s255 = sphi 0, %s254
    %s271 = sphi 0, %s255
    %s275 = sphi 0, %s275
    %s277 = sphi 0, %s275
    %s278 = sphi 0, %s277
    %s292 = sphi 0, %s278
    %s296 = sphi 0, %s296
    %s298 = sphi 0, %s296
    %s299 = sphi 0, %s298
    %s313 = sphi 0, %s299
    %s317 = sphi 0, %s317
    %s319 = sphi 0, %s317
    %s320 = sphi 0, %s319
    %s334 = sphi 0, %s320
    %s338 = sphi 0, %s338
    %s340 = sphi 0, %s338
    %s341 = sphi 0, %s340
    %s355 = sphi 0, %s341
    %s363 = sphi 0, %s365
    %s366 = sphi 0, %s363
    %s367 = sphi 0, %s366
    %s383 = sphi 0, %s367
  $region4: #{sif_forward.1} parent=0 // loop_header_branch
    %22 = sbr.rel (%p20) target = $region8
  $region5: #{sif_forward.1} parent=0 // loop_body
    %s24 = ssub.s32 %s19, 1
    %s25 = ssub.s32 %s19, 2
    %s32 = sadd.s32 1, %s27
    %p33 = scmp.ge.s32.totalorder %s32, 1
    %s34 = scalar_select %p33, 0, %s32
    %s35 = sadd.s32 1, %s26
    %s36 = scalar_select %p33, %s35, %s26
    %p37 = scmp.ge.s32.totalorder %s36, 2
    %s38 = scalar_select %p37, 0, %s36
    %s39 = ssub.s32 %s26, %s38
    %s40 = ssub.s32 %s27, %s34
    %s41 = sor.u32 %s39, %s40
    %p42 = scmp.eq.s32.totalorder %s41, 0
    %s44 = sadd.s32 %s43, 1
    %s45 = scalar_select %p42, %s43, %s44
    %p48 = pneg %p42
    %p49 = scmp.eq.s32.totalorder %s19, 1
    %p50 = por %p48, %p49
    %p51 = scmp.ne.s32.totalorder %s43, %s46
    %p52 = scmp.eq.s32.totalorder %s19, 0
    %p53 = por %p51, %p52
    %p54 = scmp.ne.s32.totalorder %s43, %s46
    %p55 = scmp.eq.s32.totalorder %s24, 1
    %p56 = por %p54, %p55
    %p57 = scmp.ne.s32.totalorder %s46, %s47
    %p58 = scmp.eq.s32.totalorder %s24, 0
    %p59 = por %p57, %p58
    %p60 = scmp.ne.s32.totalorder %s46, %s47
    %p61 = scmp.eq.s32.totalorder %s25, 1
    %p62 = por %p60, %p61
    %p64 = scmp.ne.s32.totalorder %s47, %s63
    %p65 = scmp.eq.s32.totalorder %s25, 0
    %p66 = por %p64, %p65
    %s67 = ssub.s32 %s26, %s38
    %p68 = scmp.eq.s32.totalorder %s67, 0
    %s70 = sadd.s32 %s69, 1
    %s71 = scalar_select %p68, %s69, %s70
    %p74 = pneg %p68
    %p75 = scmp.eq.s32.totalorder %s19, 1
    %p76 = por %p74, %p75
    %p77 = scmp.ne.s32.totalorder %s69, %s72
    %p78 = scmp.eq.s32.totalorder %s19, 0
    %p79 = por %p77, %p78
    %p80 = scmp.ne.s32.totalorder %s69, %s72
    %p81 = scmp.eq.s32.totalorder %s24, 1
    %p82 = por %p80, %p81
    %p83 = scmp.ne.s32.totalorder %s72, %s73
    %p84 = scmp.eq.s32.totalorder %s24, 0
    %p85 = por %p83, %p84
    %p86 = scmp.ne.s32.totalorder %s72, %s73
    %p87 = scmp.eq.s32.totalorder %s25, 1
    %p88 = por %p86, %p87
    %p90 = scmp.ne.s32.totalorder %s73, %s89
    %p91 = scmp.eq.s32.totalorder %s25, 0
    %p92 = por %p90, %p91
    %s93 = ssub.s32 %s26, %s38
    %p94 = scmp.eq.s32.totalorder %s93, 0
    %s96 = sadd.s32 %s95, 1
    %s97 = scalar_select %p94, %s95, %s96
    %p100 = pneg %p94
    %p101 = scmp.eq.s32.totalorder %s19, 1
    %p102 = por %p100, %p101
    %p103 = scmp.ne.s32.totalorder %s95, %s98
    %p104 = scmp.eq.s32.totalorder %s19, 0
    %p105 = por %p103, %p104
    %p106 = scmp.ne.s32.totalorder %s95, %s98
    %p107 = scmp.eq.s32.totalorder %s24, 1
    %p108 = por %p106, %p107
    %p109 = scmp.ne.s32.totalorder %s98, %s99
    %p110 = scmp.eq.s32.totalorder %s24, 0
    %p111 = por %p109, %p110
    %p112 = scmp.ne.s32.totalorder %s98, %s99
    %p113 = scmp.eq.s32.totalorder %s25, 1
    %p114 = por %p112, %p113
    %p116 = scmp.ne.s32.totalorder %s99, %s115
    %p117 = scmp.eq.s32.totalorder %s25, 0
    %p118 = por %p116, %p117
    %s119 = ssub.s32 %s26, %s38
    %p120 = scmp.eq.s32.totalorder %s119, 0
    %s122 = sadd.s32 %s121, 1
    %s123 = scalar_select %p120, %s121, %s122
    %p126 = pneg %p120
    %p127 = scmp.eq.s32.totalorder %s19, 1
    %p128 = por %p126, %p127
    %p129 = scmp.ne.s32.totalorder %s121, %s124
    %p130 = scmp.eq.s32.totalorder %s19, 0
    %p131 = por %p129, %p130
    %p132 = scmp.ne.s32.totalorder %s121, %s124
    %p133 = scmp.eq.s32.totalorder %s24, 1
    %p134 = por %p132, %p133
    %p135 = scmp.ne.s32.totalorder %s124, %s125
    %p136 = scmp.eq.s32.totalorder %s24, 0
    %p137 = por %p135, %p136
    %p138 = scmp.ne.s32.totalorder %s124, %s125
    %p139 = scmp.eq.s32.totalorder %s25, 1
    %p140 = por %p138, %p139
    %p142 = scmp.ne.s32.totalorder %s125, %s141
    %p143 = scmp.eq.s32.totalorder %s25, 0
    %p144 = por %p142, %p143
    %s145 = ssub.s32 %s26, %s38
    %p146 = scmp.eq.s32.totalorder %s145, 0
    %s148 = sadd.s32 %s147, 1
    %s149 = scalar_select %p146, %s147, %s148
    %p152 = pneg %p146
    %p153 = scmp.eq.s32.totalorder %s19, 1
    %p154 = por %p152, %p153
    %p155 = scmp.ne.s32.totalorder %s147, %s150
    %p156 = scmp.eq.s32.totalorder %s19, 0
    %p157 = por %p155, %p156
    %p158 = scmp.ne.s32.totalorder %s147, %s150
    %p159 = scmp.eq.s32.totalorder %s24, 1
    %p160 = por %p158, %p159
    %p161 = scmp.ne.s32.totalorder %s150, %s151
    %p162 = scmp.eq.s32.totalorder %s24, 0
    %p163 = por %p161, %p162
    %p164 = scmp.ne.s32.totalorder %s150, %s151
    %p165 = scmp.eq.s32.totalorder %s25, 1
    %p166 = por %p164, %p165
    %p168 = scmp.ne.s32.totalorder %s151, %s167
    %p169 = scmp.eq.s32.totalorder %s25, 0
    %p170 = por %p168, %p169
    %s171 = ssub.s32 %s26, %s38
    %p172 = scmp.eq.s32.totalorder %s171, 0
    %s174 = sadd.s32 %s173, 1
    %s175 = scalar_select %p172, %s173, %s174
    %p178 = pneg %p172
    %p179 = scmp.eq.s32.totalorder %s19, 1
    %p180 = por %p178, %p179
    %p181 = scmp.ne.s32.totalorder %s173, %s176
    %p182 = scmp.eq.s32.totalorder %s19, 0
    %p183 = por %p181, %p182
    %p184 = scmp.ne.s32.totalorder %s173, %s176
    %p185 = scmp.eq.s32.totalorder %s24, 1
    %p186 = por %p184, %p185
    %p187 = scmp.ne.s32.totalorder %s176, %s177
    %p188 = scmp.eq.s32.totalorder %s24, 0
    %p189 = por %p187, %p188
    %p190 = scmp.ne.s32.totalorder %s176, %s177
    %p191 = scmp.eq.s32.totalorder %s25, 1
    %p192 = por %p190, %p191
    %p194 = scmp.ne.s32.totalorder %s177, %s193
    %p195 = scmp.eq.s32.totalorder %s25, 0
    %p196 = por %p194, %p195
    %s197 = ssub.s32 %s26, %s38
    %p198 = scmp.eq.s32.totalorder %s197, 0
    %s200 = sadd.s32 %s199, 1
    %s201 = scalar_select %p198, %s199, %s200
    %p204 = pneg %p198
    %p205 = scmp.eq.s32.totalorder %s19, 1
    %p206 = por %p204, %p205
    %p207 = scmp.ne.s32.totalorder %s199, %s202
    %p208 = scmp.eq.s32.totalorder %s19, 0
    %p209 = por %p207, %p208
    %p210 = scmp.ne.s32.totalorder %s199, %s202
    %p211 = scmp.eq.s32.totalorder %s24, 1
    %p212 = por %p210, %p211
    %p213 = scmp.ne.s32.totalorder %s202, %s203
    %p214 = scmp.eq.s32.totalorder %s24, 0
    %p215 = por %p213, %p214
    %p216 = scmp.ne.s32.totalorder %s202, %s203
    %p217 = scmp.eq.s32.totalorder %s25, 1
    %p218 = por %p216, %p217
    %p220 = scmp.ne.s32.totalorder %s203, %s219
    %p221 = scmp.eq.s32.totalorder %s25, 0
    %p222 = por %p220, %p221
    %s223 = ssub.s32 %s26, %s38
    %p224 = scmp.eq.s32.totalorder %s223, 0
    %s226 = sadd.s32 %s225, 1
    %s227 = scalar_select %p224, %s225, %s226
    %p230 = pneg %p224
    %p231 = scmp.eq.s32.totalorder %s19, 1
    %p232 = por %p230, %p231
    %p233 = scmp.ne.s32.totalorder %s225, %s228
    %p234 = scmp.eq.s32.totalorder %s19, 0
    %p235 = por %p233, %p234
    %p236 = scmp.ne.s32.totalorder %s225, %s228
    %p237 = scmp.eq.s32.totalorder %s24, 1
    %p238 = por %p236, %p237
    %p239 = scmp.ne.s32.totalorder %s228, %s229
    %p240 = scmp.eq.s32.totalorder %s24, 0
    %p241 = por %p239, %p240
    %p242 = scmp.ne.s32.totalorder %s228, %s229
    %p243 = scmp.eq.s32.totalorder %s25, 1
    %p244 = por %p242, %p243
    %p246 = scmp.ne.s32.totalorder %s229, %s245
    %p247 = scmp.eq.s32.totalorder %s25, 0
    %p248 = por %p246, %p247
    %s249 = ssub.s32 %s26, %s38
    %p250 = scmp.eq.s32.totalorder %s249, 0
    %s252 = sadd.s32 %s251, 1
    %s253 = scalar_select %p250, %s251, %s252
    %p256 = pneg %p250
    %p257 = scmp.eq.s32.totalorder %s19, 1
    %p258 = por %p256, %p257
    %p259 = scmp.ne.s32.totalorder %s251, %s254
    %p260 = scmp.eq.s32.totalorder %s19, 0
    %p261 = por %p259, %p260
    %p262 = scmp.ne.s32.totalorder %s251, %s254
    %p263 = scmp.eq.s32.totalorder %s24, 1
    %p264 = por %p262, %p263
    %p265 = scmp.ne.s32.totalorder %s254, %s255
    %p266 = scmp.eq.s32.totalorder %s24, 0
    %p267 = por %p265, %p266
    %p268 = scmp.ne.s32.totalorder %s254, %s255
    %p269 = scmp.eq.s32.totalorder %s25, 1
    %p270 = por %p268, %p269
    %p272 = scmp.ne.s32.totalorder %s255, %s271
    %p273 = scmp.eq.s32.totalorder %s25, 0
    %p274 = por %p272, %p273
    %s276 = sadd.s32 %s275, 1
    %p279 = scmp.eq.s32.totalorder %s19, 1
    %p280 = scmp.ne.s32.totalorder %s275, %s277
    %p281 = scmp.eq.s32.totalorder %s19, 0
    %p282 = por %p280, %p281
    %p283 = scmp.ne.s32.totalorder %s275, %s277
    %p284 = scmp.eq.s32.totalorder %s24, 1
    %p285 = por %p283, %p284
    %p286 = scmp.ne.s32.totalorder %s277, %s278
    %p287 = scmp.eq.s32.totalorder %s24, 0
    %p288 = por %p286, %p287
    %p289 = scmp.ne.s32.totalorder %s277, %s278
    %p290 = scmp.eq.s32.totalorder %s25, 1
    %p291 = por %p289, %p290
    %p293 = scmp.ne.s32.totalorder %s278, %s292
    %p294 = scmp.eq.s32.totalorder %s25, 0
    %p295 = por %p293, %p294
    %s297 = sadd.s32 %s296, 1
    %p300 = scmp.eq.s32.totalorder %s19, 1
    %p301 = scmp.ne.s32.totalorder %s296, %s298
    %p302 = scmp.eq.s32.totalorder %s19, 0
    %p303 = por %p301, %p302
    %p304 = scmp.ne.s32.totalorder %s296, %s298
    %p305 = scmp.eq.s32.totalorder %s24, 1
    %p306 = por %p304, %p305
    %p307 = scmp.ne.s32.totalorder %s298, %s299
    %p308 = scmp.eq.s32.totalorder %s24, 0
    %p309 = por %p307, %p308
    %p310 = scmp.ne.s32.totalorder %s298, %s299
    %p311 = scmp.eq.s32.totalorder %s25, 1
    %p312 = por %p310, %p311
    %p314 = scmp.ne.s32.totalorder %s299, %s313
    %p315 = scmp.eq.s32.totalorder %s25, 0
    %p316 = por %p314, %p315
    %s318 = sadd.s32 %s317, 1
    %p321 = scmp.eq.s32.totalorder %s19, 1
    %p322 = scmp.ne.s32.totalorder %s317, %s319
    %p323 = scmp.eq.s32.totalorder %s19, 0
    %p324 = por %p322, %p323
    %p325 = scmp.ne.s32.totalorder %s317, %s319
    %p326 = scmp.eq.s32.totalorder %s24, 1
    %p327 = por %p325, %p326
    %p328 = scmp.ne.s32.totalorder %s319, %s320
    %p329 = scmp.eq.s32.totalorder %s24, 0
    %p330 = por %p328, %p329
    %p331 = scmp.ne.s32.totalorder %s319, %s320
    %p332 = scmp.eq.s32.totalorder %s25, 1
    %p333 = por %p331, %p332
    %p335 = scmp.ne.s32.totalorder %s320, %s334
    %p336 = scmp.eq.s32.totalorder %s25, 0
    %p337 = por %p335, %p336
    %s339 = sadd.s32 %s338, 1
    %p342 = scmp.eq.s32.totalorder %s19, 1
    %p343 = scmp.ne.s32.totalorder %s338, %s340
    %p344 = scmp.eq.s32.totalorder %s19, 0
    %p345 = por %p343, %p344
    %p346 = scmp.ne.s32.totalorder %s338, %s340
    %p347 = scmp.eq.s32.totalorder %s24, 1
    %p348 = por %p346, %p347
    %p349 = scmp.ne.s32.totalorder %s340, %s341
    %p350 = scmp.eq.s32.totalorder %s24, 0
    %p351 = por %p349, %p350
    %p352 = scmp.ne.s32.totalorder %s340, %s341
    %p353 = scmp.eq.s32.totalorder %s25, 1
    %p354 = por %p352, %p353
    %p356 = scmp.ne.s32.totalorder %s341, %s355
    %p357 = scmp.eq.s32.totalorder %s25, 0
    %p358 = por %p356, %p357
    %s359 = ssub.s32 %s26, %s38
    %s360 = ssub.s32 %s27, %s34
    %s361 = sor.u32 %s359, %s360
    %p362 = scmp.eq.s32.totalorder %s361, 0
    %s364 = sadd.s32 %s363, 1
    %s365 = scalar_select %p362, %s363, %s364
    %p368 = pneg %p362
    %p369 = scmp.eq.s32.totalorder %s19, 1
    %p370 = por %p368, %p369
    %p371 = scmp.ne.s32.totalorder %s363, %s366
    %p372 = scmp.eq.s32.totalorder %s19, 0
    %p373 = por %p371, %p372
    %p374 = scmp.ne.s32.totalorder %s363, %s366
    %p375 = scmp.eq.s32.totalorder %s24, 1
    %p376 = por %p374, %p375
    %p377 = scmp.ne.s32.totalorder %s366, %s367
    %p378 = scmp.eq.s32.totalorder %s24, 0
    %p379 = por %p377, %p378
    %p380 = scmp.ne.s32.totalorder %s366, %s367
    %p381 = scmp.eq.s32.totalorder %s25, 1
    %p382 = por %p380, %p381
    %p384 = scmp.ne.s32.totalorder %s367, %s383
    %p385 = scmp.eq.s32.totalorder %s25, 0
    %p386 = por %p384, %p385
    %p387 = scmp.le.s32.totalorder 1, %s19
    %p388 = scmp.lt.s32.totalorder %s19, 3
    %p389 = pnand %p387, %p388
    %p390 = pneg %p389
    // Predicated region
    $region9: #{sif_forward.1} parent=5 // pred_check
      _
    $region10: #{sif_forward.1} parent=5 // pred_check_branch
      %392 = sbr.rel (%p389) target = $region12
    $region11: #{sif_forward.1} parent=5 // pred_region
      %s393 = ssub.s32 %s19, 1
      // Predicated region
      $region13: #{sif_forward.1} parent=11 // pred_check
        %p394 = pneg %p288
      $region14: #{sif_forward.1} parent=11 // pred_check_branch
        %396 = sbr.rel (%p394) target = $region16
      $region15: #{sif_forward.1} parent=11 // pred_region
        _
      $region16: #{sif_forward.1} parent=11 // pred_fallthru
        _
      // Predicated region
      $region17: #{sif_forward.1} parent=11 // pred_check
        %p397 = pneg %p309
      $region18: #{sif_forward.1} parent=11 // pred_check_branch
        %399 = sbr.rel (%p397) target = $region20
      $region19: #{sif_forward.1} parent=11 // pred_region
        _
      $region20: #{sif_forward.1} parent=11 // pred_fallthru
        _
      // Predicated region
      $region21: #{sif_forward.1} parent=11 // pred_check
        %p400 = pneg %p330
      $region22: #{sif_forward.1} parent=11 // pred_check_branch
        %402 = sbr.rel (%p400) target = $region24
      $region23: #{sif_forward.1} parent=11 // pred_region
        _
      $region24: #{sif_forward.1} parent=11 // pred_fallthru
        _
      // Predicated region
      $region25: #{sif_forward.1} parent=11 // pred_check
        %p403 = pneg %p351
      $region26: #{sif_forward.1} parent=11 // pred_check_branch
        %405 = sbr.rel (%p403) target = $region28
      $region27: #{sif_forward.1} parent=11 // pred_region
        _
      $region28: #{sif_forward.1} parent=11 // pred_fallthru
        _
    $region12: #{sif_forward.1} parent=5 // pred_fallthru
      _
    %p406 = scmp.lt.s32.totalorder %s19, 2
    // Predicated region
    $region29: #{sif_forward.1} parent=5 // pred_check
      %p407 = pneg %p406
    $region30: #{sif_forward.1} parent=5 // pred_check_branch
      %409 = sbr.rel (%p407) target = $region32
    $region31: #{sif_forward.1} parent=5 // pred_region
      // Predicated region
      $region33: #{sif_forward.1} parent=31 // pred_check
        %p410 = pneg %p53
      $region34: #{sif_forward.1} parent=31 // pred_check_branch
        %412 = sbr.rel (%p410) target = $region36
      $region35: #{sif_forward.1} parent=31 // pred_region
        %s413 = smul.u32 32, %s27
        %p414 = scmp.lt.s32.totalorder %s26, 1
        %s415 = scalar_select %p414, %s26, 1
        %p416 = scmp.lt.s32.totalorder %s413, 31
        %s417 = scalar_select %p416, %s413, 31
        %s418 = smul.addr %s415, 32
        %s419 = sadd.s32 %s417, %s418
        %s420 = smul.addr %s419, 8
        %s421 = scalar_lea.vmem %s0, %s420
        %s422 = smul.u32 32, %s27
      $region36: #{sif_forward.1} parent=31 // pred_fallthru
        _
      // Predicated region
      $region37: #{sif_forward.1} parent=31 // pred_check
        %p423 = pneg %p79
      $region38: #{sif_forward.1} parent=31 // pred_check_branch
        %425 = sbr.rel (%p423) target = $region40
      $region39: #{sif_forward.1} parent=31 // pred_region
        %p426 = scmp.lt.s32.totalorder %s26, 1
        %s427 = scalar_select %p426, %s26, 1
        %s428 = smul.addr %s427, 2
        %s429 = smul.addr %s428, 4
        %s430 = scalar_lea.vmem %s1, %s429
      $region40: #{sif_forward.1} parent=31 // pred_fallthru
        _
      // Predicated region
      $region41: #{sif_forward.1} parent=31 // pred_check
        %p431 = pneg %p105
      $region42: #{sif_forward.1} parent=31 // pred_check_branch
        %433 = sbr.rel (%p431) target = $region44
      $region43: #{sif_forward.1} parent=31 // pred_region
        %p434 = scmp.lt.s32.totalorder %s26, 1
        %s435 = scalar_select %p434, %s26, 1
        %s436 = smul.addr %s435, 2
        %s437 = scalar_lea.vmem %s2, %s436
      $region44: #{sif_forward.1} parent=31 // pred_fallthru
        _
      // Predicated region
      $region45: #{sif_forward.1} parent=31 // pred_check
        %p438 = pneg %p131
      $region46: #{sif_forward.1} parent=31 // pred_check_branch
        %440 = sbr.rel (%p438) target = $region48
      $region47: #{sif_forward.1} parent=31 // pred_region
        %p441 = scmp.lt.s32.totalorder %s26, 1
        %s442 = scalar_select %p441, %s26, 1
        %s443 = smul.addr %s442, 64
        %s444 = smul.addr %s443, 4
        %s445 = scalar_lea.vmem %s3, %s444
      $region48: #{sif_forward.1} parent=31 // pred_fallthru
        _
      // Predicated region
      $region49: #{sif_forward.1} parent=31 // pred_check
        %p446 = pneg %p157
      $region50: #{sif_forward.1} parent=31 // pred_check_branch
        %448 = sbr.rel (%p446) target = $region52
      $region51: #{sif_forward.1} parent=31 // pred_region
        %p449 = scmp.lt.s32.totalorder %s26, 1
        %s450 = scalar_select %p449, %s26, 1
        %s451 = smul.addr %s450, 2
        %s452 = scalar_lea.vmem %s4, %s451
      $region52: #{sif_forward.1} parent=31 // pred_fallthru
        _
      // Predicated region
      $region53: #{sif_forward.1} parent=31 // pred_check
        %p453 = pneg %p183
      $region54: #{sif_forward.1} parent=31 // pred_check_branch
        %455 = sbr.rel (%p453) target = $region56
      $region55: #{sif_forward.1} parent=31 // pred_region
        %p456 = scmp.lt.s32.totalorder %s26, 1
        %s457 = scalar_select %p456, %s26, 1
        %s458 = smul.addr %s457, 64
        %s459 = smul.addr %s458, 4
        %s460 = scalar_lea.vmem %s5, %s459
      $region56: #{sif_forward.1} parent=31 // pred_fallthru
        _
      // Predicated region
      $region57: #{sif_forward.1} parent=31 // pred_check
        %p461 = pneg %p209
      $region58: #{sif_forward.1} parent=31 // pred_check_branch
        %463 = sbr.rel (%p461) target = $region60
      $region59: #{sif_forward.1} parent=31 // pred_region
        %p464 = scmp.lt.s32.totalorder %s26, 1
        %s465 = scalar_select %p464, %s26, 1
        %s466 = smul.addr %s465, 2
        %s467 = scalar_lea.vmem %s6, %s466
      $region60: #{sif_forward.1} parent=31 // pred_fallthru
        _
      // Predicated region
      $region61: #{sif_forward.1} parent=31 // pred_check
        %p468 = pneg %p235
      $region62: #{sif_forward.1} parent=31 // pred_check_branch
        %470 = sbr.rel (%p468) target = $region64
      $region63: #{sif_forward.1} parent=31 // pred_region
        %p471 = scmp.lt.s32.totalorder %s26, 1
        %s472 = scalar_select %p471, %s26, 1
        %s473 = smul.addr %s472, 64
        %s474 = smul.addr %s473, 4
        %s475 = scalar_lea.vmem %s7, %s474
      $region64: #{sif_forward.1} parent=31 // pred_fallthru
        _
      // Predicated region
      $region65: #{sif_forward.1} parent=31 // pred_check
        %p476 = pneg %p261
      $region66: #{sif_forward.1} parent=31 // pred_check_branch
        %478 = sbr.rel (%p476) target = $region68
      $region67: #{sif_forward.1} parent=31 // pred_region
        %p479 = scmp.lt.s32.totalorder %s26, 1
        %s480 = scalar_select %p479, %s26, 1
        %s481 = smul.addr %s480, 2
        %s482 = scalar_lea.vmem %s8, %s481
      $region68: #{sif_forward.1} parent=31 // pred_fallthru
        _
    $region32: #{sif_forward.1} parent=5 // pred_fallthru
      _
    %p483 = scmp.le.s32.totalorder 1, %s19
    %p484 = scmp.lt.s32.totalorder %s19, 3
    %p485 = pnand %p483, %p484
    %p486 = pneg %p485
    // Predicated region
    $region69: #{sif_forward.1} parent=5 // pred_check
      _
    $region70: #{sif_forward.1} parent=5 // pred_check_branch
      %488 = sbr.rel (%p485) target = $region72
    $region71: #{sif_forward.1} parent=5 // pred_region
      %s489 = ssub.s32 %s19, 1
      %s490 = smul.u32 32, %s29
      %p491 = scmp.lt.s32.totalorder %s28, 1
      %s492 = scalar_select %p491, %s28, 1
      %p493 = scmp.lt.s32.totalorder %s490, 31
      %s494 = scalar_select %p493, %s490, 31
      %s495 = smul.addr %s492, 32
      %s496 = sadd.s32 %s494, %s495
      %s497 = smul.addr %s496, 8
      %s498 = scalar_lea.vmem %s0, %s497
      %p499 = pneg %p59
      %p500 = pneg %p56
      %p501 = scmp.lt.s32.totalorder %s28, 1
      %s502 = scalar_select %p501, %s28, 1
      %s503 = smul.addr %s502, 2
      %s504 = smul.addr %s503, 4
      %s505 = scalar_lea.vmem %s1, %s504
      %p506 = pneg %p85
      %p507 = pneg %p82
      %p508 = scmp.lt.s32.totalorder %s28, 1
      %s509 = scalar_select %p508, %s28, 1
      %s510 = smul.addr %s509, 2
      %s511 = scalar_lea.vmem %s2, %s510
      %p512 = pneg %p111
      %p513 = pneg %p108
      %p514 = scmp.lt.s32.totalorder %s28, 1
      %s515 = scalar_select %p514, %s28, 1
      %s516 = smul.addr %s515, 64
      %s517 = smul.addr %s516, 4
      %s518 = scalar_lea.vmem %s3, %s517
      %p519 = pneg %p137
      %p520 = pneg %p134
      %p521 = scmp.lt.s32.totalorder %s28, 1
      %s522 = scalar_select %p521, %s28, 1
      %s523 = smul.addr %s522, 2
      %s524 = scalar_lea.vmem %s4, %s523
      %p525 = pneg %p163
      %p526 = pneg %p160
      %p527 = scmp.lt.s32.totalorder %s28, 1
      %s528 = scalar_select %p527, %s28, 1
      %s529 = smul.addr %s528, 64
      %s530 = smul.addr %s529, 4
      %s531 = scalar_lea.vmem %s5, %s530
      %p532 = pneg %p189
      %p533 = pneg %p186
      %p534 = scmp.lt.s32.totalorder %s28, 1
      %s535 = scalar_select %p534, %s28, 1
      %s536 = smul.addr %s535, 2
      %s537 = scalar_lea.vmem %s6, %s536
      %p538 = pneg %p215
      %p539 = pneg %p212
      %p540 = scmp.lt.s32.totalorder %s28, 1
      %s541 = scalar_select %p540, %s28, 1
      %s542 = smul.addr %s541, 64
      %s543 = smul.addr %s542, 4
      %s544 = scalar_lea.vmem %s7, %s543
      %p545 = pneg %p241
      %p546 = pneg %p238
      %p547 = scmp.lt.s32.totalorder %s28, 1
      %s548 = scalar_select %p547, %s28, 1
      %s549 = smul.addr %s548, 2
      %s550 = scalar_lea.vmem %s8, %s549
      %p551 = pneg %p267
      %p552 = pneg %p264
      %p553 = pneg %p288
      %p554 = pneg %p285
      %p555 = pneg %p309
      %p556 = pneg %p306
      %p557 = pneg %p330
      %p558 = pneg %p327
      %p559 = pneg %p351
      %p560 = pneg %p348
      %p561 = pneg %p379
      %p562 = pneg %p376
      %s563 = smul.u32 32, %s29
      %p564 = scmp.lt.s32.totalorder %s28, 1
      %s565 = scalar_select %p564, %s28, 1
      %p566 = scmp.lt.s32.totalorder %s563, 31
      %s567 = scalar_select %p566, %s563, 31
      %s568 = smul.addr %s565, 32
      %s569 = sadd.s32 %s567, %s568
      %s570 = smul.addr %s569, 8
      %s571 = scalar_lea.vmem %s13, %s570
      %s572 = smul.u32 32, %s29
      %p573 = scmp.lt.s32.totalorder %s28, 1
      %s574 = scalar_select %p573, %s28, 1
      %p575 = scmp.lt.s32.totalorder %s572, 31
      %s576 = scalar_select %p575, %s572, 31
      %s577 = smul.addr %s574, 32
      %s578 = sadd.s32 %s576, %s577
      %s579 = smul.addr %s578, 8
      %s580 = scalar_lea.vmem %s0, %s579
      %s581 = smul.u32 32, %s29
      %p582 = scmp.lt.s32.totalorder %s28, 1
      %s583 = scalar_select %p582, %s28, 1
      %s584 = smul.addr %s583, 2
      %s585 = smul.addr %s584, 4
      %s586 = scalar_lea.vmem %s1, %s585
      %p587 = scmp.lt.s32.totalorder %s28, 1
      %s588 = scalar_select %p587, %s28, 1
      %s589 = smul.addr %s588, 2
      %s590 = scalar_lea.vmem %s2, %s589
      %p591 = scmp.lt.s32.totalorder %s28, 1
      %s592 = scalar_select %p591, %s28, 1
      %s593 = smul.addr %s592, 64
      %s594 = smul.addr %s593, 4
      %s595 = scalar_lea.vmem %s3, %s594
      %p596 = scmp.lt.s32.totalorder %s28, 1
      %s597 = scalar_select %p596, %s28, 1
      %s598 = smul.addr %s597, 2
      %s599 = scalar_lea.vmem %s4, %s598
      %p600 = scmp.lt.s32.totalorder %s28, 1
      %s601 = scalar_select %p600, %s28, 1
      %s602 = smul.addr %s601, 64
      %s603 = smul.addr %s602, 4
      %s604 = scalar_lea.vmem %s5, %s603
      %p605 = scmp.lt.s32.totalorder %s28, 1
      %s606 = scalar_select %p605, %s28, 1
      %s607 = smul.addr %s606, 2
      %s608 = scalar_lea.vmem %s6, %s607
      %p609 = scmp.lt.s32.totalorder %s28, 1
      %s610 = scalar_select %p609, %s28, 1
      %s611 = smul.addr %s610, 64
      %s612 = smul.addr %s611, 4
      %s613 = scalar_lea.vmem %s7, %s612
      %p614 = scmp.lt.s32.totalorder %s28, 1
      %s615 = scalar_select %p614, %s28, 1
      %s616 = smul.addr %s615, 2
      %s617 = scalar_lea.vmem %s8, %s616
      %s618 = smul.u32 32, %s29
      %p619 = scmp.lt.s32.totalorder %s28, 1
      %s620 = scalar_select %p619, %s28, 1
      %p621 = scmp.lt.s32.totalorder %s618, 31
      %s622 = scalar_select %p621, %s618, 31
      %s623 = smul.addr %s620, 32
      %s624 = sadd.s32 %s622, %s623
      %s625 = smul.addr %s624, 8
      %s626 = scalar_lea.vmem %s13, %s625
      %s627 = smul.u32 32, %s29
      %v628 = vld [vmem:[%s580] sm:$0xff]
      %v629 = vld [vmem:[%s580 + $0x8] sm:$0xff]
      %v630 = vld [vmem:[%s580 + $0x10] sm:$0xff]
      %v631 = vld [vmem:[%s580 + $0x18] sm:$0xff]
      %v632 = vld [vmem:[%s580 + $0x20] sm:$0xff]
      %v633 = vld [vmem:[%s580 + $0x28] sm:$0xff]
      %v634 = vld [vmem:[%s580 + $0x30] sm:$0xff]
      %v635 = vld [vmem:[%s580 + $0x38] sm:$0xff]
      %v636 = vld [vmem:[%s580 + $0x40] sm:$0xff]
      %v637 = vld [vmem:[%s580 + $0x48] sm:$0xff]
      %v638 = vld [vmem:[%s580 + $0x50] sm:$0xff]
      %v639 = vld [vmem:[%s580 + $0x58] sm:$0xff]
      %v640 = vld [vmem:[%s580 + $0x60] sm:$0xff]
      %v641 = vld [vmem:[%s580 + $0x68] sm:$0xff]
      %v642 = vld [vmem:[%s580 + $0x70] sm:$0xff]
      %v643 = vld [vmem:[%s580 + $0x78] sm:$0xff]
      %v644 = vld [vmem:[%s580 + $0x80] sm:$0xff]
      %v645 = vld [vmem:[%s580 + $0x88] sm:$0xff]
      %v646 = vld [vmem:[%s580 + $0x90] sm:$0xff]
      %v647 = vld [vmem:[%s580 + $0x98] sm:$0xff]
      %v648 = vld [vmem:[%s580 + $0xa0] sm:$0xff]
      %v649 = vld [vmem:[%s580 + $0xa8] sm:$0xff]
      %v650 = vld [vmem:[%s580 + $0xb0] sm:$0xff]
      %v651 = vld [vmem:[%s580 + $0xb8] sm:$0xff]
      %v652 = vld [vmem:[%s580 + $0xc0] sm:$0xff]
      %v653 = vld [vmem:[%s580 + $0xc8] sm:$0xff]
      %v654 = vld [vmem:[%s580 + $0xd0] sm:$0xff]
      %v655 = vld [vmem:[%s580 + $0xd8] sm:$0xff]
      %v656 = vld [vmem:[%s580 + $0xe0] sm:$0xff]
      %v657 = vld [vmem:[%s580 + $0xe8] sm:$0xff]
      %v658 = vld [vmem:[%s580 + $0xf0] sm:$0xff]
      %v659 = vld [vmem:[%s580 + $0xf8] sm:$0xff]
      %v660 = vld [vmem:[%s586] sm:$0x77]
      %v661 = vld [vmem:[%s590] sm:$0x3]
      %663 = vset.pattern.permute.xlu0 0
      %664 = vperm.xlu0 %663, %v628
      %v665 = vpop.permute.xlu0 %664
      %668 = vset.pattern.permute.xlu0 0
      %669 = vperm.xlu0 %668, %v629
      %v670 = vpop.permute.xlu0 %669
      %673 = vset.pattern.permute.xlu0 0
      %674 = vperm.xlu0 %673, %v630
      %v675 = vpop.permute.xlu0 %674
      %678 = vset.pattern.permute.xlu0 0
      %679 = vperm.xlu0 %678, %v631
      %v680 = vpop.permute.xlu0 %679
      %683 = vset.pattern.permute.xlu0 0
      %684 = vperm.xlu0 %683, %v632
      %v685 = vpop.permute.xlu0 %684
      %688 = vset.pattern.permute.xlu0 0
      %689 = vperm.xlu0 %688, %v633
      %v690 = vpop.permute.xlu0 %689
      %693 = vset.pattern.permute.xlu0 0
      %694 = vperm.xlu0 %693, %v634
      %v695 = vpop.permute.xlu0 %694
      %698 = vset.pattern.permute.xlu0 0
      %699 = vperm.xlu0 %698, %v635
      %v700 = vpop.permute.xlu0 %699
      %703 = vset.pattern.permute.xlu0 0
      %704 = vperm.xlu0 %703, %v636
      %v705 = vpop.permute.xlu0 %704
      %708 = vset.pattern.permute.xlu0 0
      %709 = vperm.xlu0 %708, %v637
      %v710 = vpop.permute.xlu0 %709
      %713 = vset.pattern.permute.xlu0 0
      %714 = vperm.xlu0 %713, %v638
      %v715 = vpop.permute.xlu0 %714
      %718 = vset.pattern.permute.xlu0 0
      %719 = vperm.xlu0 %718, %v639
      %v720 = vpop.permute.xlu0 %719
      %723 = vset.pattern.permute.xlu0 0
      %724 = vperm.xlu0 %723, %v640
      %v725 = vpop.permute.xlu0 %724
      %728 = vset.pattern.permute.xlu0 0
      %729 = vperm.xlu0 %728, %v641
      %v730 = vpop.permute.xlu0 %729
      %733 = vset.pattern.permute.xlu0 0
      %734 = vperm.xlu0 %733, %v642
      %v735 = vpop.permute.xlu0 %734
      %738 = vset.pattern.permute.xlu0 0
      %739 = vperm.xlu0 %738, %v643
      %v740 = vpop.permute.xlu0 %739
      %v743 = vperm.slane %v660, 0
      %v744 = vperm.slane %v660, 4
      %v747 = vperm.slane %v743, 0
      %v748 = vperm.slane %v744, 0
      %v749 = vmul.f32 %v665, %v747
      %v750 = vmul.f32 %v665, %v748
      %v751 = vmul.f32 %v670, %v747
      %v752 = vmul.f32 %v670, %v748
      %v753 = vmul.f32 %v675, %v747
      %v754 = vmul.f32 %v675, %v748
      %v755 = vmul.f32 %v680, %v747
      %v756 = vmul.f32 %v680, %v748
      %v757 = vmul.f32 %v685, %v747
      %v758 = vmul.f32 %v685, %v748
      %v759 = vmul.f32 %v690, %v747
      %v760 = vmul.f32 %v690, %v748
      %v761 = vmul.f32 %v695, %v747
      %v762 = vmul.f32 %v695, %v748
      %v763 = vmul.f32 %v700, %v747
      %v764 = vmul.f32 %v700, %v748
      %v765 = vmul.f32 %v705, %v747
      %v766 = vmul.f32 %v705, %v748
      %v767 = vmul.f32 %v710, %v747
      %v768 = vmul.f32 %v710, %v748
      %v769 = vmul.f32 %v715, %v747
      %v770 = vmul.f32 %v715, %v748
      %v771 = vmul.f32 %v720, %v747
      %v772 = vmul.f32 %v720, %v748
      %v773 = vmul.f32 %v725, %v747
      %v774 = vmul.f32 %v725, %v748
      %v775 = vmul.f32 %v730, %v747
      %v776 = vmul.f32 %v730, %v748
      %v777 = vmul.f32 %v735, %v747
      %v778 = vmul.f32 %v735, %v748
      %v779 = vmul.f32 %v740, %v747
      %v780 = vmul.f32 %v740, %v748
      %781 = vset.pattern.permute.xlu0 1
      %782 = vperm.xlu0 %781, %v628
      %v783 = vpop.permute.xlu0 %782
      %785 = vset.pattern.permute.xlu0 1
      %786 = vperm.xlu0 %785, %v629
      %v787 = vpop.permute.xlu0 %786
      %789 = vset.pattern.permute.xlu0 1
      %790 = vperm.xlu0 %789, %v630
      %v791 = vpop.permute.xlu0 %790
      %793 = vset.pattern.permute.xlu0 1
      %794 = vperm.xlu0 %793, %v631
      %v795 = vpop.permute.xlu0 %794
      %797 = vset.pattern.permute.xlu0 1
      %798 = vperm.xlu0 %797, %v632
      %v799 = vpop.permute.xlu0 %798
      %801 = vset.pattern.permute.xlu0 1
      %802 = vperm.xlu0 %801, %v633
      %v803 = vpop.permute.xlu0 %802
      %805 = vset.pattern.permute.xlu0 1
      %806 = vperm.xlu0 %805, %v634
      %v807 = vpop.permute.xlu0 %806
      %809 = vset.pattern.permute.xlu0 1
      %810 = vperm.xlu0 %809, %v635
      %v811 = vpop.permute.xlu0 %810
      %813 = vset.pattern.permute.xlu0 1
      %814 = vperm.xlu0 %813, %v636
      %v815 = vpop.permute.xlu0 %814
      %817 = vset.pattern.permute.xlu0 1
      %818 = vperm.xlu0 %817, %v637
      %v819 = vpop.permute.xlu0 %818
      %821 = vset.pattern.permute.xlu0 1
      %822 = vperm.xlu0 %821, %v638
      %v823 = vpop.permute.xlu0 %822
      %825 = vset.pattern.permute.xlu0 1
      %826 = vperm.xlu0 %825, %v639
      %v827 = vpop.permute.xlu0 %826
      %829 = vset.pattern.permute.xlu0 1
      %830 = vperm.xlu0 %829, %v640
      %v831 = vpop.permute.xlu0 %830
      %833 = vset.pattern.permute.xlu0 1
      %834 = vperm.xlu0 %833, %v641
      %v835 = vpop.permute.xlu0 %834
      %837 = vset.pattern.permute.xlu0 1
      %838 = vperm.xlu0 %837, %v642
      %v839 = vpop.permute.xlu0 %838
      %841 = vset.pattern.permute.xlu0 1
      %842 = vperm.xlu0 %841, %v643
      %v843 = vpop.permute.xlu0 %842
      %v845 = vperm.slane %v660, 1
      %v846 = vperm.slane %v660, 5
      %v849 = vperm.slane %v845, 1
      %v850 = vperm.slane %v846, 1
      %v851 = vmul.f32 %v783, %v849
      %v852 = vmul.f32 %v783, %v850
      %v853 = vmul.f32 %v787, %v849
      %v854 = vmul.f32 %v787, %v850
      %v855 = vmul.f32 %v791, %v849
      %v856 = vmul.f32 %v791, %v850
      %v857 = vmul.f32 %v795, %v849
      %v858 = vmul.f32 %v795, %v850
      %v859 = vmul.f32 %v799, %v849
      %v860 = vmul.f32 %v799, %v850
      %v861 = vmul.f32 %v803, %v849
      %v862 = vmul.f32 %v803, %v850
      %v863 = vmul.f32 %v807, %v849
      %v864 = vmul.f32 %v807, %v850
      %v865 = vmul.f32 %v811, %v849
      %v866 = vmul.f32 %v811, %v850
      %v867 = vmul.f32 %v815, %v849
      %v868 = vmul.f32 %v815, %v850
      %v869 = vmul.f32 %v819, %v849
      %v870 = vmul.f32 %v819, %v850
      %v871 = vmul.f32 %v823, %v849
      %v872 = vmul.f32 %v823, %v850
      %v873 = vmul.f32 %v827, %v849
      %v874 = vmul.f32 %v827, %v850
      %v875 = vmul.f32 %v831, %v849
      %v876 = vmul.f32 %v831, %v850
      %v877 = vmul.f32 %v835, %v849
      %v878 = vmul.f32 %v835, %v850
      %v879 = vmul.f32 %v839, %v849
      %v880 = vmul.f32 %v839, %v850
      %v881 = vmul.f32 %v843, %v849
      %v882 = vmul.f32 %v843, %v850
      %v883 = vadd.f32 %v749, %v851
      %v884 = vadd.f32 %v750, %v852
      %v885 = vadd.f32 %v751, %v853
      %v886 = vadd.f32 %v752, %v854
      %v887 = vadd.f32 %v753, %v855
      %v888 = vadd.f32 %v754, %v856
      %v889 = vadd.f32 %v755, %v857
      %v890 = vadd.f32 %v756, %v858
      %v891 = vadd.f32 %v757, %v859
      %v892 = vadd.f32 %v758, %v860
      %v893 = vadd.f32 %v759, %v861
      %v894 = vadd.f32 %v760, %v862
      %v895 = vadd.f32 %v761, %v863
      %v896 = vadd.f32 %v762, %v864
      %v897 = vadd.f32 %v763, %v865
      %v898 = vadd.f32 %v764, %v866
      %v899 = vadd.f32 %v765, %v867
      %v900 = vadd.f32 %v766, %v868
      %v901 = vadd.f32 %v767, %v869
      %v902 = vadd.f32 %v768, %v870
      %v903 = vadd.f32 %v769, %v871
      %v904 = vadd.f32 %v770, %v872
      %v905 = vadd.f32 %v771, %v873
      %v906 = vadd.f32 %v772, %v874
      %v907 = vadd.f32 %v773, %v875
      %v908 = vadd.f32 %v774, %v876
      %v909 = vadd.f32 %v775, %v877
      %v910 = vadd.f32 %v776, %v878
      %v911 = vadd.f32 %v777, %v879
      %v912 = vadd.f32 %v778, %v880
      %v913 = vadd.f32 %v779, %v881
      %v914 = vadd.f32 %v780, %v882
      %915 = vset.pattern.permute.xlu0 2
      %916 = vperm.xlu0 %915, %v628
      %v917 = vpop.permute.xlu0 %916
      %919 = vset.pattern.permute.xlu0 2
      %920 = vperm.xlu0 %919, %v629
      %v921 = vpop.permute.xlu0 %920
      %923 = vset.pattern.permute.xlu0 2
      %924 = vperm.xlu0 %923, %v630
      %v925 = vpop.permute.xlu0 %924
      %927 = vset.pattern.permute.xlu0 2
      %928 = vperm.xlu0 %927, %v631
      %v929 = vpop.permute.xlu0 %928
      %931 = vset.pattern.permute.xlu0 2
      %932 = vperm.xlu0 %931, %v632
      %v933 = vpop.permute.xlu0 %932
      %935 = vset.pattern.permute.xlu0 2
      %936 = vperm.xlu0 %935, %v633
      %v937 = vpop.permute.xlu0 %936
      %939 = vset.pattern.permute.xlu0 2
      %940 = vperm.xlu0 %939, %v634
      %v941 = vpop.permute.xlu0 %940
      %943 = vset.pattern.permute.xlu0 2
      %944 = vperm.xlu0 %943, %v635
      %v945 = vpop.permute.xlu0 %944
      %947 = vset.pattern.permute.xlu0 2
      %948 = vperm.xlu0 %947, %v636
      %v949 = vpop.permute.xlu0 %948
      %951 = vset.pattern.permute.xlu0 2
      %952 = vperm.xlu0 %951, %v637
      %v953 = vpop.permute.xlu0 %952
      %955 = vset.pattern.permute.xlu0 2
      %956 = vperm.xlu0 %955, %v638
      %v957 = vpop.permute.xlu0 %956
      %959 = vset.pattern.permute.xlu0 2
      %960 = vperm.xlu0 %959, %v639
      %v961 = vpop.permute.xlu0 %960
      %963 = vset.pattern.permute.xlu0 2
      %964 = vperm.xlu0 %963, %v640
      %v965 = vpop.permute.xlu0 %964
      %967 = vset.pattern.permute.xlu0 2
      %968 = vperm.xlu0 %967, %v641
      %v969 = vpop.permute.xlu0 %968
      %971 = vset.pattern.permute.xlu0 2
      %972 = vperm.xlu0 %971, %v642
      %v973 = vpop.permute.xlu0 %972
      %975 = vset.pattern.permute.xlu0 2
      %976 = vperm.xlu0 %975, %v643
      %v977 = vpop.permute.xlu0 %976
      %v979 = vperm.slane %v660, 2
      %v980 = vperm.slane %v660, 6
      %v983 = vperm.slane %v979, 2
      %v984 = vperm.slane %v980, 2
      %v985 = vmul.f32 %v917, %v983
      %v986 = vmul.f32 %v917, %v984
      %v987 = vmul.f32 %v921, %v983
      %v988 = vmul.f32 %v921, %v984
      %v989 = vmul.f32 %v925, %v983
      %v990 = vmul.f32 %v925, %v984
      %v991 = vmul.f32 %v929, %v983
      %v992 = vmul.f32 %v929, %v984
      %v993 = vmul.f32 %v933, %v983
      %v994 = vmul.f32 %v933, %v984
      %v995 = vmul.f32 %v937, %v983
      %v996 = vmul.f32 %v937, %v984
      %v997 = vmul.f32 %v941, %v983
      %v998 = vmul.f32 %v941, %v984
      %v999 = vmul.f32 %v945, %v983
      %v1000 = vmul.f32 %v945, %v984
      %v1001 = vmul.f32 %v949, %v983
      %v1002 = vmul.f32 %v949, %v984
      %v1003 = vmul.f32 %v953, %v983
      %v1004 = vmul.f32 %v953, %v984
      %v1005 = vmul.f32 %v957, %v983
      %v1006 = vmul.f32 %v957, %v984
      %v1007 = vmul.f32 %v961, %v983
      %v1008 = vmul.f32 %v961, %v984
      %v1009 = vmul.f32 %v965, %v983
      %v1010 = vmul.f32 %v965, %v984
      %v1011 = vmul.f32 %v969, %v983
      %v1012 = vmul.f32 %v969, %v984
      %v1013 = vmul.f32 %v973, %v983
      %v1014 = vmul.f32 %v973, %v984
      %v1015 = vmul.f32 %v977, %v983
      %v1016 = vmul.f32 %v977, %v984
      %v1017 = vadd.f32 %v883, %v985
      %v1018 = vadd.f32 %v884, %v986
      %v1019 = vadd.f32 %v885, %v987
      %v1020 = vadd.f32 %v886, %v988
      %v1021 = vadd.f32 %v887, %v989
      %v1022 = vadd.f32 %v888, %v990
      %v1023 = vadd.f32 %v889, %v991
      %v1024 = vadd.f32 %v890, %v992
      %v1025 = vadd.f32 %v891, %v993
      %v1026 = vadd.f32 %v892, %v994
      %v1027 = vadd.f32 %v893, %v995
      %v1028 = vadd.f32 %v894, %v996
      %v1029 = vadd.f32 %v895, %v997
      %v1030 = vadd.f32 %v896, %v998
      %v1031 = vadd.f32 %v897, %v999
      %v1032 = vadd.f32 %v898, %v1000
      %v1033 = vadd.f32 %v899, %v1001
      %v1034 = vadd.f32 %v900, %v1002
      %v1035 = vadd.f32 %v901, %v1003
      %v1036 = vadd.f32 %v902, %v1004
      %v1037 = vadd.f32 %v903, %v1005
      %v1038 = vadd.f32 %v904, %v1006
      %v1039 = vadd.f32 %v905, %v1007
      %v1040 = vadd.f32 %v906, %v1008
      %v1041 = vadd.f32 %v907, %v1009
      %v1042 = vadd.f32 %v908, %v1010
      %v1043 = vadd.f32 %v909, %v1011
      %v1044 = vadd.f32 %v910, %v1012
      %v1045 = vadd.f32 %v911, %v1013
      %v1046 = vadd.f32 %v912, %v1014
      %v1047 = vadd.f32 %v913, %v1015
      %v1048 = vadd.f32 %v914, %v1016
      %v1050 = vperm.slane %v661, 0
      %v1051 = vperm.slane %v661, 1
      %v1054 = vadd.f32 %v1017, %v1050
      %v1055 = vadd.f32 %v1018, %v1051
      %v1056 = vadd.f32 %v1019, %v1050
      %v1057 = vadd.f32 %v1020, %v1051
      %v1058 = vadd.f32 %v1021, %v1050
      %v1059 = vadd.f32 %v1022, %v1051
      %v1060 = vadd.f32 %v1023, %v1050
      %v1061 = vadd.f32 %v1024, %v1051
      %v1062 = vadd.f32 %v1025, %v1050
      %v1063 = vadd.f32 %v1026, %v1051
      %v1064 = vadd.f32 %v1027, %v1050
      %v1065 = vadd.f32 %v1028, %v1051
      %v1066 = vadd.f32 %v1029, %v1050
      %v1067 = vadd.f32 %v1030, %v1051
      %v1068 = vadd.f32 %v1031, %v1050
      %v1069 = vadd.f32 %v1032, %v1051
      %v1070 = vadd.f32 %v1033, %v1050
      %v1071 = vadd.f32 %v1034, %v1051
      %v1072 = vadd.f32 %v1035, %v1050
      %v1073 = vadd.f32 %v1036, %v1051
      %v1074 = vadd.f32 %v1037, %v1050
      %v1075 = vadd.f32 %v1038, %v1051
      %v1076 = vadd.f32 %v1039, %v1050
      %v1077 = vadd.f32 %v1040, %v1051
      %v1078 = vadd.f32 %v1041, %v1050
      %v1079 = vadd.f32 %v1042, %v1051
      %v1080 = vadd.f32 %v1043, %v1050
      %v1081 = vadd.f32 %v1044, %v1051
      %v1082 = vadd.f32 %v1045, %v1050
      %v1083 = vadd.f32 %v1046, %v1051
      %v1084 = vadd.f32 %v1047, %v1050
      %v1085 = vadd.f32 %v1048, %v1051
      %v1086 = vadd.f32 %v1054, %v1055
      %1087 = vadd.xlane.f32.xlu0 %v1086
      %v1088 = vpop.xlane.xlu0 %1087
      %v1089 = vadd.f32 %v1056, %v1057
      %1090 = vadd.xlane.f32.xlu0 %v1089
      %v1091 = vpop.xlane.xlu0 %1090
      %v1092 = vadd.f32 %v1058, %v1059
      %1093 = vadd.xlane.f32.xlu0 %v1092
      %v1094 = vpop.xlane.xlu0 %1093
      %v1095 = vadd.f32 %v1060, %v1061
      %1096 = vadd.xlane.f32.xlu0 %v1095
      %v1097 = vpop.xlane.xlu0 %1096
      %v1098 = vadd.f32 %v1062, %v1063
      %1099 = vadd.xlane.f32.xlu0 %v1098
      %v1100 = vpop.xlane.xlu0 %1099
      %v1101 = vadd.f32 %v1064, %v1065
      %1102 = vadd.xlane.f32.xlu0 %v1101
      %v1103 = vpop.xlane.xlu0 %1102
      %v1104 = vadd.f32 %v1066, %v1067
      %1105 = vadd.xlane.f32.xlu0 %v1104
      %v1106 = vpop.xlane.xlu0 %1105
      %v1107 = vadd.f32 %v1068, %v1069
      %1108 = vadd.xlane.f32.xlu0 %v1107
      %v1109 = vpop.xlane.xlu0 %1108
      %v1110 = vadd.f32 %v1070, %v1071
      %1111 = vadd.xlane.f32.xlu0 %v1110
      %v1112 = vpop.xlane.xlu0 %1111
      %v1113 = vadd.f32 %v1072, %v1073
      %1114 = vadd.xlane.f32.xlu0 %v1113
      %v1115 = vpop.xlane.xlu0 %1114
      %v1116 = vadd.f32 %v1074, %v1075
      %1117 = vadd.xlane.f32.xlu0 %v1116
      %v1118 = vpop.xlane.xlu0 %1117
      %v1119 = vadd.f32 %v1076, %v1077
      %1120 = vadd.xlane.f32.xlu0 %v1119
      %v1121 = vpop.xlane.xlu0 %1120
      %v1122 = vadd.f32 %v1078, %v1079
      %1123 = vadd.xlane.f32.xlu0 %v1122
      %v1124 = vpop.xlane.xlu0 %1123
      %v1125 = vadd.f32 %v1080, %v1081
      %1126 = vadd.xlane.f32.xlu0 %v1125
      %v1127 = vpop.xlane.xlu0 %1126
      %v1128 = vadd.f32 %v1082, %v1083
      %1129 = vadd.xlane.f32.xlu0 %v1128
      %v1130 = vpop.xlane.xlu0 %1129
      %v1131 = vadd.f32 %v1084, %v1085
      %1132 = vadd.xlane.f32.xlu0 %v1131
      %v1133 = vpop.xlane.xlu0 %1132
      %v1134 = vrcp.pop 256.0
      %v1135 = vmul.f32 256.0, %v1134
      %v1136 = vsub.f32 1.0, %v1135
      %v1137 = vmul.f32 %v1134, %v1136
      %v1138 = vadd.f32 %v1134, %v1137
      %vm1139 = vweird.f32 %v1134
      %v1140 = vsel %vm1139, %v1134, %v1138
      %v1141 = vmul.f32 %v1088, %v1140
      %v1142 = vmul.f32 %v1091, %v1140
      %v1143 = vmul.f32 %v1094, %v1140
      %v1144 = vmul.f32 %v1097, %v1140
      %v1145 = vmul.f32 %v1100, %v1140
      %v1146 = vmul.f32 %v1103, %v1140
      %v1147 = vmul.f32 %v1106, %v1140
      %v1148 = vmul.f32 %v1109, %v1140
      %v1149 = vmul.f32 %v1112, %v1140
      %v1150 = vmul.f32 %v1115, %v1140
      %v1151 = vmul.f32 %v1118, %v1140
      %v1152 = vmul.f32 %v1121, %v1140
      %v1153 = vmul.f32 %v1124, %v1140
      %v1154 = vmul.f32 %v1127, %v1140
      %v1155 = vmul.f32 %v1130, %v1140
      %v1156 = vmul.f32 %v1133, %v1140
      %v1157 = vsub.f32 %v1054, %v1141
      %v1158 = vsub.f32 %v1055, %v1141
      %v1159 = vsub.f32 %v1056, %v1142
      %v1160 = vsub.f32 %v1057, %v1142
      %v1161 = vsub.f32 %v1058, %v1143
      %v1162 = vsub.f32 %v1059, %v1143
      %v1163 = vsub.f32 %v1060, %v1144
      %v1164 = vsub.f32 %v1061, %v1144
      %v1165 = vsub.f32 %v1062, %v1145
      %v1166 = vsub.f32 %v1063, %v1145
      %v1167 = vsub.f32 %v1064, %v1146
      %v1168 = vsub.f32 %v1065, %v1146
      %v1169 = vsub.f32 %v1066, %v1147
      %v1170 = vsub.f32 %v1067, %v1147
      %v1171 = vsub.f32 %v1068, %v1148
      %v1172 = vsub.f32 %v1069, %v1148
      %v1173 = vsub.f32 %v1070, %v1149
      %v1174 = vsub.f32 %v1071, %v1149
      %v1175 = vsub.f32 %v1072, %v1150
      %v1176 = vsub.f32 %v1073, %v1150
      %v1177 = vsub.f32 %v1074, %v1151
      %v1178 = vsub.f32 %v1075, %v1151
      %v1179 = vsub.f32 %v1076, %v1152
      %v1180 = vsub.f32 %v1077, %v1152
      %v1181 = vsub.f32 %v1078, %v1153
      %v1182 = vsub.f32 %v1079, %v1153
      %v1183 = vsub.f32 %v1080, %v1154
      %v1184 = vsub.f32 %v1081, %v1154
      %v1185 = vsub.f32 %v1082, %v1155
      %v1186 = vsub.f32 %v1083, %v1155
      %v1187 = vsub.f32 %v1084, %v1156
      %v1188 = vsub.f32 %v1085, %v1156
      %v1189 = vmul.f32 %v1157, %v1157
      %v1190 = vmul.f32 %v1158, %v1158
      %v1191 = vmul.f32 %v1159, %v1159
      %v1192 = vmul.f32 %v1160, %v1160
      %v1193 = vmul.f32 %v1161, %v1161
      %v1194 = vmul.f32 %v1162, %v1162
      %v1195 = vmul.f32 %v1163, %v1163
      %v1196 = vmul.f32 %v1164, %v1164
      %v1197 = vmul.f32 %v1165, %v1165
      %v1198 = vmul.f32 %v1166, %v1166
      %v1199 = vmul.f32 %v1167, %v1167
      %v1200 = vmul.f32 %v1168, %v1168
      %v1201 = vmul.f32 %v1169, %v1169
      %v1202 = vmul.f32 %v1170, %v1170
      %v1203 = vmul.f32 %v1171, %v1171
      %v1204 = vmul.f32 %v1172, %v1172
      %v1205 = vmul.f32 %v1173, %v1173
      %v1206 = vmul.f32 %v1174, %v1174
      %v1207 = vmul.f32 %v1175, %v1175
      %v1208 = vmul.f32 %v1176, %v1176
      %v1209 = vmul.f32 %v1177, %v1177
      %v1210 = vmul.f32 %v1178, %v1178
      %v1211 = vmul.f32 %v1179, %v1179
      %v1212 = vmul.f32 %v1180, %v1180
      %v1213 = vmul.f32 %v1181, %v1181
      %v1214 = vmul.f32 %v1182, %v1182
      %v1215 = vmul.f32 %v1183, %v1183
      %v1216 = vmul.f32 %v1184, %v1184
      %v1217 = vmul.f32 %v1185, %v1185
      %v1218 = vmul.f32 %v1186, %v1186
      %v1219 = vmul.f32 %v1187, %v1187
      %v1220 = vmul.f32 %v1188, %v1188
      %v1221 = vadd.f32 %v1189, %v1190
      %1222 = vadd.xlane.f32.xlu0 %v1221
      %v1223 = vpop.xlane.xlu0 %1222
      %v1224 = vadd.f32 %v1191, %v1192
      %1225 = vadd.xlane.f32.xlu0 %v1224
      %v1226 = vpop.xlane.xlu0 %1225
      %v1227 = vadd.f32 %v1193, %v1194
      %1228 = vadd.xlane.f32.xlu0 %v1227
      %v1229 = vpop.xlane.xlu0 %1228
      %v1230 = vadd.f32 %v1195, %v1196
      %1231 = vadd.xlane.f32.xlu0 %v1230
      %v1232 = vpop.xlane.xlu0 %1231
      %v1233 = vadd.f32 %v1197, %v1198
      %1234 = vadd.xlane.f32.xlu0 %v1233
      %v1235 = vpop.xlane.xlu0 %1234
      %v1236 = vadd.f32 %v1199, %v1200
      %1237 = vadd.xlane.f32.xlu0 %v1236
      %v1238 = vpop.xlane.xlu0 %1237
      %v1239 = vadd.f32 %v1201, %v1202
      %1240 = vadd.xlane.f32.xlu0 %v1239
      %v1241 = vpop.xlane.xlu0 %1240
      %v1242 = vadd.f32 %v1203, %v1204
      %1243 = vadd.xlane.f32.xlu0 %v1242
      %v1244 = vpop.xlane.xlu0 %1243
      %v1245 = vadd.f32 %v1205, %v1206
      %1246 = vadd.xlane.f32.xlu0 %v1245
      %v1247 = vpop.xlane.xlu0 %1246
      %v1248 = vadd.f32 %v1207, %v1208
      %1249 = vadd.xlane.f32.xlu0 %v1248
      %v1250 = vpop.xlane.xlu0 %1249
      %v1251 = vadd.f32 %v1209, %v1210
      %1252 = vadd.xlane.f32.xlu0 %v1251
      %v1253 = vpop.xlane.xlu0 %1252
      %v1254 = vadd.f32 %v1211, %v1212
      %1255 = vadd.xlane.f32.xlu0 %v1254
      %v1256 = vpop.xlane.xlu0 %1255
      %v1257 = vadd.f32 %v1213, %v1214
      %1258 = vadd.xlane.f32.xlu0 %v1257
      %v1259 = vpop.xlane.xlu0 %1258
      %v1260 = vadd.f32 %v1215, %v1216
      %1261 = vadd.xlane.f32.xlu0 %v1260
      %v1262 = vpop.xlane.xlu0 %1261
      %v1263 = vadd.f32 %v1217, %v1218
      %1264 = vadd.xlane.f32.xlu0 %v1263
      %v1265 = vpop.xlane.xlu0 %1264
      %v1266 = vadd.f32 %v1219, %v1220
      %1267 = vadd.xlane.f32.xlu0 %v1266
      %v1268 = vpop.xlane.xlu0 %1267
      %v1269 = vmul.f32 %v1223, %v1140
      %v1270 = vmul.f32 %v1226, %v1140
      %v1271 = vmul.f32 %v1229, %v1140
      %v1272 = vmul.f32 %v1232, %v1140
      %v1273 = vmul.f32 %v1235, %v1140
      %v1274 = vmul.f32 %v1238, %v1140
      %v1275 = vmul.f32 %v1241, %v1140
      %v1276 = vmul.f32 %v1244, %v1140
      %v1277 = vmul.f32 %v1247, %v1140
      %v1278 = vmul.f32 %v1250, %v1140
      %v1279 = vmul.f32 %v1253, %v1140
      %v1280 = vmul.f32 %v1256, %v1140
      %v1281 = vmul.f32 %v1259, %v1140
      %v1282 = vmul.f32 %v1262, %v1140
      %v1283 = vmul.f32 %v1265, %v1140
      %v1284 = vmul.f32 %v1268, %v1140
      %v1285 = vadd.f32 %v1269, 1e-05
      %v1286 = vadd.f32 %v1270, 1e-05
      %v1287 = vadd.f32 %v1271, 1e-05
      %v1288 = vadd.f32 %v1272, 1e-05
      %v1289 = vadd.f32 %v1273, 1e-05
      %v1290 = vadd.f32 %v1274, 1e-05
      %v1291 = vadd.f32 %v1275, 1e-05
      %v1292 = vadd.f32 %v1276, 1e-05
      %v1293 = vadd.f32 %v1277, 1e-05
      %v1294 = vadd.f32 %v1278, 1e-05
      %v1295 = vadd.f32 %v1279, 1e-05
      %v1296 = vadd.f32 %v1280, 1e-05
      %v1297 = vadd.f32 %v1281, 1e-05
      %v1298 = vadd.f32 %v1282, 1e-05
      %v1299 = vadd.f32 %v1283, 1e-05
      %v1300 = vadd.f32 %v1284, 1e-05
      %v1301 = vrsqrt.pop %v1285
      %v1302 = vmul.f32 %v1301, %v1285
      %v1303 = vmul.f32 %v1302, %v1301
      %v1304 = vmul.f32 0.5, %v1303
      %v1305 = vsub.f32 1.5, %v1304
      %v1306 = vmul.f32 %v1301, %v1305
      %vm1307 = vweird.f32 %v1285
      %vm1308 = vweird.f32 %v1301
      %vm1309 = vmor %vm1307, %vm1308
      %v1310 = vsel %vm1309, %v1301, %v1306
      %v1311 = vrsqrt.pop %v1286
      %v1312 = vmul.f32 %v1311, %v1286
      %v1313 = vmul.f32 %v1312, %v1311
      %v1314 = vmul.f32 0.5, %v1313
      %v1315 = vsub.f32 1.5, %v1314
      %v1316 = vmul.f32 %v1311, %v1315
      %vm1317 = vweird.f32 %v1286
      %vm1318 = vweird.f32 %v1311
      %vm1319 = vmor %vm1317, %vm1318
      %v1320 = vsel %vm1319, %v1311, %v1316
      %v1321 = vrsqrt.pop %v1287
      %v1322 = vmul.f32 %v1321, %v1287
      %v1323 = vmul.f32 %v1322, %v1321
      %v1324 = vmul.f32 0.5, %v1323
      %v1325 = vsub.f32 1.5, %v1324
      %v1326 = vmul.f32 %v1321, %v1325
      %vm1327 = vweird.f32 %v1287
      %vm1328 = vweird.f32 %v1321
      %vm1329 = vmor %vm1327, %vm1328
      %v1330 = vsel %vm1329, %v1321, %v1326
      %v1331 = vrsqrt.pop %v1288
      %v1332 = vmul.f32 %v1331, %v1288
      %v1333 = vmul.f32 %v1332, %v1331
      %v1334 = vmul.f32 0.5, %v1333
      %v1335 = vsub.f32 1.5, %v1334
      %v1336 = vmul.f32 %v1331, %v1335
      %vm1337 = vweird.f32 %v1288
      %vm1338 = vweird.f32 %v1331
      %vm1339 = vmor %vm1337, %vm1338
      %v1340 = vsel %vm1339, %v1331, %v1336
      %v1341 = vrsqrt.pop %v1289
      %v1342 = vmul.f32 %v1341, %v1289
      %v1343 = vmul.f32 %v1342, %v1341
      %v1344 = vmul.f32 0.5, %v1343
      %v1345 = vsub.f32 1.5, %v1344
      %v1346 = vmul.f32 %v1341, %v1345
      %vm1347 = vweird.f32 %v1289
      %vm1348 = vweird.f32 %v1341
      %vm1349 = vmor %vm1347, %vm1348
      %v1350 = vsel %vm1349, %v1341, %v1346
      %v1351 = vrsqrt.pop %v1290
      %v1352 = vmul.f32 %v1351, %v1290
      %v1353 = vmul.f32 %v1352, %v1351
      %v1354 = vmul.f32 0.5, %v1353
      %v1355 = vsub.f32 1.5, %v1354
      %v1356 = vmul.f32 %v1351, %v1355
      %vm1357 = vweird.f32 %v1290
      %vm1358 = vweird.f32 %v1351
      %vm1359 = vmor %vm1357, %vm1358
      %v1360 = vsel %vm1359, %v1351, %v1356
      %v1361 = vrsqrt.pop %v1291
      %v1362 = vmul.f32 %v1361, %v1291
      %v1363 = vmul.f32 %v1362, %v1361
      %v1364 = vmul.f32 0.5, %v1363
      %v1365 = vsub.f32 1.5, %v1364
      %v1366 = vmul.f32 %v1361, %v1365
      %vm1367 = vweird.f32 %v1291
      %vm1368 = vweird.f32 %v1361
      %vm1369 = vmor %vm1367, %vm1368
      %v1370 = vsel %vm1369, %v1361, %v1366
      %v1371 = vrsqrt.pop %v1292
      %v1372 = vmul.f32 %v1371, %v1292
      %v1373 = vmul.f32 %v1372, %v1371
      %v1374 = vmul.f32 0.5, %v1373
      %v1375 = vsub.f32 1.5, %v1374
      %v1376 = vmul.f32 %v1371, %v1375
      %vm1377 = vweird.f32 %v1292
      %vm1378 = vweird.f32 %v1371
      %vm1379 = vmor %vm1377, %vm1378
      %v1380 = vsel %vm1379, %v1371, %v1376
      %v1381 = vrsqrt.pop %v1293
      %v1382 = vmul.f32 %v1381, %v1293
      %v1383 = vmul.f32 %v1382, %v1381
      %v1384 = vmul.f32 0.5, %v1383
      %v1385 = vsub.f32 1.5, %v1384
      %v1386 = vmul.f32 %v1381, %v1385
      %vm1387 = vweird.f32 %v1293
      %vm1388 = vweird.f32 %v1381
      %vm1389 = vmor %vm1387, %vm1388
      %v1390 = vsel %vm1389, %v1381, %v1386
      %v1391 = vrsqrt.pop %v1294
      %v1392 = vmul.f32 %v1391, %v1294
      %v1393 = vmul.f32 %v1392, %v1391
      %v1394 = vmul.f32 0.5, %v1393
      %v1395 = vsub.f32 1.5, %v1394
      %v1396 = vmul.f32 %v1391, %v1395
      %vm1397 = vweird.f32 %v1294
      %vm1398 = vweird.f32 %v1391
      %vm1399 = vmor %vm1397, %vm1398
      %v1400 = vsel %vm1399, %v1391, %v1396
      %v1401 = vrsqrt.pop %v1295
      %v1402 = vmul.f32 %v1401, %v1295
      %v1403 = vmul.f32 %v1402, %v1401
      %v1404 = vmul.f32 0.5, %v1403
      %v1405 = vsub.f32 1.5, %v1404
      %v1406 = vmul.f32 %v1401, %v1405
      %vm1407 = vweird.f32 %v1295
      %vm1408 = vweird.f32 %v1401
      %vm1409 = vmor %vm1407, %vm1408
      %v1410 = vsel %vm1409, %v1401, %v1406
      %v1411 = vrsqrt.pop %v1296
      %v1412 = vmul.f32 %v1411, %v1296
      %v1413 = vmul.f32 %v1412, %v1411
      %v1414 = vmul.f32 0.5, %v1413
      %v1415 = vsub.f32 1.5, %v1414
      %v1416 = vmul.f32 %v1411, %v1415
      %vm1417 = vweird.f32 %v1296
      %vm1418 = vweird.f32 %v1411
      %vm1419 = vmor %vm1417, %vm1418
      %v1420 = vsel %vm1419, %v1411, %v1416
      %v1421 = vrsqrt.pop %v1297
      %v1422 = vmul.f32 %v1421, %v1297
      %v1423 = vmul.f32 %v1422, %v1421
      %v1424 = vmul.f32 0.5, %v1423
      %v1425 = vsub.f32 1.5, %v1424
      %v1426 = vmul.f32 %v1421, %v1425
      %vm1427 = vweird.f32 %v1297
      %vm1428 = vweird.f32 %v1421
      %vm1429 = vmor %vm1427, %vm1428
      %v1430 = vsel %vm1429, %v1421, %v1426
      %v1431 = vrsqrt.pop %v1298
      %v1432 = vmul.f32 %v1431, %v1298
      %v1433 = vmul.f32 %v1432, %v1431
      %v1434 = vmul.f32 0.5, %v1433
      %v1435 = vsub.f32 1.5, %v1434
      %v1436 = vmul.f32 %v1431, %v1435
      %vm1437 = vweird.f32 %v1298
      %vm1438 = vweird.f32 %v1431
      %vm1439 = vmor %vm1437, %vm1438
      %v1440 = vsel %vm1439, %v1431, %v1436
      %v1441 = vrsqrt.pop %v1299
      %v1442 = vmul.f32 %v1441, %v1299
      %v1443 = vmul.f32 %v1442, %v1441
      %v1444 = vmul.f32 0.5, %v1443
      %v1445 = vsub.f32 1.5, %v1444
      %v1446 = vmul.f32 %v1441, %v1445
      %vm1447 = vweird.f32 %v1299
      %vm1448 = vweird.f32 %v1441
      %vm1449 = vmor %vm1447, %vm1448
      %v1450 = vsel %vm1449, %v1441, %v1446
      %v1451 = vrsqrt.pop %v1300
      %v1452 = vmul.f32 %v1451, %v1300
      %v1453 = vmul.f32 %v1452, %v1451
      %v1454 = vmul.f32 0.5, %v1453
      %v1455 = vsub.f32 1.5, %v1454
      %v1456 = vmul.f32 %v1451, %v1455
      %vm1457 = vweird.f32 %v1300
      %vm1458 = vweird.f32 %v1451
      %vm1459 = vmor %vm1457, %vm1458
      %v1460 = vsel %vm1459, %v1451, %v1456
      %v1461 = vmul.f32 %v1157, %v1310
      %v1462 = vmul.f32 %v1158, %v1310
      %v1463 = vmul.f32 %v1159, %v1320
      %v1464 = vmul.f32 %v1160, %v1320
      %v1465 = vmul.f32 %v1161, %v1330
      %v1466 = vmul.f32 %v1162, %v1330
      %v1467 = vmul.f32 %v1163, %v1340
      %v1468 = vmul.f32 %v1164, %v1340
      %v1469 = vmul.f32 %v1165, %v1350
      %v1470 = vmul.f32 %v1166, %v1350
      %v1471 = vmul.f32 %v1167, %v1360
      %v1472 = vmul.f32 %v1168, %v1360
      %v1473 = vmul.f32 %v1169, %v1370
      %v1474 = vmul.f32 %v1170, %v1370
      %v1475 = vmul.f32 %v1171, %v1380
      %v1476 = vmul.f32 %v1172, %v1380
      %v1477 = vmul.f32 %v1173, %v1390
      %v1478 = vmul.f32 %v1174, %v1390
      %v1479 = vmul.f32 %v1175, %v1400
      %v1480 = vmul.f32 %v1176, %v1400
      %v1481 = vmul.f32 %v1177, %v1410
      %v1482 = vmul.f32 %v1178, %v1410
      %v1483 = vmul.f32 %v1179, %v1420
      %v1484 = vmul.f32 %v1180, %v1420
      %v1485 = vmul.f32 %v1181, %v1430
      %v1486 = vmul.f32 %v1182, %v1430
      %v1487 = vmul.f32 %v1183, %v1440
      %v1488 = vmul.f32 %v1184, %v1440
      %v1489 = vmul.f32 %v1185, %v1450
      %v1490 = vmul.f32 %v1186, %v1450
      %v1491 = vmul.f32 %v1187, %v1460
      %v1492 = vmul.f32 %v1188, %v1460
      %v1493 = vmax.f32 %v1461, 0.0
      %v1494 = vmax.f32 %v1462, 0.0
      %v1495 = vmax.f32 %v1463, 0.0
      %v1496 = vmax.f32 %v1464, 0.0
      %v1497 = vmax.f32 %v1465, 0.0
      %v1498 = vmax.f32 %v1466, 0.0
      %v1499 = vmax.f32 %v1467, 0.0
      %v1500 = vmax.f32 %v1468, 0.0
      %v1501 = vmax.f32 %v1469, 0.0
      %v1502 = vmax.f32 %v1470, 0.0
      %v1503 = vmax.f32 %v1471, 0.0
      %v1504 = vmax.f32 %v1472, 0.0
      %v1505 = vmax.f32 %v1473, 0.0
      %v1506 = vmax.f32 %v1474, 0.0
      %v1507 = vmax.f32 %v1475, 0.0
      %v1508 = vmax.f32 %v1476, 0.0
      %v1509 = vmax.f32 %v1477, 0.0
      %v1510 = vmax.f32 %v1478, 0.0
      %v1511 = vmax.f32 %v1479, 0.0
      %v1512 = vmax.f32 %v1480, 0.0
      %v1513 = vmax.f32 %v1481, 0.0
      %v1514 = vmax.f32 %v1482, 0.0
      %v1515 = vmax.f32 %v1483, 0.0
      %v1516 = vmax.f32 %v1484, 0.0
      %v1517 = vmax.f32 %v1485, 0.0
      %v1518 = vmax.f32 %v1486, 0.0
      %v1519 = vmax.f32 %v1487, 0.0
      %v1520 = vmax.f32 %v1488, 0.0
      %v1521 = vmax.f32 %v1489, 0.0
      %v1522 = vmax.f32 %v1490, 0.0
      %v1523 = vmax.f32 %v1491, 0.0
      %v1524 = vmax.f32 %v1492, 0.0
      %v1525 = vpack.c.bf16 %v1495, %v1493
      %v1526 = vpack.c.bf16 %v1496, %v1494
      %v1527 = vpack.c.bf16 %v1499, %v1497
      %v1528 = vpack.c.bf16 %v1500, %v1498
      %v1529 = vpack.c.bf16 %v1503, %v1501
      %v1530 = vpack.c.bf16 %v1504, %v1502
      %v1531 = vpack.c.bf16 %v1507, %v1505
      %v1532 = vpack.c.bf16 %v1508, %v1506
      %v1533 = vpack.c.bf16 %v1511, %v1509
      %v1534 = vpack.c.bf16 %v1512, %v1510
      %v1535 = vpack.c.bf16 %v1515, %v1513
      %v1536 = vpack.c.bf16 %v1516, %v1514
      %v1537 = vpack.c.bf16 %v1519, %v1517
      %v1538 = vpack.c.bf16 %v1520, %v1518
      %v1539 = vpack.c.bf16 %v1523, %v1521
      %v1540 = vpack.c.bf16 %v1524, %v1522
      %1542 = vset.pattern.permute.xlu0 0
      %1543 = vperm.xlu0 %1542, %v644
      %v1544 = vpop.permute.xlu0 %1543
      %1547 = vset.pattern.permute.xlu0 0
      %1548 = vperm.xlu0 %1547, %v645
      %v1549 = vpop.permute.xlu0 %1548
      %1552 = vset.pattern.permute.xlu0 0
      %1553 = vperm.xlu0 %1552, %v646
      %v1554 = vpop.permute.xlu0 %1553
      %1557 = vset.pattern.permute.xlu0 0
      %1558 = vperm.xlu0 %1557, %v647
      %v1559 = vpop.permute.xlu0 %1558
      %1562 = vset.pattern.permute.xlu0 0
      %1563 = vperm.xlu0 %1562, %v648
      %v1564 = vpop.permute.xlu0 %1563
      %1567 = vset.pattern.permute.xlu0 0
      %1568 = vperm.xlu0 %1567, %v649
      %v1569 = vpop.permute.xlu0 %1568
      %1572 = vset.pattern.permute.xlu0 0
      %1573 = vperm.xlu0 %1572, %v650
      %v1574 = vpop.permute.xlu0 %1573
      %1577 = vset.pattern.permute.xlu0 0
      %1578 = vperm.xlu0 %1577, %v651
      %v1579 = vpop.permute.xlu0 %1578
      %1582 = vset.pattern.permute.xlu0 0
      %1583 = vperm.xlu0 %1582, %v652
      %v1584 = vpop.permute.xlu0 %1583
      %1587 = vset.pattern.permute.xlu0 0
      %1588 = vperm.xlu0 %1587, %v653
      %v1589 = vpop.permute.xlu0 %1588
      %1592 = vset.pattern.permute.xlu0 0
      %1593 = vperm.xlu0 %1592, %v654
      %v1594 = vpop.permute.xlu0 %1593
      %1597 = vset.pattern.permute.xlu0 0
      %1598 = vperm.xlu0 %1597, %v655
      %v1599 = vpop.permute.xlu0 %1598
      %1602 = vset.pattern.permute.xlu0 0
      %1603 = vperm.xlu0 %1602, %v656
      %v1604 = vpop.permute.xlu0 %1603
      %1607 = vset.pattern.permute.xlu0 0
      %1608 = vperm.xlu0 %1607, %v657
      %v1609 = vpop.permute.xlu0 %1608
      %1612 = vset.pattern.permute.xlu0 0
      %1613 = vperm.xlu0 %1612, %v658
      %v1614 = vpop.permute.xlu0 %1613
      %1617 = vset.pattern.permute.xlu0 0
      %1618 = vperm.xlu0 %1617, %v659
      %v1619 = vpop.permute.xlu0 %1618
      %v1621 = vmul.f32 %v1544, %v747
      %v1622 = vmul.f32 %v1544, %v748
      %v1623 = vmul.f32 %v1549, %v747
      %v1624 = vmul.f32 %v1549, %v748
      %v1625 = vmul.f32 %v1554, %v747
      %v1626 = vmul.f32 %v1554, %v748
      %v1627 = vmul.f32 %v1559, %v747
      %v1628 = vmul.f32 %v1559, %v748
      %v1629 = vmul.f32 %v1564, %v747
      %v1630 = vmul.f32 %v1564, %v748
      %v1631 = vmul.f32 %v1569, %v747
      %v1632 = vmul.f32 %v1569, %v748
      %v1633 = vmul.f32 %v1574, %v747
      %v1634 = vmul.f32 %v1574, %v748
      %v1635 = vmul.f32 %v1579, %v747
      %v1636 = vmul.f32 %v1579, %v748
      %v1637 = vmul.f32 %v1584, %v747
      %v1638 = vmul.f32 %v1584, %v748
      %v1639 = vmul.f32 %v1589, %v747
      %v1640 = vmul.f32 %v1589, %v748
      %v1641 = vmul.f32 %v1594, %v747
      %v1642 = vmul.f32 %v1594, %v748
      %v1643 = vmul.f32 %v1599, %v747
      %v1644 = vmul.f32 %v1599, %v748
      %v1645 = vmul.f32 %v1604, %v747
      %v1646 = vmul.f32 %v1604, %v748
      %v1647 = vmul.f32 %v1609, %v747
      %v1648 = vmul.f32 %v1609, %v748
      %v1649 = vmul.f32 %v1614, %v747
      %v1650 = vmul.f32 %v1614, %v748
      %v1651 = vmul.f32 %v1619, %v747
      %v1652 = vmul.f32 %v1619, %v748
      %1653 = vset.pattern.permute.xlu0 1
      %1654 = vperm.xlu0 %1653, %v644
      %v1655 = vpop.permute.xlu0 %1654
      %1657 = vset.pattern.permute.xlu0 1
      %1658 = vperm.xlu0 %1657, %v645
      %v1659 = vpop.permute.xlu0 %1658
      %1661 = vset.pattern.permute.xlu0 1
      %1662 = vperm.xlu0 %1661, %v646
      %v1663 = vpop.permute.xlu0 %1662
      %1665 = vset.pattern.permute.xlu0 1
      %1666 = vperm.xlu0 %1665, %v647
      %v1667 = vpop.permute.xlu0 %1666
      %1669 = vset.pattern.permute.xlu0 1
      %1670 = vperm.xlu0 %1669, %v648
      %v1671 = vpop.permute.xlu0 %1670
      %1673 = vset.pattern.permute.xlu0 1
      %1674 = vperm.xlu0 %1673, %v649
      %v1675 = vpop.permute.xlu0 %1674
      %1677 = vset.pattern.permute.xlu0 1
      %1678 = vperm.xlu0 %1677, %v650
      %v1679 = vpop.permute.xlu0 %1678
      %1681 = vset.pattern.permute.xlu0 1
      %1682 = vperm.xlu0 %1681, %v651
      %v1683 = vpop.permute.xlu0 %1682
      %1685 = vset.pattern.permute.xlu0 1
      %1686 = vperm.xlu0 %1685, %v652
      %v1687 = vpop.permute.xlu0 %1686
      %1689 = vset.pattern.permute.xlu0 1
      %1690 = vperm.xlu0 %1689, %v653
      %v1691 = vpop.permute.xlu0 %1690
      %1693 = vset.pattern.permute.xlu0 1
      %1694 = vperm.xlu0 %1693, %v654
      %v1695 = vpop.permute.xlu0 %1694
      %1697 = vset.pattern.permute.xlu0 1
      %1698 = vperm.xlu0 %1697, %v655
      %v1699 = vpop.permute.xlu0 %1698
      %1701 = vset.pattern.permute.xlu0 1
      %1702 = vperm.xlu0 %1701, %v656
      %v1703 = vpop.permute.xlu0 %1702
      %1705 = vset.pattern.permute.xlu0 1
      %1706 = vperm.xlu0 %1705, %v657
      %v1707 = vpop.permute.xlu0 %1706
      %1709 = vset.pattern.permute.xlu0 1
      %1710 = vperm.xlu0 %1709, %v658
      %v1711 = vpop.permute.xlu0 %1710
      %1713 = vset.pattern.permute.xlu0 1
      %1714 = vperm.xlu0 %1713, %v659
      %v1715 = vpop.permute.xlu0 %1714
      %v1717 = vmul.f32 %v1655, %v849
      %v1718 = vmul.f32 %v1655, %v850
      %v1719 = vmul.f32 %v1659, %v849
      %v1720 = vmul.f32 %v1659, %v850
      %v1721 = vmul.f32 %v1663, %v849
      %v1722 = vmul.f32 %v1663, %v850
      %v1723 = vmul.f32 %v1667, %v849
      %v1724 = vmul.f32 %v1667, %v850
      %v1725 = vmul.f32 %v1671, %v849
      %v1726 = vmul.f32 %v1671, %v850
      %v1727 = vmul.f32 %v1675, %v849
      %v1728 = vmul.f32 %v1675, %v850
      %v1729 = vmul.f32 %v1679, %v849
      %v1730 = vmul.f32 %v1679, %v850
      %v1731 = vmul.f32 %v1683, %v849
      %v1732 = vmul.f32 %v1683, %v850
      %v1733 = vmul.f32 %v1687, %v849
      %v1734 = vmul.f32 %v1687, %v850
      %v1735 = vmul.f32 %v1691, %v849
      %v1736 = vmul.f32 %v1691, %v850
      %v1737 = vmul.f32 %v1695, %v849
      %v1738 = vmul.f32 %v1695, %v850
      %v1739 = vmul.f32 %v1699, %v849
      %v1740 = vmul.f32 %v1699, %v850
      %v1741 = vmul.f32 %v1703, %v849
      %v1742 = vmul.f32 %v1703, %v850
      %v1743 = vmul.f32 %v1707, %v849
      %v1744 = vmul.f32 %v1707, %v850
      %v1745 = vmul.f32 %v1711, %v849
      %v1746 = vmul.f32 %v1711, %v850
      %v1747 = vmul.f32 %v1715, %v849
      %v1748 = vmul.f32 %v1715, %v850
      %v1749 = vadd.f32 %v1621, %v1717
      %v1750 = vadd.f32 %v1622, %v1718
      %v1751 = vadd.f32 %v1623, %v1719
      %v1752 = vadd.f32 %v1624, %v1720
      %v1753 = vadd.f32 %v1625, %v1721
      %v1754 = vadd.f32 %v1626, %v1722
      %v1755 = vadd.f32 %v1627, %v1723
      %v1756 = vadd.f32 %v1628, %v1724
      %v1757 = vadd.f32 %v1629, %v1725
      %v1758 = vadd.f32 %v1630, %v1726
      %v1759 = vadd.f32 %v1631, %v1727
      %v1760 = vadd.f32 %v1632, %v1728
      %v1761 = vadd.f32 %v1633, %v1729
      %v1762 = vadd.f32 %v1634, %v1730
      %v1763 = vadd.f32 %v1635, %v1731
      %v1764 = vadd.f32 %v1636, %v1732
      %v1765 = vadd.f32 %v1637, %v1733
      %v1766 = vadd.f32 %v1638, %v1734
      %v1767 = vadd.f32 %v1639, %v1735
      %v1768 = vadd.f32 %v1640, %v1736
      %v1769 = vadd.f32 %v1641, %v1737
      %v1770 = vadd.f32 %v1642, %v1738
      %v1771 = vadd.f32 %v1643, %v1739
      %v1772 = vadd.f32 %v1644, %v1740
      %v1773 = vadd.f32 %v1645, %v1741
      %v1774 = vadd.f32 %v1646, %v1742
      %v1775 = vadd.f32 %v1647, %v1743
      %v1776 = vadd.f32 %v1648, %v1744
      %v1777 = vadd.f32 %v1649, %v1745
      %v1778 = vadd.f32 %v1650, %v1746
      %v1779 = vadd.f32 %v1651, %v1747
      %v1780 = vadd.f32 %v1652, %v1748
      %1781 = vset.pattern.permute.xlu0 2
      %1782 = vperm.xlu0 %1781, %v644
      %v1783 = vpop.permute.xlu0 %1782
      %1785 = vset.pattern.permute.xlu0 2
      %1786 = vperm.xlu0 %1785, %v645
      %v1787 = vpop.permute.xlu0 %1786
      %1789 = vset.pattern.permute.xlu0 2
      %1790 = vperm.xlu0 %1789, %v646
      %v1791 = vpop.permute.xlu0 %1790
      %1793 = vset.pattern.permute.xlu0 2
      %1794 = vperm.xlu0 %1793, %v647
      %v1795 = vpop.permute.xlu0 %1794
      %1797 = vset.pattern.permute.xlu0 2
      %1798 = vperm.xlu0 %1797, %v648
      %v1799 = vpop.permute.xlu0 %1798
      %1801 = vset.pattern.permute.xlu0 2
      %1802 = vperm.xlu0 %1801, %v649
      %v1803 = vpop.permute.xlu0 %1802
      %1805 = vset.pattern.permute.xlu0 2
      %1806 = vperm.xlu0 %1805, %v650
      %v1807 = vpop.permute.xlu0 %1806
      %1809 = vset.pattern.permute.xlu0 2
      %1810 = vperm.xlu0 %1809, %v651
      %v1811 = vpop.permute.xlu0 %1810
      %1813 = vset.pattern.permute.xlu0 2
      %1814 = vperm.xlu0 %1813, %v652
      %v1815 = vpop.permute.xlu0 %1814
      %1817 = vset.pattern.permute.xlu0 2
      %1818 = vperm.xlu0 %1817, %v653
      %v1819 = vpop.permute.xlu0 %1818
      %1821 = vset.pattern.permute.xlu0 2
      %1822 = vperm.xlu0 %1821, %v654
      %v1823 = vpop.permute.xlu0 %1822
      %1825 = vset.pattern.permute.xlu0 2
      %1826 = vperm.xlu0 %1825, %v655
      %v1827 = vpop.permute.xlu0 %1826
      %1829 = vset.pattern.permute.xlu0 2
      %1830 = vperm.xlu0 %1829, %v656
      %v1831 = vpop.permute.xlu0 %1830
      %1833 = vset.pattern.permute.xlu0 2
      %1834 = vperm.xlu0 %1833, %v657
      %v1835 = vpop.permute.xlu0 %1834
      %1837 = vset.pattern.permute.xlu0 2
      %1838 = vperm.xlu0 %1837, %v658
      %v1839 = vpop.permute.xlu0 %1838
      %1841 = vset.pattern.permute.xlu0 2
      %1842 = vperm.xlu0 %1841, %v659
      %v1843 = vpop.permute.xlu0 %1842
      %v1845 = vmul.f32 %v1783, %v983
      %v1846 = vmul.f32 %v1783, %v984
      %v1847 = vmul.f32 %v1787, %v983
      %v1848 = vmul.f32 %v1787, %v984
      %v1849 = vmul.f32 %v1791, %v983
      %v1850 = vmul.f32 %v1791, %v984
      %v1851 = vmul.f32 %v1795, %v983
      %v1852 = vmul.f32 %v1795, %v984
      %v1853 = vmul.f32 %v1799, %v983
      %v1854 = vmul.f32 %v1799, %v984
      %v1855 = vmul.f32 %v1803, %v983
      %v1856 = vmul.f32 %v1803, %v984
      %v1857 = vmul.f32 %v1807, %v983
      %v1858 = vmul.f32 %v1807, %v984
      %v1859 = vmul.f32 %v1811, %v983
      %v1860 = vmul.f32 %v1811, %v984
      %v1861 = vmul.f32 %v1815, %v983
      %v1862 = vmul.f32 %v1815, %v984
      %v1863 = vmul.f32 %v1819, %v983
      %v1864 = vmul.f32 %v1819, %v984
      %v1865 = vmul.f32 %v1823, %v983
      %v1866 = vmul.f32 %v1823, %v984
      %v1867 = vmul.f32 %v1827, %v983
      %v1868 = vmul.f32 %v1827, %v984
      %v1869 = vmul.f32 %v1831, %v983
      %v1870 = vmul.f32 %v1831, %v984
      %v1871 = vmul.f32 %v1835, %v983
      %v1872 = vmul.f32 %v1835, %v984
      %v1873 = vmul.f32 %v1839, %v983
      %v1874 = vmul.f32 %v1839, %v984
      %v1875 = vmul.f32 %v1843, %v983
      %v1876 = vmul.f32 %v1843, %v984
      %v1877 = vadd.f32 %v1749, %v1845
      %v1878 = vadd.f32 %v1750, %v1846
      %v1879 = vadd.f32 %v1751, %v1847
      %v1880 = vadd.f32 %v1752, %v1848
      %v1881 = vadd.f32 %v1753, %v1849
      %v1882 = vadd.f32 %v1754, %v1850
      %v1883 = vadd.f32 %v1755, %v1851
      %v1884 = vadd.f32 %v1756, %v1852
      %v1885 = vadd.f32 %v1757, %v1853
      %v1886 = vadd.f32 %v1758, %v1854
      %v1887 = vadd.f32 %v1759, %v1855
      %v1888 = vadd.f32 %v1760, %v1856
      %v1889 = vadd.f32 %v1761, %v1857
      %v1890 = vadd.f32 %v1762, %v1858
      %v1891 = vadd.f32 %v1763, %v1859
      %v1892 = vadd.f32 %v1764, %v1860
      %v1893 = vadd.f32 %v1765, %v1861
      %v1894 = vadd.f32 %v1766, %v1862
      %v1895 = vadd.f32 %v1767, %v1863
      %v1896 = vadd.f32 %v1768, %v1864
      %v1897 = vadd.f32 %v1769, %v1865
      %v1898 = vadd.f32 %v1770, %v1866
      %v1899 = vadd.f32 %v1771, %v1867
      %v1900 = vadd.f32 %v1772, %v1868
      %v1901 = vadd.f32 %v1773, %v1869
      %v1902 = vadd.f32 %v1774, %v1870
      %v1903 = vadd.f32 %v1775, %v1871
      %v1904 = vadd.f32 %v1776, %v1872
      %v1905 = vadd.f32 %v1777, %v1873
      %v1906 = vadd.f32 %v1778, %v1874
      %v1907 = vadd.f32 %v1779, %v1875
      %v1908 = vadd.f32 %v1780, %v1876
      %v1909 = vadd.f32 %v1877, %v1050
      %v1910 = vadd.f32 %v1878, %v1051
      %v1911 = vadd.f32 %v1879, %v1050
      %v1912 = vadd.f32 %v1880, %v1051
      %v1913 = vadd.f32 %v1881, %v1050
      %v1914 = vadd.f32 %v1882, %v1051
      %v1915 = vadd.f32 %v1883, %v1050
      %v1916 = vadd.f32 %v1884, %v1051
      %v1917 = vadd.f32 %v1885, %v1050
      %v1918 = vadd.f32 %v1886, %v1051
      %v1919 = vadd.f32 %v1887, %v1050
      %v1920 = vadd.f32 %v1888, %v1051
      %v1921 = vadd.f32 %v1889, %v1050
      %v1922 = vadd.f32 %v1890, %v1051
      %v1923 = vadd.f32 %v1891, %v1050
      %v1924 = vadd.f32 %v1892, %v1051
      %v1925 = vadd.f32 %v1893, %v1050
      %v1926 = vadd.f32 %v1894, %v1051
      %v1927 = vadd.f32 %v1895, %v1050
      %v1928 = vadd.f32 %v1896, %v1051
      %v1929 = vadd.f32 %v1897, %v1050
      %v1930 = vadd.f32 %v1898, %v1051
      %v1931 = vadd.f32 %v1899, %v1050
      %v1932 = vadd.f32 %v1900, %v1051
      %v1933 = vadd.f32 %v1901, %v1050
      %v1934 = vadd.f32 %v1902, %v1051
      %v1935 = vadd.f32 %v1903, %v1050
      %v1936 = vadd.f32 %v1904, %v1051
      %v1937 = vadd.f32 %v1905, %v1050
      %v1938 = vadd.f32 %v1906, %v1051
      %v1939 = vadd.f32 %v1907, %v1050
      %v1940 = vadd.f32 %v1908, %v1051
      %v1941 = vadd.f32 %v1909, %v1910
      %1942 = vadd.xlane.f32.xlu0 %v1941
      %v1943 = vpop.xlane.xlu0 %1942
      %v1944 = vadd.f32 %v1911, %v1912
      %1945 = vadd.xlane.f32.xlu0 %v1944
      %v1946 = vpop.xlane.xlu0 %1945
      %v1947 = vadd.f32 %v1913, %v1914
      %1948 = vadd.xlane.f32.xlu0 %v1947
      %v1949 = vpop.xlane.xlu0 %1948
      %v1950 = vadd.f32 %v1915, %v1916
      %1951 = vadd.xlane.f32.xlu0 %v1950
      %v1952 = vpop.xlane.xlu0 %1951
      %v1953 = vadd.f32 %v1917, %v1918
      %1954 = vadd.xlane.f32.xlu0 %v1953
      %v1955 = vpop.xlane.xlu0 %1954
      %v1956 = vadd.f32 %v1919, %v1920
      %1957 = vadd.xlane.f32.xlu0 %v1956
      %v1958 = vpop.xlane.xlu0 %1957
      %v1959 = vadd.f32 %v1921, %v1922
      %1960 = vadd.xlane.f32.xlu0 %v1959
      %v1961 = vpop.xlane.xlu0 %1960
      %v1962 = vadd.f32 %v1923, %v1924
      %1963 = vadd.xlane.f32.xlu0 %v1962
      %v1964 = vpop.xlane.xlu0 %1963
      %v1965 = vadd.f32 %v1925, %v1926
      %1966 = vadd.xlane.f32.xlu0 %v1965
      %v1967 = vpop.xlane.xlu0 %1966
      %v1968 = vadd.f32 %v1927, %v1928
      %1969 = vadd.xlane.f32.xlu0 %v1968
      %v1970 = vpop.xlane.xlu0 %1969
      %v1971 = vadd.f32 %v1929, %v1930
      %1972 = vadd.xlane.f32.xlu0 %v1971
      %v1973 = vpop.xlane.xlu0 %1972
      %v1974 = vadd.f32 %v1931, %v1932
      %1975 = vadd.xlane.f32.xlu0 %v1974
      %v1976 = vpop.xlane.xlu0 %1975
      %v1977 = vadd.f32 %v1933, %v1934
      %1978 = vadd.xlane.f32.xlu0 %v1977
      %v1979 = vpop.xlane.xlu0 %1978
      %v1980 = vadd.f32 %v1935, %v1936
      %1981 = vadd.xlane.f32.xlu0 %v1980
      %v1982 = vpop.xlane.xlu0 %1981
      %v1983 = vadd.f32 %v1937, %v1938
      %1984 = vadd.xlane.f32.xlu0 %v1983
      %v1985 = vpop.xlane.xlu0 %1984
      %v1986 = vadd.f32 %v1939, %v1940
      %1987 = vadd.xlane.f32.xlu0 %v1986
      %v1988 = vpop.xlane.xlu0 %1987
      %v1989 = vmul.f32 %v1943, %v1140
      %v1990 = vmul.f32 %v1946, %v1140
      %v1991 = vmul.f32 %v1949, %v1140
      %v1992 = vmul.f32 %v1952, %v1140
      %v1993 = vmul.f32 %v1955, %v1140
      %v1994 = vmul.f32 %v1958, %v1140
      %v1995 = vmul.f32 %v1961, %v1140
      %v1996 = vmul.f32 %v1964, %v1140
      %v1997 = vmul.f32 %v1967, %v1140
      %v1998 = vmul.f32 %v1970, %v1140
      %v1999 = vmul.f32 %v1973, %v1140
      %v2000 = vmul.f32 %v1976, %v1140
      %v2001 = vmul.f32 %v1979, %v1140
      %v2002 = vmul.f32 %v1982, %v1140
      %v2003 = vmul.f32 %v1985, %v1140
      %v2004 = vmul.f32 %v1988, %v1140
      %v2005 = vsub.f32 %v1909, %v1989
      %v2006 = vsub.f32 %v1910, %v1989
      %v2007 = vsub.f32 %v1911, %v1990
      %v2008 = vsub.f32 %v1912, %v1990
      %v2009 = vsub.f32 %v1913, %v1991
      %v2010 = vsub.f32 %v1914, %v1991
      %v2011 = vsub.f32 %v1915, %v1992
      %v2012 = vsub.f32 %v1916, %v1992
      %v2013 = vsub.f32 %v1917, %v1993
      %v2014 = vsub.f32 %v1918, %v1993
      %v2015 = vsub.f32 %v1919, %v1994
      %v2016 = vsub.f32 %v1920, %v1994
      %v2017 = vsub.f32 %v1921, %v1995
      %v2018 = vsub.f32 %v1922, %v1995
      %v2019 = vsub.f32 %v1923, %v1996
      %v2020 = vsub.f32 %v1924, %v1996
      %v2021 = vsub.f32 %v1925, %v1997
      %v2022 = vsub.f32 %v1926, %v1997
      %v2023 = vsub.f32 %v1927, %v1998
      %v2024 = vsub.f32 %v1928, %v1998
      %v2025 = vsub.f32 %v1929, %v1999
      %v2026 = vsub.f32 %v1930, %v1999
      %v2027 = vsub.f32 %v1931, %v2000
      %v2028 = vsub.f32 %v1932, %v2000
      %v2029 = vsub.f32 %v1933, %v2001
      %v2030 = vsub.f32 %v1934, %v2001
      %v2031 = vsub.f32 %v1935, %v2002
      %v2032 = vsub.f32 %v1936, %v2002
      %v2033 = vsub.f32 %v1937, %v2003
      %v2034 = vsub.f32 %v1938, %v2003
      %v2035 = vsub.f32 %v1939, %v2004
      %v2036 = vsub.f32 %v1940, %v2004
      %v2037 = vmul.f32 %v2005, %v2005
      %v2038 = vmul.f32 %v2006, %v2006
      %v2039 = vmul.f32 %v2007, %v2007
      %v2040 = vmul.f32 %v2008, %v2008
      %v2041 = vmul.f32 %v2009, %v2009
      %v2042 = vmul.f32 %v2010, %v2010
      %v2043 = vmul.f32 %v2011, %v2011
      %v2044 = vmul.f32 %v2012, %v2012
      %v2045 = vmul.f32 %v2013, %v2013
      %v2046 = vmul.f32 %v2014, %v2014
      %v2047 = vmul.f32 %v2015, %v2015
      %v2048 = vmul.f32 %v2016, %v2016
      %v2049 = vmul.f32 %v2017, %v2017
      %v2050 = vmul.f32 %v2018, %v2018
      %v2051 = vmul.f32 %v2019, %v2019
      %v2052 = vmul.f32 %v2020, %v2020
      %v2053 = vmul.f32 %v2021, %v2021
      %v2054 = vmul.f32 %v2022, %v2022
      %v2055 = vmul.f32 %v2023, %v2023
      %v2056 = vmul.f32 %v2024, %v2024
      %v2057 = vmul.f32 %v2025, %v2025
      %v2058 = vmul.f32 %v2026, %v2026
      %v2059 = vmul.f32 %v2027, %v2027
      %v2060 = vmul.f32 %v2028, %v2028
      %v2061 = vmul.f32 %v2029, %v2029
      %v2062 = vmul.f32 %v2030, %v2030
      %v2063 = vmul.f32 %v2031, %v2031
      %v2064 = vmul.f32 %v2032, %v2032
      %v2065 = vmul.f32 %v2033, %v2033
      %v2066 = vmul.f32 %v2034, %v2034
      %v2067 = vmul.f32 %v2035, %v2035
      %v2068 = vmul.f32 %v2036, %v2036
      %v2069 = vadd.f32 %v2037, %v2038
      %2070 = vadd.xlane.f32.xlu0 %v2069
      %v2071 = vpop.xlane.xlu0 %2070
      %v2072 = vadd.f32 %v2039, %v2040
      %2073 = vadd.xlane.f32.xlu0 %v2072
      %v2074 = vpop.xlane.xlu0 %2073
      %v2075 = vadd.f32 %v2041, %v2042
      %2076 = vadd.xlane.f32.xlu0 %v2075
      %v2077 = vpop.xlane.xlu0 %2076
      %v2078 = vadd.f32 %v2043, %v2044
      %2079 = vadd.xlane.f32.xlu0 %v2078
      %v2080 = vpop.xlane.xlu0 %2079
      %v2081 = vadd.f32 %v2045, %v2046
      %2082 = vadd.xlane.f32.xlu0 %v2081
      %v2083 = vpop.xlane.xlu0 %2082
      %v2084 = vadd.f32 %v2047, %v2048
      %2085 = vadd.xlane.f32.xlu0 %v2084
      %v2086 = vpop.xlane.xlu0 %2085
      %v2087 = vadd.f32 %v2049, %v2050
      %2088 = vadd.xlane.f32.xlu0 %v2087
      %v2089 = vpop.xlane.xlu0 %2088
      %v2090 = vadd.f32 %v2051, %v2052
      %2091 = vadd.xlane.f32.xlu0 %v2090
      %v2092 = vpop.xlane.xlu0 %2091
      %v2093 = vadd.f32 %v2053, %v2054
      %2094 = vadd.xlane.f32.xlu0 %v2093
      %v2095 = vpop.xlane.xlu0 %2094
      %v2096 = vadd.f32 %v2055, %v2056
      %2097 = vadd.xlane.f32.xlu0 %v2096
      %v2098 = vpop.xlane.xlu0 %2097
      %v2099 = vadd.f32 %v2057, %v2058
      %2100 = vadd.xlane.f32.xlu0 %v2099
      %v2101 = vpop.xlane.xlu0 %2100
      %v2102 = vadd.f32 %v2059, %v2060
      %2103 = vadd.xlane.f32.xlu0 %v2102
      %v2104 = vpop.xlane.xlu0 %2103
      %v2105 = vadd.f32 %v2061, %v2062
      %2106 = vadd.xlane.f32.xlu0 %v2105
      %v2107 = vpop.xlane.xlu0 %2106
      %v2108 = vadd.f32 %v2063, %v2064
      %2109 = vadd.xlane.f32.xlu0 %v2108
      %v2110 = vpop.xlane.xlu0 %2109
      %v2111 = vadd.f32 %v2065, %v2066
      %2112 = vadd.xlane.f32.xlu0 %v2111
      %v2113 = vpop.xlane.xlu0 %2112
      %v2114 = vadd.f32 %v2067, %v2068
      %2115 = vadd.xlane.f32.xlu0 %v2114
      %v2116 = vpop.xlane.xlu0 %2115
      %v2117 = vmul.f32 %v2071, %v1140
      %v2118 = vmul.f32 %v2074, %v1140
      %v2119 = vmul.f32 %v2077, %v1140
      %v2120 = vmul.f32 %v2080, %v1140
      %v2121 = vmul.f32 %v2083, %v1140
      %v2122 = vmul.f32 %v2086, %v1140
      %v2123 = vmul.f32 %v2089, %v1140
      %v2124 = vmul.f32 %v2092, %v1140
      %v2125 = vmul.f32 %v2095, %v1140
      %v2126 = vmul.f32 %v2098, %v1140
      %v2127 = vmul.f32 %v2101, %v1140
      %v2128 = vmul.f32 %v2104, %v1140
      %v2129 = vmul.f32 %v2107, %v1140
      %v2130 = vmul.f32 %v2110, %v1140
      %v2131 = vmul.f32 %v2113, %v1140
      %v2132 = vmul.f32 %v2116, %v1140
      %v2133 = vadd.f32 %v2117, 1e-05
      %v2134 = vadd.f32 %v2118, 1e-05
      %v2135 = vadd.f32 %v2119, 1e-05
      %v2136 = vadd.f32 %v2120, 1e-05
      %v2137 = vadd.f32 %v2121, 1e-05
      %v2138 = vadd.f32 %v2122, 1e-05
      %v2139 = vadd.f32 %v2123, 1e-05
      %v2140 = vadd.f32 %v2124, 1e-05
      %v2141 = vadd.f32 %v2125, 1e-05
      %v2142 = vadd.f32 %v2126, 1e-05
      %v2143 = vadd.f32 %v2127, 1e-05
      %v2144 = vadd.f32 %v2128, 1e-05
      %v2145 = vadd.f32 %v2129, 1e-05
      %v2146 = vadd.f32 %v2130, 1e-05
      %v2147 = vadd.f32 %v2131, 1e-05
      %v2148 = vadd.f32 %v2132, 1e-05
      %v2149 = vrsqrt.pop %v2133
      %v2150 = vmul.f32 %v2149, %v2133
      %v2151 = vmul.f32 %v2150, %v2149
      %v2152 = vmul.f32 0.5, %v2151
      %v2153 = vsub.f32 1.5, %v2152
      %v2154 = vmul.f32 %v2149, %v2153
      %vm2155 = vweird.f32 %v2133
      %vm2156 = vweird.f32 %v2149
      %vm2157 = vmor %vm2155, %vm2156
      %v2158 = vsel %vm2157, %v2149, %v2154
      %v2159 = vrsqrt.pop %v2134
      %v2160 = vmul.f32 %v2159, %v2134
      %v2161 = vmul.f32 %v2160, %v2159
      %v2162 = vmul.f32 0.5, %v2161
      %v2163 = vsub.f32 1.5, %v2162
      %v2164 = vmul.f32 %v2159, %v2163
      %vm2165 = vweird.f32 %v2134
      %vm2166 = vweird.f32 %v2159
      %vm2167 = vmor %vm2165, %vm2166
      %v2168 = vsel %vm2167, %v2159, %v2164
      %v2169 = vrsqrt.pop %v2135
      %v2170 = vmul.f32 %v2169, %v2135
      %v2171 = vmul.f32 %v2170, %v2169
      %v2172 = vmul.f32 0.5, %v2171
      %v2173 = vsub.f32 1.5, %v2172
      %v2174 = vmul.f32 %v2169, %v2173
      %vm2175 = vweird.f32 %v2135
      %vm2176 = vweird.f32 %v2169
      %vm2177 = vmor %vm2175, %vm2176
      %v2178 = vsel %vm2177, %v2169, %v2174
      %v2179 = vrsqrt.pop %v2136
      %v2180 = vmul.f32 %v2179, %v2136
      %v2181 = vmul.f32 %v2180, %v2179
      %v2182 = vmul.f32 0.5, %v2181
      %v2183 = vsub.f32 1.5, %v2182
      %v2184 = vmul.f32 %v2179, %v2183
      %vm2185 = vweird.f32 %v2136
      %vm2186 = vweird.f32 %v2179
      %vm2187 = vmor %vm2185, %vm2186
      %v2188 = vsel %vm2187, %v2179, %v2184
      %v2189 = vrsqrt.pop %v2137
      %v2190 = vmul.f32 %v2189, %v2137
      %v2191 = vmul.f32 %v2190, %v2189
      %v2192 = vmul.f32 0.5, %v2191
      %v2193 = vsub.f32 1.5, %v2192
      %v2194 = vmul.f32 %v2189, %v2193
      %vm2195 = vweird.f32 %v2137
      %vm2196 = vweird.f32 %v2189
      %vm2197 = vmor %vm2195, %vm2196
      %v2198 = vsel %vm2197, %v2189, %v2194
      %v2199 = vrsqrt.pop %v2138
      %v2200 = vmul.f32 %v2199, %v2138
      %v2201 = vmul.f32 %v2200, %v2199
      %v2202 = vmul.f32 0.5, %v2201
      %v2203 = vsub.f32 1.5, %v2202
      %v2204 = vmul.f32 %v2199, %v2203
      %vm2205 = vweird.f32 %v2138
      %vm2206 = vweird.f32 %v2199
      %vm2207 = vmor %vm2205, %vm2206
      %v2208 = vsel %vm2207, %v2199, %v2204
      %v2209 = vrsqrt.pop %v2139
      %v2210 = vmul.f32 %v2209, %v2139
      %v2211 = vmul.f32 %v2210, %v2209
      %v2212 = vmul.f32 0.5, %v2211
      %v2213 = vsub.f32 1.5, %v2212
      %v2214 = vmul.f32 %v2209, %v2213
      %vm2215 = vweird.f32 %v2139
      %vm2216 = vweird.f32 %v2209
      %vm2217 = vmor %vm2215, %vm2216
      %v2218 = vsel %vm2217, %v2209, %v2214
      %v2219 = vrsqrt.pop %v2140
      %v2220 = vmul.f32 %v2219, %v2140
      %v2221 = vmul.f32 %v2220, %v2219
      %v2222 = vmul.f32 0.5, %v2221
      %v2223 = vsub.f32 1.5, %v2222
      %v2224 = vmul.f32 %v2219, %v2223
      %vm2225 = vweird.f32 %v2140
      %vm2226 = vweird.f32 %v2219
      %vm2227 = vmor %vm2225, %vm2226
      %v2228 = vsel %vm2227, %v2219, %v2224
      %v2229 = vrsqrt.pop %v2141
      %v2230 = vmul.f32 %v2229, %v2141
      %v2231 = vmul.f32 %v2230, %v2229
      %v2232 = vmul.f32 0.5, %v2231
      %v2233 = vsub.f32 1.5, %v2232
      %v2234 = vmul.f32 %v2229, %v2233
      %vm2235 = vweird.f32 %v2141
      %vm2236 = vweird.f32 %v2229
      %vm2237 = vmor %vm2235, %vm2236
      %v2238 = vsel %vm2237, %v2229, %v2234
      %v2239 = vrsqrt.pop %v2142
      %v2240 = vmul.f32 %v2239, %v2142
      %v2241 = vmul.f32 %v2240, %v2239
      %v2242 = vmul.f32 0.5, %v2241
      %v2243 = vsub.f32 1.5, %v2242
      %v2244 = vmul.f32 %v2239, %v2243
      %vm2245 = vweird.f32 %v2142
      %vm2246 = vweird.f32 %v2239
      %vm2247 = vmor %vm2245, %vm2246
      %v2248 = vsel %vm2247, %v2239, %v2244
      %v2249 = vrsqrt.pop %v2143
      %v2250 = vmul.f32 %v2249, %v2143
      %v2251 = vmul.f32 %v2250, %v2249
      %v2252 = vmul.f32 0.5, %v2251
      %v2253 = vsub.f32 1.5, %v2252
      %v2254 = vmul.f32 %v2249, %v2253
      %vm2255 = vweird.f32 %v2143
      %vm2256 = vweird.f32 %v2249
      %vm2257 = vmor %vm2255, %vm2256
      %v2258 = vsel %vm2257, %v2249, %v2254
      %v2259 = vrsqrt.pop %v2144
      %v2260 = vmul.f32 %v2259, %v2144
      %v2261 = vmul.f32 %v2260, %v2259
      %v2262 = vmul.f32 0.5, %v2261
      %v2263 = vsub.f32 1.5, %v2262
      %v2264 = vmul.f32 %v2259, %v2263
      %vm2265 = vweird.f32 %v2144
      %vm2266 = vweird.f32 %v2259
      %vm2267 = vmor %vm2265, %vm2266
      %v2268 = vsel %vm2267, %v2259, %v2264
      %v2269 = vrsqrt.pop %v2145
      %v2270 = vmul.f32 %v2269, %v2145
      %v2271 = vmul.f32 %v2270, %v2269
      %v2272 = vmul.f32 0.5, %v2271
      %v2273 = vsub.f32 1.5, %v2272
      %v2274 = vmul.f32 %v2269, %v2273
      %vm2275 = vweird.f32 %v2145
      %vm2276 = vweird.f32 %v2269
      %vm2277 = vmor %vm2275, %vm2276
      %v2278 = vsel %vm2277, %v2269, %v2274
      %v2279 = vrsqrt.pop %v2146
      %v2280 = vmul.f32 %v2279, %v2146
      %v2281 = vmul.f32 %v2280, %v2279
      %v2282 = vmul.f32 0.5, %v2281
      %v2283 = vsub.f32 1.5, %v2282
      %v2284 = vmul.f32 %v2279, %v2283
      %vm2285 = vweird.f32 %v2146
      %vm2286 = vweird.f32 %v2279
      %vm2287 = vmor %vm2285, %vm2286
      %v2288 = vsel %vm2287, %v2279, %v2284
      %v2289 = vrsqrt.pop %v2147
      %v2290 = vmul.f32 %v2289, %v2147
      %v2291 = vmul.f32 %v2290, %v2289
      %v2292 = vmul.f32 0.5, %v2291
      %v2293 = vsub.f32 1.5, %v2292
      %v2294 = vmul.f32 %v2289, %v2293
      %vm2295 = vweird.f32 %v2147
      %vm2296 = vweird.f32 %v2289
      %vm2297 = vmor %vm2295, %vm2296
      %v2298 = vsel %vm2297, %v2289, %v2294
      %v2299 = vrsqrt.pop %v2148
      %v2300 = vmul.f32 %v2299, %v2148
      %v2301 = vmul.f32 %v2300, %v2299
      %v2302 = vmul.f32 0.5, %v2301
      %v2303 = vsub.f32 1.5, %v2302
      %v2304 = vmul.f32 %v2299, %v2303
      %vm2305 = vweird.f32 %v2148
      %vm2306 = vweird.f32 %v2299
      %vm2307 = vmor %vm2305, %vm2306
      %v2308 = vsel %vm2307, %v2299, %v2304
      %v2309 = vmul.f32 %v2005, %v2158
      %v2310 = vmul.f32 %v2006, %v2158
      %v2311 = vmul.f32 %v2007, %v2168
      %v2312 = vmul.f32 %v2008, %v2168
      %v2313 = vmul.f32 %v2009, %v2178
      %v2314 = vmul.f32 %v2010, %v2178
      %v2315 = vmul.f32 %v2011, %v2188
      %v2316 = vmul.f32 %v2012, %v2188
      %v2317 = vmul.f32 %v2013, %v2198
      %v2318 = vmul.f32 %v2014, %v2198
      %v2319 = vmul.f32 %v2015, %v2208
      %v2320 = vmul.f32 %v2016, %v2208
      %v2321 = vmul.f32 %v2017, %v2218
      %v2322 = vmul.f32 %v2018, %v2218
      %v2323 = vmul.f32 %v2019, %v2228
      %v2324 = vmul.f32 %v2020, %v2228
      %v2325 = vmul.f32 %v2021, %v2238
      %v2326 = vmul.f32 %v2022, %v2238
      %v2327 = vmul.f32 %v2023, %v2248
      %v2328 = vmul.f32 %v2024, %v2248
      %v2329 = vmul.f32 %v2025, %v2258
      %v2330 = vmul.f32 %v2026, %v2258
      %v2331 = vmul.f32 %v2027, %v2268
      %v2332 = vmul.f32 %v2028, %v2268
      %v2333 = vmul.f32 %v2029, %v2278
      %v2334 = vmul.f32 %v2030, %v2278
      %v2335 = vmul.f32 %v2031, %v2288
      %v2336 = vmul.f32 %v2032, %v2288
      %v2337 = vmul.f32 %v2033, %v2298
      %v2338 = vmul.f32 %v2034, %v2298
      %v2339 = vmul.f32 %v2035, %v2308
      %v2340 = vmul.f32 %v2036, %v2308
      %v2341 = vmax.f32 %v2309, 0.0
      %v2342 = vmax.f32 %v2310, 0.0
      %v2343 = vmax.f32 %v2311, 0.0
      %v2344 = vmax.f32 %v2312, 0.0
      %v2345 = vmax.f32 %v2313, 0.0
      %v2346 = vmax.f32 %v2314, 0.0
      %v2347 = vmax.f32 %v2315, 0.0
      %v2348 = vmax.f32 %v2316, 0.0
      %v2349 = vmax.f32 %v2317, 0.0
      %v2350 = vmax.f32 %v2318, 0.0
      %v2351 = vmax.f32 %v2319, 0.0
      %v2352 = vmax.f32 %v2320, 0.0
      %v2353 = vmax.f32 %v2321, 0.0
      %v2354 = vmax.f32 %v2322, 0.0
      %v2355 = vmax.f32 %v2323, 0.0
      %v2356 = vmax.f32 %v2324, 0.0
      %v2357 = vmax.f32 %v2325, 0.0
      %v2358 = vmax.f32 %v2326, 0.0
      %v2359 = vmax.f32 %v2327, 0.0
      %v2360 = vmax.f32 %v2328, 0.0
      %v2361 = vmax.f32 %v2329, 0.0
      %v2362 = vmax.f32 %v2330, 0.0
      %v2363 = vmax.f32 %v2331, 0.0
      %v2364 = vmax.f32 %v2332, 0.0
      %v2365 = vmax.f32 %v2333, 0.0
      %v2366 = vmax.f32 %v2334, 0.0
      %v2367 = vmax.f32 %v2335, 0.0
      %v2368 = vmax.f32 %v2336, 0.0
      %v2369 = vmax.f32 %v2337, 0.0
      %v2370 = vmax.f32 %v2338, 0.0
      %v2371 = vmax.f32 %v2339, 0.0
      %v2372 = vmax.f32 %v2340, 0.0
      %v2373 = vpack.c.bf16 %v2343, %v2341
      %v2374 = vpack.c.bf16 %v2344, %v2342
      %v2375 = vpack.c.bf16 %v2347, %v2345
      %v2376 = vpack.c.bf16 %v2348, %v2346
      %v2377 = vpack.c.bf16 %v2351, %v2349
      %v2378 = vpack.c.bf16 %v2352, %v2350
      %v2379 = vpack.c.bf16 %v2355, %v2353
      %v2380 = vpack.c.bf16 %v2356, %v2354
      %v2381 = vpack.c.bf16 %v2359, %v2357
      %v2382 = vpack.c.bf16 %v2360, %v2358
      %v2383 = vpack.c.bf16 %v2363, %v2361
      %v2384 = vpack.c.bf16 %v2364, %v2362
      %v2385 = vpack.c.bf16 %v2367, %v2365
      %v2386 = vpack.c.bf16 %v2368, %v2366
      %v2387 = vpack.c.bf16 %v2371, %v2369
      %v2388 = vpack.c.bf16 %v2372, %v2370
      %v2389 = vld [vmem:[%s595] sm:$0xff]
      %v2390 = vld [vmem:[%s595 + $0x8] sm:$0xff]
      %v2391 = vld [vmem:[%s595 + $0x10] sm:$0xff]
      %v2392 = vld [vmem:[%s595 + $0x18] sm:$0xff]
      %v2393 = vld [vmem:[%s595 + $0x20] sm:$0xff]
      %v2394 = vld [vmem:[%s595 + $0x28] sm:$0xff]
      %v2395 = vld [vmem:[%s595 + $0x30] sm:$0xff]
      %v2396 = vld [vmem:[%s595 + $0x38] sm:$0xff]
      %v2397 = vld [vmem:[%s595 + $0x40] sm:$0xff]
      %v2398 = vld [vmem:[%s595 + $0x48] sm:$0xff]
      %v2399 = vld [vmem:[%s595 + $0x50] sm:$0xff]
      %v2400 = vld [vmem:[%s595 + $0x58] sm:$0xff]
      %v2401 = vld [vmem:[%s595 + $0x60] sm:$0xff]
      %v2402 = vld [vmem:[%s595 + $0x68] sm:$0xff]
      %v2403 = vld [vmem:[%s595 + $0x70] sm:$0xff]
      %v2404 = vld [vmem:[%s595 + $0x78] sm:$0xff]
      %v2405 = vld [vmem:[%s595 + $0x80] sm:$0xff]
      %v2406 = vld [vmem:[%s595 + $0x88] sm:$0xff]
      %v2407 = vld [vmem:[%s595 + $0x90] sm:$0xff]
      %v2408 = vld [vmem:[%s595 + $0x98] sm:$0xff]
      %v2409 = vld [vmem:[%s595 + $0xa0] sm:$0xff]
      %v2410 = vld [vmem:[%s595 + $0xa8] sm:$0xff]
      %v2411 = vld [vmem:[%s595 + $0xb0] sm:$0xff]
      %v2412 = vld [vmem:[%s595 + $0xb8] sm:$0xff]
      %v2413 = vld [vmem:[%s595 + $0xc0] sm:$0xff]
      %v2414 = vld [vmem:[%s595 + $0xc8] sm:$0xff]
      %v2415 = vld [vmem:[%s595 + $0xd0] sm:$0xff]
      %v2416 = vld [vmem:[%s595 + $0xd8] sm:$0xff]
      %v2417 = vld [vmem:[%s595 + $0xe0] sm:$0xff]
      %v2418 = vld [vmem:[%s595 + $0xe8] sm:$0xff]
      %v2419 = vld [vmem:[%s595 + $0xf0] sm:$0xff]
      %v2420 = vld [vmem:[%s595 + $0xf8] sm:$0xff]
      %v2421 = vld [vmem:[%s599] sm:$0x3]
      %v2423 = vperm.slane %v2421, 0
      %v2424 = vperm.slane %v2421, 1
      %v2459 = vunpack.c.l.b16 %v2389
      %v2460 = vunpack.c.h.b16 %v2389
      %v2461 = vunpack.c.l.b16 %v2390
      %v2462 = vunpack.c.h.b16 %v2390
      %v2463 = vunpack.c.l.b16 %v2391
      %v2464 = vunpack.c.h.b16 %v2391
      %v2465 = vunpack.c.l.b16 %v2392
      %v2466 = vunpack.c.h.b16 %v2392
      %v2467 = vunpack.c.l.b16 %v2393
      %v2468 = vunpack.c.h.b16 %v2393
      %v2469 = vunpack.c.l.b16 %v2394
      %v2470 = vunpack.c.h.b16 %v2394
      %v2471 = vunpack.c.l.b16 %v2395
      %v2472 = vunpack.c.h.b16 %v2395
      %v2473 = vunpack.c.l.b16 %v2396
      %v2474 = vunpack.c.h.b16 %v2396
      %v2475 = vunpack.c.l.b16 %v2397
      %v2476 = vunpack.c.h.b16 %v2397
      %v2477 = vunpack.c.l.b16 %v2398
      %v2478 = vunpack.c.h.b16 %v2398
      %v2479 = vunpack.c.l.b16 %v2399
      %v2480 = vunpack.c.h.b16 %v2399
      %v2481 = vunpack.c.l.b16 %v2400
      %v2482 = vunpack.c.h.b16 %v2400
      %v2483 = vunpack.c.l.b16 %v2401
      %v2484 = vunpack.c.h.b16 %v2401
      %v2485 = vunpack.c.l.b16 %v2402
      %v2486 = vunpack.c.h.b16 %v2402
      %v2487 = vunpack.c.l.b16 %v2403
      %v2488 = vunpack.c.h.b16 %v2403
      %v2489 = vunpack.c.l.b16 %v2404
      %v2490 = vunpack.c.h.b16 %v2404
      %v2491 = vunpack.c.l.b16 %v2405
      %v2492 = vunpack.c.h.b16 %v2405
      %v2493 = vunpack.c.l.b16 %v2406
      %v2494 = vunpack.c.h.b16 %v2406
      %v2495 = vunpack.c.l.b16 %v2407
      %v2496 = vunpack.c.h.b16 %v2407
      %v2497 = vunpack.c.l.b16 %v2408
      %v2498 = vunpack.c.h.b16 %v2408
      %v2499 = vunpack.c.l.b16 %v2409
      %v2500 = vunpack.c.h.b16 %v2409
      %v2501 = vunpack.c.l.b16 %v2410
      %v2502 = vunpack.c.h.b16 %v2410
      %v2503 = vunpack.c.l.b16 %v2411
      %v2504 = vunpack.c.h.b16 %v2411
      %v2505 = vunpack.c.l.b16 %v2412
      %v2506 = vunpack.c.h.b16 %v2412
      %v2507 = vunpack.c.l.b16 %v2413
      %v2508 = vunpack.c.h.b16 %v2413
      %v2509 = vunpack.c.l.b16 %v2414
      %v2510 = vunpack.c.h.b16 %v2414
      %v2511 = vunpack.c.l.b16 %v2415
      %v2512 = vunpack.c.h.b16 %v2415
      %v2513 = vunpack.c.l.b16 %v2416
      %v2514 = vunpack.c.h.b16 %v2416
      %v2515 = vunpack.c.l.b16 %v2417
      %v2516 = vunpack.c.h.b16 %v2417
      %v2517 = vunpack.c.l.b16 %v2418
      %v2518 = vunpack.c.h.b16 %v2418
      %v2519 = vunpack.c.l.b16 %v2419
      %v2520 = vunpack.c.h.b16 %v2419
      %v2521 = vunpack.c.l.b16 %v2420
      %v2522 = vunpack.c.h.b16 %v2420
      %v2523 = vpack.c.b16 %v2461, %v2459
      %v2524 = vpack.c.b16 %v2462, %v2460
      %v2525 = vpack.c.b16 %v2465, %v2463
      %v2526 = vpack.c.b16 %v2466, %v2464
      %v2527 = vpack.c.b16 %v2469, %v2467
      %v2528 = vpack.c.b16 %v2470, %v2468
      %v2529 = vpack.c.b16 %v2473, %v2471
      %v2530 = vpack.c.b16 %v2474, %v2472
      %v2531 = vpack.c.b16 %v2477, %v2475
      %v2532 = vpack.c.b16 %v2478, %v2476
      %v2533 = vpack.c.b16 %v2481, %v2479
      %v2534 = vpack.c.b16 %v2482, %v2480
      %v2535 = vpack.c.b16 %v2485, %v2483
      %v2536 = vpack.c.b16 %v2486, %v2484
      %v2537 = vpack.c.b16 %v2489, %v2487
      %v2538 = vpack.c.b16 %v2490, %v2488
      %v2539 = vpack.c.b16 %v2493, %v2491
      %v2540 = vpack.c.b16 %v2494, %v2492
      %v2541 = vpack.c.b16 %v2497, %v2495
      %v2542 = vpack.c.b16 %v2498, %v2496
      %v2543 = vpack.c.b16 %v2501, %v2499
      %v2544 = vpack.c.b16 %v2502, %v2500
      %v2545 = vpack.c.b16 %v2505, %v2503
      %v2546 = vpack.c.b16 %v2506, %v2504
      %v2547 = vpack.c.b16 %v2509, %v2507
      %v2548 = vpack.c.b16 %v2510, %v2508
      %v2549 = vpack.c.b16 %v2513, %v2511
      %v2550 = vpack.c.b16 %v2514, %v2512
      %v2551 = vpack.c.b16 %v2517, %v2515
      %v2552 = vpack.c.b16 %v2518, %v2516
      %v2553 = vpack.c.b16 %v2521, %v2519
      %v2554 = vpack.c.b16 %v2522, %v2520
      %2587 = vmatpush.bf16.msra.mxu0 %v2537
      %2588 = vmatpush.bf16.msra.mxu0 %v2535
      %2589 = vmatpush.bf16.msra.mxu0 %v2533
      %2590 = vmatpush.bf16.msra.mxu0 %v2531
      %2591 = vmatpush.bf16.msra.mxu0 %v2529
      %2592 = vmatpush.bf16.msra.mxu0 %v2527
      %2593 = vmatpush.bf16.msra.mxu0 %v2525
      %2594 = vmatpush.bf16.msra.mxu0 %v2523
      %2595 = vmatmul.bf16.gmra.mxu0 %v1525
      %v2596 = vpop.f32.mrf.mxu0
      %v2597 = vadd.f32 %v2423, %v2596
      %v2598 = vpop.f32.mrf.mxu0
      %v2599 = vadd.f32 %v2423, %v2598
      %2600 = vmatmul.bf16.gmra.mxu0 %v1527
      %v2601 = vpop.f32.mrf.mxu0
      %v2602 = vadd.f32 %v2423, %v2601
      %v2603 = vpop.f32.mrf.mxu0
      %v2604 = vadd.f32 %v2423, %v2603
      %2605 = vmatmul.bf16.gmra.mxu0 %v1529
      %v2606 = vpop.f32.mrf.mxu0
      %v2607 = vadd.f32 %v2423, %v2606
      %v2608 = vpop.f32.mrf.mxu0
      %v2609 = vadd.f32 %v2423, %v2608
      %2610 = vmatmul.bf16.gmra.mxu0 %v1531
      %v2611 = vpop.f32.mrf.mxu0
      %v2612 = vadd.f32 %v2423, %v2611
      %v2613 = vpop.f32.mrf.mxu0
      %v2614 = vadd.f32 %v2423, %v2613
      %2615 = vmatmul.bf16.gmra.mxu0 %v1533
      %v2616 = vpop.f32.mrf.mxu0
      %v2617 = vadd.f32 %v2423, %v2616
      %v2618 = vpop.f32.mrf.mxu0
      %v2619 = vadd.f32 %v2423, %v2618
      %2620 = vmatmul.bf16.gmra.mxu0 %v1535
      %v2621 = vpop.f32.mrf.mxu0
      %v2622 = vadd.f32 %v2423, %v2621
      %v2623 = vpop.f32.mrf.mxu0
      %v2624 = vadd.f32 %v2423, %v2623
      %2625 = vmatmul.bf16.gmra.mxu0 %v1537
      %v2626 = vpop.f32.mrf.mxu0
      %v2627 = vadd.f32 %v2423, %v2626
      %v2628 = vpop.f32.mrf.mxu0
      %v2629 = vadd.f32 %v2423, %v2628
      %2630 = vmatmul.bf16.gmra.mxu0 %v1539
      %v2631 = vpop.f32.mrf.mxu0
      %v2632 = vadd.f32 %v2423, %v2631
      %v2633 = vpop.f32.mrf.mxu0
      %v2634 = vadd.f32 %v2423, %v2633
      %2635 = vdwg.mxu0
      %2636 = vmatpush.bf16.msra.mxu0 %v2553
      %2637 = vmatpush.bf16.msra.mxu0 %v2551
      %2638 = vmatpush.bf16.msra.mxu0 %v2549
      %2639 = vmatpush.bf16.msra.mxu0 %v2547
      %2640 = vmatpush.bf16.msra.mxu0 %v2545
      %2641 = vmatpush.bf16.msra.mxu0 %v2543
      %2642 = vmatpush.bf16.msra.mxu0 %v2541
      %2643 = vmatpush.bf16.msra.mxu0 %v2539
      %2644 = vmatmul.bf16.gmra.mxu0 %v1526
      %v2645 = vpop.f32.mrf.mxu0
      %v2646 = vadd.f32 %v2597, %v2645
      %v2647 = vpop.f32.mrf.mxu0
      %v2648 = vadd.f32 %v2599, %v2647
      %2649 = vmatmul.bf16.gmra.mxu0 %v1528
      %v2650 = vpop.f32.mrf.mxu0
      %v2651 = vadd.f32 %v2602, %v2650
      %v2652 = vpop.f32.mrf.mxu0
      %v2653 = vadd.f32 %v2604, %v2652
      %2654 = vmatmul.bf16.gmra.mxu0 %v1530
      %v2655 = vpop.f32.mrf.mxu0
      %v2656 = vadd.f32 %v2607, %v2655
      %v2657 = vpop.f32.mrf.mxu0
      %v2658 = vadd.f32 %v2609, %v2657
      %2659 = vmatmul.bf16.gmra.mxu0 %v1532
      %v2660 = vpop.f32.mrf.mxu0
      %v2661 = vadd.f32 %v2612, %v2660
      %v2662 = vpop.f32.mrf.mxu0
      %v2663 = vadd.f32 %v2614, %v2662
      %2664 = vmatmul.bf16.gmra.mxu0 %v1534
      %v2665 = vpop.f32.mrf.mxu0
      %v2666 = vadd.f32 %v2617, %v2665
      %v2667 = vpop.f32.mrf.mxu0
      %v2668 = vadd.f32 %v2619, %v2667
      %2669 = vmatmul.bf16.gmra.mxu0 %v1536
      %v2670 = vpop.f32.mrf.mxu0
      %v2671 = vadd.f32 %v2622, %v2670
      %v2672 = vpop.f32.mrf.mxu0
      %v2673 = vadd.f32 %v2624, %v2672
      %2674 = vmatmul.bf16.gmra.mxu0 %v1538
      %v2675 = vpop.f32.mrf.mxu0
      %v2676 = vadd.f32 %v2627, %v2675
      %v2677 = vpop.f32.mrf.mxu0
      %v2678 = vadd.f32 %v2629, %v2677
      %2679 = vmatmul.bf16.gmra.mxu0 %v1540
      %v2680 = vpop.f32.mrf.mxu0
      %v2681 = vadd.f32 %v2632, %v2680
      %v2682 = vpop.f32.mrf.mxu0
      %v2683 = vadd.f32 %v2634, %v2682
      %2684 = vdwg.mxu0
      %2685 = vmatpush.bf16.msra.mxu0 %v2538
      %2686 = vmatpush.bf16.msra.mxu0 %v2536
      %2687 = vmatpush.bf16.msra.mxu0 %v2534
      %2688 = vmatpush.bf16.msra.mxu0 %v2532
      %2689 = vmatpush.bf16.msra.mxu0 %v2530
      %2690 = vmatpush.bf16.msra.mxu0 %v2528
      %2691 = vmatpush.bf16.msra.mxu0 %v2526
      %2692 = vmatpush.bf16.msra.mxu0 %v2524
      %2693 = vmatmul.bf16.gmra.mxu0 %v1525
      %v2694 = vpop.f32.mrf.mxu0
      %v2695 = vadd.f32 %v2424, %v2694
      %v2696 = vpop.f32.mrf.mxu0
      %v2697 = vadd.f32 %v2424, %v2696
      %2698 = vmatmul.bf16.gmra.mxu0 %v1527
      %v2699 = vpop.f32.mrf.mxu0
      %v2700 = vadd.f32 %v2424, %v2699
      %v2701 = vpop.f32.mrf.mxu0
      %v2702 = vadd.f32 %v2424, %v2701
      %2703 = vmatmul.bf16.gmra.mxu0 %v1529
      %v2704 = vpop.f32.mrf.mxu0
      %v2705 = vadd.f32 %v2424, %v2704
      %v2706 = vpop.f32.mrf.mxu0
      %v2707 = vadd.f32 %v2424, %v2706
      %2708 = vmatmul.bf16.gmra.mxu0 %v1531
      %v2709 = vpop.f32.mrf.mxu0
      %v2710 = vadd.f32 %v2424, %v2709
      %v2711 = vpop.f32.mrf.mxu0
      %v2712 = vadd.f32 %v2424, %v2711
      %2713 = vmatmul.bf16.gmra.mxu0 %v1533
      %v2714 = vpop.f32.mrf.mxu0
      %v2715 = vadd.f32 %v2424, %v2714
      %v2716 = vpop.f32.mrf.mxu0
      %v2717 = vadd.f32 %v2424, %v2716
      %2718 = vmatmul.bf16.gmra.mxu0 %v1535
      %v2719 = vpop.f32.mrf.mxu0
      %v2720 = vadd.f32 %v2424, %v2719
      %v2721 = vpop.f32.mrf.mxu0
      %v2722 = vadd.f32 %v2424, %v2721
      %2723 = vmatmul.bf16.gmra.mxu0 %v1537
      %v2724 = vpop.f32.mrf.mxu0
      %v2725 = vadd.f32 %v2424, %v2724
      %v2726 = vpop.f32.mrf.mxu0
      %v2727 = vadd.f32 %v2424, %v2726
      %2728 = vmatmul.bf16.gmra.mxu0 %v1539
      %v2729 = vpop.f32.mrf.mxu0
      %v2730 = vadd.f32 %v2424, %v2729
      %v2731 = vpop.f32.mrf.mxu0
      %v2732 = vadd.f32 %v2424, %v2731
      %2733 = vdwg.mxu0
      %2734 = vmatpush.bf16.msra.mxu0 %v2554
      %2735 = vmatpush.bf16.msra.mxu0 %v2552
      %2736 = vmatpush.bf16.msra.mxu0 %v2550
      %2737 = vmatpush.bf16.msra.mxu0 %v2548
      %2738 = vmatpush.bf16.msra.mxu0 %v2546
      %2739 = vmatpush.bf16.msra.mxu0 %v2544
      %2740 = vmatpush.bf16.msra.mxu0 %v2542
      %2741 = vmatpush.bf16.msra.mxu0 %v2540
      %2742 = vmatmul.bf16.gmra.mxu0 %v1526
      %v2743 = vpop.f32.mrf.mxu0
      %v2744 = vadd.f32 %v2695, %v2743
      %v2745 = vpop.f32.mrf.mxu0
      %v2746 = vadd.f32 %v2697, %v2745
      %2747 = vmatmul.bf16.gmra.mxu0 %v1528
      %v2748 = vpop.f32.mrf.mxu0
      %v2749 = vadd.f32 %v2700, %v2748
      %v2750 = vpop.f32.mrf.mxu0
      %v2751 = vadd.f32 %v2702, %v2750
      %2752 = vmatmul.bf16.gmra.mxu0 %v1530
      %v2753 = vpop.f32.mrf.mxu0
      %v2754 = vadd.f32 %v2705, %v2753
      %v2755 = vpop.f32.mrf.mxu0
      %v2756 = vadd.f32 %v2707, %v2755
      %2757 = vmatmul.bf16.gmra.mxu0 %v1532
      %v2758 = vpop.f32.mrf.mxu0
      %v2759 = vadd.f32 %v2710, %v2758
      %v2760 = vpop.f32.mrf.mxu0
      %v2761 = vadd.f32 %v2712, %v2760
      %2762 = vmatmul.bf16.gmra.mxu0 %v1534
      %v2763 = vpop.f32.mrf.mxu0
      %v2764 = vadd.f32 %v2715, %v2763
      %v2765 = vpop.f32.mrf.mxu0
      %v2766 = vadd.f32 %v2717, %v2765
      %2767 = vmatmul.bf16.gmra.mxu0 %v1536
      %v2768 = vpop.f32.mrf.mxu0
      %v2769 = vadd.f32 %v2720, %v2768
      %v2770 = vpop.f32.mrf.mxu0
      %v2771 = vadd.f32 %v2722, %v2770
      %2772 = vmatmul.bf16.gmra.mxu0 %v1538
      %v2773 = vpop.f32.mrf.mxu0
      %v2774 = vadd.f32 %v2725, %v2773
      %v2775 = vpop.f32.mrf.mxu0
      %v2776 = vadd.f32 %v2727, %v2775
      %2777 = vmatmul.bf16.gmra.mxu0 %v1540
      %v2778 = vpop.f32.mrf.mxu0
      %v2779 = vadd.f32 %v2730, %v2778
      %v2780 = vpop.f32.mrf.mxu0
      %v2781 = vadd.f32 %v2732, %v2780
      %2782 = vdwg.mxu0
      %2783 = vmatpush.bf16.msra.mxu0 %v2537
      %2784 = vmatpush.bf16.msra.mxu0 %v2535
      %2785 = vmatpush.bf16.msra.mxu0 %v2533
      %2786 = vmatpush.bf16.msra.mxu0 %v2531
      %2787 = vmatpush.bf16.msra.mxu0 %v2529
      %2788 = vmatpush.bf16.msra.mxu0 %v2527
      %2789 = vmatpush.bf16.msra.mxu0 %v2525
      %2790 = vmatpush.bf16.msra.mxu0 %v2523
      %2791 = vmatmul.bf16.gmra.mxu0 %v2373
      %v2792 = vpop.f32.mrf.mxu0
      %v2793 = vadd.f32 %v2423, %v2792
      %v2794 = vpop.f32.mrf.mxu0
      %v2795 = vadd.f32 %v2423, %v2794
      %2796 = vmatmul.bf16.gmra.mxu0 %v2375
      %v2797 = vpop.f32.mrf.mxu0
      %v2798 = vadd.f32 %v2423, %v2797
      %v2799 = vpop.f32.mrf.mxu0
      %v2800 = vadd.f32 %v2423, %v2799
      %2801 = vmatmul.bf16.gmra.mxu0 %v2377
      %v2802 = vpop.f32.mrf.mxu0
      %v2803 = vadd.f32 %v2423, %v2802
      %v2804 = vpop.f32.mrf.mxu0
      %v2805 = vadd.f32 %v2423, %v2804
      %2806 = vmatmul.bf16.gmra.mxu0 %v2379
      %v2807 = vpop.f32.mrf.mxu0
      %v2808 = vadd.f32 %v2423, %v2807
      %v2809 = vpop.f32.mrf.mxu0
      %v2810 = vadd.f32 %v2423, %v2809
      %2811 = vmatmul.bf16.gmra.mxu0 %v2381
      %v2812 = vpop.f32.mrf.mxu0
      %v2813 = vadd.f32 %v2423, %v2812
      %v2814 = vpop.f32.mrf.mxu0
      %v2815 = vadd.f32 %v2423, %v2814
      %2816 = vmatmul.bf16.gmra.mxu0 %v2383
      %v2817 = vpop.f32.mrf.mxu0
      %v2818 = vadd.f32 %v2423, %v2817
      %v2819 = vpop.f32.mrf.mxu0
      %v2820 = vadd.f32 %v2423, %v2819
      %2821 = vmatmul.bf16.gmra.mxu0 %v2385
      %v2822 = vpop.f32.mrf.mxu0
      %v2823 = vadd.f32 %v2423, %v2822
      %v2824 = vpop.f32.mrf.mxu0
      %v2825 = vadd.f32 %v2423, %v2824
      %2826 = vmatmul.bf16.gmra.mxu0 %v2387
      %v2827 = vpop.f32.mrf.mxu0
      %v2828 = vadd.f32 %v2423, %v2827
      %v2829 = vpop.f32.mrf.mxu0
      %v2830 = vadd.f32 %v2423, %v2829
      %2831 = vdwg.mxu0
      %2832 = vmatpush.bf16.msra.mxu0 %v2553
      %2833 = vmatpush.bf16.msra.mxu0 %v2551
      %2834 = vmatpush.bf16.msra.mxu0 %v2549
      %2835 = vmatpush.bf16.msra.mxu0 %v2547
      %2836 = vmatpush.bf16.msra.mxu0 %v2545
      %2837 = vmatpush.bf16.msra.mxu0 %v2543
      %2838 = vmatpush.bf16.msra.mxu0 %v2541
      %2839 = vmatpush.bf16.msra.mxu0 %v2539
      %2840 = vmatmul.bf16.gmra.mxu0 %v2374
      %v2841 = vpop.f32.mrf.mxu0
      %v2842 = vadd.f32 %v2793, %v2841
      %v2843 = vpop.f32.mrf.mxu0
      %v2844 = vadd.f32 %v2795, %v2843
      %2845 = vmatmul.bf16.gmra.mxu0 %v2376
      %v2846 = vpop.f32.mrf.mxu0
      %v2847 = vadd.f32 %v2798, %v2846
      %v2848 = vpop.f32.mrf.mxu0
      %v2849 = vadd.f32 %v2800, %v2848
      %2850 = vmatmul.bf16.gmra.mxu0 %v2378
      %v2851 = vpop.f32.mrf.mxu0
      %v2852 = vadd.f32 %v2803, %v2851
      %v2853 = vpop.f32.mrf.mxu0
      %v2854 = vadd.f32 %v2805, %v2853
      %2855 = vmatmul.bf16.gmra.mxu0 %v2380
      %v2856 = vpop.f32.mrf.mxu0
      %v2857 = vadd.f32 %v2808, %v2856
      %v2858 = vpop.f32.mrf.mxu0
      %v2859 = vadd.f32 %v2810, %v2858
      %2860 = vmatmul.bf16.gmra.mxu0 %v2382
      %v2861 = vpop.f32.mrf.mxu0
      %v2862 = vadd.f32 %v2813, %v2861
      %v2863 = vpop.f32.mrf.mxu0
      %v2864 = vadd.f32 %v2815, %v2863
      %2865 = vmatmul.bf16.gmra.mxu0 %v2384
      %v2866 = vpop.f32.mrf.mxu0
      %v2867 = vadd.f32 %v2818, %v2866
      %v2868 = vpop.f32.mrf.mxu0
      %v2869 = vadd.f32 %v2820, %v2868
      %2870 = vmatmul.bf16.gmra.mxu0 %v2386
      %v2871 = vpop.f32.mrf.mxu0
      %v2872 = vadd.f32 %v2823, %v2871
      %v2873 = vpop.f32.mrf.mxu0
      %v2874 = vadd.f32 %v2825, %v2873
      %2875 = vmatmul.bf16.gmra.mxu0 %v2388
      %v2876 = vpop.f32.mrf.mxu0
      %v2877 = vadd.f32 %v2828, %v2876
      %v2878 = vpop.f32.mrf.mxu0
      %v2879 = vadd.f32 %v2830, %v2878
      %2880 = vdwg.mxu0
      %2881 = vmatpush.bf16.msra.mxu0 %v2538
      %2882 = vmatpush.bf16.msra.mxu0 %v2536
      %2883 = vmatpush.bf16.msra.mxu0 %v2534
      %2884 = vmatpush.bf16.msra.mxu0 %v2532
      %2885 = vmatpush.bf16.msra.mxu0 %v2530
      %2886 = vmatpush.bf16.msra.mxu0 %v2528
      %2887 = vmatpush.bf16.msra.mxu0 %v2526
      %2888 = vmatpush.bf16.msra.mxu0 %v2524
      %2889 = vmatmul.bf16.gmra.mxu0 %v2373
      %v2890 = vpop.f32.mrf.mxu0
      %v2891 = vadd.f32 %v2424, %v2890
      %v2892 = vpop.f32.mrf.mxu0
      %v2893 = vadd.f32 %v2424, %v2892
      %2894 = vmatmul.bf16.gmra.mxu0 %v2375
      %v2895 = vpop.f32.mrf.mxu0
      %v2896 = vadd.f32 %v2424, %v2895
      %v2897 = vpop.f32.mrf.mxu0
      %v2898 = vadd.f32 %v2424, %v2897
      %2899 = vmatmul.bf16.gmra.mxu0 %v2377
      %v2900 = vpop.f32.mrf.mxu0
      %v2901 = vadd.f32 %v2424, %v2900
      %v2902 = vpop.f32.mrf.mxu0
      %v2903 = vadd.f32 %v2424, %v2902
      %2904 = vmatmul.bf16.gmra.mxu0 %v2379
      %v2905 = vpop.f32.mrf.mxu0
      %v2906 = vadd.f32 %v2424, %v2905
      %v2907 = vpop.f32.mrf.mxu0
      %v2908 = vadd.f32 %v2424, %v2907
      %2909 = vmatmul.bf16.gmra.mxu0 %v2381
      %v2910 = vpop.f32.mrf.mxu0
      %v2911 = vadd.f32 %v2424, %v2910
      %v2912 = vpop.f32.mrf.mxu0
      %v2913 = vadd.f32 %v2424, %v2912
      %2914 = vmatmul.bf16.gmra.mxu0 %v2383
      %v2915 = vpop.f32.mrf.mxu0
      %v2916 = vadd.f32 %v2424, %v2915
      %v2917 = vpop.f32.mrf.mxu0
      %v2918 = vadd.f32 %v2424, %v2917
      %2919 = vmatmul.bf16.gmra.mxu0 %v2385
      %v2920 = vpop.f32.mrf.mxu0
      %v2921 = vadd.f32 %v2424, %v2920
      %v2922 = vpop.f32.mrf.mxu0
      %v2923 = vadd.f32 %v2424, %v2922
      %2924 = vmatmul.bf16.gmra.mxu0 %v2387
      %v2925 = vpop.f32.mrf.mxu0
      %v2926 = vadd.f32 %v2424, %v2925
      %v2927 = vpop.f32.mrf.mxu0
      %v2928 = vadd.f32 %v2424, %v2927
      %2929 = vdwg.mxu0
      %2930 = vmatpush.bf16.msra.mxu0 %v2554
      %2931 = vmatpush.bf16.msra.mxu0 %v2552
      %2932 = vmatpush.bf16.msra.mxu0 %v2550
      %2933 = vmatpush.bf16.msra.mxu0 %v2548
      %2934 = vmatpush.bf16.msra.mxu0 %v2546
      %2935 = vmatpush.bf16.msra.mxu0 %v2544
      %2936 = vmatpush.bf16.msra.mxu0 %v2542
      %2937 = vmatpush.bf16.msra.mxu0 %v2540
      %2938 = vmatmul.bf16.gmra.mxu0 %v2374
      %v2939 = vpop.f32.mrf.mxu0
      %v2940 = vadd.f32 %v2891, %v2939
      %v2941 = vpop.f32.mrf.mxu0
      %v2942 = vadd.f32 %v2893, %v2941
      %2943 = vmatmul.bf16.gmra.mxu0 %v2376
      %v2944 = vpop.f32.mrf.mxu0
      %v2945 = vadd.f32 %v2896, %v2944
      %v2946 = vpop.f32.mrf.mxu0
      %v2947 = vadd.f32 %v2898, %v2946
      %2948 = vmatmul.bf16.gmra.mxu0 %v2378
      %v2949 = vpop.f32.mrf.mxu0
      %v2950 = vadd.f32 %v2901, %v2949
      %v2951 = vpop.f32.mrf.mxu0
      %v2952 = vadd.f32 %v2903, %v2951
      %2953 = vmatmul.bf16.gmra.mxu0 %v2380
      %v2954 = vpop.f32.mrf.mxu0
      %v2955 = vadd.f32 %v2906, %v2954
      %v2956 = vpop.f32.mrf.mxu0
      %v2957 = vadd.f32 %v2908, %v2956
      %2958 = vmatmul.bf16.gmra.mxu0 %v2382
      %v2959 = vpop.f32.mrf.mxu0
      %v2960 = vadd.f32 %v2911, %v2959
      %v2961 = vpop.f32.mrf.mxu0
      %v2962 = vadd.f32 %v2913, %v2961
      %2963 = vmatmul.bf16.gmra.mxu0 %v2384
      %v2964 = vpop.f32.mrf.mxu0
      %v2965 = vadd.f32 %v2916, %v2964
      %v2966 = vpop.f32.mrf.mxu0
      %v2967 = vadd.f32 %v2918, %v2966
      %2968 = vmatmul.bf16.gmra.mxu0 %v2386
      %v2969 = vpop.f32.mrf.mxu0
      %v2970 = vadd.f32 %v2921, %v2969
      %v2971 = vpop.f32.mrf.mxu0
      %v2972 = vadd.f32 %v2923, %v2971
      %2973 = vmatmul.bf16.gmra.mxu0 %v2388
      %v2974 = vpop.f32.mrf.mxu0
      %v2975 = vadd.f32 %v2926, %v2974
      %v2976 = vpop.f32.mrf.mxu0
      %v2977 = vadd.f32 %v2928, %v2976
      %2978 = vdwg.mxu0
      %v2979 = vadd.f32 %v2646, %v2744
      %2980 = vadd.xlane.f32.xlu0 %v2979
      %v2981 = vpop.xlane.xlu0 %2980
      %v2982 = vadd.f32 %v2648, %v2746
      %2983 = vadd.xlane.f32.xlu0 %v2982
      %v2984 = vpop.xlane.xlu0 %2983
      %v2985 = vadd.f32 %v2651, %v2749
      %2986 = vadd.xlane.f32.xlu0 %v2985
      %v2987 = vpop.xlane.xlu0 %2986
      %v2988 = vadd.f32 %v2653, %v2751
      %2989 = vadd.xlane.f32.xlu0 %v2988
      %v2990 = vpop.xlane.xlu0 %2989
      %v2991 = vadd.f32 %v2656, %v2754
      %2992 = vadd.xlane.f32.xlu0 %v2991
      %v2993 = vpop.xlane.xlu0 %2992
      %v2994 = vadd.f32 %v2658, %v2756
      %2995 = vadd.xlane.f32.xlu0 %v2994
      %v2996 = vpop.xlane.xlu0 %2995
      %v2997 = vadd.f32 %v2661, %v2759
      %2998 = vadd.xlane.f32.xlu0 %v2997
      %v2999 = vpop.xlane.xlu0 %2998
      %v3000 = vadd.f32 %v2663, %v2761
      %3001 = vadd.xlane.f32.xlu0 %v3000
      %v3002 = vpop.xlane.xlu0 %3001
      %v3003 = vadd.f32 %v2666, %v2764
      %3004 = vadd.xlane.f32.xlu0 %v3003
      %v3005 = vpop.xlane.xlu0 %3004
      %v3006 = vadd.f32 %v2668, %v2766
      %3007 = vadd.xlane.f32.xlu0 %v3006
      %v3008 = vpop.xlane.xlu0 %3007
      %v3009 = vadd.f32 %v2671, %v2769
      %3010 = vadd.xlane.f32.xlu0 %v3009
      %v3011 = vpop.xlane.xlu0 %3010
      %v3012 = vadd.f32 %v2673, %v2771
      %3013 = vadd.xlane.f32.xlu0 %v3012
      %v3014 = vpop.xlane.xlu0 %3013
      %v3015 = vadd.f32 %v2676, %v2774
      %3016 = vadd.xlane.f32.xlu0 %v3015
      %v3017 = vpop.xlane.xlu0 %3016
      %v3018 = vadd.f32 %v2678, %v2776
      %3019 = vadd.xlane.f32.xlu0 %v3018
      %v3020 = vpop.xlane.xlu0 %3019
      %v3021 = vadd.f32 %v2681, %v2779
      %3022 = vadd.xlane.f32.xlu0 %v3021
      %v3023 = vpop.xlane.xlu0 %3022
      %v3024 = vadd.f32 %v2683, %v2781
      %3025 = vadd.xlane.f32.xlu0 %v3024
      %v3026 = vpop.xlane.xlu0 %3025
      %v3027 = vmul.f32 %v2981, %v1140
      %v3028 = vmul.f32 %v2984, %v1140
      %v3029 = vmul.f32 %v2987, %v1140
      %v3030 = vmul.f32 %v2990, %v1140
      %v3031 = vmul.f32 %v2993, %v1140
      %v3032 = vmul.f32 %v2996, %v1140
      %v3033 = vmul.f32 %v2999, %v1140
      %v3034 = vmul.f32 %v3002, %v1140
      %v3035 = vmul.f32 %v3005, %v1140
      %v3036 = vmul.f32 %v3008, %v1140
      %v3037 = vmul.f32 %v3011, %v1140
      %v3038 = vmul.f32 %v3014, %v1140
      %v3039 = vmul.f32 %v3017, %v1140
      %v3040 = vmul.f32 %v3020, %v1140
      %v3041 = vmul.f32 %v3023, %v1140
      %v3042 = vmul.f32 %v3026, %v1140
      %v3043 = vsub.f32 %v2646, %v3027
      %v3044 = vsub.f32 %v2744, %v3027
      %v3045 = vsub.f32 %v2648, %v3028
      %v3046 = vsub.f32 %v2746, %v3028
      %v3047 = vsub.f32 %v2651, %v3029
      %v3048 = vsub.f32 %v2749, %v3029
      %v3049 = vsub.f32 %v2653, %v3030
      %v3050 = vsub.f32 %v2751, %v3030
      %v3051 = vsub.f32 %v2656, %v3031
      %v3052 = vsub.f32 %v2754, %v3031
      %v3053 = vsub.f32 %v2658, %v3032
      %v3054 = vsub.f32 %v2756, %v3032
      %v3055 = vsub.f32 %v2661, %v3033
      %v3056 = vsub.f32 %v2759, %v3033
      %v3057 = vsub.f32 %v2663, %v3034
      %v3058 = vsub.f32 %v2761, %v3034
      %v3059 = vsub.f32 %v2666, %v3035
      %v3060 = vsub.f32 %v2764, %v3035
      %v3061 = vsub.f32 %v2668, %v3036
      %v3062 = vsub.f32 %v2766, %v3036
      %v3063 = vsub.f32 %v2671, %v3037
      %v3064 = vsub.f32 %v2769, %v3037
      %v3065 = vsub.f32 %v2673, %v3038
      %v3066 = vsub.f32 %v2771, %v3038
      %v3067 = vsub.f32 %v2676, %v3039
      %v3068 = vsub.f32 %v2774, %v3039
      %v3069 = vsub.f32 %v2678, %v3040
      %v3070 = vsub.f32 %v2776, %v3040
      %v3071 = vsub.f32 %v2681, %v3041
      %v3072 = vsub.f32 %v2779, %v3041
      %v3073 = vsub.f32 %v2683, %v3042
      %v3074 = vsub.f32 %v2781, %v3042
      %v3075 = vmul.f32 %v3043, %v3043
      %v3076 = vmul.f32 %v3044, %v3044
      %v3077 = vmul.f32 %v3045, %v3045
      %v3078 = vmul.f32 %v3046, %v3046
      %v3079 = vmul.f32 %v3047, %v3047
      %v3080 = vmul.f32 %v3048, %v3048
      %v3081 = vmul.f32 %v3049, %v3049
      %v3082 = vmul.f32 %v3050, %v3050
      %v3083 = vmul.f32 %v3051, %v3051
      %v3084 = vmul.f32 %v3052, %v3052
      %v3085 = vmul.f32 %v3053, %v3053
      %v3086 = vmul.f32 %v3054, %v3054
      %v3087 = vmul.f32 %v3055, %v3055
      %v3088 = vmul.f32 %v3056, %v3056
      %v3089 = vmul.f32 %v3057, %v3057
      %v3090 = vmul.f32 %v3058, %v3058
      %v3091 = vmul.f32 %v3059, %v3059
      %v3092 = vmul.f32 %v3060, %v3060
      %v3093 = vmul.f32 %v3061, %v3061
      %v3094 = vmul.f32 %v3062, %v3062
      %v3095 = vmul.f32 %v3063, %v3063
      %v3096 = vmul.f32 %v3064, %v3064
      %v3097 = vmul.f32 %v3065, %v3065
      %v3098 = vmul.f32 %v3066, %v3066
      %v3099 = vmul.f32 %v3067, %v3067
      %v3100 = vmul.f32 %v3068, %v3068
      %v3101 = vmul.f32 %v3069, %v3069
      %v3102 = vmul.f32 %v3070, %v3070
      %v3103 = vmul.f32 %v3071, %v3071
      %v3104 = vmul.f32 %v3072, %v3072
      %v3105 = vmul.f32 %v3073, %v3073
      %v3106 = vmul.f32 %v3074, %v3074
      %v3107 = vadd.f32 %v3075, %v3076
      %3108 = vadd.xlane.f32.xlu0 %v3107
      %v3109 = vpop.xlane.xlu0 %3108
      %v3110 = vadd.f32 %v3077, %v3078
      %3111 = vadd.xlane.f32.xlu0 %v3110
      %v3112 = vpop.xlane.xlu0 %3111
      %v3113 = vadd.f32 %v3079, %v3080
      %3114 = vadd.xlane.f32.xlu0 %v3113
      %v3115 = vpop.xlane.xlu0 %3114
      %v3116 = vadd.f32 %v3081, %v3082
      %3117 = vadd.xlane.f32.xlu0 %v3116
      %v3118 = vpop.xlane.xlu0 %3117
      %v3119 = vadd.f32 %v3083, %v3084
      %3120 = vadd.xlane.f32.xlu0 %v3119
      %v3121 = vpop.xlane.xlu0 %3120
      %v3122 = vadd.f32 %v3085, %v3086
      %3123 = vadd.xlane.f32.xlu0 %v3122
      %v3124 = vpop.xlane.xlu0 %3123
      %v3125 = vadd.f32 %v3087, %v3088
      %3126 = vadd.xlane.f32.xlu0 %v3125
      %v3127 = vpop.xlane.xlu0 %3126
      %v3128 = vadd.f32 %v3089, %v3090
      %3129 = vadd.xlane.f32.xlu0 %v3128
      %v3130 = vpop.xlane.xlu0 %3129
      %v3131 = vadd.f32 %v3091, %v3092
      %3132 = vadd.xlane.f32.xlu0 %v3131
      %v3133 = vpop.xlane.xlu0 %3132
      %v3134 = vadd.f32 %v3093, %v3094
      %3135 = vadd.xlane.f32.xlu0 %v3134
      %v3136 = vpop.xlane.xlu0 %3135
      %v3137 = vadd.f32 %v3095, %v3096
      %3138 = vadd.xlane.f32.xlu0 %v3137
      %v3139 = vpop.xlane.xlu0 %3138
      %v3140 = vadd.f32 %v3097, %v3098
      %3141 = vadd.xlane.f32.xlu0 %v3140
      %v3142 = vpop.xlane.xlu0 %3141
      %v3143 = vadd.f32 %v3099, %v3100
      %3144 = vadd.xlane.f32.xlu0 %v3143
      %v3145 = vpop.xlane.xlu0 %3144
      %v3146 = vadd.f32 %v3101, %v3102
      %3147 = vadd.xlane.f32.xlu0 %v3146
      %v3148 = vpop.xlane.xlu0 %3147
      %v3149 = vadd.f32 %v3103, %v3104
      %3150 = vadd.xlane.f32.xlu0 %v3149
      %v3151 = vpop.xlane.xlu0 %3150
      %v3152 = vadd.f32 %v3105, %v3106
      %3153 = vadd.xlane.f32.xlu0 %v3152
      %v3154 = vpop.xlane.xlu0 %3153
      %v3155 = vmul.f32 %v3109, %v1140
      %v3156 = vmul.f32 %v3112, %v1140
      %v3157 = vmul.f32 %v3115, %v1140
      %v3158 = vmul.f32 %v3118, %v1140
      %v3159 = vmul.f32 %v3121, %v1140
      %v3160 = vmul.f32 %v3124, %v1140
      %v3161 = vmul.f32 %v3127, %v1140
      %v3162 = vmul.f32 %v3130, %v1140
      %v3163 = vmul.f32 %v3133, %v1140
      %v3164 = vmul.f32 %v3136, %v1140
      %v3165 = vmul.f32 %v3139, %v1140
      %v3166 = vmul.f32 %v3142, %v1140
      %v3167 = vmul.f32 %v3145, %v1140
      %v3168 = vmul.f32 %v3148, %v1140
      %v3169 = vmul.f32 %v3151, %v1140
      %v3170 = vmul.f32 %v3154, %v1140
      %v3171 = vadd.f32 %v3155, 1e-05
      %v3172 = vadd.f32 %v3156, 1e-05
      %v3173 = vadd.f32 %v3157, 1e-05
      %v3174 = vadd.f32 %v3158, 1e-05
      %v3175 = vadd.f32 %v3159, 1e-05
      %v3176 = vadd.f32 %v3160, 1e-05
      %v3177 = vadd.f32 %v3161, 1e-05
      %v3178 = vadd.f32 %v3162, 1e-05
      %v3179 = vadd.f32 %v3163, 1e-05
      %v3180 = vadd.f32 %v3164, 1e-05
      %v3181 = vadd.f32 %v3165, 1e-05
      %v3182 = vadd.f32 %v3166, 1e-05
      %v3183 = vadd.f32 %v3167, 1e-05
      %v3184 = vadd.f32 %v3168, 1e-05
      %v3185 = vadd.f32 %v3169, 1e-05
      %v3186 = vadd.f32 %v3170, 1e-05
      %v3187 = vrsqrt.pop %v3171
      %v3188 = vmul.f32 %v3187, %v3171
      %v3189 = vmul.f32 %v3188, %v3187
      %v3190 = vmul.f32 0.5, %v3189
      %v3191 = vsub.f32 1.5, %v3190
      %v3192 = vmul.f32 %v3187, %v3191
      %vm3193 = vweird.f32 %v3171
      %vm3194 = vweird.f32 %v3187
      %vm3195 = vmor %vm3193, %vm3194
      %v3196 = vsel %vm3195, %v3187, %v3192
      %v3197 = vrsqrt.pop %v3172
      %v3198 = vmul.f32 %v3197, %v3172
      %v3199 = vmul.f32 %v3198, %v3197
      %v3200 = vmul.f32 0.5, %v3199
      %v3201 = vsub.f32 1.5, %v3200
      %v3202 = vmul.f32 %v3197, %v3201
      %vm3203 = vweird.f32 %v3172
      %vm3204 = vweird.f32 %v3197
      %vm3205 = vmor %vm3203, %vm3204
      %v3206 = vsel %vm3205, %v3197, %v3202
      %v3207 = vrsqrt.pop %v3173
      %v3208 = vmul.f32 %v3207, %v3173
      %v3209 = vmul.f32 %v3208, %v3207
      %v3210 = vmul.f32 0.5, %v3209
      %v3211 = vsub.f32 1.5, %v3210
      %v3212 = vmul.f32 %v3207, %v3211
      %vm3213 = vweird.f32 %v3173
      %vm3214 = vweird.f32 %v3207
      %vm3215 = vmor %vm3213, %vm3214
      %v3216 = vsel %vm3215, %v3207, %v3212
      %v3217 = vrsqrt.pop %v3174
      %v3218 = vmul.f32 %v3217, %v3174
      %v3219 = vmul.f32 %v3218, %v3217
      %v3220 = vmul.f32 0.5, %v3219
      %v3221 = vsub.f32 1.5, %v3220
      %v3222 = vmul.f32 %v3217, %v3221
      %vm3223 = vweird.f32 %v3174
      %vm3224 = vweird.f32 %v3217
      %vm3225 = vmor %vm3223, %vm3224
      %v3226 = vsel %vm3225, %v3217, %v3222
      %v3227 = vrsqrt.pop %v3175
      %v3228 = vmul.f32 %v3227, %v3175
      %v3229 = vmul.f32 %v3228, %v3227
      %v3230 = vmul.f32 0.5, %v3229
      %v3231 = vsub.f32 1.5, %v3230
      %v3232 = vmul.f32 %v3227, %v3231
      %vm3233 = vweird.f32 %v3175
      %vm3234 = vweird.f32 %v3227
      %vm3235 = vmor %vm3233, %vm3234
      %v3236 = vsel %vm3235, %v3227, %v3232
      %v3237 = vrsqrt.pop %v3176
      %v3238 = vmul.f32 %v3237, %v3176
      %v3239 = vmul.f32 %v3238, %v3237
      %v3240 = vmul.f32 0.5, %v3239
      %v3241 = vsub.f32 1.5, %v3240
      %v3242 = vmul.f32 %v3237, %v3241
      %vm3243 = vweird.f32 %v3176
      %vm3244 = vweird.f32 %v3237
      %vm3245 = vmor %vm3243, %vm3244
      %v3246 = vsel %vm3245, %v3237, %v3242
      %v3247 = vrsqrt.pop %v3177
      %v3248 = vmul.f32 %v3247, %v3177
      %v3249 = vmul.f32 %v3248, %v3247
      %v3250 = vmul.f32 0.5, %v3249
      %v3251 = vsub.f32 1.5, %v3250
      %v3252 = vmul.f32 %v3247, %v3251
      %vm3253 = vweird.f32 %v3177
      %vm3254 = vweird.f32 %v3247
      %vm3255 = vmor %vm3253, %vm3254
      %v3256 = vsel %vm3255, %v3247, %v3252
      %v3257 = vrsqrt.pop %v3178
      %v3258 = vmul.f32 %v3257, %v3178
      %v3259 = vmul.f32 %v3258, %v3257
      %v3260 = vmul.f32 0.5, %v3259
      %v3261 = vsub.f32 1.5, %v3260
      %v3262 = vmul.f32 %v3257, %v3261
      %vm3263 = vweird.f32 %v3178
      %vm3264 = vweird.f32 %v3257
      %vm3265 = vmor %vm3263, %vm3264
      %v3266 = vsel %vm3265, %v3257, %v3262
      %v3267 = vrsqrt.pop %v3179
      %v3268 = vmul.f32 %v3267, %v3179
      %v3269 = vmul.f32 %v3268, %v3267
      %v3270 = vmul.f32 0.5, %v3269
      %v3271 = vsub.f32 1.5, %v3270
      %v3272 = vmul.f32 %v3267, %v3271
      %vm3273 = vweird.f32 %v3179
      %vm3274 = vweird.f32 %v3267
      %vm3275 = vmor %vm3273, %vm3274
      %v3276 = vsel %vm3275, %v3267, %v3272
      %v3277 = vrsqrt.pop %v3180
      %v3278 = vmul.f32 %v3277, %v3180
      %v3279 = vmul.f32 %v3278, %v3277
      %v3280 = vmul.f32 0.5, %v3279
      %v3281 = vsub.f32 1.5, %v3280
      %v3282 = vmul.f32 %v3277, %v3281
      %vm3283 = vweird.f32 %v3180
      %vm3284 = vweird.f32 %v3277
      %vm3285 = vmor %vm3283, %vm3284
      %v3286 = vsel %vm3285, %v3277, %v3282
      %v3287 = vrsqrt.pop %v3181
      %v3288 = vmul.f32 %v3287, %v3181
      %v3289 = vmul.f32 %v3288, %v3287
      %v3290 = vmul.f32 0.5, %v3289
      %v3291 = vsub.f32 1.5, %v3290
      %v3292 = vmul.f32 %v3287, %v3291
      %vm3293 = vweird.f32 %v3181
      %vm3294 = vweird.f32 %v3287
      %vm3295 = vmor %vm3293, %vm3294
      %v3296 = vsel %vm3295, %v3287, %v3292
      %v3297 = vrsqrt.pop %v3182
      %v3298 = vmul.f32 %v3297, %v3182
      %v3299 = vmul.f32 %v3298, %v3297
      %v3300 = vmul.f32 0.5, %v3299
      %v3301 = vsub.f32 1.5, %v3300
      %v3302 = vmul.f32 %v3297, %v3301
      %vm3303 = vweird.f32 %v3182
      %vm3304 = vweird.f32 %v3297
      %vm3305 = vmor %vm3303, %vm3304
      %v3306 = vsel %vm3305, %v3297, %v3302
      %v3307 = vrsqrt.pop %v3183
      %v3308 = vmul.f32 %v3307, %v3183
      %v3309 = vmul.f32 %v3308, %v3307
      %v3310 = vmul.f32 0.5, %v3309
      %v3311 = vsub.f32 1.5, %v3310
      %v3312 = vmul.f32 %v3307, %v3311
      %vm3313 = vweird.f32 %v3183
      %vm3314 = vweird.f32 %v3307
      %vm3315 = vmor %vm3313, %vm3314
      %v3316 = vsel %vm3315, %v3307, %v3312
      %v3317 = vrsqrt.pop %v3184
      %v3318 = vmul.f32 %v3317, %v3184
      %v3319 = vmul.f32 %v3318, %v3317
      %v3320 = vmul.f32 0.5, %v3319
      %v3321 = vsub.f32 1.5, %v3320
      %v3322 = vmul.f32 %v3317, %v3321
      %vm3323 = vweird.f32 %v3184
      %vm3324 = vweird.f32 %v3317
      %vm3325 = vmor %vm3323, %vm3324
      %v3326 = vsel %vm3325, %v3317, %v3322
      %v3327 = vrsqrt.pop %v3185
      %v3328 = vmul.f32 %v3327, %v3185
      %v3329 = vmul.f32 %v3328, %v3327
      %v3330 = vmul.f32 0.5, %v3329
      %v3331 = vsub.f32 1.5, %v3330
      %v3332 = vmul.f32 %v3327, %v3331
      %vm3333 = vweird.f32 %v3185
      %vm3334 = vweird.f32 %v3327
      %vm3335 = vmor %vm3333, %vm3334
      %v3336 = vsel %vm3335, %v3327, %v3332
      %v3337 = vrsqrt.pop %v3186
      %v3338 = vmul.f32 %v3337, %v3186
      %v3339 = vmul.f32 %v3338, %v3337
      %v3340 = vmul.f32 0.5, %v3339
      %v3341 = vsub.f32 1.5, %v3340
      %v3342 = vmul.f32 %v3337, %v3341
      %vm3343 = vweird.f32 %v3186
      %vm3344 = vweird.f32 %v3337
      %vm3345 = vmor %vm3343, %vm3344
      %v3346 = vsel %vm3345, %v3337, %v3342
      %v3347 = vmul.f32 %v3043, %v3196
      %v3348 = vmul.f32 %v3044, %v3196
      %v3349 = vmul.f32 %v3045, %v3206
      %v3350 = vmul.f32 %v3046, %v3206
      %v3351 = vmul.f32 %v3047, %v3216
      %v3352 = vmul.f32 %v3048, %v3216
      %v3353 = vmul.f32 %v3049, %v3226
      %v3354 = vmul.f32 %v3050, %v3226
      %v3355 = vmul.f32 %v3051, %v3236
      %v3356 = vmul.f32 %v3052, %v3236
      %v3357 = vmul.f32 %v3053, %v3246
      %v3358 = vmul.f32 %v3054, %v3246
      %v3359 = vmul.f32 %v3055, %v3256
      %v3360 = vmul.f32 %v3056, %v3256
      %v3361 = vmul.f32 %v3057, %v3266
      %v3362 = vmul.f32 %v3058, %v3266
      %v3363 = vmul.f32 %v3059, %v3276
      %v3364 = vmul.f32 %v3060, %v3276
      %v3365 = vmul.f32 %v3061, %v3286
      %v3366 = vmul.f32 %v3062, %v3286
      %v3367 = vmul.f32 %v3063, %v3296
      %v3368 = vmul.f32 %v3064, %v3296
      %v3369 = vmul.f32 %v3065, %v3306
      %v3370 = vmul.f32 %v3066, %v3306
      %v3371 = vmul.f32 %v3067, %v3316
      %v3372 = vmul.f32 %v3068, %v3316
      %v3373 = vmul.f32 %v3069, %v3326
      %v3374 = vmul.f32 %v3070, %v3326
      %v3375 = vmul.f32 %v3071, %v3336
      %v3376 = vmul.f32 %v3072, %v3336
      %v3377 = vmul.f32 %v3073, %v3346
      %v3378 = vmul.f32 %v3074, %v3346
      %v3379 = vmax.f32 %v3347, 0.0
      %v3380 = vmax.f32 %v3348, 0.0
      %v3381 = vmax.f32 %v3349, 0.0
      %v3382 = vmax.f32 %v3350, 0.0
      %v3383 = vmax.f32 %v3351, 0.0
      %v3384 = vmax.f32 %v3352, 0.0
      %v3385 = vmax.f32 %v3353, 0.0
      %v3386 = vmax.f32 %v3354, 0.0
      %v3387 = vmax.f32 %v3355, 0.0
      %v3388 = vmax.f32 %v3356, 0.0
      %v3389 = vmax.f32 %v3357, 0.0
      %v3390 = vmax.f32 %v3358, 0.0
      %v3391 = vmax.f32 %v3359, 0.0
      %v3392 = vmax.f32 %v3360, 0.0
      %v3393 = vmax.f32 %v3361, 0.0
      %v3394 = vmax.f32 %v3362, 0.0
      %v3395 = vmax.f32 %v3363, 0.0
      %v3396 = vmax.f32 %v3364, 0.0
      %v3397 = vmax.f32 %v3365, 0.0
      %v3398 = vmax.f32 %v3366, 0.0
      %v3399 = vmax.f32 %v3367, 0.0
      %v3400 = vmax.f32 %v3368, 0.0
      %v3401 = vmax.f32 %v3369, 0.0
      %v3402 = vmax.f32 %v3370, 0.0
      %v3403 = vmax.f32 %v3371, 0.0
      %v3404 = vmax.f32 %v3372, 0.0
      %v3405 = vmax.f32 %v3373, 0.0
      %v3406 = vmax.f32 %v3374, 0.0
      %v3407 = vmax.f32 %v3375, 0.0
      %v3408 = vmax.f32 %v3376, 0.0
      %v3409 = vmax.f32 %v3377, 0.0
      %v3410 = vmax.f32 %v3378, 0.0
      %v3411 = vpack.c.bf16 %v3381, %v3379
      %v3412 = vpack.c.bf16 %v3382, %v3380
      %v3413 = vpack.c.bf16 %v3385, %v3383
      %v3414 = vpack.c.bf16 %v3386, %v3384
      %v3415 = vpack.c.bf16 %v3389, %v3387
      %v3416 = vpack.c.bf16 %v3390, %v3388
      %v3417 = vpack.c.bf16 %v3393, %v3391
      %v3418 = vpack.c.bf16 %v3394, %v3392
      %v3419 = vpack.c.bf16 %v3397, %v3395
      %v3420 = vpack.c.bf16 %v3398, %v3396
      %v3421 = vpack.c.bf16 %v3401, %v3399
      %v3422 = vpack.c.bf16 %v3402, %v3400
      %v3423 = vpack.c.bf16 %v3405, %v3403
      %v3424 = vpack.c.bf16 %v3406, %v3404
      %v3425 = vpack.c.bf16 %v3409, %v3407
      %v3426 = vpack.c.bf16 %v3410, %v3408
      %v3427 = vadd.f32 %v2842, %v2940
      %3428 = vadd.xlane.f32.xlu0 %v3427
      %v3429 = vpop.xlane.xlu0 %3428
      %v3430 = vadd.f32 %v2844, %v2942
      %3431 = vadd.xlane.f32.xlu0 %v3430
      %v3432 = vpop.xlane.xlu0 %3431
      %v3433 = vadd.f32 %v2847, %v2945
      %3434 = vadd.xlane.f32.xlu0 %v3433
      %v3435 = vpop.xlane.xlu0 %3434
      %v3436 = vadd.f32 %v2849, %v2947
      %3437 = vadd.xlane.f32.xlu0 %v3436
      %v3438 = vpop.xlane.xlu0 %3437
      %v3439 = vadd.f32 %v2852, %v2950
      %3440 = vadd.xlane.f32.xlu0 %v3439
      %v3441 = vpop.xlane.xlu0 %3440
      %v3442 = vadd.f32 %v2854, %v2952
      %3443 = vadd.xlane.f32.xlu0 %v3442
      %v3444 = vpop.xlane.xlu0 %3443
      %v3445 = vadd.f32 %v2857, %v2955
      %3446 = vadd.xlane.f32.xlu0 %v3445
      %v3447 = vpop.xlane.xlu0 %3446
      %v3448 = vadd.f32 %v2859, %v2957
      %3449 = vadd.xlane.f32.xlu0 %v3448
      %v3450 = vpop.xlane.xlu0 %3449
      %v3451 = vadd.f32 %v2862, %v2960
      %3452 = vadd.xlane.f32.xlu0 %v3451
      %v3453 = vpop.xlane.xlu0 %3452
      %v3454 = vadd.f32 %v2864, %v2962
      %3455 = vadd.xlane.f32.xlu0 %v3454
      %v3456 = vpop.xlane.xlu0 %3455
      %v3457 = vadd.f32 %v2867, %v2965
      %3458 = vadd.xlane.f32.xlu0 %v3457
      %v3459 = vpop.xlane.xlu0 %3458
      %v3460 = vadd.f32 %v2869, %v2967
      %3461 = vadd.xlane.f32.xlu0 %v3460
      %v3462 = vpop.xlane.xlu0 %3461
      %v3463 = vadd.f32 %v2872, %v2970
      %3464 = vadd.xlane.f32.xlu0 %v3463
      %v3465 = vpop.xlane.xlu0 %3464
      %v3466 = vadd.f32 %v2874, %v2972
      %3467 = vadd.xlane.f32.xlu0 %v3466
      %v3468 = vpop.xlane.xlu0 %3467
      %v3469 = vadd.f32 %v2877, %v2975
      %3470 = vadd.xlane.f32.xlu0 %v3469
      %v3471 = vpop.xlane.xlu0 %3470
      %v3472 = vadd.f32 %v2879, %v2977
      %3473 = vadd.xlane.f32.xlu0 %v3472
      %v3474 = vpop.xlane.xlu0 %3473
      %v3475 = vmul.f32 %v3429, %v1140
      %v3476 = vmul.f32 %v3432, %v1140
      %v3477 = vmul.f32 %v3435, %v1140
      %v3478 = vmul.f32 %v3438, %v1140
      %v3479 = vmul.f32 %v3441, %v1140
      %v3480 = vmul.f32 %v3444, %v1140
      %v3481 = vmul.f32 %v3447, %v1140
      %v3482 = vmul.f32 %v3450, %v1140
      %v3483 = vmul.f32 %v3453, %v1140
      %v3484 = vmul.f32 %v3456, %v1140
      %v3485 = vmul.f32 %v3459, %v1140
      %v3486 = vmul.f32 %v3462, %v1140
      %v3487 = vmul.f32 %v3465, %v1140
      %v3488 = vmul.f32 %v3468, %v1140
      %v3489 = vmul.f32 %v3471, %v1140
      %v3490 = vmul.f32 %v3474, %v1140
      %v3491 = vsub.f32 %v2842, %v3475
      %v3492 = vsub.f32 %v2940, %v3475
      %v3493 = vsub.f32 %v2844, %v3476
      %v3494 = vsub.f32 %v2942, %v3476
      %v3495 = vsub.f32 %v2847, %v3477
      %v3496 = vsub.f32 %v2945, %v3477
      %v3497 = vsub.f32 %v2849, %v3478
      %v3498 = vsub.f32 %v2947, %v3478
      %v3499 = vsub.f32 %v2852, %v3479
      %v3500 = vsub.f32 %v2950, %v3479
      %v3501 = vsub.f32 %v2854, %v3480
      %v3502 = vsub.f32 %v2952, %v3480
      %v3503 = vsub.f32 %v2857, %v3481
      %v3504 = vsub.f32 %v2955, %v3481
      %v3505 = vsub.f32 %v2859, %v3482
      %v3506 = vsub.f32 %v2957, %v3482
      %v3507 = vsub.f32 %v2862, %v3483
      %v3508 = vsub.f32 %v2960, %v3483
      %v3509 = vsub.f32 %v2864, %v3484
      %v3510 = vsub.f32 %v2962, %v3484
      %v3511 = vsub.f32 %v2867, %v3485
      %v3512 = vsub.f32 %v2965, %v3485
      %v3513 = vsub.f32 %v2869, %v3486
      %v3514 = vsub.f32 %v2967, %v3486
      %v3515 = vsub.f32 %v2872, %v3487
      %v3516 = vsub.f32 %v2970, %v3487
      %v3517 = vsub.f32 %v2874, %v3488
      %v3518 = vsub.f32 %v2972, %v3488
      %v3519 = vsub.f32 %v2877, %v3489
      %v3520 = vsub.f32 %v2975, %v3489
      %v3521 = vsub.f32 %v2879, %v3490
      %v3522 = vsub.f32 %v2977, %v3490
      %v3523 = vmul.f32 %v3491, %v3491
      %v3524 = vmul.f32 %v3492, %v3492
      %v3525 = vmul.f32 %v3493, %v3493
      %v3526 = vmul.f32 %v3494, %v3494
      %v3527 = vmul.f32 %v3495, %v3495
      %v3528 = vmul.f32 %v3496, %v3496
      %v3529 = vmul.f32 %v3497, %v3497
      %v3530 = vmul.f32 %v3498, %v3498
      %v3531 = vmul.f32 %v3499, %v3499
      %v3532 = vmul.f32 %v3500, %v3500
      %v3533 = vmul.f32 %v3501, %v3501
      %v3534 = vmul.f32 %v3502, %v3502
      %v3535 = vmul.f32 %v3503, %v3503
      %v3536 = vmul.f32 %v3504, %v3504
      %v3537 = vmul.f32 %v3505, %v3505
      %v3538 = vmul.f32 %v3506, %v3506
      %v3539 = vmul.f32 %v3507, %v3507
      %v3540 = vmul.f32 %v3508, %v3508
      %v3541 = vmul.f32 %v3509, %v3509
      %v3542 = vmul.f32 %v3510, %v3510
      %v3543 = vmul.f32 %v3511, %v3511
      %v3544 = vmul.f32 %v3512, %v3512
      %v3545 = vmul.f32 %v3513, %v3513
      %v3546 = vmul.f32 %v3514, %v3514
      %v3547 = vmul.f32 %v3515, %v3515
      %v3548 = vmul.f32 %v3516, %v3516
      %v3549 = vmul.f32 %v3517, %v3517
      %v3550 = vmul.f32 %v3518, %v3518
      %v3551 = vmul.f32 %v3519, %v3519
      %v3552 = vmul.f32 %v3520, %v3520
      %v3553 = vmul.f32 %v3521, %v3521
      %v3554 = vmul.f32 %v3522, %v3522
      %v3555 = vadd.f32 %v3523, %v3524
      %3556 = vadd.xlane.f32.xlu0 %v3555
      %v3557 = vpop.xlane.xlu0 %3556
      %v3558 = vadd.f32 %v3525, %v3526
      %3559 = vadd.xlane.f32.xlu0 %v3558
      %v3560 = vpop.xlane.xlu0 %3559
      %v3561 = vadd.f32 %v3527, %v3528
      %3562 = vadd.xlane.f32.xlu0 %v3561
      %v3563 = vpop.xlane.xlu0 %3562
      %v3564 = vadd.f32 %v3529, %v3530
      %3565 = vadd.xlane.f32.xlu0 %v3564
      %v3566 = vpop.xlane.xlu0 %3565
      %v3567 = vadd.f32 %v3531, %v3532
      %3568 = vadd.xlane.f32.xlu0 %v3567
      %v3569 = vpop.xlane.xlu0 %3568
      %v3570 = vadd.f32 %v3533, %v3534
      %3571 = vadd.xlane.f32.xlu0 %v3570
      %v3572 = vpop.xlane.xlu0 %3571
      %v3573 = vadd.f32 %v3535, %v3536
      %3574 = vadd.xlane.f32.xlu0 %v3573
      %v3575 = vpop.xlane.xlu0 %3574
      %v3576 = vadd.f32 %v3537, %v3538
      %3577 = vadd.xlane.f32.xlu0 %v3576
      %v3578 = vpop.xlane.xlu0 %3577
      %v3579 = vadd.f32 %v3539, %v3540
      %3580 = vadd.xlane.f32.xlu0 %v3579
      %v3581 = vpop.xlane.xlu0 %3580
      %v3582 = vadd.f32 %v3541, %v3542
      %3583 = vadd.xlane.f32.xlu0 %v3582
      %v3584 = vpop.xlane.xlu0 %3583
      %v3585 = vadd.f32 %v3543, %v3544
      %3586 = vadd.xlane.f32.xlu0 %v3585
      %v3587 = vpop.xlane.xlu0 %3586
      %v3588 = vadd.f32 %v3545, %v3546
      %3589 = vadd.xlane.f32.xlu0 %v3588
      %v3590 = vpop.xlane.xlu0 %3589
      %v3591 = vadd.f32 %v3547, %v3548
      %3592 = vadd.xlane.f32.xlu0 %v3591
      %v3593 = vpop.xlane.xlu0 %3592
      %v3594 = vadd.f32 %v3549, %v3550
      %3595 = vadd.xlane.f32.xlu0 %v3594
      %v3596 = vpop.xlane.xlu0 %3595
      %v3597 = vadd.f32 %v3551, %v3552
      %3598 = vadd.xlane.f32.xlu0 %v3597
      %v3599 = vpop.xlane.xlu0 %3598
      %v3600 = vadd.f32 %v3553, %v3554
      %3601 = vadd.xlane.f32.xlu0 %v3600
      %v3602 = vpop.xlane.xlu0 %3601
      %v3603 = vmul.f32 %v3557, %v1140
      %v3604 = vmul.f32 %v3560, %v1140
      %v3605 = vmul.f32 %v3563, %v1140
      %v3606 = vmul.f32 %v3566, %v1140
      %v3607 = vmul.f32 %v3569, %v1140
      %v3608 = vmul.f32 %v3572, %v1140
      %v3609 = vmul.f32 %v3575, %v1140
      %v3610 = vmul.f32 %v3578, %v1140
      %v3611 = vmul.f32 %v3581, %v1140
      %v3612 = vmul.f32 %v3584, %v1140
      %v3613 = vmul.f32 %v3587, %v1140
      %v3614 = vmul.f32 %v3590, %v1140
      %v3615 = vmul.f32 %v3593, %v1140
      %v3616 = vmul.f32 %v3596, %v1140
      %v3617 = vmul.f32 %v3599, %v1140
      %v3618 = vmul.f32 %v3602, %v1140
      %v3619 = vadd.f32 %v3603, 1e-05
      %v3620 = vadd.f32 %v3604, 1e-05
      %v3621 = vadd.f32 %v3605, 1e-05
      %v3622 = vadd.f32 %v3606, 1e-05
      %v3623 = vadd.f32 %v3607, 1e-05
      %v3624 = vadd.f32 %v3608, 1e-05
      %v3625 = vadd.f32 %v3609, 1e-05
      %v3626 = vadd.f32 %v3610, 1e-05
      %v3627 = vadd.f32 %v3611, 1e-05
      %v3628 = vadd.f32 %v3612, 1e-05
      %v3629 = vadd.f32 %v3613, 1e-05
      %v3630 = vadd.f32 %v3614, 1e-05
      %v3631 = vadd.f32 %v3615, 1e-05
      %v3632 = vadd.f32 %v3616, 1e-05
      %v3633 = vadd.f32 %v3617, 1e-05
      %v3634 = vadd.f32 %v3618, 1e-05
      %v3635 = vrsqrt.pop %v3619
      %v3636 = vmul.f32 %v3635, %v3619
      %v3637 = vmul.f32 %v3636, %v3635
      %v3638 = vmul.f32 0.5, %v3637
      %v3639 = vsub.f32 1.5, %v3638
      %v3640 = vmul.f32 %v3635, %v3639
      %vm3641 = vweird.f32 %v3619
      %vm3642 = vweird.f32 %v3635
      %vm3643 = vmor %vm3641, %vm3642
      %v3644 = vsel %vm3643, %v3635, %v3640
      %v3645 = vrsqrt.pop %v3620
      %v3646 = vmul.f32 %v3645, %v3620
      %v3647 = vmul.f32 %v3646, %v3645
      %v3648 = vmul.f32 0.5, %v3647
      %v3649 = vsub.f32 1.5, %v3648
      %v3650 = vmul.f32 %v3645, %v3649
      %vm3651 = vweird.f32 %v3620
      %vm3652 = vweird.f32 %v3645
      %vm3653 = vmor %vm3651, %vm3652
      %v3654 = vsel %vm3653, %v3645, %v3650
      %v3655 = vrsqrt.pop %v3621
      %v3656 = vmul.f32 %v3655, %v3621
      %v3657 = vmul.f32 %v3656, %v3655
      %v3658 = vmul.f32 0.5, %v3657
      %v3659 = vsub.f32 1.5, %v3658
      %v3660 = vmul.f32 %v3655, %v3659
      %vm3661 = vweird.f32 %v3621
      %vm3662 = vweird.f32 %v3655
      %vm3663 = vmor %vm3661, %vm3662
      %v3664 = vsel %vm3663, %v3655, %v3660
      %v3665 = vrsqrt.pop %v3622
      %v3666 = vmul.f32 %v3665, %v3622
      %v3667 = vmul.f32 %v3666, %v3665
      %v3668 = vmul.f32 0.5, %v3667
      %v3669 = vsub.f32 1.5, %v3668
      %v3670 = vmul.f32 %v3665, %v3669
      %vm3671 = vweird.f32 %v3622
      %vm3672 = vweird.f32 %v3665
      %vm3673 = vmor %vm3671, %vm3672
      %v3674 = vsel %vm3673, %v3665, %v3670
      %v3675 = vrsqrt.pop %v3623
      %v3676 = vmul.f32 %v3675, %v3623
      %v3677 = vmul.f32 %v3676, %v3675
      %v3678 = vmul.f32 0.5, %v3677
      %v3679 = vsub.f32 1.5, %v3678
      %v3680 = vmul.f32 %v3675, %v3679
      %vm3681 = vweird.f32 %v3623
      %vm3682 = vweird.f32 %v3675
      %vm3683 = vmor %vm3681, %vm3682
      %v3684 = vsel %vm3683, %v3675, %v3680
      %v3685 = vrsqrt.pop %v3624
      %v3686 = vmul.f32 %v3685, %v3624
      %v3687 = vmul.f32 %v3686, %v3685
      %v3688 = vmul.f32 0.5, %v3687
      %v3689 = vsub.f32 1.5, %v3688
      %v3690 = vmul.f32 %v3685, %v3689
      %vm3691 = vweird.f32 %v3624
      %vm3692 = vweird.f32 %v3685
      %vm3693 = vmor %vm3691, %vm3692
      %v3694 = vsel %vm3693, %v3685, %v3690
      %v3695 = vrsqrt.pop %v3625
      %v3696 = vmul.f32 %v3695, %v3625
      %v3697 = vmul.f32 %v3696, %v3695
      %v3698 = vmul.f32 0.5, %v3697
      %v3699 = vsub.f32 1.5, %v3698
      %v3700 = vmul.f32 %v3695, %v3699
      %vm3701 = vweird.f32 %v3625
      %vm3702 = vweird.f32 %v3695
      %vm3703 = vmor %vm3701, %vm3702
      %v3704 = vsel %vm3703, %v3695, %v3700
      %v3705 = vrsqrt.pop %v3626
      %v3706 = vmul.f32 %v3705, %v3626
      %v3707 = vmul.f32 %v3706, %v3705
      %v3708 = vmul.f32 0.5, %v3707
      %v3709 = vsub.f32 1.5, %v3708
      %v3710 = vmul.f32 %v3705, %v3709
      %vm3711 = vweird.f32 %v3626
      %vm3712 = vweird.f32 %v3705
      %vm3713 = vmor %vm3711, %vm3712
      %v3714 = vsel %vm3713, %v3705, %v3710
      %v3715 = vrsqrt.pop %v3627
      %v3716 = vmul.f32 %v3715, %v3627
      %v3717 = vmul.f32 %v3716, %v3715
      %v3718 = vmul.f32 0.5, %v3717
      %v3719 = vsub.f32 1.5, %v3718
      %v3720 = vmul.f32 %v3715, %v3719
      %vm3721 = vweird.f32 %v3627
      %vm3722 = vweird.f32 %v3715
      %vm3723 = vmor %vm3721, %vm3722
      %v3724 = vsel %vm3723, %v3715, %v3720
      %v3725 = vrsqrt.pop %v3628
      %v3726 = vmul.f32 %v3725, %v3628
      %v3727 = vmul.f32 %v3726, %v3725
      %v3728 = vmul.f32 0.5, %v3727
      %v3729 = vsub.f32 1.5, %v3728
      %v3730 = vmul.f32 %v3725, %v3729
      %vm3731 = vweird.f32 %v3628
      %vm3732 = vweird.f32 %v3725
      %vm3733 = vmor %vm3731, %vm3732
      %v3734 = vsel %vm3733, %v3725, %v3730
      %v3735 = vrsqrt.pop %v3629
      %v3736 = vmul.f32 %v3735, %v3629
      %v3737 = vmul.f32 %v3736, %v3735
      %v3738 = vmul.f32 0.5, %v3737
      %v3739 = vsub.f32 1.5, %v3738
      %v3740 = vmul.f32 %v3735, %v3739
      %vm3741 = vweird.f32 %v3629
      %vm3742 = vweird.f32 %v3735
      %vm3743 = vmor %vm3741, %vm3742
      %v3744 = vsel %vm3743, %v3735, %v3740
      %v3745 = vrsqrt.pop %v3630
      %v3746 = vmul.f32 %v3745, %v3630
      %v3747 = vmul.f32 %v3746, %v3745
      %v3748 = vmul.f32 0.5, %v3747
      %v3749 = vsub.f32 1.5, %v3748
      %v3750 = vmul.f32 %v3745, %v3749
      %vm3751 = vweird.f32 %v3630
      %vm3752 = vweird.f32 %v3745
      %vm3753 = vmor %vm3751, %vm3752
      %v3754 = vsel %vm3753, %v3745, %v3750
      %v3755 = vrsqrt.pop %v3631
      %v3756 = vmul.f32 %v3755, %v3631
      %v3757 = vmul.f32 %v3756, %v3755
      %v3758 = vmul.f32 0.5, %v3757
      %v3759 = vsub.f32 1.5, %v3758
      %v3760 = vmul.f32 %v3755, %v3759
      %vm3761 = vweird.f32 %v3631
      %vm3762 = vweird.f32 %v3755
      %vm3763 = vmor %vm3761, %vm3762
      %v3764 = vsel %vm3763, %v3755, %v3760
      %v3765 = vrsqrt.pop %v3632
      %v3766 = vmul.f32 %v3765, %v3632
      %v3767 = vmul.f32 %v3766, %v3765
      %v3768 = vmul.f32 0.5, %v3767
      %v3769 = vsub.f32 1.5, %v3768
      %v3770 = vmul.f32 %v3765, %v3769
      %vm3771 = vweird.f32 %v3632
      %vm3772 = vweird.f32 %v3765
      %vm3773 = vmor %vm3771, %vm3772
      %v3774 = vsel %vm3773, %v3765, %v3770
      %v3775 = vrsqrt.pop %v3633
      %v3776 = vmul.f32 %v3775, %v3633
      %v3777 = vmul.f32 %v3776, %v3775
      %v3778 = vmul.f32 0.5, %v3777
      %v3779 = vsub.f32 1.5, %v3778
      %v3780 = vmul.f32 %v3775, %v3779
      %vm3781 = vweird.f32 %v3633
      %vm3782 = vweird.f32 %v3775
      %vm3783 = vmor %vm3781, %vm3782
      %v3784 = vsel %vm3783, %v3775, %v3780
      %v3785 = vrsqrt.pop %v3634
      %v3786 = vmul.f32 %v3785, %v3634
      %v3787 = vmul.f32 %v3786, %v3785
      %v3788 = vmul.f32 0.5, %v3787
      %v3789 = vsub.f32 1.5, %v3788
      %v3790 = vmul.f32 %v3785, %v3789
      %vm3791 = vweird.f32 %v3634
      %vm3792 = vweird.f32 %v3785
      %vm3793 = vmor %vm3791, %vm3792
      %v3794 = vsel %vm3793, %v3785, %v3790
      %v3795 = vmul.f32 %v3491, %v3644
      %v3796 = vmul.f32 %v3492, %v3644
      %v3797 = vmul.f32 %v3493, %v3654
      %v3798 = vmul.f32 %v3494, %v3654
      %v3799 = vmul.f32 %v3495, %v3664
      %v3800 = vmul.f32 %v3496, %v3664
      %v3801 = vmul.f32 %v3497, %v3674
      %v3802 = vmul.f32 %v3498, %v3674
      %v3803 = vmul.f32 %v3499, %v3684
      %v3804 = vmul.f32 %v3500, %v3684
      %v3805 = vmul.f32 %v3501, %v3694
      %v3806 = vmul.f32 %v3502, %v3694
      %v3807 = vmul.f32 %v3503, %v3704
      %v3808 = vmul.f32 %v3504, %v3704
      %v3809 = vmul.f32 %v3505, %v3714
      %v3810 = vmul.f32 %v3506, %v3714
      %v3811 = vmul.f32 %v3507, %v3724
      %v3812 = vmul.f32 %v3508, %v3724
      %v3813 = vmul.f32 %v3509, %v3734
      %v3814 = vmul.f32 %v3510, %v3734
      %v3815 = vmul.f32 %v3511, %v3744
      %v3816 = vmul.f32 %v3512, %v3744
      %v3817 = vmul.f32 %v3513, %v3754
      %v3818 = vmul.f32 %v3514, %v3754
      %v3819 = vmul.f32 %v3515, %v3764
      %v3820 = vmul.f32 %v3516, %v3764
      %v3821 = vmul.f32 %v3517, %v3774
      %v3822 = vmul.f32 %v3518, %v3774
      %v3823 = vmul.f32 %v3519, %v3784
      %v3824 = vmul.f32 %v3520, %v3784
      %v3825 = vmul.f32 %v3521, %v3794
      %v3826 = vmul.f32 %v3522, %v3794
      %v3827 = vmax.f32 %v3795, 0.0
      %v3828 = vmax.f32 %v3796, 0.0
      %v3829 = vmax.f32 %v3797, 0.0
      %v3830 = vmax.f32 %v3798, 0.0
      %v3831 = vmax.f32 %v3799, 0.0
      %v3832 = vmax.f32 %v3800, 0.0
      %v3833 = vmax.f32 %v3801, 0.0
      %v3834 = vmax.f32 %v3802, 0.0
      %v3835 = vmax.f32 %v3803, 0.0
      %v3836 = vmax.f32 %v3804, 0.0
      %v3837 = vmax.f32 %v3805, 0.0
      %v3838 = vmax.f32 %v3806, 0.0
      %v3839 = vmax.f32 %v3807, 0.0
      %v3840 = vmax.f32 %v3808, 0.0
      %v3841 = vmax.f32 %v3809, 0.0
      %v3842 = vmax.f32 %v3810, 0.0
      %v3843 = vmax.f32 %v3811, 0.0
      %v3844 = vmax.f32 %v3812, 0.0
      %v3845 = vmax.f32 %v3813, 0.0
      %v3846 = vmax.f32 %v3814, 0.0
      %v3847 = vmax.f32 %v3815, 0.0
      %v3848 = vmax.f32 %v3816, 0.0
      %v3849 = vmax.f32 %v3817, 0.0
      %v3850 = vmax.f32 %v3818, 0.0
      %v3851 = vmax.f32 %v3819, 0.0
      %v3852 = vmax.f32 %v3820, 0.0
      %v3853 = vmax.f32 %v3821, 0.0
      %v3854 = vmax.f32 %v3822, 0.0
      %v3855 = vmax.f32 %v3823, 0.0
      %v3856 = vmax.f32 %v3824, 0.0
      %v3857 = vmax.f32 %v3825, 0.0
      %v3858 = vmax.f32 %v3826, 0.0
      %v3859 = vpack.c.bf16 %v3829, %v3827
      %v3860 = vpack.c.bf16 %v3830, %v3828
      %v3861 = vpack.c.bf16 %v3833, %v3831
      %v3862 = vpack.c.bf16 %v3834, %v3832
      %v3863 = vpack.c.bf16 %v3837, %v3835
      %v3864 = vpack.c.bf16 %v3838, %v3836
      %v3865 = vpack.c.bf16 %v3841, %v3839
      %v3866 = vpack.c.bf16 %v3842, %v3840
      %v3867 = vpack.c.bf16 %v3845, %v3843
      %v3868 = vpack.c.bf16 %v3846, %v3844
      %v3869 = vpack.c.bf16 %v3849, %v3847
      %v3870 = vpack.c.bf16 %v3850, %v3848
      %v3871 = vpack.c.bf16 %v3853, %v3851
      %v3872 = vpack.c.bf16 %v3854, %v3852
      %v3873 = vpack.c.bf16 %v3857, %v3855
      %v3874 = vpack.c.bf16 %v3858, %v3856
      %v3875 = vld [vmem:[%s604] sm:$0xff]
      %v3876 = vld [vmem:[%s604 + $0x8] sm:$0xff]
      %v3877 = vld [vmem:[%s604 + $0x10] sm:$0xff]
      %v3878 = vld [vmem:[%s604 + $0x18] sm:$0xff]
      %v3879 = vld [vmem:[%s604 + $0x20] sm:$0xff]
      %v3880 = vld [vmem:[%s604 + $0x28] sm:$0xff]
      %v3881 = vld [vmem:[%s604 + $0x30] sm:$0xff]
      %v3882 = vld [vmem:[%s604 + $0x38] sm:$0xff]
      %v3883 = vld [vmem:[%s604 + $0x40] sm:$0xff]
      %v3884 = vld [vmem:[%s604 + $0x48] sm:$0xff]
      %v3885 = vld [vmem:[%s604 + $0x50] sm:$0xff]
      %v3886 = vld [vmem:[%s604 + $0x58] sm:$0xff]
      %v3887 = vld [vmem:[%s604 + $0x60] sm:$0xff]
      %v3888 = vld [vmem:[%s604 + $0x68] sm:$0xff]
      %v3889 = vld [vmem:[%s604 + $0x70] sm:$0xff]
      %v3890 = vld [vmem:[%s604 + $0x78] sm:$0xff]
      %v3891 = vld [vmem:[%s604 + $0x80] sm:$0xff]
      %v3892 = vld [vmem:[%s604 + $0x88] sm:$0xff]
      %v3893 = vld [vmem:[%s604 + $0x90] sm:$0xff]
      %v3894 = vld [vmem:[%s604 + $0x98] sm:$0xff]
      %v3895 = vld [vmem:[%s604 + $0xa0] sm:$0xff]
      %v3896 = vld [vmem:[%s604 + $0xa8] sm:$0xff]
      %v3897 = vld [vmem:[%s604 + $0xb0] sm:$0xff]
      %v3898 = vld [vmem:[%s604 + $0xb8] sm:$0xff]
      %v3899 = vld [vmem:[%s604 + $0xc0] sm:$0xff]
      %v3900 = vld [vmem:[%s604 + $0xc8] sm:$0xff]
      %v3901 = vld [vmem:[%s604 + $0xd0] sm:$0xff]
      %v3902 = vld [vmem:[%s604 + $0xd8] sm:$0xff]
      %v3903 = vld [vmem:[%s604 + $0xe0] sm:$0xff]
      %v3904 = vld [vmem:[%s604 + $0xe8] sm:$0xff]
      %v3905 = vld [vmem:[%s604 + $0xf0] sm:$0xff]
      %v3906 = vld [vmem:[%s604 + $0xf8] sm:$0xff]
      %v3907 = vld [vmem:[%s608] sm:$0x3]
      %v3909 = vperm.slane %v3907, 0
      %v3910 = vperm.slane %v3907, 1
      %v3945 = vunpack.c.l.b16 %v3875
      %v3946 = vunpack.c.h.b16 %v3875
      %v3947 = vunpack.c.l.b16 %v3876
      %v3948 = vunpack.c.h.b16 %v3876
      %v3949 = vunpack.c.l.b16 %v3877
      %v3950 = vunpack.c.h.b16 %v3877
      %v3951 = vunpack.c.l.b16 %v3878
      %v3952 = vunpack.c.h.b16 %v3878
      %v3953 = vunpack.c.l.b16 %v3879
      %v3954 = vunpack.c.h.b16 %v3879
      %v3955 = vunpack.c.l.b16 %v3880
      %v3956 = vunpack.c.h.b16 %v3880
      %v3957 = vunpack.c.l.b16 %v3881
      %v3958 = vunpack.c.h.b16 %v3881
      %v3959 = vunpack.c.l.b16 %v3882
      %v3960 = vunpack.c.h.b16 %v3882
      %v3961 = vunpack.c.l.b16 %v3883
      %v3962 = vunpack.c.h.b16 %v3883
      %v3963 = vunpack.c.l.b16 %v3884
      %v3964 = vunpack.c.h.b16 %v3884
      %v3965 = vunpack.c.l.b16 %v3885
      %v3966 = vunpack.c.h.b16 %v3885
      %v3967 = vunpack.c.l.b16 %v3886
      %v3968 = vunpack.c.h.b16 %v3886
      %v3969 = vunpack.c.l.b16 %v3887
      %v3970 = vunpack.c.h.b16 %v3887
      %v3971 = vunpack.c.l.b16 %v3888
      %v3972 = vunpack.c.h.b16 %v3888
      %v3973 = vunpack.c.l.b16 %v3889
      %v3974 = vunpack.c.h.b16 %v3889
      %v3975 = vunpack.c.l.b16 %v3890
      %v3976 = vunpack.c.h.b16 %v3890
      %v3977 = vunpack.c.l.b16 %v3891
      %v3978 = vunpack.c.h.b16 %v3891
      %v3979 = vunpack.c.l.b16 %v3892
      %v3980 = vunpack.c.h.b16 %v3892
      %v3981 = vunpack.c.l.b16 %v3893
      %v3982 = vunpack.c.h.b16 %v3893
      %v3983 = vunpack.c.l.b16 %v3894
      %v3984 = vunpack.c.h.b16 %v3894
      %v3985 = vunpack.c.l.b16 %v3895
      %v3986 = vunpack.c.h.b16 %v3895
      %v3987 = vunpack.c.l.b16 %v3896
      %v3988 = vunpack.c.h.b16 %v3896
      %v3989 = vunpack.c.l.b16 %v3897
      %v3990 = vunpack.c.h.b16 %v3897
      %v3991 = vunpack.c.l.b16 %v3898
      %v3992 = vunpack.c.h.b16 %v3898
      %v3993 = vunpack.c.l.b16 %v3899
      %v3994 = vunpack.c.h.b16 %v3899
      %v3995 = vunpack.c.l.b16 %v3900
      %v3996 = vunpack.c.h.b16 %v3900
      %v3997 = vunpack.c.l.b16 %v3901
      %v3998 = vunpack.c.h.b16 %v3901
      %v3999 = vunpack.c.l.b16 %v3902
      %v4000 = vunpack.c.h.b16 %v3902
      %v4001 = vunpack.c.l.b16 %v3903
      %v4002 = vunpack.c.h.b16 %v3903
      %v4003 = vunpack.c.l.b16 %v3904
      %v4004 = vunpack.c.h.b16 %v3904
      %v4005 = vunpack.c.l.b16 %v3905
      %v4006 = vunpack.c.h.b16 %v3905
      %v4007 = vunpack.c.l.b16 %v3906
      %v4008 = vunpack.c.h.b16 %v3906
      %v4009 = vpack.c.b16 %v3947, %v3945
      %v4010 = vpack.c.b16 %v3948, %v3946
      %v4011 = vpack.c.b16 %v3951, %v3949
      %v4012 = vpack.c.b16 %v3952, %v3950
      %v4013 = vpack.c.b16 %v3955, %v3953
      %v4014 = vpack.c.b16 %v3956, %v3954
      %v4015 = vpack.c.b16 %v3959, %v3957
      %v4016 = vpack.c.b16 %v3960, %v3958
      %v4017 = vpack.c.b16 %v3963, %v3961
      %v4018 = vpack.c.b16 %v3964, %v3962
      %v4019 = vpack.c.b16 %v3967, %v3965
      %v4020 = vpack.c.b16 %v3968, %v3966
      %v4021 = vpack.c.b16 %v3971, %v3969
      %v4022 = vpack.c.b16 %v3972, %v3970
      %v4023 = vpack.c.b16 %v3975, %v3973
      %v4024 = vpack.c.b16 %v3976, %v3974
      %v4025 = vpack.c.b16 %v3979, %v3977
      %v4026 = vpack.c.b16 %v3980, %v3978
      %v4027 = vpack.c.b16 %v3983, %v3981
      %v4028 = vpack.c.b16 %v3984, %v3982
      %v4029 = vpack.c.b16 %v3987, %v3985
      %v4030 = vpack.c.b16 %v3988, %v3986
      %v4031 = vpack.c.b16 %v3991, %v3989
      %v4032 = vpack.c.b16 %v3992, %v3990
      %v4033 = vpack.c.b16 %v3995, %v3993
      %v4034 = vpack.c.b16 %v3996, %v3994
      %v4035 = vpack.c.b16 %v3999, %v3997
      %v4036 = vpack.c.b16 %v4000, %v3998
      %v4037 = vpack.c.b16 %v4003, %v4001
      %v4038 = vpack.c.b16 %v4004, %v4002
      %v4039 = vpack.c.b16 %v4007, %v4005
      %v4040 = vpack.c.b16 %v4008, %v4006
      %4073 = vmatpush.bf16.msra.mxu0 %v4023
      %4074 = vmatpush.bf16.msra.mxu0 %v4021
      %4075 = vmatpush.bf16.msra.mxu0 %v4019
      %4076 = vmatpush.bf16.msra.mxu0 %v4017
      %4077 = vmatpush.bf16.msra.mxu0 %v4015
      %4078 = vmatpush.bf16.msra.mxu0 %v4013
      %4079 = vmatpush.bf16.msra.mxu0 %v4011
      %4080 = vmatpush.bf16.msra.mxu0 %v4009
      %4081 = vmatmul.bf16.gmra.mxu0 %v3411
      %v4082 = vpop.f32.mrf.mxu0
      %v4083 = vadd.f32 %v3909, %v4082
      %v4084 = vpop.f32.mrf.mxu0
      %v4085 = vadd.f32 %v3909, %v4084
      %4086 = vmatmul.bf16.gmra.mxu0 %v3413
      %v4087 = vpop.f32.mrf.mxu0
      %v4088 = vadd.f32 %v3909, %v4087
      %v4089 = vpop.f32.mrf.mxu0
      %v4090 = vadd.f32 %v3909, %v4089
      %4091 = vmatmul.bf16.gmra.mxu0 %v3415
      %v4092 = vpop.f32.mrf.mxu0
      %v4093 = vadd.f32 %v3909, %v4092
      %v4094 = vpop.f32.mrf.mxu0
      %v4095 = vadd.f32 %v3909, %v4094
      %4096 = vmatmul.bf16.gmra.mxu0 %v3417
      %v4097 = vpop.f32.mrf.mxu0
      %v4098 = vadd.f32 %v3909, %v4097
      %v4099 = vpop.f32.mrf.mxu0
      %v4100 = vadd.f32 %v3909, %v4099
      %4101 = vmatmul.bf16.gmra.mxu0 %v3419
      %v4102 = vpop.f32.mrf.mxu0
      %v4103 = vadd.f32 %v3909, %v4102
      %v4104 = vpop.f32.mrf.mxu0
      %v4105 = vadd.f32 %v3909, %v4104
      %4106 = vmatmul.bf16.gmra.mxu0 %v3421
      %v4107 = vpop.f32.mrf.mxu0
      %v4108 = vadd.f32 %v3909, %v4107
      %v4109 = vpop.f32.mrf.mxu0
      %v4110 = vadd.f32 %v3909, %v4109
      %4111 = vmatmul.bf16.gmra.mxu0 %v3423
      %v4112 = vpop.f32.mrf.mxu0
      %v4113 = vadd.f32 %v3909, %v4112
      %v4114 = vpop.f32.mrf.mxu0
      %v4115 = vadd.f32 %v3909, %v4114
      %4116 = vmatmul.bf16.gmra.mxu0 %v3425
      %v4117 = vpop.f32.mrf.mxu0
      %v4118 = vadd.f32 %v3909, %v4117
      %v4119 = vpop.f32.mrf.mxu0
      %v4120 = vadd.f32 %v3909, %v4119
      %4121 = vdwg.mxu0
      %4122 = vmatpush.bf16.msra.mxu0 %v4039
      %4123 = vmatpush.bf16.msra.mxu0 %v4037
      %4124 = vmatpush.bf16.msra.mxu0 %v4035
      %4125 = vmatpush.bf16.msra.mxu0 %v4033
      %4126 = vmatpush.bf16.msra.mxu0 %v4031
      %4127 = vmatpush.bf16.msra.mxu0 %v4029
      %4128 = vmatpush.bf16.msra.mxu0 %v4027
      %4129 = vmatpush.bf16.msra.mxu0 %v4025
      %4130 = vmatmul.bf16.gmra.mxu0 %v3412
      %v4131 = vpop.f32.mrf.mxu0
      %v4132 = vadd.f32 %v4083, %v4131
      %v4133 = vpop.f32.mrf.mxu0
      %v4134 = vadd.f32 %v4085, %v4133
      %4135 = vmatmul.bf16.gmra.mxu0 %v3414
      %v4136 = vpop.f32.mrf.mxu0
      %v4137 = vadd.f32 %v4088, %v4136
      %v4138 = vpop.f32.mrf.mxu0
      %v4139 = vadd.f32 %v4090, %v4138
      %4140 = vmatmul.bf16.gmra.mxu0 %v3416
      %v4141 = vpop.f32.mrf.mxu0
      %v4142 = vadd.f32 %v4093, %v4141
      %v4143 = vpop.f32.mrf.mxu0
      %v4144 = vadd.f32 %v4095, %v4143
      %4145 = vmatmul.bf16.gmra.mxu0 %v3418
      %v4146 = vpop.f32.mrf.mxu0
      %v4147 = vadd.f32 %v4098, %v4146
      %v4148 = vpop.f32.mrf.mxu0
      %v4149 = vadd.f32 %v4100, %v4148
      %4150 = vmatmul.bf16.gmra.mxu0 %v3420
      %v4151 = vpop.f32.mrf.mxu0
      %v4152 = vadd.f32 %v4103, %v4151
      %v4153 = vpop.f32.mrf.mxu0
      %v4154 = vadd.f32 %v4105, %v4153
      %4155 = vmatmul.bf16.gmra.mxu0 %v3422
      %v4156 = vpop.f32.mrf.mxu0
      %v4157 = vadd.f32 %v4108, %v4156
      %v4158 = vpop.f32.mrf.mxu0
      %v4159 = vadd.f32 %v4110, %v4158
      %4160 = vmatmul.bf16.gmra.mxu0 %v3424
      %v4161 = vpop.f32.mrf.mxu0
      %v4162 = vadd.f32 %v4113, %v4161
      %v4163 = vpop.f32.mrf.mxu0
      %v4164 = vadd.f32 %v4115, %v4163
      %4165 = vmatmul.bf16.gmra.mxu0 %v3426
      %v4166 = vpop.f32.mrf.mxu0
      %v4167 = vadd.f32 %v4118, %v4166
      %v4168 = vpop.f32.mrf.mxu0
      %v4169 = vadd.f32 %v4120, %v4168
      %4170 = vdwg.mxu0
      %4171 = vmatpush.bf16.msra.mxu0 %v4024
      %4172 = vmatpush.bf16.msra.mxu0 %v4022
      %4173 = vmatpush.bf16.msra.mxu0 %v4020
      %4174 = vmatpush.bf16.msra.mxu0 %v4018
      %4175 = vmatpush.bf16.msra.mxu0 %v4016
      %4176 = vmatpush.bf16.msra.mxu0 %v4014
      %4177 = vmatpush.bf16.msra.mxu0 %v4012
      %4178 = vmatpush.bf16.msra.mxu0 %v4010
      %4179 = vmatmul.bf16.gmra.mxu0 %v3411
      %v4180 = vpop.f32.mrf.mxu0
      %v4181 = vadd.f32 %v3910, %v4180
      %v4182 = vpop.f32.mrf.mxu0
      %v4183 = vadd.f32 %v3910, %v4182
      %4184 = vmatmul.bf16.gmra.mxu0 %v3413
      %v4185 = vpop.f32.mrf.mxu0
      %v4186 = vadd.f32 %v3910, %v4185
      %v4187 = vpop.f32.mrf.mxu0
      %v4188 = vadd.f32 %v3910, %v4187
      %4189 = vmatmul.bf16.gmra.mxu0 %v3415
      %v4190 = vpop.f32.mrf.mxu0
      %v4191 = vadd.f32 %v3910, %v4190
      %v4192 = vpop.f32.mrf.mxu0
      %v4193 = vadd.f32 %v3910, %v4192
      %4194 = vmatmul.bf16.gmra.mxu0 %v3417
      %v4195 = vpop.f32.mrf.mxu0
      %v4196 = vadd.f32 %v3910, %v4195
      %v4197 = vpop.f32.mrf.mxu0
      %v4198 = vadd.f32 %v3910, %v4197
      %4199 = vmatmul.bf16.gmra.mxu0 %v3419
      %v4200 = vpop.f32.mrf.mxu0
      %v4201 = vadd.f32 %v3910, %v4200
      %v4202 = vpop.f32.mrf.mxu0
      %v4203 = vadd.f32 %v3910, %v4202
      %4204 = vmatmul.bf16.gmra.mxu0 %v3421
      %v4205 = vpop.f32.mrf.mxu0
      %v4206 = vadd.f32 %v3910, %v4205
      %v4207 = vpop.f32.mrf.mxu0
      %v4208 = vadd.f32 %v3910, %v4207
      %4209 = vmatmul.bf16.gmra.mxu0 %v3423
      %v4210 = vpop.f32.mrf.mxu0
      %v4211 = vadd.f32 %v3910, %v4210
      %v4212 = vpop.f32.mrf.mxu0
      %v4213 = vadd.f32 %v3910, %v4212
      %4214 = vmatmul.bf16.gmra.mxu0 %v3425
      %v4215 = vpop.f32.mrf.mxu0
      %v4216 = vadd.f32 %v3910, %v4215
      %v4217 = vpop.f32.mrf.mxu0
      %v4218 = vadd.f32 %v3910, %v4217
      %4219 = vdwg.mxu0
      %4220 = vmatpush.bf16.msra.mxu0 %v4040
      %4221 = vmatpush.bf16.msra.mxu0 %v4038
      %4222 = vmatpush.bf16.msra.mxu0 %v4036
      %4223 = vmatpush.bf16.msra.mxu0 %v4034
      %4224 = vmatpush.bf16.msra.mxu0 %v4032
      %4225 = vmatpush.bf16.msra.mxu0 %v4030
      %4226 = vmatpush.bf16.msra.mxu0 %v4028
      %4227 = vmatpush.bf16.msra.mxu0 %v4026
      %4228 = vmatmul.bf16.gmra.mxu0 %v3412
      %v4229 = vpop.f32.mrf.mxu0
      %v4230 = vadd.f32 %v4181, %v4229
      %v4231 = vpop.f32.mrf.mxu0
      %v4232 = vadd.f32 %v4183, %v4231
      %4233 = vmatmul.bf16.gmra.mxu0 %v3414
      %v4234 = vpop.f32.mrf.mxu0
      %v4235 = vadd.f32 %v4186, %v4234
      %v4236 = vpop.f32.mrf.mxu0
      %v4237 = vadd.f32 %v4188, %v4236
      %4238 = vmatmul.bf16.gmra.mxu0 %v3416
      %v4239 = vpop.f32.mrf.mxu0
      %v4240 = vadd.f32 %v4191, %v4239
      %v4241 = vpop.f32.mrf.mxu0
      %v4242 = vadd.f32 %v4193, %v4241
      %4243 = vmatmul.bf16.gmra.mxu0 %v3418
      %v4244 = vpop.f32.mrf.mxu0
      %v4245 = vadd.f32 %v4196, %v4244
      %v4246 = vpop.f32.mrf.mxu0
      %v4247 = vadd.f32 %v4198, %v4246
      %4248 = vmatmul.bf16.gmra.mxu0 %v3420
      %v4249 = vpop.f32.mrf.mxu0
      %v4250 = vadd.f32 %v4201, %v4249
      %v4251 = vpop.f32.mrf.mxu0
      %v4252 = vadd.f32 %v4203, %v4251
      %4253 = vmatmul.bf16.gmra.mxu0 %v3422
      %v4254 = vpop.f32.mrf.mxu0
      %v4255 = vadd.f32 %v4206, %v4254
      %v4256 = vpop.f32.mrf.mxu0
      %v4257 = vadd.f32 %v4208, %v4256
      %4258 = vmatmul.bf16.gmra.mxu0 %v3424
      %v4259 = vpop.f32.mrf.mxu0
      %v4260 = vadd.f32 %v4211, %v4259
      %v4261 = vpop.f32.mrf.mxu0
      %v4262 = vadd.f32 %v4213, %v4261
      %4263 = vmatmul.bf16.gmra.mxu0 %v3426
      %v4264 = vpop.f32.mrf.mxu0
      %v4265 = vadd.f32 %v4216, %v4264
      %v4266 = vpop.f32.mrf.mxu0
      %v4267 = vadd.f32 %v4218, %v4266
      %4268 = vdwg.mxu0
      %4269 = vmatpush.bf16.msra.mxu0 %v4023
      %4270 = vmatpush.bf16.msra.mxu0 %v4021
      %4271 = vmatpush.bf16.msra.mxu0 %v4019
      %4272 = vmatpush.bf16.msra.mxu0 %v4017
      %4273 = vmatpush.bf16.msra.mxu0 %v4015
      %4274 = vmatpush.bf16.msra.mxu0 %v4013
      %4275 = vmatpush.bf16.msra.mxu0 %v4011
      %4276 = vmatpush.bf16.msra.mxu0 %v4009
      %4277 = vmatmul.bf16.gmra.mxu0 %v3859
      %v4278 = vpop.f32.mrf.mxu0
      %v4279 = vadd.f32 %v3909, %v4278
      %v4280 = vpop.f32.mrf.mxu0
      %v4281 = vadd.f32 %v3909, %v4280
      %4282 = vmatmul.bf16.gmra.mxu0 %v3861
      %v4283 = vpop.f32.mrf.mxu0
      %v4284 = vadd.f32 %v3909, %v4283
      %v4285 = vpop.f32.mrf.mxu0
      %v4286 = vadd.f32 %v3909, %v4285
      %4287 = vmatmul.bf16.gmra.mxu0 %v3863
      %v4288 = vpop.f32.mrf.mxu0
      %v4289 = vadd.f32 %v3909, %v4288
      %v4290 = vpop.f32.mrf.mxu0
      %v4291 = vadd.f32 %v3909, %v4290
      %4292 = vmatmul.bf16.gmra.mxu0 %v3865
      %v4293 = vpop.f32.mrf.mxu0
      %v4294 = vadd.f32 %v3909, %v4293
      %v4295 = vpop.f32.mrf.mxu0
      %v4296 = vadd.f32 %v3909, %v4295
      %4297 = vmatmul.bf16.gmra.mxu0 %v3867
      %v4298 = vpop.f32.mrf.mxu0
      %v4299 = vadd.f32 %v3909, %v4298
      %v4300 = vpop.f32.mrf.mxu0
      %v4301 = vadd.f32 %v3909, %v4300
      %4302 = vmatmul.bf16.gmra.mxu0 %v3869
      %v4303 = vpop.f32.mrf.mxu0
      %v4304 = vadd.f32 %v3909, %v4303
      %v4305 = vpop.f32.mrf.mxu0
      %v4306 = vadd.f32 %v3909, %v4305
      %4307 = vmatmul.bf16.gmra.mxu0 %v3871
      %v4308 = vpop.f32.mrf.mxu0
      %v4309 = vadd.f32 %v3909, %v4308
      %v4310 = vpop.f32.mrf.mxu0
      %v4311 = vadd.f32 %v3909, %v4310
      %4312 = vmatmul.bf16.gmra.mxu0 %v3873
      %v4313 = vpop.f32.mrf.mxu0
      %v4314 = vadd.f32 %v3909, %v4313
      %v4315 = vpop.f32.mrf.mxu0
      %v4316 = vadd.f32 %v3909, %v4315
      %4317 = vdwg.mxu0
      %4318 = vmatpush.bf16.msra.mxu0 %v4039
      %4319 = vmatpush.bf16.msra.mxu0 %v4037
      %4320 = vmatpush.bf16.msra.mxu0 %v4035
      %4321 = vmatpush.bf16.msra.mxu0 %v4033
      %4322 = vmatpush.bf16.msra.mxu0 %v4031
      %4323 = vmatpush.bf16.msra.mxu0 %v4029
      %4324 = vmatpush.bf16.msra.mxu0 %v4027
      %4325 = vmatpush.bf16.msra.mxu0 %v4025
      %4326 = vmatmul.bf16.gmra.mxu0 %v3860
      %v4327 = vpop.f32.mrf.mxu0
      %v4328 = vadd.f32 %v4279, %v4327
      %v4329 = vpop.f32.mrf.mxu0
      %v4330 = vadd.f32 %v4281, %v4329
      %4331 = vmatmul.bf16.gmra.mxu0 %v3862
      %v4332 = vpop.f32.mrf.mxu0
      %v4333 = vadd.f32 %v4284, %v4332
      %v4334 = vpop.f32.mrf.mxu0
      %v4335 = vadd.f32 %v4286, %v4334
      %4336 = vmatmul.bf16.gmra.mxu0 %v3864
      %v4337 = vpop.f32.mrf.mxu0
      %v4338 = vadd.f32 %v4289, %v4337
      %v4339 = vpop.f32.mrf.mxu0
      %v4340 = vadd.f32 %v4291, %v4339
      %4341 = vmatmul.bf16.gmra.mxu0 %v3866
      %v4342 = vpop.f32.mrf.mxu0
      %v4343 = vadd.f32 %v4294, %v4342
      %v4344 = vpop.f32.mrf.mxu0
      %v4345 = vadd.f32 %v4296, %v4344
      %4346 = vmatmul.bf16.gmra.mxu0 %v3868
      %v4347 = vpop.f32.mrf.mxu0
      %v4348 = vadd.f32 %v4299, %v4347
      %v4349 = vpop.f32.mrf.mxu0
      %v4350 = vadd.f32 %v4301, %v4349
      %4351 = vmatmul.bf16.gmra.mxu0 %v3870
      %v4352 = vpop.f32.mrf.mxu0
      %v4353 = vadd.f32 %v4304, %v4352
      %v4354 = vpop.f32.mrf.mxu0
      %v4355 = vadd.f32 %v4306, %v4354
      %4356 = vmatmul.bf16.gmra.mxu0 %v3872
      %v4357 = vpop.f32.mrf.mxu0
      %v4358 = vadd.f32 %v4309, %v4357
      %v4359 = vpop.f32.mrf.mxu0
      %v4360 = vadd.f32 %v4311, %v4359
      %4361 = vmatmul.bf16.gmra.mxu0 %v3874
      %v4362 = vpop.f32.mrf.mxu0
      %v4363 = vadd.f32 %v4314, %v4362
      %v4364 = vpop.f32.mrf.mxu0
      %v4365 = vadd.f32 %v4316, %v4364
      %4366 = vdwg.mxu0
      %4367 = vmatpush.bf16.msra.mxu0 %v4024
      %4368 = vmatpush.bf16.msra.mxu0 %v4022
      %4369 = vmatpush.bf16.msra.mxu0 %v4020
      %4370 = vmatpush.bf16.msra.mxu0 %v4018
      %4371 = vmatpush.bf16.msra.mxu0 %v4016
      %4372 = vmatpush.bf16.msra.mxu0 %v4014
      %4373 = vmatpush.bf16.msra.mxu0 %v4012
      %4374 = vmatpush.bf16.msra.mxu0 %v4010
      %4375 = vmatmul.bf16.gmra.mxu0 %v3859
      %v4376 = vpop.f32.mrf.mxu0
      %v4377 = vadd.f32 %v3910, %v4376
      %v4378 = vpop.f32.mrf.mxu0
      %v4379 = vadd.f32 %v3910, %v4378
      %4380 = vmatmul.bf16.gmra.mxu0 %v3861
      %v4381 = vpop.f32.mrf.mxu0
      %v4382 = vadd.f32 %v3910, %v4381
      %v4383 = vpop.f32.mrf.mxu0
      %v4384 = vadd.f32 %v3910, %v4383
      %4385 = vmatmul.bf16.gmra.mxu0 %v3863
      %v4386 = vpop.f32.mrf.mxu0
      %v4387 = vadd.f32 %v3910, %v4386
      %v4388 = vpop.f32.mrf.mxu0
      %v4389 = vadd.f32 %v3910, %v4388
      %4390 = vmatmul.bf16.gmra.mxu0 %v3865
      %v4391 = vpop.f32.mrf.mxu0
      %v4392 = vadd.f32 %v3910, %v4391
      %v4393 = vpop.f32.mrf.mxu0
      %v4394 = vadd.f32 %v3910, %v4393
      %4395 = vmatmul.bf16.gmra.mxu0 %v3867
      %v4396 = vpop.f32.mrf.mxu0
      %v4397 = vadd.f32 %v3910, %v4396
      %v4398 = vpop.f32.mrf.mxu0
      %v4399 = vadd.f32 %v3910, %v4398
      %4400 = vmatmul.bf16.gmra.mxu0 %v3869
      %v4401 = vpop.f32.mrf.mxu0
      %v4402 = vadd.f32 %v3910, %v4401
      %v4403 = vpop.f32.mrf.mxu0
      %v4404 = vadd.f32 %v3910, %v4403
      %4405 = vmatmul.bf16.gmra.mxu0 %v3871
      %v4406 = vpop.f32.mrf.mxu0
      %v4407 = vadd.f32 %v3910, %v4406
      %v4408 = vpop.f32.mrf.mxu0
      %v4409 = vadd.f32 %v3910, %v4408
      %4410 = vmatmul.bf16.gmra.mxu0 %v3873
      %v4411 = vpop.f32.mrf.mxu0
      %v4412 = vadd.f32 %v3910, %v4411
      %v4413 = vpop.f32.mrf.mxu0
      %v4414 = vadd.f32 %v3910, %v4413
      %4415 = vdwg.mxu0
      %4416 = vmatpush.bf16.msra.mxu0 %v4040
      %4417 = vmatpush.bf16.msra.mxu0 %v4038
      %4418 = vmatpush.bf16.msra.mxu0 %v4036
      %4419 = vmatpush.bf16.msra.mxu0 %v4034
      %4420 = vmatpush.bf16.msra.mxu0 %v4032
      %4421 = vmatpush.bf16.msra.mxu0 %v4030
      %4422 = vmatpush.bf16.msra.mxu0 %v4028
      %4423 = vmatpush.bf16.msra.mxu0 %v4026
      %4424 = vmatmul.bf16.gmra.mxu0 %v3860
      %v4425 = vpop.f32.mrf.mxu0
      %v4426 = vadd.f32 %v4377, %v4425
      %v4427 = vpop.f32.mrf.mxu0
      %v4428 = vadd.f32 %v4379, %v4427
      %4429 = vmatmul.bf16.gmra.mxu0 %v3862
      %v4430 = vpop.f32.mrf.mxu0
      %v4431 = vadd.f32 %v4382, %v4430
      %v4432 = vpop.f32.mrf.mxu0
      %v4433 = vadd.f32 %v4384, %v4432
      %4434 = vmatmul.bf16.gmra.mxu0 %v3864
      %v4435 = vpop.f32.mrf.mxu0
      %v4436 = vadd.f32 %v4387, %v4435
      %v4437 = vpop.f32.mrf.mxu0
      %v4438 = vadd.f32 %v4389, %v4437
      %4439 = vmatmul.bf16.gmra.mxu0 %v3866
      %v4440 = vpop.f32.mrf.mxu0
      %v4441 = vadd.f32 %v4392, %v4440
      %v4442 = vpop.f32.mrf.mxu0
      %v4443 = vadd.f32 %v4394, %v4442
      %4444 = vmatmul.bf16.gmra.mxu0 %v3868
      %v4445 = vpop.f32.mrf.mxu0
      %v4446 = vadd.f32 %v4397, %v4445
      %v4447 = vpop.f32.mrf.mxu0
      %v4448 = vadd.f32 %v4399, %v4447
      %4449 = vmatmul.bf16.gmra.mxu0 %v3870
      %v4450 = vpop.f32.mrf.mxu0
      %v4451 = vadd.f32 %v4402, %v4450
      %v4452 = vpop.f32.mrf.mxu0
      %v4453 = vadd.f32 %v4404, %v4452
      %4454 = vmatmul.bf16.gmra.mxu0 %v3872
      %v4455 = vpop.f32.mrf.mxu0
      %v4456 = vadd.f32 %v4407, %v4455
      %v4457 = vpop.f32.mrf.mxu0
      %v4458 = vadd.f32 %v4409, %v4457
      %4459 = vmatmul.bf16.gmra.mxu0 %v3874
      %v4460 = vpop.f32.mrf.mxu0
      %v4461 = vadd.f32 %v4412, %v4460
      %v4462 = vpop.f32.mrf.mxu0
      %v4463 = vadd.f32 %v4414, %v4462
      %4464 = vdwg.mxu0
      %v4465 = vadd.f32 %v4132, %v4230
      %4466 = vadd.xlane.f32.xlu0 %v4465
      %v4467 = vpop.xlane.xlu0 %4466
      %v4468 = vadd.f32 %v4134, %v4232
      %4469 = vadd.xlane.f32.xlu0 %v4468
      %v4470 = vpop.xlane.xlu0 %4469
      %v4471 = vadd.f32 %v4137, %v4235
      %4472 = vadd.xlane.f32.xlu0 %v4471
      %v4473 = vpop.xlane.xlu0 %4472
      %v4474 = vadd.f32 %v4139, %v4237
      %4475 = vadd.xlane.f32.xlu0 %v4474
      %v4476 = vpop.xlane.xlu0 %4475
      %v4477 = vadd.f32 %v4142, %v4240
      %4478 = vadd.xlane.f32.xlu0 %v4477
      %v4479 = vpop.xlane.xlu0 %4478
      %v4480 = vadd.f32 %v4144, %v4242
      %4481 = vadd.xlane.f32.xlu0 %v4480
      %v4482 = vpop.xlane.xlu0 %4481
      %v4483 = vadd.f32 %v4147, %v4245
      %4484 = vadd.xlane.f32.xlu0 %v4483
      %v4485 = vpop.xlane.xlu0 %4484
      %v4486 = vadd.f32 %v4149, %v4247
      %4487 = vadd.xlane.f32.xlu0 %v4486
      %v4488 = vpop.xlane.xlu0 %4487
      %v4489 = vadd.f32 %v4152, %v4250
      %4490 = vadd.xlane.f32.xlu0 %v4489
      %v4491 = vpop.xlane.xlu0 %4490
      %v4492 = vadd.f32 %v4154, %v4252
      %4493 = vadd.xlane.f32.xlu0 %v4492
      %v4494 = vpop.xlane.xlu0 %4493
      %v4495 = vadd.f32 %v4157, %v4255
      %4496 = vadd.xlane.f32.xlu0 %v4495
      %v4497 = vpop.xlane.xlu0 %4496
      %v4498 = vadd.f32 %v4159, %v4257
      %4499 = vadd.xlane.f32.xlu0 %v4498
      %v4500 = vpop.xlane.xlu0 %4499
      %v4501 = vadd.f32 %v4162, %v4260
      %4502 = vadd.xlane.f32.xlu0 %v4501
      %v4503 = vpop.xlane.xlu0 %4502
      %v4504 = vadd.f32 %v4164, %v4262
      %4505 = vadd.xlane.f32.xlu0 %v4504
      %v4506 = vpop.xlane.xlu0 %4505
      %v4507 = vadd.f32 %v4167, %v4265
      %4508 = vadd.xlane.f32.xlu0 %v4507
      %v4509 = vpop.xlane.xlu0 %4508
      %v4510 = vadd.f32 %v4169, %v4267
      %4511 = vadd.xlane.f32.xlu0 %v4510
      %v4512 = vpop.xlane.xlu0 %4511
      %v4513 = vmul.f32 %v4467, %v1140
      %v4514 = vmul.f32 %v4470, %v1140
      %v4515 = vmul.f32 %v4473, %v1140
      %v4516 = vmul.f32 %v4476, %v1140
      %v4517 = vmul.f32 %v4479, %v1140
      %v4518 = vmul.f32 %v4482, %v1140
      %v4519 = vmul.f32 %v4485, %v1140
      %v4520 = vmul.f32 %v4488, %v1140
      %v4521 = vmul.f32 %v4491, %v1140
      %v4522 = vmul.f32 %v4494, %v1140
      %v4523 = vmul.f32 %v4497, %v1140
      %v4524 = vmul.f32 %v4500, %v1140
      %v4525 = vmul.f32 %v4503, %v1140
      %v4526 = vmul.f32 %v4506, %v1140
      %v4527 = vmul.f32 %v4509, %v1140
      %v4528 = vmul.f32 %v4512, %v1140
      %v4529 = vsub.f32 %v4132, %v4513
      %v4530 = vsub.f32 %v4230, %v4513
      %v4531 = vsub.f32 %v4134, %v4514
      %v4532 = vsub.f32 %v4232, %v4514
      %v4533 = vsub.f32 %v4137, %v4515
      %v4534 = vsub.f32 %v4235, %v4515
      %v4535 = vsub.f32 %v4139, %v4516
      %v4536 = vsub.f32 %v4237, %v4516
      %v4537 = vsub.f32 %v4142, %v4517
      %v4538 = vsub.f32 %v4240, %v4517
      %v4539 = vsub.f32 %v4144, %v4518
      %v4540 = vsub.f32 %v4242, %v4518
      %v4541 = vsub.f32 %v4147, %v4519
      %v4542 = vsub.f32 %v4245, %v4519
      %v4543 = vsub.f32 %v4149, %v4520
      %v4544 = vsub.f32 %v4247, %v4520
      %v4545 = vsub.f32 %v4152, %v4521
      %v4546 = vsub.f32 %v4250, %v4521
      %v4547 = vsub.f32 %v4154, %v4522
      %v4548 = vsub.f32 %v4252, %v4522
      %v4549 = vsub.f32 %v4157, %v4523
      %v4550 = vsub.f32 %v4255, %v4523
      %v4551 = vsub.f32 %v4159, %v4524
      %v4552 = vsub.f32 %v4257, %v4524
      %v4553 = vsub.f32 %v4162, %v4525
      %v4554 = vsub.f32 %v4260, %v4525
      %v4555 = vsub.f32 %v4164, %v4526
      %v4556 = vsub.f32 %v4262, %v4526
      %v4557 = vsub.f32 %v4167, %v4527
      %v4558 = vsub.f32 %v4265, %v4527
      %v4559 = vsub.f32 %v4169, %v4528
      %v4560 = vsub.f32 %v4267, %v4528
      %v4561 = vmul.f32 %v4529, %v4529
      %v4562 = vmul.f32 %v4530, %v4530
      %v4563 = vmul.f32 %v4531, %v4531
      %v4564 = vmul.f32 %v4532, %v4532
      %v4565 = vmul.f32 %v4533, %v4533
      %v4566 = vmul.f32 %v4534, %v4534
      %v4567 = vmul.f32 %v4535, %v4535
      %v4568 = vmul.f32 %v4536, %v4536
      %v4569 = vmul.f32 %v4537, %v4537
      %v4570 = vmul.f32 %v4538, %v4538
      %v4571 = vmul.f32 %v4539, %v4539
      %v4572 = vmul.f32 %v4540, %v4540
      %v4573 = vmul.f32 %v4541, %v4541
      %v4574 = vmul.f32 %v4542, %v4542
      %v4575 = vmul.f32 %v4543, %v4543
      %v4576 = vmul.f32 %v4544, %v4544
      %v4577 = vmul.f32 %v4545, %v4545
      %v4578 = vmul.f32 %v4546, %v4546
      %v4579 = vmul.f32 %v4547, %v4547
      %v4580 = vmul.f32 %v4548, %v4548
      %v4581 = vmul.f32 %v4549, %v4549
      %v4582 = vmul.f32 %v4550, %v4550
      %v4583 = vmul.f32 %v4551, %v4551
      %v4584 = vmul.f32 %v4552, %v4552
      %v4585 = vmul.f32 %v4553, %v4553
      %v4586 = vmul.f32 %v4554, %v4554
      %v4587 = vmul.f32 %v4555, %v4555
      %v4588 = vmul.f32 %v4556, %v4556
      %v4589 = vmul.f32 %v4557, %v4557
      %v4590 = vmul.f32 %v4558, %v4558
      %v4591 = vmul.f32 %v4559, %v4559
      %v4592 = vmul.f32 %v4560, %v4560
      %v4593 = vadd.f32 %v4561, %v4562
      %4594 = vadd.xlane.f32.xlu0 %v4593
      %v4595 = vpop.xlane.xlu0 %4594
      %v4596 = vadd.f32 %v4563, %v4564
      %4597 = vadd.xlane.f32.xlu0 %v4596
      %v4598 = vpop.xlane.xlu0 %4597
      %v4599 = vadd.f32 %v4565, %v4566
      %4600 = vadd.xlane.f32.xlu0 %v4599
      %v4601 = vpop.xlane.xlu0 %4600
      %v4602 = vadd.f32 %v4567, %v4568
      %4603 = vadd.xlane.f32.xlu0 %v4602
      %v4604 = vpop.xlane.xlu0 %4603
      %v4605 = vadd.f32 %v4569, %v4570
      %4606 = vadd.xlane.f32.xlu0 %v4605
      %v4607 = vpop.xlane.xlu0 %4606
      %v4608 = vadd.f32 %v4571, %v4572
      %4609 = vadd.xlane.f32.xlu0 %v4608
      %v4610 = vpop.xlane.xlu0 %4609
      %v4611 = vadd.f32 %v4573, %v4574
      %4612 = vadd.xlane.f32.xlu0 %v4611
      %v4613 = vpop.xlane.xlu0 %4612
      %v4614 = vadd.f32 %v4575, %v4576
      %4615 = vadd.xlane.f32.xlu0 %v4614
      %v4616 = vpop.xlane.xlu0 %4615
      %v4617 = vadd.f32 %v4577, %v4578
      %4618 = vadd.xlane.f32.xlu0 %v4617
      %v4619 = vpop.xlane.xlu0 %4618
      %v4620 = vadd.f32 %v4579, %v4580
      %4621 = vadd.xlane.f32.xlu0 %v4620
      %v4622 = vpop.xlane.xlu0 %4621
      %v4623 = vadd.f32 %v4581, %v4582
      %4624 = vadd.xlane.f32.xlu0 %v4623
      %v4625 = vpop.xlane.xlu0 %4624
      %v4626 = vadd.f32 %v4583, %v4584
      %4627 = vadd.xlane.f32.xlu0 %v4626
      %v4628 = vpop.xlane.xlu0 %4627
      %v4629 = vadd.f32 %v4585, %v4586
      %4630 = vadd.xlane.f32.xlu0 %v4629
      %v4631 = vpop.xlane.xlu0 %4630
      %v4632 = vadd.f32 %v4587, %v4588
      %4633 = vadd.xlane.f32.xlu0 %v4632
      %v4634 = vpop.xlane.xlu0 %4633
      %v4635 = vadd.f32 %v4589, %v4590
      %4636 = vadd.xlane.f32.xlu0 %v4635
      %v4637 = vpop.xlane.xlu0 %4636
      %v4638 = vadd.f32 %v4591, %v4592
      %4639 = vadd.xlane.f32.xlu0 %v4638
      %v4640 = vpop.xlane.xlu0 %4639
      %v4641 = vmul.f32 %v4595, %v1140
      %v4642 = vmul.f32 %v4598, %v1140
      %v4643 = vmul.f32 %v4601, %v1140
      %v4644 = vmul.f32 %v4604, %v1140
      %v4645 = vmul.f32 %v4607, %v1140
      %v4646 = vmul.f32 %v4610, %v1140
      %v4647 = vmul.f32 %v4613, %v1140
      %v4648 = vmul.f32 %v4616, %v1140
      %v4649 = vmul.f32 %v4619, %v1140
      %v4650 = vmul.f32 %v4622, %v1140
      %v4651 = vmul.f32 %v4625, %v1140
      %v4652 = vmul.f32 %v4628, %v1140
      %v4653 = vmul.f32 %v4631, %v1140
      %v4654 = vmul.f32 %v4634, %v1140
      %v4655 = vmul.f32 %v4637, %v1140
      %v4656 = vmul.f32 %v4640, %v1140
      %v4657 = vadd.f32 %v4641, 1e-05
      %v4658 = vadd.f32 %v4642, 1e-05
      %v4659 = vadd.f32 %v4643, 1e-05
      %v4660 = vadd.f32 %v4644, 1e-05
      %v4661 = vadd.f32 %v4645, 1e-05
      %v4662 = vadd.f32 %v4646, 1e-05
      %v4663 = vadd.f32 %v4647, 1e-05
      %v4664 = vadd.f32 %v4648, 1e-05
      %v4665 = vadd.f32 %v4649, 1e-05
      %v4666 = vadd.f32 %v4650, 1e-05
      %v4667 = vadd.f32 %v4651, 1e-05
      %v4668 = vadd.f32 %v4652, 1e-05
      %v4669 = vadd.f32 %v4653, 1e-05
      %v4670 = vadd.f32 %v4654, 1e-05
      %v4671 = vadd.f32 %v4655, 1e-05
      %v4672 = vadd.f32 %v4656, 1e-05
      %v4673 = vrsqrt.pop %v4657
      %v4674 = vmul.f32 %v4673, %v4657
      %v4675 = vmul.f32 %v4674, %v4673
      %v4676 = vmul.f32 0.5, %v4675
      %v4677 = vsub.f32 1.5, %v4676
      %v4678 = vmul.f32 %v4673, %v4677
      %vm4679 = vweird.f32 %v4657
      %vm4680 = vweird.f32 %v4673
      %vm4681 = vmor %vm4679, %vm4680
      %v4682 = vsel %vm4681, %v4673, %v4678
      %v4683 = vrsqrt.pop %v4658
      %v4684 = vmul.f32 %v4683, %v4658
      %v4685 = vmul.f32 %v4684, %v4683
      %v4686 = vmul.f32 0.5, %v4685
      %v4687 = vsub.f32 1.5, %v4686
      %v4688 = vmul.f32 %v4683, %v4687
      %vm4689 = vweird.f32 %v4658
      %vm4690 = vweird.f32 %v4683
      %vm4691 = vmor %vm4689, %vm4690
      %v4692 = vsel %vm4691, %v4683, %v4688
      %v4693 = vrsqrt.pop %v4659
      %v4694 = vmul.f32 %v4693, %v4659
      %v4695 = vmul.f32 %v4694, %v4693
      %v4696 = vmul.f32 0.5, %v4695
      %v4697 = vsub.f32 1.5, %v4696
      %v4698 = vmul.f32 %v4693, %v4697
      %vm4699 = vweird.f32 %v4659
      %vm4700 = vweird.f32 %v4693
      %vm4701 = vmor %vm4699, %vm4700
      %v4702 = vsel %vm4701, %v4693, %v4698
      %v4703 = vrsqrt.pop %v4660
      %v4704 = vmul.f32 %v4703, %v4660
      %v4705 = vmul.f32 %v4704, %v4703
      %v4706 = vmul.f32 0.5, %v4705
      %v4707 = vsub.f32 1.5, %v4706
      %v4708 = vmul.f32 %v4703, %v4707
      %vm4709 = vweird.f32 %v4660
      %vm4710 = vweird.f32 %v4703
      %vm4711 = vmor %vm4709, %vm4710
      %v4712 = vsel %vm4711, %v4703, %v4708
      %v4713 = vrsqrt.pop %v4661
      %v4714 = vmul.f32 %v4713, %v4661
      %v4715 = vmul.f32 %v4714, %v4713
      %v4716 = vmul.f32 0.5, %v4715
      %v4717 = vsub.f32 1.5, %v4716
      %v4718 = vmul.f32 %v4713, %v4717
      %vm4719 = vweird.f32 %v4661
      %vm4720 = vweird.f32 %v4713
      %vm4721 = vmor %vm4719, %vm4720
      %v4722 = vsel %vm4721, %v4713, %v4718
      %v4723 = vrsqrt.pop %v4662
      %v4724 = vmul.f32 %v4723, %v4662
      %v4725 = vmul.f32 %v4724, %v4723
      %v4726 = vmul.f32 0.5, %v4725
      %v4727 = vsub.f32 1.5, %v4726
      %v4728 = vmul.f32 %v4723, %v4727
      %vm4729 = vweird.f32 %v4662
      %vm4730 = vweird.f32 %v4723
      %vm4731 = vmor %vm4729, %vm4730
      %v4732 = vsel %vm4731, %v4723, %v4728
      %v4733 = vrsqrt.pop %v4663
      %v4734 = vmul.f32 %v4733, %v4663
      %v4735 = vmul.f32 %v4734, %v4733
      %v4736 = vmul.f32 0.5, %v4735
      %v4737 = vsub.f32 1.5, %v4736
      %v4738 = vmul.f32 %v4733, %v4737
      %vm4739 = vweird.f32 %v4663
      %vm4740 = vweird.f32 %v4733
      %vm4741 = vmor %vm4739, %vm4740
      %v4742 = vsel %vm4741, %v4733, %v4738
      %v4743 = vrsqrt.pop %v4664
      %v4744 = vmul.f32 %v4743, %v4664
      %v4745 = vmul.f32 %v4744, %v4743
      %v4746 = vmul.f32 0.5, %v4745
      %v4747 = vsub.f32 1.5, %v4746
      %v4748 = vmul.f32 %v4743, %v4747
      %vm4749 = vweird.f32 %v4664
      %vm4750 = vweird.f32 %v4743
      %vm4751 = vmor %vm4749, %vm4750
      %v4752 = vsel %vm4751, %v4743, %v4748
      %v4753 = vrsqrt.pop %v4665
      %v4754 = vmul.f32 %v4753, %v4665
      %v4755 = vmul.f32 %v4754, %v4753
      %v4756 = vmul.f32 0.5, %v4755
      %v4757 = vsub.f32 1.5, %v4756
      %v4758 = vmul.f32 %v4753, %v4757
      %vm4759 = vweird.f32 %v4665
      %vm4760 = vweird.f32 %v4753
      %vm4761 = vmor %vm4759, %vm4760
      %v4762 = vsel %vm4761, %v4753, %v4758
      %v4763 = vrsqrt.pop %v4666
      %v4764 = vmul.f32 %v4763, %v4666
      %v4765 = vmul.f32 %v4764, %v4763
      %v4766 = vmul.f32 0.5, %v4765
      %v4767 = vsub.f32 1.5, %v4766
      %v4768 = vmul.f32 %v4763, %v4767
      %vm4769 = vweird.f32 %v4666
      %vm4770 = vweird.f32 %v4763
      %vm4771 = vmor %vm4769, %vm4770
      %v4772 = vsel %vm4771, %v4763, %v4768
      %v4773 = vrsqrt.pop %v4667
      %v4774 = vmul.f32 %v4773, %v4667
      %v4775 = vmul.f32 %v4774, %v4773
      %v4776 = vmul.f32 0.5, %v4775
      %v4777 = vsub.f32 1.5, %v4776
      %v4778 = vmul.f32 %v4773, %v4777
      %vm4779 = vweird.f32 %v4667
      %vm4780 = vweird.f32 %v4773
      %vm4781 = vmor %vm4779, %vm4780
      %v4782 = vsel %vm4781, %v4773, %v4778
      %v4783 = vrsqrt.pop %v4668
      %v4784 = vmul.f32 %v4783, %v4668
      %v4785 = vmul.f32 %v4784, %v4783
      %v4786 = vmul.f32 0.5, %v4785
      %v4787 = vsub.f32 1.5, %v4786
      %v4788 = vmul.f32 %v4783, %v4787
      %vm4789 = vweird.f32 %v4668
      %vm4790 = vweird.f32 %v4783
      %vm4791 = vmor %vm4789, %vm4790
      %v4792 = vsel %vm4791, %v4783, %v4788
      %v4793 = vrsqrt.pop %v4669
      %v4794 = vmul.f32 %v4793, %v4669
      %v4795 = vmul.f32 %v4794, %v4793
      %v4796 = vmul.f32 0.5, %v4795
      %v4797 = vsub.f32 1.5, %v4796
      %v4798 = vmul.f32 %v4793, %v4797
      %vm4799 = vweird.f32 %v4669
      %vm4800 = vweird.f32 %v4793
      %vm4801 = vmor %vm4799, %vm4800
      %v4802 = vsel %vm4801, %v4793, %v4798
      %v4803 = vrsqrt.pop %v4670
      %v4804 = vmul.f32 %v4803, %v4670
      %v4805 = vmul.f32 %v4804, %v4803
      %v4806 = vmul.f32 0.5, %v4805
      %v4807 = vsub.f32 1.5, %v4806
      %v4808 = vmul.f32 %v4803, %v4807
      %vm4809 = vweird.f32 %v4670
      %vm4810 = vweird.f32 %v4803
      %vm4811 = vmor %vm4809, %vm4810
      %v4812 = vsel %vm4811, %v4803, %v4808
      %v4813 = vrsqrt.pop %v4671
      %v4814 = vmul.f32 %v4813, %v4671
      %v4815 = vmul.f32 %v4814, %v4813
      %v4816 = vmul.f32 0.5, %v4815
      %v4817 = vsub.f32 1.5, %v4816
      %v4818 = vmul.f32 %v4813, %v4817
      %vm4819 = vweird.f32 %v4671
      %vm4820 = vweird.f32 %v4813
      %vm4821 = vmor %vm4819, %vm4820
      %v4822 = vsel %vm4821, %v4813, %v4818
      %v4823 = vrsqrt.pop %v4672
      %v4824 = vmul.f32 %v4823, %v4672
      %v4825 = vmul.f32 %v4824, %v4823
      %v4826 = vmul.f32 0.5, %v4825
      %v4827 = vsub.f32 1.5, %v4826
      %v4828 = vmul.f32 %v4823, %v4827
      %vm4829 = vweird.f32 %v4672
      %vm4830 = vweird.f32 %v4823
      %vm4831 = vmor %vm4829, %vm4830
      %v4832 = vsel %vm4831, %v4823, %v4828
      %v4833 = vmul.f32 %v4529, %v4682
      %v4834 = vmul.f32 %v4530, %v4682
      %v4835 = vmul.f32 %v4531, %v4692
      %v4836 = vmul.f32 %v4532, %v4692
      %v4837 = vmul.f32 %v4533, %v4702
      %v4838 = vmul.f32 %v4534, %v4702
      %v4839 = vmul.f32 %v4535, %v4712
      %v4840 = vmul.f32 %v4536, %v4712
      %v4841 = vmul.f32 %v4537, %v4722
      %v4842 = vmul.f32 %v4538, %v4722
      %v4843 = vmul.f32 %v4539, %v4732
      %v4844 = vmul.f32 %v4540, %v4732
      %v4845 = vmul.f32 %v4541, %v4742
      %v4846 = vmul.f32 %v4542, %v4742
      %v4847 = vmul.f32 %v4543, %v4752
      %v4848 = vmul.f32 %v4544, %v4752
      %v4849 = vmul.f32 %v4545, %v4762
      %v4850 = vmul.f32 %v4546, %v4762
      %v4851 = vmul.f32 %v4547, %v4772
      %v4852 = vmul.f32 %v4548, %v4772
      %v4853 = vmul.f32 %v4549, %v4782
      %v4854 = vmul.f32 %v4550, %v4782
      %v4855 = vmul.f32 %v4551, %v4792
      %v4856 = vmul.f32 %v4552, %v4792
      %v4857 = vmul.f32 %v4553, %v4802
      %v4858 = vmul.f32 %v4554, %v4802
      %v4859 = vmul.f32 %v4555, %v4812
      %v4860 = vmul.f32 %v4556, %v4812
      %v4861 = vmul.f32 %v4557, %v4822
      %v4862 = vmul.f32 %v4558, %v4822
      %v4863 = vmul.f32 %v4559, %v4832
      %v4864 = vmul.f32 %v4560, %v4832
      %v4865 = vmax.f32 %v4833, 0.0
      %v4866 = vmax.f32 %v4834, 0.0
      %v4867 = vmax.f32 %v4835, 0.0
      %v4868 = vmax.f32 %v4836, 0.0
      %v4869 = vmax.f32 %v4837, 0.0
      %v4870 = vmax.f32 %v4838, 0.0
      %v4871 = vmax.f32 %v4839, 0.0
      %v4872 = vmax.f32 %v4840, 0.0
      %v4873 = vmax.f32 %v4841, 0.0
      %v4874 = vmax.f32 %v4842, 0.0
      %v4875 = vmax.f32 %v4843, 0.0
      %v4876 = vmax.f32 %v4844, 0.0
      %v4877 = vmax.f32 %v4845, 0.0
      %v4878 = vmax.f32 %v4846, 0.0
      %v4879 = vmax.f32 %v4847, 0.0
      %v4880 = vmax.f32 %v4848, 0.0
      %v4881 = vmax.f32 %v4849, 0.0
      %v4882 = vmax.f32 %v4850, 0.0
      %v4883 = vmax.f32 %v4851, 0.0
      %v4884 = vmax.f32 %v4852, 0.0
      %v4885 = vmax.f32 %v4853, 0.0
      %v4886 = vmax.f32 %v4854, 0.0
      %v4887 = vmax.f32 %v4855, 0.0
      %v4888 = vmax.f32 %v4856, 0.0
      %v4889 = vmax.f32 %v4857, 0.0
      %v4890 = vmax.f32 %v4858, 0.0
      %v4891 = vmax.f32 %v4859, 0.0
      %v4892 = vmax.f32 %v4860, 0.0
      %v4893 = vmax.f32 %v4861, 0.0
      %v4894 = vmax.f32 %v4862, 0.0
      %v4895 = vmax.f32 %v4863, 0.0
      %v4896 = vmax.f32 %v4864, 0.0
      %v4897 = vpack.c.bf16 %v4867, %v4865
      %v4898 = vpack.c.bf16 %v4868, %v4866
      %v4899 = vpack.c.bf16 %v4871, %v4869
      %v4900 = vpack.c.bf16 %v4872, %v4870
      %v4901 = vpack.c.bf16 %v4875, %v4873
      %v4902 = vpack.c.bf16 %v4876, %v4874
      %v4903 = vpack.c.bf16 %v4879, %v4877
      %v4904 = vpack.c.bf16 %v4880, %v4878
      %v4905 = vpack.c.bf16 %v4883, %v4881
      %v4906 = vpack.c.bf16 %v4884, %v4882
      %v4907 = vpack.c.bf16 %v4887, %v4885
      %v4908 = vpack.c.bf16 %v4888, %v4886
      %v4909 = vpack.c.bf16 %v4891, %v4889
      %v4910 = vpack.c.bf16 %v4892, %v4890
      %v4911 = vpack.c.bf16 %v4895, %v4893
      %v4912 = vpack.c.bf16 %v4896, %v4894
      %v4913 = vadd.f32 %v4328, %v4426
      %4914 = vadd.xlane.f32.xlu0 %v4913
      %v4915 = vpop.xlane.xlu0 %4914
      %v4916 = vadd.f32 %v4330, %v4428
      %4917 = vadd.xlane.f32.xlu0 %v4916
      %v4918 = vpop.xlane.xlu0 %4917
      %v4919 = vadd.f32 %v4333, %v4431
      %4920 = vadd.xlane.f32.xlu0 %v4919
      %v4921 = vpop.xlane.xlu0 %4920
      %v4922 = vadd.f32 %v4335, %v4433
      %4923 = vadd.xlane.f32.xlu0 %v4922
      %v4924 = vpop.xlane.xlu0 %4923
      %v4925 = vadd.f32 %v4338, %v4436
      %4926 = vadd.xlane.f32.xlu0 %v4925
      %v4927 = vpop.xlane.xlu0 %4926
      %v4928 = vadd.f32 %v4340, %v4438
      %4929 = vadd.xlane.f32.xlu0 %v4928
      %v4930 = vpop.xlane.xlu0 %4929
      %v4931 = vadd.f32 %v4343, %v4441
      %4932 = vadd.xlane.f32.xlu0 %v4931
      %v4933 = vpop.xlane.xlu0 %4932
      %v4934 = vadd.f32 %v4345, %v4443
      %4935 = vadd.xlane.f32.xlu0 %v4934
      %v4936 = vpop.xlane.xlu0 %4935
      %v4937 = vadd.f32 %v4348, %v4446
      %4938 = vadd.xlane.f32.xlu0 %v4937
      %v4939 = vpop.xlane.xlu0 %4938
      %v4940 = vadd.f32 %v4350, %v4448
      %4941 = vadd.xlane.f32.xlu0 %v4940
      %v4942 = vpop.xlane.xlu0 %4941
      %v4943 = vadd.f32 %v4353, %v4451
      %4944 = vadd.xlane.f32.xlu0 %v4943
      %v4945 = vpop.xlane.xlu0 %4944
      %v4946 = vadd.f32 %v4355, %v4453
      %4947 = vadd.xlane.f32.xlu0 %v4946
      %v4948 = vpop.xlane.xlu0 %4947
      %v4949 = vadd.f32 %v4358, %v4456
      %4950 = vadd.xlane.f32.xlu0 %v4949
      %v4951 = vpop.xlane.xlu0 %4950
      %v4952 = vadd.f32 %v4360, %v4458
      %4953 = vadd.xlane.f32.xlu0 %v4952
      %v4954 = vpop.xlane.xlu0 %4953
      %v4955 = vadd.f32 %v4363, %v4461
      %4956 = vadd.xlane.f32.xlu0 %v4955
      %v4957 = vpop.xlane.xlu0 %4956
      %v4958 = vadd.f32 %v4365, %v4463
      %4959 = vadd.xlane.f32.xlu0 %v4958
      %v4960 = vpop.xlane.xlu0 %4959
      %v4961 = vmul.f32 %v4915, %v1140
      %v4962 = vmul.f32 %v4918, %v1140
      %v4963 = vmul.f32 %v4921, %v1140
      %v4964 = vmul.f32 %v4924, %v1140
      %v4965 = vmul.f32 %v4927, %v1140
      %v4966 = vmul.f32 %v4930, %v1140
      %v4967 = vmul.f32 %v4933, %v1140
      %v4968 = vmul.f32 %v4936, %v1140
      %v4969 = vmul.f32 %v4939, %v1140
      %v4970 = vmul.f32 %v4942, %v1140
      %v4971 = vmul.f32 %v4945, %v1140
      %v4972 = vmul.f32 %v4948, %v1140
      %v4973 = vmul.f32 %v4951, %v1140
      %v4974 = vmul.f32 %v4954, %v1140
      %v4975 = vmul.f32 %v4957, %v1140
      %v4976 = vmul.f32 %v4960, %v1140
      %v4977 = vsub.f32 %v4328, %v4961
      %v4978 = vsub.f32 %v4426, %v4961
      %v4979 = vsub.f32 %v4330, %v4962
      %v4980 = vsub.f32 %v4428, %v4962
      %v4981 = vsub.f32 %v4333, %v4963
      %v4982 = vsub.f32 %v4431, %v4963
      %v4983 = vsub.f32 %v4335, %v4964
      %v4984 = vsub.f32 %v4433, %v4964
      %v4985 = vsub.f32 %v4338, %v4965
      %v4986 = vsub.f32 %v4436, %v4965
      %v4987 = vsub.f32 %v4340, %v4966
      %v4988 = vsub.f32 %v4438, %v4966
      %v4989 = vsub.f32 %v4343, %v4967
      %v4990 = vsub.f32 %v4441, %v4967
      %v4991 = vsub.f32 %v4345, %v4968
      %v4992 = vsub.f32 %v4443, %v4968
      %v4993 = vsub.f32 %v4348, %v4969
      %v4994 = vsub.f32 %v4446, %v4969
      %v4995 = vsub.f32 %v4350, %v4970
      %v4996 = vsub.f32 %v4448, %v4970
      %v4997 = vsub.f32 %v4353, %v4971
      %v4998 = vsub.f32 %v4451, %v4971
      %v4999 = vsub.f32 %v4355, %v4972
      %v5000 = vsub.f32 %v4453, %v4972
      %v5001 = vsub.f32 %v4358, %v4973
      %v5002 = vsub.f32 %v4456, %v4973
      %v5003 = vsub.f32 %v4360, %v4974
      %v5004 = vsub.f32 %v4458, %v4974
      %v5005 = vsub.f32 %v4363, %v4975
      %v5006 = vsub.f32 %v4461, %v4975
      %v5007 = vsub.f32 %v4365, %v4976
      %v5008 = vsub.f32 %v4463, %v4976
      %v5009 = vmul.f32 %v4977, %v4977
      %v5010 = vmul.f32 %v4978, %v4978
      %v5011 = vmul.f32 %v4979, %v4979
      %v5012 = vmul.f32 %v4980, %v4980
      %v5013 = vmul.f32 %v4981, %v4981
      %v5014 = vmul.f32 %v4982, %v4982
      %v5015 = vmul.f32 %v4983, %v4983
      %v5016 = vmul.f32 %v4984, %v4984
      %v5017 = vmul.f32 %v4985, %v4985
      %v5018 = vmul.f32 %v4986, %v4986
      %v5019 = vmul.f32 %v4987, %v4987
      %v5020 = vmul.f32 %v4988, %v4988
      %v5021 = vmul.f32 %v4989, %v4989
      %v5022 = vmul.f32 %v4990, %v4990
      %v5023 = vmul.f32 %v4991, %v4991
      %v5024 = vmul.f32 %v4992, %v4992
      %v5025 = vmul.f32 %v4993, %v4993
      %v5026 = vmul.f32 %v4994, %v4994
      %v5027 = vmul.f32 %v4995, %v4995
      %v5028 = vmul.f32 %v4996, %v4996
      %v5029 = vmul.f32 %v4997, %v4997
      %v5030 = vmul.f32 %v4998, %v4998
      %v5031 = vmul.f32 %v4999, %v4999
      %v5032 = vmul.f32 %v5000, %v5000
      %v5033 = vmul.f32 %v5001, %v5001
      %v5034 = vmul.f32 %v5002, %v5002
      %v5035 = vmul.f32 %v5003, %v5003
      %v5036 = vmul.f32 %v5004, %v5004
      %v5037 = vmul.f32 %v5005, %v5005
      %v5038 = vmul.f32 %v5006, %v5006
      %v5039 = vmul.f32 %v5007, %v5007
      %v5040 = vmul.f32 %v5008, %v5008
      %v5041 = vadd.f32 %v5009, %v5010
      %5042 = vadd.xlane.f32.xlu0 %v5041
      %v5043 = vpop.xlane.xlu0 %5042
      %v5044 = vadd.f32 %v5011, %v5012
      %5045 = vadd.xlane.f32.xlu0 %v5044
      %v5046 = vpop.xlane.xlu0 %5045
      %v5047 = vadd.f32 %v5013, %v5014
      %5048 = vadd.xlane.f32.xlu0 %v5047
      %v5049 = vpop.xlane.xlu0 %5048
      %v5050 = vadd.f32 %v5015, %v5016
      %5051 = vadd.xlane.f32.xlu0 %v5050
      %v5052 = vpop.xlane.xlu0 %5051
      %v5053 = vadd.f32 %v5017, %v5018
      %5054 = vadd.xlane.f32.xlu0 %v5053
      %v5055 = vpop.xlane.xlu0 %5054
      %v5056 = vadd.f32 %v5019, %v5020
      %5057 = vadd.xlane.f32.xlu0 %v5056
      %v5058 = vpop.xlane.xlu0 %5057
      %v5059 = vadd.f32 %v5021, %v5022
      %5060 = vadd.xlane.f32.xlu0 %v5059
      %v5061 = vpop.xlane.xlu0 %5060
      %v5062 = vadd.f32 %v5023, %v5024
      %5063 = vadd.xlane.f32.xlu0 %v5062
      %v5064 = vpop.xlane.xlu0 %5063
      %v5065 = vadd.f32 %v5025, %v5026
      %5066 = vadd.xlane.f32.xlu0 %v5065
      %v5067 = vpop.xlane.xlu0 %5066
      %v5068 = vadd.f32 %v5027, %v5028
      %5069 = vadd.xlane.f32.xlu0 %v5068
      %v5070 = vpop.xlane.xlu0 %5069
      %v5071 = vadd.f32 %v5029, %v5030
      %5072 = vadd.xlane.f32.xlu0 %v5071
      %v5073 = vpop.xlane.xlu0 %5072
      %v5074 = vadd.f32 %v5031, %v5032
      %5075 = vadd.xlane.f32.xlu0 %v5074
      %v5076 = vpop.xlane.xlu0 %5075
      %v5077 = vadd.f32 %v5033, %v5034
      %5078 = vadd.xlane.f32.xlu0 %v5077
      %v5079 = vpop.xlane.xlu0 %5078
      %v5080 = vadd.f32 %v5035, %v5036
      %5081 = vadd.xlane.f32.xlu0 %v5080
      %v5082 = vpop.xlane.xlu0 %5081
      %v5083 = vadd.f32 %v5037, %v5038
      %5084 = vadd.xlane.f32.xlu0 %v5083
      %v5085 = vpop.xlane.xlu0 %5084
      %v5086 = vadd.f32 %v5039, %v5040
      %5087 = vadd.xlane.f32.xlu0 %v5086
      %v5088 = vpop.xlane.xlu0 %5087
      %v5089 = vmul.f32 %v5043, %v1140
      %v5090 = vmul.f32 %v5046, %v1140
      %v5091 = vmul.f32 %v5049, %v1140
      %v5092 = vmul.f32 %v5052, %v1140
      %v5093 = vmul.f32 %v5055, %v1140
      %v5094 = vmul.f32 %v5058, %v1140
      %v5095 = vmul.f32 %v5061, %v1140
      %v5096 = vmul.f32 %v5064, %v1140
      %v5097 = vmul.f32 %v5067, %v1140
      %v5098 = vmul.f32 %v5070, %v1140
      %v5099 = vmul.f32 %v5073, %v1140
      %v5100 = vmul.f32 %v5076, %v1140
      %v5101 = vmul.f32 %v5079, %v1140
      %v5102 = vmul.f32 %v5082, %v1140
      %v5103 = vmul.f32 %v5085, %v1140
      %v5104 = vmul.f32 %v5088, %v1140
      %v5105 = vadd.f32 %v5089, 1e-05
      %v5106 = vadd.f32 %v5090, 1e-05
      %v5107 = vadd.f32 %v5091, 1e-05
      %v5108 = vadd.f32 %v5092, 1e-05
      %v5109 = vadd.f32 %v5093, 1e-05
      %v5110 = vadd.f32 %v5094, 1e-05
      %v5111 = vadd.f32 %v5095, 1e-05
      %v5112 = vadd.f32 %v5096, 1e-05
      %v5113 = vadd.f32 %v5097, 1e-05
      %v5114 = vadd.f32 %v5098, 1e-05
      %v5115 = vadd.f32 %v5099, 1e-05
      %v5116 = vadd.f32 %v5100, 1e-05
      %v5117 = vadd.f32 %v5101, 1e-05
      %v5118 = vadd.f32 %v5102, 1e-05
      %v5119 = vadd.f32 %v5103, 1e-05
      %v5120 = vadd.f32 %v5104, 1e-05
      %v5121 = vrsqrt.pop %v5105
      %v5122 = vmul.f32 %v5121, %v5105
      %v5123 = vmul.f32 %v5122, %v5121
      %v5124 = vmul.f32 0.5, %v5123
      %v5125 = vsub.f32 1.5, %v5124
      %v5126 = vmul.f32 %v5121, %v5125
      %vm5127 = vweird.f32 %v5105
      %vm5128 = vweird.f32 %v5121
      %vm5129 = vmor %vm5127, %vm5128
      %v5130 = vsel %vm5129, %v5121, %v5126
      %v5131 = vrsqrt.pop %v5106
      %v5132 = vmul.f32 %v5131, %v5106
      %v5133 = vmul.f32 %v5132, %v5131
      %v5134 = vmul.f32 0.5, %v5133
      %v5135 = vsub.f32 1.5, %v5134
      %v5136 = vmul.f32 %v5131, %v5135
      %vm5137 = vweird.f32 %v5106
      %vm5138 = vweird.f32 %v5131
      %vm5139 = vmor %vm5137, %vm5138
      %v5140 = vsel %vm5139, %v5131, %v5136
      %v5141 = vrsqrt.pop %v5107
      %v5142 = vmul.f32 %v5141, %v5107
      %v5143 = vmul.f32 %v5142, %v5141
      %v5144 = vmul.f32 0.5, %v5143
      %v5145 = vsub.f32 1.5, %v5144
      %v5146 = vmul.f32 %v5141, %v5145
      %vm5147 = vweird.f32 %v5107
      %vm5148 = vweird.f32 %v5141
      %vm5149 = vmor %vm5147, %vm5148
      %v5150 = vsel %vm5149, %v5141, %v5146
      %v5151 = vrsqrt.pop %v5108
      %v5152 = vmul.f32 %v5151, %v5108
      %v5153 = vmul.f32 %v5152, %v5151
      %v5154 = vmul.f32 0.5, %v5153
      %v5155 = vsub.f32 1.5, %v5154
      %v5156 = vmul.f32 %v5151, %v5155
      %vm5157 = vweird.f32 %v5108
      %vm5158 = vweird.f32 %v5151
      %vm5159 = vmor %vm5157, %vm5158
      %v5160 = vsel %vm5159, %v5151, %v5156
      %v5161 = vrsqrt.pop %v5109
      %v5162 = vmul.f32 %v5161, %v5109
      %v5163 = vmul.f32 %v5162, %v5161
      %v5164 = vmul.f32 0.5, %v5163
      %v5165 = vsub.f32 1.5, %v5164
      %v5166 = vmul.f32 %v5161, %v5165
      %vm5167 = vweird.f32 %v5109
      %vm5168 = vweird.f32 %v5161
      %vm5169 = vmor %vm5167, %vm5168
      %v5170 = vsel %vm5169, %v5161, %v5166
      %v5171 = vrsqrt.pop %v5110
      %v5172 = vmul.f32 %v5171, %v5110
      %v5173 = vmul.f32 %v5172, %v5171
      %v5174 = vmul.f32 0.5, %v5173
      %v5175 = vsub.f32 1.5, %v5174
      %v5176 = vmul.f32 %v5171, %v5175
      %vm5177 = vweird.f32 %v5110
      %vm5178 = vweird.f32 %v5171
      %vm5179 = vmor %vm5177, %vm5178
      %v5180 = vsel %vm5179, %v5171, %v5176
      %v5181 = vrsqrt.pop %v5111
      %v5182 = vmul.f32 %v5181, %v5111
      %v5183 = vmul.f32 %v5182, %v5181
      %v5184 = vmul.f32 0.5, %v5183
      %v5185 = vsub.f32 1.5, %v5184
      %v5186 = vmul.f32 %v5181, %v5185
      %vm5187 = vweird.f32 %v5111
      %vm5188 = vweird.f32 %v5181
      %vm5189 = vmor %vm5187, %vm5188
      %v5190 = vsel %vm5189, %v5181, %v5186
      %v5191 = vrsqrt.pop %v5112
      %v5192 = vmul.f32 %v5191, %v5112
      %v5193 = vmul.f32 %v5192, %v5191
      %v5194 = vmul.f32 0.5, %v5193
      %v5195 = vsub.f32 1.5, %v5194
      %v5196 = vmul.f32 %v5191, %v5195
      %vm5197 = vweird.f32 %v5112
      %vm5198 = vweird.f32 %v5191
      %vm5199 = vmor %vm5197, %vm5198
      %v5200 = vsel %vm5199, %v5191, %v5196
      %v5201 = vrsqrt.pop %v5113
      %v5202 = vmul.f32 %v5201, %v5113
      %v5203 = vmul.f32 %v5202, %v5201
      %v5204 = vmul.f32 0.5, %v5203
      %v5205 = vsub.f32 1.5, %v5204
      %v5206 = vmul.f32 %v5201, %v5205
      %vm5207 = vweird.f32 %v5113
      %vm5208 = vweird.f32 %v5201
      %vm5209 = vmor %vm5207, %vm5208
      %v5210 = vsel %vm5209, %v5201, %v5206
      %v5211 = vrsqrt.pop %v5114
      %v5212 = vmul.f32 %v5211, %v5114
      %v5213 = vmul.f32 %v5212, %v5211
      %v5214 = vmul.f32 0.5, %v5213
      %v5215 = vsub.f32 1.5, %v5214
      %v5216 = vmul.f32 %v5211, %v5215
      %vm5217 = vweird.f32 %v5114
      %vm5218 = vweird.f32 %v5211
      %vm5219 = vmor %vm5217, %vm5218
      %v5220 = vsel %vm5219, %v5211, %v5216
      %v5221 = vrsqrt.pop %v5115
      %v5222 = vmul.f32 %v5221, %v5115
      %v5223 = vmul.f32 %v5222, %v5221
      %v5224 = vmul.f32 0.5, %v5223
      %v5225 = vsub.f32 1.5, %v5224
      %v5226 = vmul.f32 %v5221, %v5225
      %vm5227 = vweird.f32 %v5115
      %vm5228 = vweird.f32 %v5221
      %vm5229 = vmor %vm5227, %vm5228
      %v5230 = vsel %vm5229, %v5221, %v5226
      %v5231 = vrsqrt.pop %v5116
      %v5232 = vmul.f32 %v5231, %v5116
      %v5233 = vmul.f32 %v5232, %v5231
      %v5234 = vmul.f32 0.5, %v5233
      %v5235 = vsub.f32 1.5, %v5234
      %v5236 = vmul.f32 %v5231, %v5235
      %vm5237 = vweird.f32 %v5116
      %vm5238 = vweird.f32 %v5231
      %vm5239 = vmor %vm5237, %vm5238
      %v5240 = vsel %vm5239, %v5231, %v5236
      %v5241 = vrsqrt.pop %v5117
      %v5242 = vmul.f32 %v5241, %v5117
      %v5243 = vmul.f32 %v5242, %v5241
      %v5244 = vmul.f32 0.5, %v5243
      %v5245 = vsub.f32 1.5, %v5244
      %v5246 = vmul.f32 %v5241, %v5245
      %vm5247 = vweird.f32 %v5117
      %vm5248 = vweird.f32 %v5241
      %vm5249 = vmor %vm5247, %vm5248
      %v5250 = vsel %vm5249, %v5241, %v5246
      %v5251 = vrsqrt.pop %v5118
      %v5252 = vmul.f32 %v5251, %v5118
      %v5253 = vmul.f32 %v5252, %v5251
      %v5254 = vmul.f32 0.5, %v5253
      %v5255 = vsub.f32 1.5, %v5254
      %v5256 = vmul.f32 %v5251, %v5255
      %vm5257 = vweird.f32 %v5118
      %vm5258 = vweird.f32 %v5251
      %vm5259 = vmor %vm5257, %vm5258
      %v5260 = vsel %vm5259, %v5251, %v5256
      %v5261 = vrsqrt.pop %v5119
      %v5262 = vmul.f32 %v5261, %v5119
      %v5263 = vmul.f32 %v5262, %v5261
      %v5264 = vmul.f32 0.5, %v5263
      %v5265 = vsub.f32 1.5, %v5264
      %v5266 = vmul.f32 %v5261, %v5265
      %vm5267 = vweird.f32 %v5119
      %vm5268 = vweird.f32 %v5261
      %vm5269 = vmor %vm5267, %vm5268
      %v5270 = vsel %vm5269, %v5261, %v5266
      %v5271 = vrsqrt.pop %v5120
      %v5272 = vmul.f32 %v5271, %v5120
      %v5273 = vmul.f32 %v5272, %v5271
      %v5274 = vmul.f32 0.5, %v5273
      %v5275 = vsub.f32 1.5, %v5274
      %v5276 = vmul.f32 %v5271, %v5275
      %vm5277 = vweird.f32 %v5120
      %vm5278 = vweird.f32 %v5271
      %vm5279 = vmor %vm5277, %vm5278
      %v5280 = vsel %vm5279, %v5271, %v5276
      %v5281 = vmul.f32 %v4977, %v5130
      %v5282 = vmul.f32 %v4978, %v5130
      %v5283 = vmul.f32 %v4979, %v5140
      %v5284 = vmul.f32 %v4980, %v5140
      %v5285 = vmul.f32 %v4981, %v5150
      %v5286 = vmul.f32 %v4982, %v5150
      %v5287 = vmul.f32 %v4983, %v5160
      %v5288 = vmul.f32 %v4984, %v5160
      %v5289 = vmul.f32 %v4985, %v5170
      %v5290 = vmul.f32 %v4986, %v5170
      %v5291 = vmul.f32 %v4987, %v5180
      %v5292 = vmul.f32 %v4988, %v5180
      %v5293 = vmul.f32 %v4989, %v5190
      %v5294 = vmul.f32 %v4990, %v5190
      %v5295 = vmul.f32 %v4991, %v5200
      %v5296 = vmul.f32 %v4992, %v5200
      %v5297 = vmul.f32 %v4993, %v5210
      %v5298 = vmul.f32 %v4994, %v5210
      %v5299 = vmul.f32 %v4995, %v5220
      %v5300 = vmul.f32 %v4996, %v5220
      %v5301 = vmul.f32 %v4997, %v5230
      %v5302 = vmul.f32 %v4998, %v5230
      %v5303 = vmul.f32 %v4999, %v5240
      %v5304 = vmul.f32 %v5000, %v5240
      %v5305 = vmul.f32 %v5001, %v5250
      %v5306 = vmul.f32 %v5002, %v5250
      %v5307 = vmul.f32 %v5003, %v5260
      %v5308 = vmul.f32 %v5004, %v5260
      %v5309 = vmul.f32 %v5005, %v5270
      %v5310 = vmul.f32 %v5006, %v5270
      %v5311 = vmul.f32 %v5007, %v5280
      %v5312 = vmul.f32 %v5008, %v5280
      %v5313 = vmax.f32 %v5281, 0.0
      %v5314 = vmax.f32 %v5282, 0.0
      %v5315 = vmax.f32 %v5283, 0.0
      %v5316 = vmax.f32 %v5284, 0.0
      %v5317 = vmax.f32 %v5285, 0.0
      %v5318 = vmax.f32 %v5286, 0.0
      %v5319 = vmax.f32 %v5287, 0.0
      %v5320 = vmax.f32 %v5288, 0.0
      %v5321 = vmax.f32 %v5289, 0.0
      %v5322 = vmax.f32 %v5290, 0.0
      %v5323 = vmax.f32 %v5291, 0.0
      %v5324 = vmax.f32 %v5292, 0.0
      %v5325 = vmax.f32 %v5293, 0.0
      %v5326 = vmax.f32 %v5294, 0.0
      %v5327 = vmax.f32 %v5295, 0.0
      %v5328 = vmax.f32 %v5296, 0.0
      %v5329 = vmax.f32 %v5297, 0.0
      %v5330 = vmax.f32 %v5298, 0.0
      %v5331 = vmax.f32 %v5299, 0.0
      %v5332 = vmax.f32 %v5300, 0.0
      %v5333 = vmax.f32 %v5301, 0.0
      %v5334 = vmax.f32 %v5302, 0.0
      %v5335 = vmax.f32 %v5303, 0.0
      %v5336 = vmax.f32 %v5304, 0.0
      %v5337 = vmax.f32 %v5305, 0.0
      %v5338 = vmax.f32 %v5306, 0.0
      %v5339 = vmax.f32 %v5307, 0.0
      %v5340 = vmax.f32 %v5308, 0.0
      %v5341 = vmax.f32 %v5309, 0.0
      %v5342 = vmax.f32 %v5310, 0.0
      %v5343 = vmax.f32 %v5311, 0.0
      %v5344 = vmax.f32 %v5312, 0.0
      %v5345 = vpack.c.bf16 %v5315, %v5313
      %v5346 = vpack.c.bf16 %v5316, %v5314
      %v5347 = vpack.c.bf16 %v5319, %v5317
      %v5348 = vpack.c.bf16 %v5320, %v5318
      %v5349 = vpack.c.bf16 %v5323, %v5321
      %v5350 = vpack.c.bf16 %v5324, %v5322
      %v5351 = vpack.c.bf16 %v5327, %v5325
      %v5352 = vpack.c.bf16 %v5328, %v5326
      %v5353 = vpack.c.bf16 %v5331, %v5329
      %v5354 = vpack.c.bf16 %v5332, %v5330
      %v5355 = vpack.c.bf16 %v5335, %v5333
      %v5356 = vpack.c.bf16 %v5336, %v5334
      %v5357 = vpack.c.bf16 %v5339, %v5337
      %v5358 = vpack.c.bf16 %v5340, %v5338
      %v5359 = vpack.c.bf16 %v5343, %v5341
      %v5360 = vpack.c.bf16 %v5344, %v5342
      %v5361 = vld [vmem:[%s613] sm:$0xff]
      %v5362 = vld [vmem:[%s613 + $0x8] sm:$0xff]
      %v5363 = vld [vmem:[%s613 + $0x10] sm:$0xff]
      %v5364 = vld [vmem:[%s613 + $0x18] sm:$0xff]
      %v5365 = vld [vmem:[%s613 + $0x20] sm:$0xff]
      %v5366 = vld [vmem:[%s613 + $0x28] sm:$0xff]
      %v5367 = vld [vmem:[%s613 + $0x30] sm:$0xff]
      %v5368 = vld [vmem:[%s613 + $0x38] sm:$0xff]
      %v5369 = vld [vmem:[%s613 + $0x40] sm:$0xff]
      %v5370 = vld [vmem:[%s613 + $0x48] sm:$0xff]
      %v5371 = vld [vmem:[%s613 + $0x50] sm:$0xff]
      %v5372 = vld [vmem:[%s613 + $0x58] sm:$0xff]
      %v5373 = vld [vmem:[%s613 + $0x60] sm:$0xff]
      %v5374 = vld [vmem:[%s613 + $0x68] sm:$0xff]
      %v5375 = vld [vmem:[%s613 + $0x70] sm:$0xff]
      %v5376 = vld [vmem:[%s613 + $0x78] sm:$0xff]
      %v5377 = vld [vmem:[%s613 + $0x80] sm:$0xff]
      %v5378 = vld [vmem:[%s613 + $0x88] sm:$0xff]
      %v5379 = vld [vmem:[%s613 + $0x90] sm:$0xff]
      %v5380 = vld [vmem:[%s613 + $0x98] sm:$0xff]
      %v5381 = vld [vmem:[%s613 + $0xa0] sm:$0xff]
      %v5382 = vld [vmem:[%s613 + $0xa8] sm:$0xff]
      %v5383 = vld [vmem:[%s613 + $0xb0] sm:$0xff]
      %v5384 = vld [vmem:[%s613 + $0xb8] sm:$0xff]
      %v5385 = vld [vmem:[%s613 + $0xc0] sm:$0xff]
      %v5386 = vld [vmem:[%s613 + $0xc8] sm:$0xff]
      %v5387 = vld [vmem:[%s613 + $0xd0] sm:$0xff]
      %v5388 = vld [vmem:[%s613 + $0xd8] sm:$0xff]
      %v5389 = vld [vmem:[%s613 + $0xe0] sm:$0xff]
      %v5390 = vld [vmem:[%s613 + $0xe8] sm:$0xff]
      %v5391 = vld [vmem:[%s613 + $0xf0] sm:$0xff]
      %v5392 = vld [vmem:[%s613 + $0xf8] sm:$0xff]
      %v5393 = vld [vmem:[%s617] sm:$0x3]
      %v5395 = vperm.slane %v5393, 0
      %v5396 = vperm.slane %v5393, 1
      %v5431 = vunpack.c.l.b16 %v5361
      %v5432 = vunpack.c.h.b16 %v5361
      %v5433 = vunpack.c.l.b16 %v5362
      %v5434 = vunpack.c.h.b16 %v5362
      %v5435 = vunpack.c.l.b16 %v5363
      %v5436 = vunpack.c.h.b16 %v5363
      %v5437 = vunpack.c.l.b16 %v5364
      %v5438 = vunpack.c.h.b16 %v5364
      %v5439 = vunpack.c.l.b16 %v5365
      %v5440 = vunpack.c.h.b16 %v5365
      %v5441 = vunpack.c.l.b16 %v5366
      %v5442 = vunpack.c.h.b16 %v5366
      %v5443 = vunpack.c.l.b16 %v5367
      %v5444 = vunpack.c.h.b16 %v5367
      %v5445 = vunpack.c.l.b16 %v5368
      %v5446 = vunpack.c.h.b16 %v5368
      %v5447 = vunpack.c.l.b16 %v5369
      %v5448 = vunpack.c.h.b16 %v5369
      %v5449 = vunpack.c.l.b16 %v5370
      %v5450 = vunpack.c.h.b16 %v5370
      %v5451 = vunpack.c.l.b16 %v5371
      %v5452 = vunpack.c.h.b16 %v5371
      %v5453 = vunpack.c.l.b16 %v5372
      %v5454 = vunpack.c.h.b16 %v5372
      %v5455 = vunpack.c.l.b16 %v5373
      %v5456 = vunpack.c.h.b16 %v5373
      %v5457 = vunpack.c.l.b16 %v5374
      %v5458 = vunpack.c.h.b16 %v5374
      %v5459 = vunpack.c.l.b16 %v5375
      %v5460 = vunpack.c.h.b16 %v5375
      %v5461 = vunpack.c.l.b16 %v5376
      %v5462 = vunpack.c.h.b16 %v5376
      %v5463 = vunpack.c.l.b16 %v5377
      %v5464 = vunpack.c.h.b16 %v5377
      %v5465 = vunpack.c.l.b16 %v5378
      %v5466 = vunpack.c.h.b16 %v5378
      %v5467 = vunpack.c.l.b16 %v5379
      %v5468 = vunpack.c.h.b16 %v5379
      %v5469 = vunpack.c.l.b16 %v5380
      %v5470 = vunpack.c.h.b16 %v5380
      %v5471 = vunpack.c.l.b16 %v5381
      %v5472 = vunpack.c.h.b16 %v5381
      %v5473 = vunpack.c.l.b16 %v5382
      %v5474 = vunpack.c.h.b16 %v5382
      %v5475 = vunpack.c.l.b16 %v5383
      %v5476 = vunpack.c.h.b16 %v5383
      %v5477 = vunpack.c.l.b16 %v5384
      %v5478 = vunpack.c.h.b16 %v5384
      %v5479 = vunpack.c.l.b16 %v5385
      %v5480 = vunpack.c.h.b16 %v5385
      %v5481 = vunpack.c.l.b16 %v5386
      %v5482 = vunpack.c.h.b16 %v5386
      %v5483 = vunpack.c.l.b16 %v5387
      %v5484 = vunpack.c.h.b16 %v5387
      %v5485 = vunpack.c.l.b16 %v5388
      %v5486 = vunpack.c.h.b16 %v5388
      %v5487 = vunpack.c.l.b16 %v5389
      %v5488 = vunpack.c.h.b16 %v5389
      %v5489 = vunpack.c.l.b16 %v5390
      %v5490 = vunpack.c.h.b16 %v5390
      %v5491 = vunpack.c.l.b16 %v5391
      %v5492 = vunpack.c.h.b16 %v5391
      %v5493 = vunpack.c.l.b16 %v5392
      %v5494 = vunpack.c.h.b16 %v5392
      %v5495 = vpack.c.b16 %v5433, %v5431
      %v5496 = vpack.c.b16 %v5434, %v5432
      %v5497 = vpack.c.b16 %v5437, %v5435
      %v5498 = vpack.c.b16 %v5438, %v5436
      %v5499 = vpack.c.b16 %v5441, %v5439
      %v5500 = vpack.c.b16 %v5442, %v5440
      %v5501 = vpack.c.b16 %v5445, %v5443
      %v5502 = vpack.c.b16 %v5446, %v5444
      %v5503 = vpack.c.b16 %v5449, %v5447
      %v5504 = vpack.c.b16 %v5450, %v5448
      %v5505 = vpack.c.b16 %v5453, %v5451
      %v5506 = vpack.c.b16 %v5454, %v5452
      %v5507 = vpack.c.b16 %v5457, %v5455
      %v5508 = vpack.c.b16 %v5458, %v5456
      %v5509 = vpack.c.b16 %v5461, %v5459
      %v5510 = vpack.c.b16 %v5462, %v5460
      %v5511 = vpack.c.b16 %v5465, %v5463
      %v5512 = vpack.c.b16 %v5466, %v5464
      %v5513 = vpack.c.b16 %v5469, %v5467
      %v5514 = vpack.c.b16 %v5470, %v5468
      %v5515 = vpack.c.b16 %v5473, %v5471
      %v5516 = vpack.c.b16 %v5474, %v5472
      %v5517 = vpack.c.b16 %v5477, %v5475
      %v5518 = vpack.c.b16 %v5478, %v5476
      %v5519 = vpack.c.b16 %v5481, %v5479
      %v5520 = vpack.c.b16 %v5482, %v5480
      %v5521 = vpack.c.b16 %v5485, %v5483
      %v5522 = vpack.c.b16 %v5486, %v5484
      %v5523 = vpack.c.b16 %v5489, %v5487
      %v5524 = vpack.c.b16 %v5490, %v5488
      %v5525 = vpack.c.b16 %v5493, %v5491
      %v5526 = vpack.c.b16 %v5494, %v5492
      %5559 = vmatpush.bf16.msra.mxu0 %v5509
      %5560 = vmatpush.bf16.msra.mxu0 %v5507
      %5561 = vmatpush.bf16.msra.mxu0 %v5505
      %5562 = vmatpush.bf16.msra.mxu0 %v5503
      %5563 = vmatpush.bf16.msra.mxu0 %v5501
      %5564 = vmatpush.bf16.msra.mxu0 %v5499
      %5565 = vmatpush.bf16.msra.mxu0 %v5497
      %5566 = vmatpush.bf16.msra.mxu0 %v5495
      %5567 = vmatmul.bf16.gmra.mxu0 %v4897
      %v5568 = vpop.f32.mrf.mxu0
      %v5569 = vadd.f32 %v5395, %v5568
      %v5570 = vpop.f32.mrf.mxu0
      %v5571 = vadd.f32 %v5395, %v5570
      %5572 = vmatmul.bf16.gmra.mxu0 %v4899
      %v5573 = vpop.f32.mrf.mxu0
      %v5574 = vadd.f32 %v5395, %v5573
      %v5575 = vpop.f32.mrf.mxu0
      %v5576 = vadd.f32 %v5395, %v5575
      %5577 = vmatmul.bf16.gmra.mxu0 %v4901
      %v5578 = vpop.f32.mrf.mxu0
      %v5579 = vadd.f32 %v5395, %v5578
      %v5580 = vpop.f32.mrf.mxu0
      %v5581 = vadd.f32 %v5395, %v5580
      %5582 = vmatmul.bf16.gmra.mxu0 %v4903
      %v5583 = vpop.f32.mrf.mxu0
      %v5584 = vadd.f32 %v5395, %v5583
      %v5585 = vpop.f32.mrf.mxu0
      %v5586 = vadd.f32 %v5395, %v5585
      %5587 = vmatmul.bf16.gmra.mxu0 %v4905
      %v5588 = vpop.f32.mrf.mxu0
      %v5589 = vadd.f32 %v5395, %v5588
      %v5590 = vpop.f32.mrf.mxu0
      %v5591 = vadd.f32 %v5395, %v5590
      %5592 = vmatmul.bf16.gmra.mxu0 %v4907
      %v5593 = vpop.f32.mrf.mxu0
      %v5594 = vadd.f32 %v5395, %v5593
      %v5595 = vpop.f32.mrf.mxu0
      %v5596 = vadd.f32 %v5395, %v5595
      %5597 = vmatmul.bf16.gmra.mxu0 %v4909
      %v5598 = vpop.f32.mrf.mxu0
      %v5599 = vadd.f32 %v5395, %v5598
      %v5600 = vpop.f32.mrf.mxu0
      %v5601 = vadd.f32 %v5395, %v5600
      %5602 = vmatmul.bf16.gmra.mxu0 %v4911
      %v5603 = vpop.f32.mrf.mxu0
      %v5604 = vadd.f32 %v5395, %v5603
      %v5605 = vpop.f32.mrf.mxu0
      %v5606 = vadd.f32 %v5395, %v5605
      %5607 = vdwg.mxu0
      %5608 = vmatpush.bf16.msra.mxu0 %v5525
      %5609 = vmatpush.bf16.msra.mxu0 %v5523
      %5610 = vmatpush.bf16.msra.mxu0 %v5521
      %5611 = vmatpush.bf16.msra.mxu0 %v5519
      %5612 = vmatpush.bf16.msra.mxu0 %v5517
      %5613 = vmatpush.bf16.msra.mxu0 %v5515
      %5614 = vmatpush.bf16.msra.mxu0 %v5513
      %5615 = vmatpush.bf16.msra.mxu0 %v5511
      %5616 = vmatmul.bf16.gmra.mxu0 %v4898
      %v5617 = vpop.f32.mrf.mxu0
      %v5618 = vadd.f32 %v5569, %v5617
      %v5619 = vpop.f32.mrf.mxu0
      %v5620 = vadd.f32 %v5571, %v5619
      %5621 = vmatmul.bf16.gmra.mxu0 %v4900
      %v5622 = vpop.f32.mrf.mxu0
      %v5623 = vadd.f32 %v5574, %v5622
      %v5624 = vpop.f32.mrf.mxu0
      %v5625 = vadd.f32 %v5576, %v5624
      %5626 = vmatmul.bf16.gmra.mxu0 %v4902
      %v5627 = vpop.f32.mrf.mxu0
      %v5628 = vadd.f32 %v5579, %v5627
      %v5629 = vpop.f32.mrf.mxu0
      %v5630 = vadd.f32 %v5581, %v5629
      %5631 = vmatmul.bf16.gmra.mxu0 %v4904
      %v5632 = vpop.f32.mrf.mxu0
      %v5633 = vadd.f32 %v5584, %v5632
      %v5634 = vpop.f32.mrf.mxu0
      %v5635 = vadd.f32 %v5586, %v5634
      %5636 = vmatmul.bf16.gmra.mxu0 %v4906
      %v5637 = vpop.f32.mrf.mxu0
      %v5638 = vadd.f32 %v5589, %v5637
      %v5639 = vpop.f32.mrf.mxu0
      %v5640 = vadd.f32 %v5591, %v5639
      %5641 = vmatmul.bf16.gmra.mxu0 %v4908
      %v5642 = vpop.f32.mrf.mxu0
      %v5643 = vadd.f32 %v5594, %v5642
      %v5644 = vpop.f32.mrf.mxu0
      %v5645 = vadd.f32 %v5596, %v5644
      %5646 = vmatmul.bf16.gmra.mxu0 %v4910
      %v5647 = vpop.f32.mrf.mxu0
      %v5648 = vadd.f32 %v5599, %v5647
      %v5649 = vpop.f32.mrf.mxu0
      %v5650 = vadd.f32 %v5601, %v5649
      %5651 = vmatmul.bf16.gmra.mxu0 %v4912
      %v5652 = vpop.f32.mrf.mxu0
      %v5653 = vadd.f32 %v5604, %v5652
      %v5654 = vpop.f32.mrf.mxu0
      %v5655 = vadd.f32 %v5606, %v5654
      %5656 = vdwg.mxu0
      %5657 = vmatpush.bf16.msra.mxu0 %v5510
      %5658 = vmatpush.bf16.msra.mxu0 %v5508
      %5659 = vmatpush.bf16.msra.mxu0 %v5506
      %5660 = vmatpush.bf16.msra.mxu0 %v5504
      %5661 = vmatpush.bf16.msra.mxu0 %v5502
      %5662 = vmatpush.bf16.msra.mxu0 %v5500
      %5663 = vmatpush.bf16.msra.mxu0 %v5498
      %5664 = vmatpush.bf16.msra.mxu0 %v5496
      %5665 = vmatmul.bf16.gmra.mxu0 %v4897
      %v5666 = vpop.f32.mrf.mxu0
      %v5667 = vadd.f32 %v5396, %v5666
      %v5668 = vpop.f32.mrf.mxu0
      %v5669 = vadd.f32 %v5396, %v5668
      %5670 = vmatmul.bf16.gmra.mxu0 %v4899
      %v5671 = vpop.f32.mrf.mxu0
      %v5672 = vadd.f32 %v5396, %v5671
      %v5673 = vpop.f32.mrf.mxu0
      %v5674 = vadd.f32 %v5396, %v5673
      %5675 = vmatmul.bf16.gmra.mxu0 %v4901
      %v5676 = vpop.f32.mrf.mxu0
      %v5677 = vadd.f32 %v5396, %v5676
      %v5678 = vpop.f32.mrf.mxu0
      %v5679 = vadd.f32 %v5396, %v5678
      %5680 = vmatmul.bf16.gmra.mxu0 %v4903
      %v5681 = vpop.f32.mrf.mxu0
      %v5682 = vadd.f32 %v5396, %v5681
      %v5683 = vpop.f32.mrf.mxu0
      %v5684 = vadd.f32 %v5396, %v5683
      %5685 = vmatmul.bf16.gmra.mxu0 %v4905
      %v5686 = vpop.f32.mrf.mxu0
      %v5687 = vadd.f32 %v5396, %v5686
      %v5688 = vpop.f32.mrf.mxu0
      %v5689 = vadd.f32 %v5396, %v5688
      %5690 = vmatmul.bf16.gmra.mxu0 %v4907
      %v5691 = vpop.f32.mrf.mxu0
      %v5692 = vadd.f32 %v5396, %v5691
      %v5693 = vpop.f32.mrf.mxu0
      %v5694 = vadd.f32 %v5396, %v5693
      %5695 = vmatmul.bf16.gmra.mxu0 %v4909
      %v5696 = vpop.f32.mrf.mxu0
      %v5697 = vadd.f32 %v5396, %v5696
      %v5698 = vpop.f32.mrf.mxu0
      %v5699 = vadd.f32 %v5396, %v5698
      %5700 = vmatmul.bf16.gmra.mxu0 %v4911
      %v5701 = vpop.f32.mrf.mxu0
      %v5702 = vadd.f32 %v5396, %v5701
      %v5703 = vpop.f32.mrf.mxu0
      %v5704 = vadd.f32 %v5396, %v5703
      %5705 = vdwg.mxu0
      %5706 = vmatpush.bf16.msra.mxu0 %v5526
      %5707 = vmatpush.bf16.msra.mxu0 %v5524
      %5708 = vmatpush.bf16.msra.mxu0 %v5522
      %5709 = vmatpush.bf16.msra.mxu0 %v5520
      %5710 = vmatpush.bf16.msra.mxu0 %v5518
      %5711 = vmatpush.bf16.msra.mxu0 %v5516
      %5712 = vmatpush.bf16.msra.mxu0 %v5514
      %5713 = vmatpush.bf16.msra.mxu0 %v5512
      %5714 = vmatmul.bf16.gmra.mxu0 %v4898
      %v5715 = vpop.f32.mrf.mxu0
      %v5716 = vadd.f32 %v5667, %v5715
      %v5717 = vpop.f32.mrf.mxu0
      %v5718 = vadd.f32 %v5669, %v5717
      %5719 = vmatmul.bf16.gmra.mxu0 %v4900
      %v5720 = vpop.f32.mrf.mxu0
      %v5721 = vadd.f32 %v5672, %v5720
      %v5722 = vpop.f32.mrf.mxu0
      %v5723 = vadd.f32 %v5674, %v5722
      %5724 = vmatmul.bf16.gmra.mxu0 %v4902
      %v5725 = vpop.f32.mrf.mxu0
      %v5726 = vadd.f32 %v5677, %v5725
      %v5727 = vpop.f32.mrf.mxu0
      %v5728 = vadd.f32 %v5679, %v5727
      %5729 = vmatmul.bf16.gmra.mxu0 %v4904
      %v5730 = vpop.f32.mrf.mxu0
      %v5731 = vadd.f32 %v5682, %v5730
      %v5732 = vpop.f32.mrf.mxu0
      %v5733 = vadd.f32 %v5684, %v5732
      %5734 = vmatmul.bf16.gmra.mxu0 %v4906
      %v5735 = vpop.f32.mrf.mxu0
      %v5736 = vadd.f32 %v5687, %v5735
      %v5737 = vpop.f32.mrf.mxu0
      %v5738 = vadd.f32 %v5689, %v5737
      %5739 = vmatmul.bf16.gmra.mxu0 %v4908
      %v5740 = vpop.f32.mrf.mxu0
      %v5741 = vadd.f32 %v5692, %v5740
      %v5742 = vpop.f32.mrf.mxu0
      %v5743 = vadd.f32 %v5694, %v5742
      %5744 = vmatmul.bf16.gmra.mxu0 %v4910
      %v5745 = vpop.f32.mrf.mxu0
      %v5746 = vadd.f32 %v5697, %v5745
      %v5747 = vpop.f32.mrf.mxu0
      %v5748 = vadd.f32 %v5699, %v5747
      %5749 = vmatmul.bf16.gmra.mxu0 %v4912
      %v5750 = vpop.f32.mrf.mxu0
      %v5751 = vadd.f32 %v5702, %v5750
      %v5752 = vpop.f32.mrf.mxu0
      %v5753 = vadd.f32 %v5704, %v5752
      %5754 = vdwg.mxu0
      %5755 = vmatpush.bf16.msra.mxu0 %v5509
      %5756 = vmatpush.bf16.msra.mxu0 %v5507
      %5757 = vmatpush.bf16.msra.mxu0 %v5505
      %5758 = vmatpush.bf16.msra.mxu0 %v5503
      %5759 = vmatpush.bf16.msra.mxu0 %v5501
      %5760 = vmatpush.bf16.msra.mxu0 %v5499
      %5761 = vmatpush.bf16.msra.mxu0 %v5497
      %5762 = vmatpush.bf16.msra.mxu0 %v5495
      %5763 = vmatmul.bf16.gmra.mxu0 %v5345
      %v5764 = vpop.f32.mrf.mxu0
      %v5765 = vadd.f32 %v5395, %v5764
      %v5766 = vpop.f32.mrf.mxu0
      %v5767 = vadd.f32 %v5395, %v5766
      %5768 = vmatmul.bf16.gmra.mxu0 %v5347
      %v5769 = vpop.f32.mrf.mxu0
      %v5770 = vadd.f32 %v5395, %v5769
      %v5771 = vpop.f32.mrf.mxu0
      %v5772 = vadd.f32 %v5395, %v5771
      %5773 = vmatmul.bf16.gmra.mxu0 %v5349
      %v5774 = vpop.f32.mrf.mxu0
      %v5775 = vadd.f32 %v5395, %v5774
      %v5776 = vpop.f32.mrf.mxu0
      %v5777 = vadd.f32 %v5395, %v5776
      %5778 = vmatmul.bf16.gmra.mxu0 %v5351
      %v5779 = vpop.f32.mrf.mxu0
      %v5780 = vadd.f32 %v5395, %v5779
      %v5781 = vpop.f32.mrf.mxu0
      %v5782 = vadd.f32 %v5395, %v5781
      %5783 = vmatmul.bf16.gmra.mxu0 %v5353
      %v5784 = vpop.f32.mrf.mxu0
      %v5785 = vadd.f32 %v5395, %v5784
      %v5786 = vpop.f32.mrf.mxu0
      %v5787 = vadd.f32 %v5395, %v5786
      %5788 = vmatmul.bf16.gmra.mxu0 %v5355
      %v5789 = vpop.f32.mrf.mxu0
      %v5790 = vadd.f32 %v5395, %v5789
      %v5791 = vpop.f32.mrf.mxu0
      %v5792 = vadd.f32 %v5395, %v5791
      %5793 = vmatmul.bf16.gmra.mxu0 %v5357
      %v5794 = vpop.f32.mrf.mxu0
      %v5795 = vadd.f32 %v5395, %v5794
      %v5796 = vpop.f32.mrf.mxu0
      %v5797 = vadd.f32 %v5395, %v5796
      %5798 = vmatmul.bf16.gmra.mxu0 %v5359
      %v5799 = vpop.f32.mrf.mxu0
      %v5800 = vadd.f32 %v5395, %v5799
      %v5801 = vpop.f32.mrf.mxu0
      %v5802 = vadd.f32 %v5395, %v5801
      %5803 = vdwg.mxu0
      %5804 = vmatpush.bf16.msra.mxu0 %v5525
      %5805 = vmatpush.bf16.msra.mxu0 %v5523
      %5806 = vmatpush.bf16.msra.mxu0 %v5521
      %5807 = vmatpush.bf16.msra.mxu0 %v5519
      %5808 = vmatpush.bf16.msra.mxu0 %v5517
      %5809 = vmatpush.bf16.msra.mxu0 %v5515
      %5810 = vmatpush.bf16.msra.mxu0 %v5513
      %5811 = vmatpush.bf16.msra.mxu0 %v5511
      %5812 = vmatmul.bf16.gmra.mxu0 %v5346
      %v5813 = vpop.f32.mrf.mxu0
      %v5814 = vadd.f32 %v5765, %v5813
      %v5815 = vpop.f32.mrf.mxu0
      %v5816 = vadd.f32 %v5767, %v5815
      %5817 = vmatmul.bf16.gmra.mxu0 %v5348
      %v5818 = vpop.f32.mrf.mxu0
      %v5819 = vadd.f32 %v5770, %v5818
      %v5820 = vpop.f32.mrf.mxu0
      %v5821 = vadd.f32 %v5772, %v5820
      %5822 = vmatmul.bf16.gmra.mxu0 %v5350
      %v5823 = vpop.f32.mrf.mxu0
      %v5824 = vadd.f32 %v5775, %v5823
      %v5825 = vpop.f32.mrf.mxu0
      %v5826 = vadd.f32 %v5777, %v5825
      %5827 = vmatmul.bf16.gmra.mxu0 %v5352
      %v5828 = vpop.f32.mrf.mxu0
      %v5829 = vadd.f32 %v5780, %v5828
      %v5830 = vpop.f32.mrf.mxu0
      %v5831 = vadd.f32 %v5782, %v5830
      %5832 = vmatmul.bf16.gmra.mxu0 %v5354
      %v5833 = vpop.f32.mrf.mxu0
      %v5834 = vadd.f32 %v5785, %v5833
      %v5835 = vpop.f32.mrf.mxu0
      %v5836 = vadd.f32 %v5787, %v5835
      %5837 = vmatmul.bf16.gmra.mxu0 %v5356
      %v5838 = vpop.f32.mrf.mxu0
      %v5839 = vadd.f32 %v5790, %v5838
      %v5840 = vpop.f32.mrf.mxu0
      %v5841 = vadd.f32 %v5792, %v5840
      %5842 = vmatmul.bf16.gmra.mxu0 %v5358
      %v5843 = vpop.f32.mrf.mxu0
      %v5844 = vadd.f32 %v5795, %v5843
      %v5845 = vpop.f32.mrf.mxu0
      %v5846 = vadd.f32 %v5797, %v5845
      %5847 = vmatmul.bf16.gmra.mxu0 %v5360
      %v5848 = vpop.f32.mrf.mxu0
      %v5849 = vadd.f32 %v5800, %v5848
      %v5850 = vpop.f32.mrf.mxu0
      %v5851 = vadd.f32 %v5802, %v5850
      %5852 = vdwg.mxu0
      %5853 = vmatpush.bf16.msra.mxu0 %v5510
      %5854 = vmatpush.bf16.msra.mxu0 %v5508
      %5855 = vmatpush.bf16.msra.mxu0 %v5506
      %5856 = vmatpush.bf16.msra.mxu0 %v5504
      %5857 = vmatpush.bf16.msra.mxu0 %v5502
      %5858 = vmatpush.bf16.msra.mxu0 %v5500
      %5859 = vmatpush.bf16.msra.mxu0 %v5498
      %5860 = vmatpush.bf16.msra.mxu0 %v5496
      %5861 = vmatmul.bf16.gmra.mxu0 %v5345
      %v5862 = vpop.f32.mrf.mxu0
      %v5863 = vadd.f32 %v5396, %v5862
      %v5864 = vpop.f32.mrf.mxu0
      %v5865 = vadd.f32 %v5396, %v5864
      %5866 = vmatmul.bf16.gmra.mxu0 %v5347
      %v5867 = vpop.f32.mrf.mxu0
      %v5868 = vadd.f32 %v5396, %v5867
      %v5869 = vpop.f32.mrf.mxu0
      %v5870 = vadd.f32 %v5396, %v5869
      %5871 = vmatmul.bf16.gmra.mxu0 %v5349
      %v5872 = vpop.f32.mrf.mxu0
      %v5873 = vadd.f32 %v5396, %v5872
      %v5874 = vpop.f32.mrf.mxu0
      %v5875 = vadd.f32 %v5396, %v5874
      %5876 = vmatmul.bf16.gmra.mxu0 %v5351
      %v5877 = vpop.f32.mrf.mxu0
      %v5878 = vadd.f32 %v5396, %v5877
      %v5879 = vpop.f32.mrf.mxu0
      %v5880 = vadd.f32 %v5396, %v5879
      %5881 = vmatmul.bf16.gmra.mxu0 %v5353
      %v5882 = vpop.f32.mrf.mxu0
      %v5883 = vadd.f32 %v5396, %v5882
      %v5884 = vpop.f32.mrf.mxu0
      %v5885 = vadd.f32 %v5396, %v5884
      %5886 = vmatmul.bf16.gmra.mxu0 %v5355
      %v5887 = vpop.f32.mrf.mxu0
      %v5888 = vadd.f32 %v5396, %v5887
      %v5889 = vpop.f32.mrf.mxu0
      %v5890 = vadd.f32 %v5396, %v5889
      %5891 = vmatmul.bf16.gmra.mxu0 %v5357
      %v5892 = vpop.f32.mrf.mxu0
      %v5893 = vadd.f32 %v5396, %v5892
      %v5894 = vpop.f32.mrf.mxu0
      %v5895 = vadd.f32 %v5396, %v5894
      %5896 = vmatmul.bf16.gmra.mxu0 %v5359
      %v5897 = vpop.f32.mrf.mxu0
      %v5898 = vadd.f32 %v5396, %v5897
      %v5899 = vpop.f32.mrf.mxu0
      %v5900 = vadd.f32 %v5396, %v5899
      %5901 = vdwg.mxu0
      %5902 = vmatpush.bf16.msra.mxu0 %v5526
      %5903 = vmatpush.bf16.msra.mxu0 %v5524
      %5904 = vmatpush.bf16.msra.mxu0 %v5522
      %5905 = vmatpush.bf16.msra.mxu0 %v5520
      %5906 = vmatpush.bf16.msra.mxu0 %v5518
      %5907 = vmatpush.bf16.msra.mxu0 %v5516
      %5908 = vmatpush.bf16.msra.mxu0 %v5514
      %5909 = vmatpush.bf16.msra.mxu0 %v5512
      %5910 = vmatmul.bf16.gmra.mxu0 %v5346
      %v5911 = vpop.f32.mrf.mxu0
      %v5912 = vadd.f32 %v5863, %v5911
      %v5913 = vpop.f32.mrf.mxu0
      %v5914 = vadd.f32 %v5865, %v5913
      %5915 = vmatmul.bf16.gmra.mxu0 %v5348
      %v5916 = vpop.f32.mrf.mxu0
      %v5917 = vadd.f32 %v5868, %v5916
      %v5918 = vpop.f32.mrf.mxu0
      %v5919 = vadd.f32 %v5870, %v5918
      %5920 = vmatmul.bf16.gmra.mxu0 %v5350
      %v5921 = vpop.f32.mrf.mxu0
      %v5922 = vadd.f32 %v5873, %v5921
      %v5923 = vpop.f32.mrf.mxu0
      %v5924 = vadd.f32 %v5875, %v5923
      %5925 = vmatmul.bf16.gmra.mxu0 %v5352
      %v5926 = vpop.f32.mrf.mxu0
      %v5927 = vadd.f32 %v5878, %v5926
      %v5928 = vpop.f32.mrf.mxu0
      %v5929 = vadd.f32 %v5880, %v5928
      %5930 = vmatmul.bf16.gmra.mxu0 %v5354
      %v5931 = vpop.f32.mrf.mxu0
      %v5932 = vadd.f32 %v5883, %v5931
      %v5933 = vpop.f32.mrf.mxu0
      %v5934 = vadd.f32 %v5885, %v5933
      %5935 = vmatmul.bf16.gmra.mxu0 %v5356
      %v5936 = vpop.f32.mrf.mxu0
      %v5937 = vadd.f32 %v5888, %v5936
      %v5938 = vpop.f32.mrf.mxu0
      %v5939 = vadd.f32 %v5890, %v5938
      %5940 = vmatmul.bf16.gmra.mxu0 %v5358
      %v5941 = vpop.f32.mrf.mxu0
      %v5942 = vadd.f32 %v5893, %v5941
      %v5943 = vpop.f32.mrf.mxu0
      %v5944 = vadd.f32 %v5895, %v5943
      %5945 = vmatmul.bf16.gmra.mxu0 %v5360
      %v5946 = vpop.f32.mrf.mxu0
      %v5947 = vadd.f32 %v5898, %v5946
      %v5948 = vpop.f32.mrf.mxu0
      %v5949 = vadd.f32 %v5900, %v5948
      %5950 = vdwg.mxu0
      %v5951 = vadd.f32 %v5618, %v5716
      %5952 = vadd.xlane.f32.xlu0 %v5951
      %v5953 = vpop.xlane.xlu0 %5952
      %v5954 = vadd.f32 %v5620, %v5718
      %5955 = vadd.xlane.f32.xlu0 %v5954
      %v5956 = vpop.xlane.xlu0 %5955
      %v5957 = vadd.f32 %v5623, %v5721
      %5958 = vadd.xlane.f32.xlu0 %v5957
      %v5959 = vpop.xlane.xlu0 %5958
      %v5960 = vadd.f32 %v5625, %v5723
      %5961 = vadd.xlane.f32.xlu0 %v5960
      %v5962 = vpop.xlane.xlu0 %5961
      %v5963 = vadd.f32 %v5628, %v5726
      %5964 = vadd.xlane.f32.xlu0 %v5963
      %v5965 = vpop.xlane.xlu0 %5964
      %v5966 = vadd.f32 %v5630, %v5728
      %5967 = vadd.xlane.f32.xlu0 %v5966
      %v5968 = vpop.xlane.xlu0 %5967
      %v5969 = vadd.f32 %v5633, %v5731
      %5970 = vadd.xlane.f32.xlu0 %v5969
      %v5971 = vpop.xlane.xlu0 %5970
      %v5972 = vadd.f32 %v5635, %v5733
      %5973 = vadd.xlane.f32.xlu0 %v5972
      %v5974 = vpop.xlane.xlu0 %5973
      %v5975 = vadd.f32 %v5638, %v5736
      %5976 = vadd.xlane.f32.xlu0 %v5975
      %v5977 = vpop.xlane.xlu0 %5976
      %v5978 = vadd.f32 %v5640, %v5738
      %5979 = vadd.xlane.f32.xlu0 %v5978
      %v5980 = vpop.xlane.xlu0 %5979
      %v5981 = vadd.f32 %v5643, %v5741
      %5982 = vadd.xlane.f32.xlu0 %v5981
      %v5983 = vpop.xlane.xlu0 %5982
      %v5984 = vadd.f32 %v5645, %v5743
      %5985 = vadd.xlane.f32.xlu0 %v5984
      %v5986 = vpop.xlane.xlu0 %5985
      %v5987 = vadd.f32 %v5648, %v5746
      %5988 = vadd.xlane.f32.xlu0 %v5987
      %v5989 = vpop.xlane.xlu0 %5988
      %v5990 = vadd.f32 %v5650, %v5748
      %5991 = vadd.xlane.f32.xlu0 %v5990
      %v5992 = vpop.xlane.xlu0 %5991
      %v5993 = vadd.f32 %v5653, %v5751
      %5994 = vadd.xlane.f32.xlu0 %v5993
      %v5995 = vpop.xlane.xlu0 %5994
      %v5996 = vadd.f32 %v5655, %v5753
      %5997 = vadd.xlane.f32.xlu0 %v5996
      %v5998 = vpop.xlane.xlu0 %5997
      %v5999 = vmul.f32 %v5953, %v1140
      %v6000 = vmul.f32 %v5956, %v1140
      %v6001 = vmul.f32 %v5959, %v1140
      %v6002 = vmul.f32 %v5962, %v1140
      %v6003 = vmul.f32 %v5965, %v1140
      %v6004 = vmul.f32 %v5968, %v1140
      %v6005 = vmul.f32 %v5971, %v1140
      %v6006 = vmul.f32 %v5974, %v1140
      %v6007 = vmul.f32 %v5977, %v1140
      %v6008 = vmul.f32 %v5980, %v1140
      %v6009 = vmul.f32 %v5983, %v1140
      %v6010 = vmul.f32 %v5986, %v1140
      %v6011 = vmul.f32 %v5989, %v1140
      %v6012 = vmul.f32 %v5992, %v1140
      %v6013 = vmul.f32 %v5995, %v1140
      %v6014 = vmul.f32 %v5998, %v1140
      %v6015 = vsub.f32 %v5618, %v5999
      %v6016 = vsub.f32 %v5716, %v5999
      %v6017 = vsub.f32 %v5620, %v6000
      %v6018 = vsub.f32 %v5718, %v6000
      %v6019 = vsub.f32 %v5623, %v6001
      %v6020 = vsub.f32 %v5721, %v6001
      %v6021 = vsub.f32 %v5625, %v6002
      %v6022 = vsub.f32 %v5723, %v6002
      %v6023 = vsub.f32 %v5628, %v6003
      %v6024 = vsub.f32 %v5726, %v6003
      %v6025 = vsub.f32 %v5630, %v6004
      %v6026 = vsub.f32 %v5728, %v6004
      %v6027 = vsub.f32 %v5633, %v6005
      %v6028 = vsub.f32 %v5731, %v6005
      %v6029 = vsub.f32 %v5635, %v6006
      %v6030 = vsub.f32 %v5733, %v6006
      %v6031 = vsub.f32 %v5638, %v6007
      %v6032 = vsub.f32 %v5736, %v6007
      %v6033 = vsub.f32 %v5640, %v6008
      %v6034 = vsub.f32 %v5738, %v6008
      %v6035 = vsub.f32 %v5643, %v6009
      %v6036 = vsub.f32 %v5741, %v6009
      %v6037 = vsub.f32 %v5645, %v6010
      %v6038 = vsub.f32 %v5743, %v6010
      %v6039 = vsub.f32 %v5648, %v6011
      %v6040 = vsub.f32 %v5746, %v6011
      %v6041 = vsub.f32 %v5650, %v6012
      %v6042 = vsub.f32 %v5748, %v6012
      %v6043 = vsub.f32 %v5653, %v6013
      %v6044 = vsub.f32 %v5751, %v6013
      %v6045 = vsub.f32 %v5655, %v6014
      %v6046 = vsub.f32 %v5753, %v6014
      %v6047 = vmul.f32 %v6015, %v6015
      %v6048 = vmul.f32 %v6016, %v6016
      %v6049 = vmul.f32 %v6017, %v6017
      %v6050 = vmul.f32 %v6018, %v6018
      %v6051 = vmul.f32 %v6019, %v6019
      %v6052 = vmul.f32 %v6020, %v6020
      %v6053 = vmul.f32 %v6021, %v6021
      %v6054 = vmul.f32 %v6022, %v6022
      %v6055 = vmul.f32 %v6023, %v6023
      %v6056 = vmul.f32 %v6024, %v6024
      %v6057 = vmul.f32 %v6025, %v6025
      %v6058 = vmul.f32 %v6026, %v6026
      %v6059 = vmul.f32 %v6027, %v6027
      %v6060 = vmul.f32 %v6028, %v6028
      %v6061 = vmul.f32 %v6029, %v6029
      %v6062 = vmul.f32 %v6030, %v6030
      %v6063 = vmul.f32 %v6031, %v6031
      %v6064 = vmul.f32 %v6032, %v6032
      %v6065 = vmul.f32 %v6033, %v6033
      %v6066 = vmul.f32 %v6034, %v6034
      %v6067 = vmul.f32 %v6035, %v6035
      %v6068 = vmul.f32 %v6036, %v6036
      %v6069 = vmul.f32 %v6037, %v6037
      %v6070 = vmul.f32 %v6038, %v6038
      %v6071 = vmul.f32 %v6039, %v6039
      %v6072 = vmul.f32 %v6040, %v6040
      %v6073 = vmul.f32 %v6041, %v6041
      %v6074 = vmul.f32 %v6042, %v6042
      %v6075 = vmul.f32 %v6043, %v6043
      %v6076 = vmul.f32 %v6044, %v6044
      %v6077 = vmul.f32 %v6045, %v6045
      %v6078 = vmul.f32 %v6046, %v6046
      %v6079 = vadd.f32 %v6047, %v6048
      %6080 = vadd.xlane.f32.xlu0 %v6079
      %v6081 = vpop.xlane.xlu0 %6080
      %v6082 = vadd.f32 %v6049, %v6050
      %6083 = vadd.xlane.f32.xlu0 %v6082
      %v6084 = vpop.xlane.xlu0 %6083
      %v6085 = vadd.f32 %v6051, %v6052
      %6086 = vadd.xlane.f32.xlu0 %v6085
      %v6087 = vpop.xlane.xlu0 %6086
      %v6088 = vadd.f32 %v6053, %v6054
      %6089 = vadd.xlane.f32.xlu0 %v6088
      %v6090 = vpop.xlane.xlu0 %6089
      %v6091 = vadd.f32 %v6055, %v6056
      %6092 = vadd.xlane.f32.xlu0 %v6091
      %v6093 = vpop.xlane.xlu0 %6092
      %v6094 = vadd.f32 %v6057, %v6058
      %6095 = vadd.xlane.f32.xlu0 %v6094
      %v6096 = vpop.xlane.xlu0 %6095
      %v6097 = vadd.f32 %v6059, %v6060
      %6098 = vadd.xlane.f32.xlu0 %v6097
      %v6099 = vpop.xlane.xlu0 %6098
      %v6100 = vadd.f32 %v6061, %v6062
      %6101 = vadd.xlane.f32.xlu0 %v6100
      %v6102 = vpop.xlane.xlu0 %6101
      %v6103 = vadd.f32 %v6063, %v6064
      %6104 = vadd.xlane.f32.xlu0 %v6103
      %v6105 = vpop.xlane.xlu0 %6104
      %v6106 = vadd.f32 %v6065, %v6066
      %6107 = vadd.xlane.f32.xlu0 %v6106
      %v6108 = vpop.xlane.xlu0 %6107
      %v6109 = vadd.f32 %v6067, %v6068
      %6110 = vadd.xlane.f32.xlu0 %v6109
      %v6111 = vpop.xlane.xlu0 %6110
      %v6112 = vadd.f32 %v6069, %v6070
      %6113 = vadd.xlane.f32.xlu0 %v6112
      %v6114 = vpop.xlane.xlu0 %6113
      %v6115 = vadd.f32 %v6071, %v6072
      %6116 = vadd.xlane.f32.xlu0 %v6115
      %v6117 = vpop.xlane.xlu0 %6116
      %v6118 = vadd.f32 %v6073, %v6074
      %6119 = vadd.xlane.f32.xlu0 %v6118
      %v6120 = vpop.xlane.xlu0 %6119
      %v6121 = vadd.f32 %v6075, %v6076
      %6122 = vadd.xlane.f32.xlu0 %v6121
      %v6123 = vpop.xlane.xlu0 %6122
      %v6124 = vadd.f32 %v6077, %v6078
      %6125 = vadd.xlane.f32.xlu0 %v6124
      %v6126 = vpop.xlane.xlu0 %6125
      %v6127 = vmul.f32 %v6081, %v1140
      %v6128 = vmul.f32 %v6084, %v1140
      %v6129 = vmul.f32 %v6087, %v1140
      %v6130 = vmul.f32 %v6090, %v1140
      %v6131 = vmul.f32 %v6093, %v1140
      %v6132 = vmul.f32 %v6096, %v1140
      %v6133 = vmul.f32 %v6099, %v1140
      %v6134 = vmul.f32 %v6102, %v1140
      %v6135 = vmul.f32 %v6105, %v1140
      %v6136 = vmul.f32 %v6108, %v1140
      %v6137 = vmul.f32 %v6111, %v1140
      %v6138 = vmul.f32 %v6114, %v1140
      %v6139 = vmul.f32 %v6117, %v1140
      %v6140 = vmul.f32 %v6120, %v1140
      %v6141 = vmul.f32 %v6123, %v1140
      %v6142 = vmul.f32 %v6126, %v1140
      %v6143 = vadd.f32 %v6127, 1e-05
      %v6144 = vadd.f32 %v6128, 1e-05
      %v6145 = vadd.f32 %v6129, 1e-05
      %v6146 = vadd.f32 %v6130, 1e-05
      %v6147 = vadd.f32 %v6131, 1e-05
      %v6148 = vadd.f32 %v6132, 1e-05
      %v6149 = vadd.f32 %v6133, 1e-05
      %v6150 = vadd.f32 %v6134, 1e-05
      %v6151 = vadd.f32 %v6135, 1e-05
      %v6152 = vadd.f32 %v6136, 1e-05
      %v6153 = vadd.f32 %v6137, 1e-05
      %v6154 = vadd.f32 %v6138, 1e-05
      %v6155 = vadd.f32 %v6139, 1e-05
      %v6156 = vadd.f32 %v6140, 1e-05
      %v6157 = vadd.f32 %v6141, 1e-05
      %v6158 = vadd.f32 %v6142, 1e-05
      %v6159 = vrsqrt.pop %v6143
      %v6160 = vmul.f32 %v6159, %v6143
      %v6161 = vmul.f32 %v6160, %v6159
      %v6162 = vmul.f32 0.5, %v6161
      %v6163 = vsub.f32 1.5, %v6162
      %v6164 = vmul.f32 %v6159, %v6163
      %vm6165 = vweird.f32 %v6143
      %vm6166 = vweird.f32 %v6159
      %vm6167 = vmor %vm6165, %vm6166
      %v6168 = vsel %vm6167, %v6159, %v6164
      %v6169 = vrsqrt.pop %v6144
      %v6170 = vmul.f32 %v6169, %v6144
      %v6171 = vmul.f32 %v6170, %v6169
      %v6172 = vmul.f32 0.5, %v6171
      %v6173 = vsub.f32 1.5, %v6172
      %v6174 = vmul.f32 %v6169, %v6173
      %vm6175 = vweird.f32 %v6144
      %vm6176 = vweird.f32 %v6169
      %vm6177 = vmor %vm6175, %vm6176
      %v6178 = vsel %vm6177, %v6169, %v6174
      %v6179 = vrsqrt.pop %v6145
      %v6180 = vmul.f32 %v6179, %v6145
      %v6181 = vmul.f32 %v6180, %v6179
      %v6182 = vmul.f32 0.5, %v6181
      %v6183 = vsub.f32 1.5, %v6182
      %v6184 = vmul.f32 %v6179, %v6183
      %vm6185 = vweird.f32 %v6145
      %vm6186 = vweird.f32 %v6179
      %vm6187 = vmor %vm6185, %vm6186
      %v6188 = vsel %vm6187, %v6179, %v6184
      %v6189 = vrsqrt.pop %v6146
      %v6190 = vmul.f32 %v6189, %v6146
      %v6191 = vmul.f32 %v6190, %v6189
      %v6192 = vmul.f32 0.5, %v6191
      %v6193 = vsub.f32 1.5, %v6192
      %v6194 = vmul.f32 %v6189, %v6193
      %vm6195 = vweird.f32 %v6146
      %vm6196 = vweird.f32 %v6189
      %vm6197 = vmor %vm6195, %vm6196
      %v6198 = vsel %vm6197, %v6189, %v6194
      %v6199 = vrsqrt.pop %v6147
      %v6200 = vmul.f32 %v6199, %v6147
      %v6201 = vmul.f32 %v6200, %v6199
      %v6202 = vmul.f32 0.5, %v6201
      %v6203 = vsub.f32 1.5, %v6202
      %v6204 = vmul.f32 %v6199, %v6203
      %vm6205 = vweird.f32 %v6147
      %vm6206 = vweird.f32 %v6199
      %vm6207 = vmor %vm6205, %vm6206
      %v6208 = vsel %vm6207, %v6199, %v6204
      %v6209 = vrsqrt.pop %v6148
      %v6210 = vmul.f32 %v6209, %v6148
      %v6211 = vmul.f32 %v6210, %v6209
      %v6212 = vmul.f32 0.5, %v6211
      %v6213 = vsub.f32 1.5, %v6212
      %v6214 = vmul.f32 %v6209, %v6213
      %vm6215 = vweird.f32 %v6148
      %vm6216 = vweird.f32 %v6209
      %vm6217 = vmor %vm6215, %vm6216
      %v6218 = vsel %vm6217, %v6209, %v6214
      %v6219 = vrsqrt.pop %v6149
      %v6220 = vmul.f32 %v6219, %v6149
      %v6221 = vmul.f32 %v6220, %v6219
      %v6222 = vmul.f32 0.5, %v6221
      %v6223 = vsub.f32 1.5, %v6222
      %v6224 = vmul.f32 %v6219, %v6223
      %vm6225 = vweird.f32 %v6149
      %vm6226 = vweird.f32 %v6219
      %vm6227 = vmor %vm6225, %vm6226
      %v6228 = vsel %vm6227, %v6219, %v6224
      %v6229 = vrsqrt.pop %v6150
      %v6230 = vmul.f32 %v6229, %v6150
      %v6231 = vmul.f32 %v6230, %v6229
      %v6232 = vmul.f32 0.5, %v6231
      %v6233 = vsub.f32 1.5, %v6232
      %v6234 = vmul.f32 %v6229, %v6233
      %vm6235 = vweird.f32 %v6150
      %vm6236 = vweird.f32 %v6229
      %vm6237 = vmor %vm6235, %vm6236
      %v6238 = vsel %vm6237, %v6229, %v6234
      %v6239 = vrsqrt.pop %v6151
      %v6240 = vmul.f32 %v6239, %v6151
      %v6241 = vmul.f32 %v6240, %v6239
      %v6242 = vmul.f32 0.5, %v6241
      %v6243 = vsub.f32 1.5, %v6242
      %v6244 = vmul.f32 %v6239, %v6243
      %vm6245 = vweird.f32 %v6151
      %vm6246 = vweird.f32 %v6239
      %vm6247 = vmor %vm6245, %vm6246
      %v6248 = vsel %vm6247, %v6239, %v6244
      %v6249 = vrsqrt.pop %v6152
      %v6250 = vmul.f32 %v6249, %v6152
      %v6251 = vmul.f32 %v6250, %v6249
      %v6252 = vmul.f32 0.5, %v6251
      %v6253 = vsub.f32 1.5, %v6252
      %v6254 = vmul.f32 %v6249, %v6253
      %vm6255 = vweird.f32 %v6152
      %vm6256 = vweird.f32 %v6249
      %vm6257 = vmor %vm6255, %vm6256
      %v6258 = vsel %vm6257, %v6249, %v6254
      %v6259 = vrsqrt.pop %v6153
      %v6260 = vmul.f32 %v6259, %v6153
      %v6261 = vmul.f32 %v6260, %v6259
      %v6262 = vmul.f32 0.5, %v6261
      %v6263 = vsub.f32 1.5, %v6262
      %v6264 = vmul.f32 %v6259, %v6263
      %vm6265 = vweird.f32 %v6153
      %vm6266 = vweird.f32 %v6259
      %vm6267 = vmor %vm6265, %vm6266
      %v6268 = vsel %vm6267, %v6259, %v6264
      %v6269 = vrsqrt.pop %v6154
      %v6270 = vmul.f32 %v6269, %v6154
      %v6271 = vmul.f32 %v6270, %v6269
      %v6272 = vmul.f32 0.5, %v6271
      %v6273 = vsub.f32 1.5, %v6272
      %v6274 = vmul.f32 %v6269, %v6273
      %vm6275 = vweird.f32 %v6154
      %vm6276 = vweird.f32 %v6269
      %vm6277 = vmor %vm6275, %vm6276
      %v6278 = vsel %vm6277, %v6269, %v6274
      %v6279 = vrsqrt.pop %v6155
      %v6280 = vmul.f32 %v6279, %v6155
      %v6281 = vmul.f32 %v6280, %v6279
      %v6282 = vmul.f32 0.5, %v6281
      %v6283 = vsub.f32 1.5, %v6282
      %v6284 = vmul.f32 %v6279, %v6283
      %vm6285 = vweird.f32 %v6155
      %vm6286 = vweird.f32 %v6279
      %vm6287 = vmor %vm6285, %vm6286
      %v6288 = vsel %vm6287, %v6279, %v6284
      %v6289 = vrsqrt.pop %v6156
      %v6290 = vmul.f32 %v6289, %v6156
      %v6291 = vmul.f32 %v6290, %v6289
      %v6292 = vmul.f32 0.5, %v6291
      %v6293 = vsub.f32 1.5, %v6292
      %v6294 = vmul.f32 %v6289, %v6293
      %vm6295 = vweird.f32 %v6156
      %vm6296 = vweird.f32 %v6289
      %vm6297 = vmor %vm6295, %vm6296
      %v6298 = vsel %vm6297, %v6289, %v6294
      %v6299 = vrsqrt.pop %v6157
      %v6300 = vmul.f32 %v6299, %v6157
      %v6301 = vmul.f32 %v6300, %v6299
      %v6302 = vmul.f32 0.5, %v6301
      %v6303 = vsub.f32 1.5, %v6302
      %v6304 = vmul.f32 %v6299, %v6303
      %vm6305 = vweird.f32 %v6157
      %vm6306 = vweird.f32 %v6299
      %vm6307 = vmor %vm6305, %vm6306
      %v6308 = vsel %vm6307, %v6299, %v6304
      %v6309 = vrsqrt.pop %v6158
      %v6310 = vmul.f32 %v6309, %v6158
      %v6311 = vmul.f32 %v6310, %v6309
      %v6312 = vmul.f32 0.5, %v6311
      %v6313 = vsub.f32 1.5, %v6312
      %v6314 = vmul.f32 %v6309, %v6313
      %vm6315 = vweird.f32 %v6158
      %vm6316 = vweird.f32 %v6309
      %vm6317 = vmor %vm6315, %vm6316
      %v6318 = vsel %vm6317, %v6309, %v6314
      %v6319 = vmul.f32 %v6015, %v6168
      %v6320 = vmul.f32 %v6016, %v6168
      %v6321 = vmul.f32 %v6017, %v6178
      %v6322 = vmul.f32 %v6018, %v6178
      %v6323 = vmul.f32 %v6019, %v6188
      %v6324 = vmul.f32 %v6020, %v6188
      %v6325 = vmul.f32 %v6021, %v6198
      %v6326 = vmul.f32 %v6022, %v6198
      %v6327 = vmul.f32 %v6023, %v6208
      %v6328 = vmul.f32 %v6024, %v6208
      %v6329 = vmul.f32 %v6025, %v6218
      %v6330 = vmul.f32 %v6026, %v6218
      %v6331 = vmul.f32 %v6027, %v6228
      %v6332 = vmul.f32 %v6028, %v6228
      %v6333 = vmul.f32 %v6029, %v6238
      %v6334 = vmul.f32 %v6030, %v6238
      %v6335 = vmul.f32 %v6031, %v6248
      %v6336 = vmul.f32 %v6032, %v6248
      %v6337 = vmul.f32 %v6033, %v6258
      %v6338 = vmul.f32 %v6034, %v6258
      %v6339 = vmul.f32 %v6035, %v6268
      %v6340 = vmul.f32 %v6036, %v6268
      %v6341 = vmul.f32 %v6037, %v6278
      %v6342 = vmul.f32 %v6038, %v6278
      %v6343 = vmul.f32 %v6039, %v6288
      %v6344 = vmul.f32 %v6040, %v6288
      %v6345 = vmul.f32 %v6041, %v6298
      %v6346 = vmul.f32 %v6042, %v6298
      %v6347 = vmul.f32 %v6043, %v6308
      %v6348 = vmul.f32 %v6044, %v6308
      %v6349 = vmul.f32 %v6045, %v6318
      %v6350 = vmul.f32 %v6046, %v6318
      %v6351 = vmax.f32 %v6319, 0.0
      %v6352 = vmax.f32 %v6320, 0.0
      %v6353 = vmax.f32 %v6321, 0.0
      %v6354 = vmax.f32 %v6322, 0.0
      %v6355 = vmax.f32 %v6323, 0.0
      %v6356 = vmax.f32 %v6324, 0.0
      %v6357 = vmax.f32 %v6325, 0.0
      %v6358 = vmax.f32 %v6326, 0.0
      %v6359 = vmax.f32 %v6327, 0.0
      %v6360 = vmax.f32 %v6328, 0.0
      %v6361 = vmax.f32 %v6329, 0.0
      %v6362 = vmax.f32 %v6330, 0.0
      %v6363 = vmax.f32 %v6331, 0.0
      %v6364 = vmax.f32 %v6332, 0.0
      %v6365 = vmax.f32 %v6333, 0.0
      %v6366 = vmax.f32 %v6334, 0.0
      %v6367 = vmax.f32 %v6335, 0.0
      %v6368 = vmax.f32 %v6336, 0.0
      %v6369 = vmax.f32 %v6337, 0.0
      %v6370 = vmax.f32 %v6338, 0.0
      %v6371 = vmax.f32 %v6339, 0.0
      %v6372 = vmax.f32 %v6340, 0.0
      %v6373 = vmax.f32 %v6341, 0.0
      %v6374 = vmax.f32 %v6342, 0.0
      %v6375 = vmax.f32 %v6343, 0.0
      %v6376 = vmax.f32 %v6344, 0.0
      %v6377 = vmax.f32 %v6345, 0.0
      %v6378 = vmax.f32 %v6346, 0.0
      %v6379 = vmax.f32 %v6347, 0.0
      %v6380 = vmax.f32 %v6348, 0.0
      %v6381 = vmax.f32 %v6349, 0.0
      %v6382 = vmax.f32 %v6350, 0.0
      %v6383 = vpack.c.bf16 %v6353, %v6351
      %v6384 = vpack.c.bf16 %v6354, %v6352
      %v6385 = vpack.c.bf16 %v6357, %v6355
      %v6386 = vpack.c.bf16 %v6358, %v6356
      %v6387 = vpack.c.bf16 %v6361, %v6359
      %v6388 = vpack.c.bf16 %v6362, %v6360
      %v6389 = vpack.c.bf16 %v6365, %v6363
      %v6390 = vpack.c.bf16 %v6366, %v6364
      %v6391 = vpack.c.bf16 %v6369, %v6367
      %v6392 = vpack.c.bf16 %v6370, %v6368
      %v6393 = vpack.c.bf16 %v6373, %v6371
      %v6394 = vpack.c.bf16 %v6374, %v6372
      %v6395 = vpack.c.bf16 %v6377, %v6375
      %v6396 = vpack.c.bf16 %v6378, %v6376
      %v6397 = vpack.c.bf16 %v6381, %v6379
      %v6398 = vpack.c.bf16 %v6382, %v6380
      %v6399 = vadd.f32 %v5814, %v5912
      %6400 = vadd.xlane.f32.xlu0 %v6399
      %v6401 = vpop.xlane.xlu0 %6400
      %v6402 = vadd.f32 %v5816, %v5914
      %6403 = vadd.xlane.f32.xlu0 %v6402
      %v6404 = vpop.xlane.xlu0 %6403
      %v6405 = vadd.f32 %v5819, %v5917
      %6406 = vadd.xlane.f32.xlu0 %v6405
      %v6407 = vpop.xlane.xlu0 %6406
      %v6408 = vadd.f32 %v5821, %v5919
      %6409 = vadd.xlane.f32.xlu0 %v6408
      %v6410 = vpop.xlane.xlu0 %6409
      %v6411 = vadd.f32 %v5824, %v5922
      %6412 = vadd.xlane.f32.xlu0 %v6411
      %v6413 = vpop.xlane.xlu0 %6412
      %v6414 = vadd.f32 %v5826, %v5924
      %6415 = vadd.xlane.f32.xlu0 %v6414
      %v6416 = vpop.xlane.xlu0 %6415
      %v6417 = vadd.f32 %v5829, %v5927
      %6418 = vadd.xlane.f32.xlu0 %v6417
      %v6419 = vpop.xlane.xlu0 %6418
      %v6420 = vadd.f32 %v5831, %v5929
      %6421 = vadd.xlane.f32.xlu0 %v6420
      %v6422 = vpop.xlane.xlu0 %6421
      %v6423 = vadd.f32 %v5834, %v5932
      %6424 = vadd.xlane.f32.xlu0 %v6423
      %v6425 = vpop.xlane.xlu0 %6424
      %v6426 = vadd.f32 %v5836, %v5934
      %6427 = vadd.xlane.f32.xlu0 %v6426
      %v6428 = vpop.xlane.xlu0 %6427
      %v6429 = vadd.f32 %v5839, %v5937
      %6430 = vadd.xlane.f32.xlu0 %v6429
      %v6431 = vpop.xlane.xlu0 %6430
      %v6432 = vadd.f32 %v5841, %v5939
      %6433 = vadd.xlane.f32.xlu0 %v6432
      %v6434 = vpop.xlane.xlu0 %6433
      %v6435 = vadd.f32 %v5844, %v5942
      %6436 = vadd.xlane.f32.xlu0 %v6435
      %v6437 = vpop.xlane.xlu0 %6436
      %v6438 = vadd.f32 %v5846, %v5944
      %6439 = vadd.xlane.f32.xlu0 %v6438
      %v6440 = vpop.xlane.xlu0 %6439
      %v6441 = vadd.f32 %v5849, %v5947
      %6442 = vadd.xlane.f32.xlu0 %v6441
      %v6443 = vpop.xlane.xlu0 %6442
      %v6444 = vadd.f32 %v5851, %v5949
      %6445 = vadd.xlane.f32.xlu0 %v6444
      %v6446 = vpop.xlane.xlu0 %6445
      %v6447 = vmul.f32 %v6401, %v1140
      %v6448 = vmul.f32 %v6404, %v1140
      %v6449 = vmul.f32 %v6407, %v1140
      %v6450 = vmul.f32 %v6410, %v1140
      %v6451 = vmul.f32 %v6413, %v1140
      %v6452 = vmul.f32 %v6416, %v1140
      %v6453 = vmul.f32 %v6419, %v1140
      %v6454 = vmul.f32 %v6422, %v1140
      %v6455 = vmul.f32 %v6425, %v1140
      %v6456 = vmul.f32 %v6428, %v1140
      %v6457 = vmul.f32 %v6431, %v1140
      %v6458 = vmul.f32 %v6434, %v1140
      %v6459 = vmul.f32 %v6437, %v1140
      %v6460 = vmul.f32 %v6440, %v1140
      %v6461 = vmul.f32 %v6443, %v1140
      %v6462 = vmul.f32 %v6446, %v1140
      %v6463 = vsub.f32 %v5814, %v6447
      %v6464 = vsub.f32 %v5912, %v6447
      %v6465 = vsub.f32 %v5816, %v6448
      %v6466 = vsub.f32 %v5914, %v6448
      %v6467 = vsub.f32 %v5819, %v6449
      %v6468 = vsub.f32 %v5917, %v6449
      %v6469 = vsub.f32 %v5821, %v6450
      %v6470 = vsub.f32 %v5919, %v6450
      %v6471 = vsub.f32 %v5824, %v6451
      %v6472 = vsub.f32 %v5922, %v6451
      %v6473 = vsub.f32 %v5826, %v6452
      %v6474 = vsub.f32 %v5924, %v6452
      %v6475 = vsub.f32 %v5829, %v6453
      %v6476 = vsub.f32 %v5927, %v6453
      %v6477 = vsub.f32 %v5831, %v6454
      %v6478 = vsub.f32 %v5929, %v6454
      %v6479 = vsub.f32 %v5834, %v6455
      %v6480 = vsub.f32 %v5932, %v6455
      %v6481 = vsub.f32 %v5836, %v6456
      %v6482 = vsub.f32 %v5934, %v6456
      %v6483 = vsub.f32 %v5839, %v6457
      %v6484 = vsub.f32 %v5937, %v6457
      %v6485 = vsub.f32 %v5841, %v6458
      %v6486 = vsub.f32 %v5939, %v6458
      %v6487 = vsub.f32 %v5844, %v6459
      %v6488 = vsub.f32 %v5942, %v6459
      %v6489 = vsub.f32 %v5846, %v6460
      %v6490 = vsub.f32 %v5944, %v6460
      %v6491 = vsub.f32 %v5849, %v6461
      %v6492 = vsub.f32 %v5947, %v6461
      %v6493 = vsub.f32 %v5851, %v6462
      %v6494 = vsub.f32 %v5949, %v6462
      %v6495 = vmul.f32 %v6463, %v6463
      %v6496 = vmul.f32 %v6464, %v6464
      %v6497 = vmul.f32 %v6465, %v6465
      %v6498 = vmul.f32 %v6466, %v6466
      %v6499 = vmul.f32 %v6467, %v6467
      %v6500 = vmul.f32 %v6468, %v6468
      %v6501 = vmul.f32 %v6469, %v6469
      %v6502 = vmul.f32 %v6470, %v6470
      %v6503 = vmul.f32 %v6471, %v6471
      %v6504 = vmul.f32 %v6472, %v6472
      %v6505 = vmul.f32 %v6473, %v6473
      %v6506 = vmul.f32 %v6474, %v6474
      %v6507 = vmul.f32 %v6475, %v6475
      %v6508 = vmul.f32 %v6476, %v6476
      %v6509 = vmul.f32 %v6477, %v6477
      %v6510 = vmul.f32 %v6478, %v6478
      %v6511 = vmul.f32 %v6479, %v6479
      %v6512 = vmul.f32 %v6480, %v6480
      %v6513 = vmul.f32 %v6481, %v6481
      %v6514 = vmul.f32 %v6482, %v6482
      %v6515 = vmul.f32 %v6483, %v6483
      %v6516 = vmul.f32 %v6484, %v6484
      %v6517 = vmul.f32 %v6485, %v6485
      %v6518 = vmul.f32 %v6486, %v6486
      %v6519 = vmul.f32 %v6487, %v6487
      %v6520 = vmul.f32 %v6488, %v6488
      %v6521 = vmul.f32 %v6489, %v6489
      %v6522 = vmul.f32 %v6490, %v6490
      %v6523 = vmul.f32 %v6491, %v6491
      %v6524 = vmul.f32 %v6492, %v6492
      %v6525 = vmul.f32 %v6493, %v6493
      %v6526 = vmul.f32 %v6494, %v6494
      %v6527 = vadd.f32 %v6495, %v6496
      %6528 = vadd.xlane.f32.xlu0 %v6527
      %v6529 = vpop.xlane.xlu0 %6528
      %v6530 = vadd.f32 %v6497, %v6498
      %6531 = vadd.xlane.f32.xlu0 %v6530
      %v6532 = vpop.xlane.xlu0 %6531
      %v6533 = vadd.f32 %v6499, %v6500
      %6534 = vadd.xlane.f32.xlu0 %v6533
      %v6535 = vpop.xlane.xlu0 %6534
      %v6536 = vadd.f32 %v6501, %v6502
      %6537 = vadd.xlane.f32.xlu0 %v6536
      %v6538 = vpop.xlane.xlu0 %6537
      %v6539 = vadd.f32 %v6503, %v6504
      %6540 = vadd.xlane.f32.xlu0 %v6539
      %v6541 = vpop.xlane.xlu0 %6540
      %v6542 = vadd.f32 %v6505, %v6506
      %6543 = vadd.xlane.f32.xlu0 %v6542
      %v6544 = vpop.xlane.xlu0 %6543
      %v6545 = vadd.f32 %v6507, %v6508
      %6546 = vadd.xlane.f32.xlu0 %v6545
      %v6547 = vpop.xlane.xlu0 %6546
      %v6548 = vadd.f32 %v6509, %v6510
      %6549 = vadd.xlane.f32.xlu0 %v6548
      %v6550 = vpop.xlane.xlu0 %6549
      %v6551 = vadd.f32 %v6511, %v6512
      %6552 = vadd.xlane.f32.xlu0 %v6551
      %v6553 = vpop.xlane.xlu0 %6552
      %v6554 = vadd.f32 %v6513, %v6514
      %6555 = vadd.xlane.f32.xlu0 %v6554
      %v6556 = vpop.xlane.xlu0 %6555
      %v6557 = vadd.f32 %v6515, %v6516
      %6558 = vadd.xlane.f32.xlu0 %v6557
      %v6559 = vpop.xlane.xlu0 %6558
      %v6560 = vadd.f32 %v6517, %v6518
      %6561 = vadd.xlane.f32.xlu0 %v6560
      %v6562 = vpop.xlane.xlu0 %6561
      %v6563 = vadd.f32 %v6519, %v6520
      %6564 = vadd.xlane.f32.xlu0 %v6563
      %v6565 = vpop.xlane.xlu0 %6564
      %v6566 = vadd.f32 %v6521, %v6522
      %6567 = vadd.xlane.f32.xlu0 %v6566
      %v6568 = vpop.xlane.xlu0 %6567
      %v6569 = vadd.f32 %v6523, %v6524
      %6570 = vadd.xlane.f32.xlu0 %v6569
      %v6571 = vpop.xlane.xlu0 %6570
      %v6572 = vadd.f32 %v6525, %v6526
      %6573 = vadd.xlane.f32.xlu0 %v6572
      %v6574 = vpop.xlane.xlu0 %6573
      %v6575 = vmul.f32 %v6529, %v1140
      %v6576 = vmul.f32 %v6532, %v1140
      %v6577 = vmul.f32 %v6535, %v1140
      %v6578 = vmul.f32 %v6538, %v1140
      %v6579 = vmul.f32 %v6541, %v1140
      %v6580 = vmul.f32 %v6544, %v1140
      %v6581 = vmul.f32 %v6547, %v1140
      %v6582 = vmul.f32 %v6550, %v1140
      %v6583 = vmul.f32 %v6553, %v1140
      %v6584 = vmul.f32 %v6556, %v1140
      %v6585 = vmul.f32 %v6559, %v1140
      %v6586 = vmul.f32 %v6562, %v1140
      %v6587 = vmul.f32 %v6565, %v1140
      %v6588 = vmul.f32 %v6568, %v1140
      %v6589 = vmul.f32 %v6571, %v1140
      %v6590 = vmul.f32 %v6574, %v1140
      %v6591 = vadd.f32 %v6575, 1e-05
      %v6592 = vadd.f32 %v6576, 1e-05
      %v6593 = vadd.f32 %v6577, 1e-05
      %v6594 = vadd.f32 %v6578, 1e-05
      %v6595 = vadd.f32 %v6579, 1e-05
      %v6596 = vadd.f32 %v6580, 1e-05
      %v6597 = vadd.f32 %v6581, 1e-05
      %v6598 = vadd.f32 %v6582, 1e-05
      %v6599 = vadd.f32 %v6583, 1e-05
      %v6600 = vadd.f32 %v6584, 1e-05
      %v6601 = vadd.f32 %v6585, 1e-05
      %v6602 = vadd.f32 %v6586, 1e-05
      %v6603 = vadd.f32 %v6587, 1e-05
      %v6604 = vadd.f32 %v6588, 1e-05
      %v6605 = vadd.f32 %v6589, 1e-05
      %v6606 = vadd.f32 %v6590, 1e-05
      %v6607 = vrsqrt.pop %v6591
      %v6608 = vmul.f32 %v6607, %v6591
      %v6609 = vmul.f32 %v6608, %v6607
      %v6610 = vmul.f32 0.5, %v6609
      %v6611 = vsub.f32 1.5, %v6610
      %v6612 = vmul.f32 %v6607, %v6611
      %vm6613 = vweird.f32 %v6591
      %vm6614 = vweird.f32 %v6607
      %vm6615 = vmor %vm6613, %vm6614
      %v6616 = vsel %vm6615, %v6607, %v6612
      %v6617 = vrsqrt.pop %v6592
      %v6618 = vmul.f32 %v6617, %v6592
      %v6619 = vmul.f32 %v6618, %v6617
      %v6620 = vmul.f32 0.5, %v6619
      %v6621 = vsub.f32 1.5, %v6620
      %v6622 = vmul.f32 %v6617, %v6621
      %vm6623 = vweird.f32 %v6592
      %vm6624 = vweird.f32 %v6617
      %vm6625 = vmor %vm6623, %vm6624
      %v6626 = vsel %vm6625, %v6617, %v6622
      %v6627 = vrsqrt.pop %v6593
      %v6628 = vmul.f32 %v6627, %v6593
      %v6629 = vmul.f32 %v6628, %v6627
      %v6630 = vmul.f32 0.5, %v6629
      %v6631 = vsub.f32 1.5, %v6630
      %v6632 = vmul.f32 %v6627, %v6631
      %vm6633 = vweird.f32 %v6593
      %vm6634 = vweird.f32 %v6627
      %vm6635 = vmor %vm6633, %vm6634
      %v6636 = vsel %vm6635, %v6627, %v6632
      %v6637 = vrsqrt.pop %v6594
      %v6638 = vmul.f32 %v6637, %v6594
      %v6639 = vmul.f32 %v6638, %v6637
      %v6640 = vmul.f32 0.5, %v6639
      %v6641 = vsub.f32 1.5, %v6640
      %v6642 = vmul.f32 %v6637, %v6641
      %vm6643 = vweird.f32 %v6594
      %vm6644 = vweird.f32 %v6637
      %vm6645 = vmor %vm6643, %vm6644
      %v6646 = vsel %vm6645, %v6637, %v6642
      %v6647 = vrsqrt.pop %v6595
      %v6648 = vmul.f32 %v6647, %v6595
      %v6649 = vmul.f32 %v6648, %v6647
      %v6650 = vmul.f32 0.5, %v6649
      %v6651 = vsub.f32 1.5, %v6650
      %v6652 = vmul.f32 %v6647, %v6651
      %vm6653 = vweird.f32 %v6595
      %vm6654 = vweird.f32 %v6647
      %vm6655 = vmor %vm6653, %vm6654
      %v6656 = vsel %vm6655, %v6647, %v6652
      %v6657 = vrsqrt.pop %v6596
      %v6658 = vmul.f32 %v6657, %v6596
      %v6659 = vmul.f32 %v6658, %v6657
      %v6660 = vmul.f32 0.5, %v6659
      %v6661 = vsub.f32 1.5, %v6660
      %v6662 = vmul.f32 %v6657, %v6661
      %vm6663 = vweird.f32 %v6596
      %vm6664 = vweird.f32 %v6657
      %vm6665 = vmor %vm6663, %vm6664
      %v6666 = vsel %vm6665, %v6657, %v6662
      %v6667 = vrsqrt.pop %v6597
      %v6668 = vmul.f32 %v6667, %v6597
      %v6669 = vmul.f32 %v6668, %v6667
      %v6670 = vmul.f32 0.5, %v6669
      %v6671 = vsub.f32 1.5, %v6670
      %v6672 = vmul.f32 %v6667, %v6671
      %vm6673 = vweird.f32 %v6597
      %vm6674 = vweird.f32 %v6667
      %vm6675 = vmor %vm6673, %vm6674
      %v6676 = vsel %vm6675, %v6667, %v6672
      %v6677 = vrsqrt.pop %v6598
      %v6678 = vmul.f32 %v6677, %v6598
      %v6679 = vmul.f32 %v6678, %v6677
      %v6680 = vmul.f32 0.5, %v6679
      %v6681 = vsub.f32 1.5, %v6680
      %v6682 = vmul.f32 %v6677, %v6681
      %vm6683 = vweird.f32 %v6598
      %vm6684 = vweird.f32 %v6677
      %vm6685 = vmor %vm6683, %vm6684
      %v6686 = vsel %vm6685, %v6677, %v6682
      %v6687 = vrsqrt.pop %v6599
      %v6688 = vmul.f32 %v6687, %v6599
      %v6689 = vmul.f32 %v6688, %v6687
      %v6690 = vmul.f32 0.5, %v6689
      %v6691 = vsub.f32 1.5, %v6690
      %v6692 = vmul.f32 %v6687, %v6691
      %vm6693 = vweird.f32 %v6599
      %vm6694 = vweird.f32 %v6687
      %vm6695 = vmor %vm6693, %vm6694
      %v6696 = vsel %vm6695, %v6687, %v6692
      %v6697 = vrsqrt.pop %v6600
      %v6698 = vmul.f32 %v6697, %v6600
      %v6699 = vmul.f32 %v6698, %v6697
      %v6700 = vmul.f32 0.5, %v6699
      %v6701 = vsub.f32 1.5, %v6700
      %v6702 = vmul.f32 %v6697, %v6701
      %vm6703 = vweird.f32 %v6600
      %vm6704 = vweird.f32 %v6697
      %vm6705 = vmor %vm6703, %vm6704
      %v6706 = vsel %vm6705, %v6697, %v6702
      %v6707 = vrsqrt.pop %v6601
      %v6708 = vmul.f32 %v6707, %v6601
      %v6709 = vmul.f32 %v6708, %v6707
      %v6710 = vmul.f32 0.5, %v6709
      %v6711 = vsub.f32 1.5, %v6710
      %v6712 = vmul.f32 %v6707, %v6711
      %vm6713 = vweird.f32 %v6601
      %vm6714 = vweird.f32 %v6707
      %vm6715 = vmor %vm6713, %vm6714
      %v6716 = vsel %vm6715, %v6707, %v6712
      %v6717 = vrsqrt.pop %v6602
      %v6718 = vmul.f32 %v6717, %v6602
      %v6719 = vmul.f32 %v6718, %v6717
      %v6720 = vmul.f32 0.5, %v6719
      %v6721 = vsub.f32 1.5, %v6720
      %v6722 = vmul.f32 %v6717, %v6721
      %vm6723 = vweird.f32 %v6602
      %vm6724 = vweird.f32 %v6717
      %vm6725 = vmor %vm6723, %vm6724
      %v6726 = vsel %vm6725, %v6717, %v6722
      %v6727 = vrsqrt.pop %v6603
      %v6728 = vmul.f32 %v6727, %v6603
      %v6729 = vmul.f32 %v6728, %v6727
      %v6730 = vmul.f32 0.5, %v6729
      %v6731 = vsub.f32 1.5, %v6730
      %v6732 = vmul.f32 %v6727, %v6731
      %vm6733 = vweird.f32 %v6603
      %vm6734 = vweird.f32 %v6727
      %vm6735 = vmor %vm6733, %vm6734
      %v6736 = vsel %vm6735, %v6727, %v6732
      %v6737 = vrsqrt.pop %v6604
      %v6738 = vmul.f32 %v6737, %v6604
      %v6739 = vmul.f32 %v6738, %v6737
      %v6740 = vmul.f32 0.5, %v6739
      %v6741 = vsub.f32 1.5, %v6740
      %v6742 = vmul.f32 %v6737, %v6741
      %vm6743 = vweird.f32 %v6604
      %vm6744 = vweird.f32 %v6737
      %vm6745 = vmor %vm6743, %vm6744
      %v6746 = vsel %vm6745, %v6737, %v6742
      %v6747 = vrsqrt.pop %v6605
      %v6748 = vmul.f32 %v6747, %v6605
      %v6749 = vmul.f32 %v6748, %v6747
      %v6750 = vmul.f32 0.5, %v6749
      %v6751 = vsub.f32 1.5, %v6750
      %v6752 = vmul.f32 %v6747, %v6751
      %vm6753 = vweird.f32 %v6605
      %vm6754 = vweird.f32 %v6747
      %vm6755 = vmor %vm6753, %vm6754
      %v6756 = vsel %vm6755, %v6747, %v6752
      %v6757 = vrsqrt.pop %v6606
      %v6758 = vmul.f32 %v6757, %v6606
      %v6759 = vmul.f32 %v6758, %v6757
      %v6760 = vmul.f32 0.5, %v6759
      %v6761 = vsub.f32 1.5, %v6760
      %v6762 = vmul.f32 %v6757, %v6761
      %vm6763 = vweird.f32 %v6606
      %vm6764 = vweird.f32 %v6757
      %vm6765 = vmor %vm6763, %vm6764
      %v6766 = vsel %vm6765, %v6757, %v6762
      %v6767 = vmul.f32 %v6463, %v6616
      %v6768 = vmul.f32 %v6464, %v6616
      %v6769 = vmul.f32 %v6465, %v6626
      %v6770 = vmul.f32 %v6466, %v6626
      %v6771 = vmul.f32 %v6467, %v6636
      %v6772 = vmul.f32 %v6468, %v6636
      %v6773 = vmul.f32 %v6469, %v6646
      %v6774 = vmul.f32 %v6470, %v6646
      %v6775 = vmul.f32 %v6471, %v6656
      %v6776 = vmul.f32 %v6472, %v6656
      %v6777 = vmul.f32 %v6473, %v6666
      %v6778 = vmul.f32 %v6474, %v6666
      %v6779 = vmul.f32 %v6475, %v6676
      %v6780 = vmul.f32 %v6476, %v6676
      %v6781 = vmul.f32 %v6477, %v6686
      %v6782 = vmul.f32 %v6478, %v6686
      %v6783 = vmul.f32 %v6479, %v6696
      %v6784 = vmul.f32 %v6480, %v6696
      %v6785 = vmul.f32 %v6481, %v6706
      %v6786 = vmul.f32 %v6482, %v6706
      %v6787 = vmul.f32 %v6483, %v6716
      %v6788 = vmul.f32 %v6484, %v6716
      %v6789 = vmul.f32 %v6485, %v6726
      %v6790 = vmul.f32 %v6486, %v6726
      %v6791 = vmul.f32 %v6487, %v6736
      %v6792 = vmul.f32 %v6488, %v6736
      %v6793 = vmul.f32 %v6489, %v6746
      %v6794 = vmul.f32 %v6490, %v6746
      %v6795 = vmul.f32 %v6491, %v6756
      %v6796 = vmul.f32 %v6492, %v6756
      %v6797 = vmul.f32 %v6493, %v6766
      %v6798 = vmul.f32 %v6494, %v6766
      %v6799 = vmax.f32 %v6767, 0.0
      %v6800 = vmax.f32 %v6768, 0.0
      %v6801 = vmax.f32 %v6769, 0.0
      %v6802 = vmax.f32 %v6770, 0.0
      %v6803 = vmax.f32 %v6771, 0.0
      %v6804 = vmax.f32 %v6772, 0.0
      %v6805 = vmax.f32 %v6773, 0.0
      %v6806 = vmax.f32 %v6774, 0.0
      %v6807 = vmax.f32 %v6775, 0.0
      %v6808 = vmax.f32 %v6776, 0.0
      %v6809 = vmax.f32 %v6777, 0.0
      %v6810 = vmax.f32 %v6778, 0.0
      %v6811 = vmax.f32 %v6779, 0.0
      %v6812 = vmax.f32 %v6780, 0.0
      %v6813 = vmax.f32 %v6781, 0.0
      %v6814 = vmax.f32 %v6782, 0.0
      %v6815 = vmax.f32 %v6783, 0.0
      %v6816 = vmax.f32 %v6784, 0.0
      %v6817 = vmax.f32 %v6785, 0.0
      %v6818 = vmax.f32 %v6786, 0.0
      %v6819 = vmax.f32 %v6787, 0.0
      %v6820 = vmax.f32 %v6788, 0.0
      %v6821 = vmax.f32 %v6789, 0.0
      %v6822 = vmax.f32 %v6790, 0.0
      %v6823 = vmax.f32 %v6791, 0.0
      %v6824 = vmax.f32 %v6792, 0.0
      %v6825 = vmax.f32 %v6793, 0.0
      %v6826 = vmax.f32 %v6794, 0.0
      %v6827 = vmax.f32 %v6795, 0.0
      %v6828 = vmax.f32 %v6796, 0.0
      %v6829 = vmax.f32 %v6797, 0.0
      %v6830 = vmax.f32 %v6798, 0.0
      %v6831 = vpack.c.bf16 %v6801, %v6799
      %v6832 = vpack.c.bf16 %v6802, %v6800
      %v6833 = vpack.c.bf16 %v6805, %v6803
      %v6834 = vpack.c.bf16 %v6806, %v6804
      %v6835 = vpack.c.bf16 %v6809, %v6807
      %v6836 = vpack.c.bf16 %v6810, %v6808
      %v6837 = vpack.c.bf16 %v6813, %v6811
      %v6838 = vpack.c.bf16 %v6814, %v6812
      %v6839 = vpack.c.bf16 %v6817, %v6815
      %v6840 = vpack.c.bf16 %v6818, %v6816
      %v6841 = vpack.c.bf16 %v6821, %v6819
      %v6842 = vpack.c.bf16 %v6822, %v6820
      %v6843 = vpack.c.bf16 %v6825, %v6823
      %v6844 = vpack.c.bf16 %v6826, %v6824
      %v6845 = vpack.c.bf16 %v6829, %v6827
      %v6846 = vpack.c.bf16 %v6830, %v6828
      %v6847 = vld [vmem:[%s9] sm:$0xff]
      %v6848 = vld [vmem:[%s9 + $0x8] sm:$0xff]
      %v6849 = vld [vmem:[%s9 + $0x10] sm:$0xff]
      %v6850 = vld [vmem:[%s9 + $0x18] sm:$0xff]
      %v6851 = vld [vmem:[%s9 + $0x20] sm:$0xff]
      %v6852 = vld [vmem:[%s9 + $0x28] sm:$0xff]
      %v6853 = vld [vmem:[%s9 + $0x30] sm:$0xff]
      %v6854 = vld [vmem:[%s9 + $0x38] sm:$0xff]
      %v6855 = vld [vmem:[%s9 + $0x40] sm:$0xff]
      %v6856 = vld [vmem:[%s9 + $0x48] sm:$0xff]
      %v6857 = vld [vmem:[%s9 + $0x50] sm:$0xff]
      %v6858 = vld [vmem:[%s9 + $0x58] sm:$0xff]
      %v6859 = vld [vmem:[%s9 + $0x60] sm:$0xff]
      %v6860 = vld [vmem:[%s9 + $0x68] sm:$0xff]
      %v6861 = vld [vmem:[%s9 + $0x70] sm:$0xff]
      %v6862 = vld [vmem:[%s9 + $0x78] sm:$0xff]
      %v6863 = vld [vmem:[%s9 + $0x80] sm:$0xff]
      %v6864 = vld [vmem:[%s9 + $0x88] sm:$0xff]
      %v6865 = vld [vmem:[%s9 + $0x90] sm:$0xff]
      %v6866 = vld [vmem:[%s9 + $0x98] sm:$0xff]
      %v6867 = vld [vmem:[%s9 + $0xa0] sm:$0xff]
      %v6868 = vld [vmem:[%s9 + $0xa8] sm:$0xff]
      %v6869 = vld [vmem:[%s9 + $0xb0] sm:$0xff]
      %v6870 = vld [vmem:[%s9 + $0xb8] sm:$0xff]
      %v6871 = vld [vmem:[%s9 + $0xc0] sm:$0xff]
      %v6872 = vld [vmem:[%s9 + $0xc8] sm:$0xff]
      %v6873 = vld [vmem:[%s9 + $0xd0] sm:$0xff]
      %v6874 = vld [vmem:[%s9 + $0xd8] sm:$0xff]
      %v6875 = vld [vmem:[%s9 + $0xe0] sm:$0xff]
      %v6876 = vld [vmem:[%s9 + $0xe8] sm:$0xff]
      %v6877 = vld [vmem:[%s9 + $0xf0] sm:$0xff]
      %v6878 = vld [vmem:[%s9 + $0xf8] sm:$0xff]
      %v6879 = vld [vmem:[%s10] sm:$0x3]
      %v6881 = vperm.slane %v6879, 0
      %v6882 = vperm.slane %v6879, 1
      %v6917 = vunpack.c.l.b16 %v6847
      %v6918 = vunpack.c.h.b16 %v6847
      %v6919 = vunpack.c.l.b16 %v6848
      %v6920 = vunpack.c.h.b16 %v6848
      %v6921 = vunpack.c.l.b16 %v6849
      %v6922 = vunpack.c.h.b16 %v6849
      %v6923 = vunpack.c.l.b16 %v6850
      %v6924 = vunpack.c.h.b16 %v6850
      %v6925 = vunpack.c.l.b16 %v6851
      %v6926 = vunpack.c.h.b16 %v6851
      %v6927 = vunpack.c.l.b16 %v6852
      %v6928 = vunpack.c.h.b16 %v6852
      %v6929 = vunpack.c.l.b16 %v6853
      %v6930 = vunpack.c.h.b16 %v6853
      %v6931 = vunpack.c.l.b16 %v6854
      %v6932 = vunpack.c.h.b16 %v6854
      %v6933 = vunpack.c.l.b16 %v6855
      %v6934 = vunpack.c.h.b16 %v6855
      %v6935 = vunpack.c.l.b16 %v6856
      %v6936 = vunpack.c.h.b16 %v6856
      %v6937 = vunpack.c.l.b16 %v6857
      %v6938 = vunpack.c.h.b16 %v6857
      %v6939 = vunpack.c.l.b16 %v6858
      %v6940 = vunpack.c.h.b16 %v6858
      %v6941 = vunpack.c.l.b16 %v6859
      %v6942 = vunpack.c.h.b16 %v6859
      %v6943 = vunpack.c.l.b16 %v6860
      %v6944 = vunpack.c.h.b16 %v6860
      %v6945 = vunpack.c.l.b16 %v6861
      %v6946 = vunpack.c.h.b16 %v6861
      %v6947 = vunpack.c.l.b16 %v6862
      %v6948 = vunpack.c.h.b16 %v6862
      %v6949 = vunpack.c.l.b16 %v6863
      %v6950 = vunpack.c.h.b16 %v6863
      %v6951 = vunpack.c.l.b16 %v6864
      %v6952 = vunpack.c.h.b16 %v6864
      %v6953 = vunpack.c.l.b16 %v6865
      %v6954 = vunpack.c.h.b16 %v6865
      %v6955 = vunpack.c.l.b16 %v6866
      %v6956 = vunpack.c.h.b16 %v6866
      %v6957 = vunpack.c.l.b16 %v6867
      %v6958 = vunpack.c.h.b16 %v6867
      %v6959 = vunpack.c.l.b16 %v6868
      %v6960 = vunpack.c.h.b16 %v6868
      %v6961 = vunpack.c.l.b16 %v6869
      %v6962 = vunpack.c.h.b16 %v6869
      %v6963 = vunpack.c.l.b16 %v6870
      %v6964 = vunpack.c.h.b16 %v6870
      %v6965 = vunpack.c.l.b16 %v6871
      %v6966 = vunpack.c.h.b16 %v6871
      %v6967 = vunpack.c.l.b16 %v6872
      %v6968 = vunpack.c.h.b16 %v6872
      %v6969 = vunpack.c.l.b16 %v6873
      %v6970 = vunpack.c.h.b16 %v6873
      %v6971 = vunpack.c.l.b16 %v6874
      %v6972 = vunpack.c.h.b16 %v6874
      %v6973 = vunpack.c.l.b16 %v6875
      %v6974 = vunpack.c.h.b16 %v6875
      %v6975 = vunpack.c.l.b16 %v6876
      %v6976 = vunpack.c.h.b16 %v6876
      %v6977 = vunpack.c.l.b16 %v6877
      %v6978 = vunpack.c.h.b16 %v6877
      %v6979 = vunpack.c.l.b16 %v6878
      %v6980 = vunpack.c.h.b16 %v6878
      %v6981 = vpack.c.b16 %v6919, %v6917
      %v6982 = vpack.c.b16 %v6920, %v6918
      %v6983 = vpack.c.b16 %v6923, %v6921
      %v6984 = vpack.c.b16 %v6924, %v6922
      %v6985 = vpack.c.b16 %v6927, %v6925
      %v6986 = vpack.c.b16 %v6928, %v6926
      %v6987 = vpack.c.b16 %v6931, %v6929
      %v6988 = vpack.c.b16 %v6932, %v6930
      %v6989 = vpack.c.b16 %v6935, %v6933
      %v6990 = vpack.c.b16 %v6936, %v6934
      %v6991 = vpack.c.b16 %v6939, %v6937
      %v6992 = vpack.c.b16 %v6940, %v6938
      %v6993 = vpack.c.b16 %v6943, %v6941
      %v6994 = vpack.c.b16 %v6944, %v6942
      %v6995 = vpack.c.b16 %v6947, %v6945
      %v6996 = vpack.c.b16 %v6948, %v6946
      %v6997 = vpack.c.b16 %v6951, %v6949
      %v6998 = vpack.c.b16 %v6952, %v6950
      %v6999 = vpack.c.b16 %v6955, %v6953
      %v7000 = vpack.c.b16 %v6956, %v6954
      %v7001 = vpack.c.b16 %v6959, %v6957
      %v7002 = vpack.c.b16 %v6960, %v6958
      %v7003 = vpack.c.b16 %v6963, %v6961
      %v7004 = vpack.c.b16 %v6964, %v6962
      %v7005 = vpack.c.b16 %v6967, %v6965
      %v7006 = vpack.c.b16 %v6968, %v6966
      %v7007 = vpack.c.b16 %v6971, %v6969
      %v7008 = vpack.c.b16 %v6972, %v6970
      %v7009 = vpack.c.b16 %v6975, %v6973
      %v7010 = vpack.c.b16 %v6976, %v6974
      %v7011 = vpack.c.b16 %v6979, %v6977
      %v7012 = vpack.c.b16 %v6980, %v6978
      %7045 = vmatpush.bf16.msra.mxu0 %v6995
      %7046 = vmatpush.bf16.msra.mxu0 %v6993
      %7047 = vmatpush.bf16.msra.mxu0 %v6991
      %7048 = vmatpush.bf16.msra.mxu0 %v6989
      %7049 = vmatpush.bf16.msra.mxu0 %v6987
      %7050 = vmatpush.bf16.msra.mxu0 %v6985
      %7051 = vmatpush.bf16.msra.mxu0 %v6983
      %7052 = vmatpush.bf16.msra.mxu0 %v6981
      %7053 = vmatmul.bf16.gmra.mxu0 %v6383
      %v7054 = vpop.f32.mrf.mxu0
      %v7055 = vadd.f32 %v6881, %v7054
      %v7056 = vpop.f32.mrf.mxu0
      %v7057 = vadd.f32 %v6881, %v7056
      %7058 = vmatmul.bf16.gmra.mxu0 %v6385
      %v7059 = vpop.f32.mrf.mxu0
      %v7060 = vadd.f32 %v6881, %v7059
      %v7061 = vpop.f32.mrf.mxu0
      %v7062 = vadd.f32 %v6881, %v7061
      %7063 = vmatmul.bf16.gmra.mxu0 %v6387
      %v7064 = vpop.f32.mrf.mxu0
      %v7065 = vadd.f32 %v6881, %v7064
      %v7066 = vpop.f32.mrf.mxu0
      %v7067 = vadd.f32 %v6881, %v7066
      %7068 = vmatmul.bf16.gmra.mxu0 %v6389
      %v7069 = vpop.f32.mrf.mxu0
      %v7070 = vadd.f32 %v6881, %v7069
      %v7071 = vpop.f32.mrf.mxu0
      %v7072 = vadd.f32 %v6881, %v7071
      %7073 = vmatmul.bf16.gmra.mxu0 %v6391
      %v7074 = vpop.f32.mrf.mxu0
      %v7075 = vadd.f32 %v6881, %v7074
      %v7076 = vpop.f32.mrf.mxu0
      %v7077 = vadd.f32 %v6881, %v7076
      %7078 = vmatmul.bf16.gmra.mxu0 %v6393
      %v7079 = vpop.f32.mrf.mxu0
      %v7080 = vadd.f32 %v6881, %v7079
      %v7081 = vpop.f32.mrf.mxu0
      %v7082 = vadd.f32 %v6881, %v7081
      %7083 = vmatmul.bf16.gmra.mxu0 %v6395
      %v7084 = vpop.f32.mrf.mxu0
      %v7085 = vadd.f32 %v6881, %v7084
      %v7086 = vpop.f32.mrf.mxu0
      %v7087 = vadd.f32 %v6881, %v7086
      %7088 = vmatmul.bf16.gmra.mxu0 %v6397
      %v7089 = vpop.f32.mrf.mxu0
      %v7090 = vadd.f32 %v6881, %v7089
      %v7091 = vpop.f32.mrf.mxu0
      %v7092 = vadd.f32 %v6881, %v7091
      %7093 = vdwg.mxu0
      %7094 = vmatpush.bf16.msra.mxu0 %v7011
      %7095 = vmatpush.bf16.msra.mxu0 %v7009
      %7096 = vmatpush.bf16.msra.mxu0 %v7007
      %7097 = vmatpush.bf16.msra.mxu0 %v7005
      %7098 = vmatpush.bf16.msra.mxu0 %v7003
      %7099 = vmatpush.bf16.msra.mxu0 %v7001
      %7100 = vmatpush.bf16.msra.mxu0 %v6999
      %7101 = vmatpush.bf16.msra.mxu0 %v6997
      %7102 = vmatmul.bf16.gmra.mxu0 %v6384
      %v7103 = vpop.f32.mrf.mxu0
      %v7104 = vadd.f32 %v7055, %v7103
      %v7105 = vpop.f32.mrf.mxu0
      %v7106 = vadd.f32 %v7057, %v7105
      %7107 = vmatmul.bf16.gmra.mxu0 %v6386
      %v7108 = vpop.f32.mrf.mxu0
      %v7109 = vadd.f32 %v7060, %v7108
      %v7110 = vpop.f32.mrf.mxu0
      %v7111 = vadd.f32 %v7062, %v7110
      %7112 = vmatmul.bf16.gmra.mxu0 %v6388
      %v7113 = vpop.f32.mrf.mxu0
      %v7114 = vadd.f32 %v7065, %v7113
      %v7115 = vpop.f32.mrf.mxu0
      %v7116 = vadd.f32 %v7067, %v7115
      %7117 = vmatmul.bf16.gmra.mxu0 %v6390
      %v7118 = vpop.f32.mrf.mxu0
      %v7119 = vadd.f32 %v7070, %v7118
      %v7120 = vpop.f32.mrf.mxu0
      %v7121 = vadd.f32 %v7072, %v7120
      %7122 = vmatmul.bf16.gmra.mxu0 %v6392
      %v7123 = vpop.f32.mrf.mxu0
      %v7124 = vadd.f32 %v7075, %v7123
      %v7125 = vpop.f32.mrf.mxu0
      %v7126 = vadd.f32 %v7077, %v7125
      %7127 = vmatmul.bf16.gmra.mxu0 %v6394
      %v7128 = vpop.f32.mrf.mxu0
      %v7129 = vadd.f32 %v7080, %v7128
      %v7130 = vpop.f32.mrf.mxu0
      %v7131 = vadd.f32 %v7082, %v7130
      %7132 = vmatmul.bf16.gmra.mxu0 %v6396
      %v7133 = vpop.f32.mrf.mxu0
      %v7134 = vadd.f32 %v7085, %v7133
      %v7135 = vpop.f32.mrf.mxu0
      %v7136 = vadd.f32 %v7087, %v7135
      %7137 = vmatmul.bf16.gmra.mxu0 %v6398
      %v7138 = vpop.f32.mrf.mxu0
      %v7139 = vadd.f32 %v7090, %v7138
      %v7140 = vpop.f32.mrf.mxu0
      %v7141 = vadd.f32 %v7092, %v7140
      %7142 = vdwg.mxu0
      %7143 = vmatpush.bf16.msra.mxu0 %v6996
      %7144 = vmatpush.bf16.msra.mxu0 %v6994
      %7145 = vmatpush.bf16.msra.mxu0 %v6992
      %7146 = vmatpush.bf16.msra.mxu0 %v6990
      %7147 = vmatpush.bf16.msra.mxu0 %v6988
      %7148 = vmatpush.bf16.msra.mxu0 %v6986
      %7149 = vmatpush.bf16.msra.mxu0 %v6984
      %7150 = vmatpush.bf16.msra.mxu0 %v6982
      %7151 = vmatmul.bf16.gmra.mxu0 %v6383
      %v7152 = vpop.f32.mrf.mxu0
      %v7153 = vadd.f32 %v6882, %v7152
      %v7154 = vpop.f32.mrf.mxu0
      %v7155 = vadd.f32 %v6882, %v7154
      %7156 = vmatmul.bf16.gmra.mxu0 %v6385
      %v7157 = vpop.f32.mrf.mxu0
      %v7158 = vadd.f32 %v6882, %v7157
      %v7159 = vpop.f32.mrf.mxu0
      %v7160 = vadd.f32 %v6882, %v7159
      %7161 = vmatmul.bf16.gmra.mxu0 %v6387
      %v7162 = vpop.f32.mrf.mxu0
      %v7163 = vadd.f32 %v6882, %v7162
      %v7164 = vpop.f32.mrf.mxu0
      %v7165 = vadd.f32 %v6882, %v7164
      %7166 = vmatmul.bf16.gmra.mxu0 %v6389
      %v7167 = vpop.f32.mrf.mxu0
      %v7168 = vadd.f32 %v6882, %v7167
      %v7169 = vpop.f32.mrf.mxu0
      %v7170 = vadd.f32 %v6882, %v7169
      %7171 = vmatmul.bf16.gmra.mxu0 %v6391
      %v7172 = vpop.f32.mrf.mxu0
      %v7173 = vadd.f32 %v6882, %v7172
      %v7174 = vpop.f32.mrf.mxu0
      %v7175 = vadd.f32 %v6882, %v7174
      %7176 = vmatmul.bf16.gmra.mxu0 %v6393
      %v7177 = vpop.f32.mrf.mxu0
      %v7178 = vadd.f32 %v6882, %v7177
      %v7179 = vpop.f32.mrf.mxu0
      %v7180 = vadd.f32 %v6882, %v7179
      %7181 = vmatmul.bf16.gmra.mxu0 %v6395
      %v7182 = vpop.f32.mrf.mxu0
      %v7183 = vadd.f32 %v6882, %v7182
      %v7184 = vpop.f32.mrf.mxu0
      %v7185 = vadd.f32 %v6882, %v7184
      %7186 = vmatmul.bf16.gmra.mxu0 %v6397
      %v7187 = vpop.f32.mrf.mxu0
      %v7188 = vadd.f32 %v6882, %v7187
      %v7189 = vpop.f32.mrf.mxu0
      %v7190 = vadd.f32 %v6882, %v7189
      %7191 = vdwg.mxu0
      %7192 = vmatpush.bf16.msra.mxu0 %v7012
      %7193 = vmatpush.bf16.msra.mxu0 %v7010
      %7194 = vmatpush.bf16.msra.mxu0 %v7008
      %7195 = vmatpush.bf16.msra.mxu0 %v7006
      %7196 = vmatpush.bf16.msra.mxu0 %v7004
      %7197 = vmatpush.bf16.msra.mxu0 %v7002
      %7198 = vmatpush.bf16.msra.mxu0 %v7000
      %7199 = vmatpush.bf16.msra.mxu0 %v6998
      %7200 = vmatmul.bf16.gmra.mxu0 %v6384
      %v7201 = vpop.f32.mrf.mxu0
      %v7202 = vadd.f32 %v7153, %v7201
      %v7203 = vpop.f32.mrf.mxu0
      %v7204 = vadd.f32 %v7155, %v7203
      %7205 = vmatmul.bf16.gmra.mxu0 %v6386
      %v7206 = vpop.f32.mrf.mxu0
      %v7207 = vadd.f32 %v7158, %v7206
      %v7208 = vpop.f32.mrf.mxu0
      %v7209 = vadd.f32 %v7160, %v7208
      %7210 = vmatmul.bf16.gmra.mxu0 %v6388
      %v7211 = vpop.f32.mrf.mxu0
      %v7212 = vadd.f32 %v7163, %v7211
      %v7213 = vpop.f32.mrf.mxu0
      %v7214 = vadd.f32 %v7165, %v7213
      %7215 = vmatmul.bf16.gmra.mxu0 %v6390
      %v7216 = vpop.f32.mrf.mxu0
      %v7217 = vadd.f32 %v7168, %v7216
      %v7218 = vpop.f32.mrf.mxu0
      %v7219 = vadd.f32 %v7170, %v7218
      %7220 = vmatmul.bf16.gmra.mxu0 %v6392
      %v7221 = vpop.f32.mrf.mxu0
      %v7222 = vadd.f32 %v7173, %v7221
      %v7223 = vpop.f32.mrf.mxu0
      %v7224 = vadd.f32 %v7175, %v7223
      %7225 = vmatmul.bf16.gmra.mxu0 %v6394
      %v7226 = vpop.f32.mrf.mxu0
      %v7227 = vadd.f32 %v7178, %v7226
      %v7228 = vpop.f32.mrf.mxu0
      %v7229 = vadd.f32 %v7180, %v7228
      %7230 = vmatmul.bf16.gmra.mxu0 %v6396
      %v7231 = vpop.f32.mrf.mxu0
      %v7232 = vadd.f32 %v7183, %v7231
      %v7233 = vpop.f32.mrf.mxu0
      %v7234 = vadd.f32 %v7185, %v7233
      %7235 = vmatmul.bf16.gmra.mxu0 %v6398
      %v7236 = vpop.f32.mrf.mxu0
      %v7237 = vadd.f32 %v7188, %v7236
      %v7238 = vpop.f32.mrf.mxu0
      %v7239 = vadd.f32 %v7190, %v7238
      %7240 = vdwg.mxu0
      %v7241 = vmax.f32 %v7104, 0.0
      %v7242 = vmax.f32 %v7202, 0.0
      %v7243 = vmax.f32 %v7106, 0.0
      %v7244 = vmax.f32 %v7204, 0.0
      %v7245 = vmax.f32 %v7109, 0.0
      %v7246 = vmax.f32 %v7207, 0.0
      %v7247 = vmax.f32 %v7111, 0.0
      %v7248 = vmax.f32 %v7209, 0.0
      %v7249 = vmax.f32 %v7114, 0.0
      %v7250 = vmax.f32 %v7212, 0.0
      %v7251 = vmax.f32 %v7116, 0.0
      %v7252 = vmax.f32 %v7214, 0.0
      %v7253 = vmax.f32 %v7119, 0.0
      %v7254 = vmax.f32 %v7217, 0.0
      %v7255 = vmax.f32 %v7121, 0.0
      %v7256 = vmax.f32 %v7219, 0.0
      %v7257 = vmax.f32 %v7124, 0.0
      %v7258 = vmax.f32 %v7222, 0.0
      %v7259 = vmax.f32 %v7126, 0.0
      %v7260 = vmax.f32 %v7224, 0.0
      %v7261 = vmax.f32 %v7129, 0.0
      %v7262 = vmax.f32 %v7227, 0.0
      %v7263 = vmax.f32 %v7131, 0.0
      %v7264 = vmax.f32 %v7229, 0.0
      %v7265 = vmax.f32 %v7134, 0.0
      %v7266 = vmax.f32 %v7232, 0.0
      %v7267 = vmax.f32 %v7136, 0.0
      %v7268 = vmax.f32 %v7234, 0.0
      %v7269 = vmax.f32 %v7139, 0.0
      %v7270 = vmax.f32 %v7237, 0.0
      %v7271 = vmax.f32 %v7141, 0.0
      %v7272 = vmax.f32 %v7239, 0.0
      %v7273 = vpack.c.bf16 %v7243, %v7241
      %v7274 = vpack.c.bf16 %v7244, %v7242
      %v7275 = vpack.c.bf16 %v7247, %v7245
      %v7276 = vpack.c.bf16 %v7248, %v7246
      %v7277 = vpack.c.bf16 %v7251, %v7249
      %v7278 = vpack.c.bf16 %v7252, %v7250
      %v7279 = vpack.c.bf16 %v7255, %v7253
      %v7280 = vpack.c.bf16 %v7256, %v7254
      %v7281 = vpack.c.bf16 %v7259, %v7257
      %v7282 = vpack.c.bf16 %v7260, %v7258
      %v7283 = vpack.c.bf16 %v7263, %v7261
      %v7284 = vpack.c.bf16 %v7264, %v7262
      %v7285 = vpack.c.bf16 %v7267, %v7265
      %v7286 = vpack.c.bf16 %v7268, %v7266
      %v7287 = vpack.c.bf16 %v7271, %v7269
      %v7288 = vpack.c.bf16 %v7272, %v7270
      %v7289 = vld [vmem:[%s11] sm:$0xf]
      %v7290 = vld [vmem:[%s11 + $0x4] sm:$0xf]
      %v7291 = vld [vmem:[%s11 + $0x8] sm:$0xf]
      %v7292 = vld [vmem:[%s11 + $0xc] sm:$0xf]
      %v7293 = vld [vmem:[%s11 + $0x10] sm:$0xf]
      %v7294 = vld [vmem:[%s11 + $0x14] sm:$0xf]
      %v7295 = vld [vmem:[%s11 + $0x18] sm:$0xf]
      %v7296 = vld [vmem:[%s11 + $0x1c] sm:$0xf]
      %v7297 = vld [vmem:[%s11 + $0x20] sm:$0xf]
      %v7298 = vld [vmem:[%s11 + $0x24] sm:$0xf]
      %v7299 = vld [vmem:[%s11 + $0x28] sm:$0xf]
      %v7300 = vld [vmem:[%s11 + $0x2c] sm:$0xf]
      %v7301 = vld [vmem:[%s11 + $0x30] sm:$0xf]
      %v7302 = vld [vmem:[%s11 + $0x34] sm:$0xf]
      %v7303 = vld [vmem:[%s11 + $0x38] sm:$0xf]
      %v7304 = vld [vmem:[%s11 + $0x3c] sm:$0xf]
      %v7305 = vld [vmem:[%s11 + $0x40] sm:$0xf]
      %v7306 = vld [vmem:[%s11 + $0x44] sm:$0xf]
      %v7307 = vld [vmem:[%s11 + $0x48] sm:$0xf]
      %v7308 = vld [vmem:[%s11 + $0x4c] sm:$0xf]
      %v7309 = vld [vmem:[%s11 + $0x50] sm:$0xf]
      %v7310 = vld [vmem:[%s11 + $0x54] sm:$0xf]
      %v7311 = vld [vmem:[%s11 + $0x58] sm:$0xf]
      %v7312 = vld [vmem:[%s11 + $0x5c] sm:$0xf]
      %v7313 = vld [vmem:[%s11 + $0x60] sm:$0xf]
      %v7314 = vld [vmem:[%s11 + $0x64] sm:$0xf]
      %v7315 = vld [vmem:[%s11 + $0x68] sm:$0xf]
      %v7316 = vld [vmem:[%s11 + $0x6c] sm:$0xf]
      %v7317 = vld [vmem:[%s11 + $0x70] sm:$0xf]
      %v7318 = vld [vmem:[%s11 + $0x74] sm:$0xf]
      %v7319 = vld [vmem:[%s11 + $0x78] sm:$0xf]
      %v7320 = vld [vmem:[%s11 + $0x7c] sm:$0xf]
      %v7321 = vld [vmem:[%s12] sm:$0x1]
      %v7323 = vperm.slane %v7321, 0
      %v7357 = vunpack.c.l.b16 %v7289
      %v7358 = vunpack.c.l.b16 %v7290
      %v7359 = vunpack.c.l.b16 %v7291
      %v7360 = vunpack.c.l.b16 %v7292
      %v7361 = vunpack.c.l.b16 %v7293
      %v7362 = vunpack.c.l.b16 %v7294
      %v7363 = vunpack.c.l.b16 %v7295
      %v7364 = vunpack.c.l.b16 %v7296
      %v7365 = vunpack.c.l.b16 %v7297
      %v7366 = vunpack.c.l.b16 %v7298
      %v7367 = vunpack.c.l.b16 %v7299
      %v7368 = vunpack.c.l.b16 %v7300
      %v7369 = vunpack.c.l.b16 %v7301
      %v7370 = vunpack.c.l.b16 %v7302
      %v7371 = vunpack.c.l.b16 %v7303
      %v7372 = vunpack.c.l.b16 %v7304
      %v7373 = vunpack.c.l.b16 %v7305
      %v7374 = vunpack.c.l.b16 %v7306
      %v7375 = vunpack.c.l.b16 %v7307
      %v7376 = vunpack.c.l.b16 %v7308
      %v7377 = vunpack.c.l.b16 %v7309
      %v7378 = vunpack.c.l.b16 %v7310
      %v7379 = vunpack.c.l.b16 %v7311
      %v7380 = vunpack.c.l.b16 %v7312
      %v7381 = vunpack.c.l.b16 %v7313
      %v7382 = vunpack.c.l.b16 %v7314
      %v7383 = vunpack.c.l.b16 %v7315
      %v7384 = vunpack.c.l.b16 %v7316
      %v7385 = vunpack.c.l.b16 %v7317
      %v7386 = vunpack.c.l.b16 %v7318
      %v7387 = vunpack.c.l.b16 %v7319
      %v7388 = vunpack.c.l.b16 %v7320
      %v7389 = vpack.c.b16 %v7358, %v7357
      %v7390 = vpack.c.b16 %v7360, %v7359
      %v7391 = vpack.c.b16 %v7362, %v7361
      %v7392 = vpack.c.b16 %v7364, %v7363
      %v7393 = vpack.c.b16 %v7366, %v7365
      %v7394 = vpack.c.b16 %v7368, %v7367
      %v7395 = vpack.c.b16 %v7370, %v7369
      %v7396 = vpack.c.b16 %v7372, %v7371
      %v7397 = vpack.c.b16 %v7374, %v7373
      %v7398 = vpack.c.b16 %v7376, %v7375
      %v7399 = vpack.c.b16 %v7378, %v7377
      %v7400 = vpack.c.b16 %v7380, %v7379
      %v7401 = vpack.c.b16 %v7382, %v7381
      %v7402 = vpack.c.b16 %v7384, %v7383
      %v7403 = vpack.c.b16 %v7386, %v7385
      %v7404 = vpack.c.b16 %v7388, %v7387
      %7421 = vmatpush.bf16.msra.mxu0 %v7396
      %7422 = vmatpush.bf16.msra.mxu0 %v7395
      %7423 = vmatpush.bf16.msra.mxu0 %v7394
      %7424 = vmatpush.bf16.msra.mxu0 %v7393
      %7425 = vmatpush.bf16.msra.mxu0 %v7392
      %7426 = vmatpush.bf16.msra.mxu0 %v7391
      %7427 = vmatpush.bf16.msra.mxu0 %v7390
      %7428 = vmatpush.bf16.msra.mxu0 %v7389
      %7429 = vmatmul.bf16.gmra.mxu0 %v7273
      %v7430 = vpop.f32.mrf.mxu0
      %v7431 = vadd.f32 %v7323, %v7430
      %v7432 = vpop.f32.mrf.mxu0
      %v7433 = vadd.f32 %v7323, %v7432
      %7434 = vmatmul.bf16.gmra.mxu0 %v7275
      %v7435 = vpop.f32.mrf.mxu0
      %v7436 = vadd.f32 %v7323, %v7435
      %v7437 = vpop.f32.mrf.mxu0
      %v7438 = vadd.f32 %v7323, %v7437
      %7439 = vmatmul.bf16.gmra.mxu0 %v7277
      %v7440 = vpop.f32.mrf.mxu0
      %v7441 = vadd.f32 %v7323, %v7440
      %v7442 = vpop.f32.mrf.mxu0
      %v7443 = vadd.f32 %v7323, %v7442
      %7444 = vmatmul.bf16.gmra.mxu0 %v7279
      %v7445 = vpop.f32.mrf.mxu0
      %v7446 = vadd.f32 %v7323, %v7445
      %v7447 = vpop.f32.mrf.mxu0
      %v7448 = vadd.f32 %v7323, %v7447
      %7449 = vmatmul.bf16.gmra.mxu0 %v7281
      %v7450 = vpop.f32.mrf.mxu0
      %v7451 = vadd.f32 %v7323, %v7450
      %v7452 = vpop.f32.mrf.mxu0
      %v7453 = vadd.f32 %v7323, %v7452
      %7454 = vmatmul.bf16.gmra.mxu0 %v7283
      %v7455 = vpop.f32.mrf.mxu0
      %v7456 = vadd.f32 %v7323, %v7455
      %v7457 = vpop.f32.mrf.mxu0
      %v7458 = vadd.f32 %v7323, %v7457
      %7459 = vmatmul.bf16.gmra.mxu0 %v7285
      %v7460 = vpop.f32.mrf.mxu0
      %v7461 = vadd.f32 %v7323, %v7460
      %v7462 = vpop.f32.mrf.mxu0
      %v7463 = vadd.f32 %v7323, %v7462
      %7464 = vmatmul.bf16.gmra.mxu0 %v7287
      %v7465 = vpop.f32.mrf.mxu0
      %v7466 = vadd.f32 %v7323, %v7465
      %v7467 = vpop.f32.mrf.mxu0
      %v7468 = vadd.f32 %v7323, %v7467
      %7469 = vdwg.mxu0
      %7470 = vmatpush.bf16.msra.mxu0 %v7404
      %7471 = vmatpush.bf16.msra.mxu0 %v7403
      %7472 = vmatpush.bf16.msra.mxu0 %v7402
      %7473 = vmatpush.bf16.msra.mxu0 %v7401
      %7474 = vmatpush.bf16.msra.mxu0 %v7400
      %7475 = vmatpush.bf16.msra.mxu0 %v7399
      %7476 = vmatpush.bf16.msra.mxu0 %v7398
      %7477 = vmatpush.bf16.msra.mxu0 %v7397
      %7478 = vmatmul.bf16.gmra.mxu0 %v7274
      %v7479 = vpop.f32.mrf.mxu0
      %v7480 = vadd.f32 %v7431, %v7479
      %v7481 = vpop.f32.mrf.mxu0
      %v7482 = vadd.f32 %v7433, %v7481
      %7483 = vmatmul.bf16.gmra.mxu0 %v7276
      %v7484 = vpop.f32.mrf.mxu0
      %v7485 = vadd.f32 %v7436, %v7484
      %v7486 = vpop.f32.mrf.mxu0
      %v7487 = vadd.f32 %v7438, %v7486
      %7488 = vmatmul.bf16.gmra.mxu0 %v7278
      %v7489 = vpop.f32.mrf.mxu0
      %v7490 = vadd.f32 %v7441, %v7489
      %v7491 = vpop.f32.mrf.mxu0
      %v7492 = vadd.f32 %v7443, %v7491
      %7493 = vmatmul.bf16.gmra.mxu0 %v7280
      %v7494 = vpop.f32.mrf.mxu0
      %v7495 = vadd.f32 %v7446, %v7494
      %v7496 = vpop.f32.mrf.mxu0
      %v7497 = vadd.f32 %v7448, %v7496
      %7498 = vmatmul.bf16.gmra.mxu0 %v7282
      %v7499 = vpop.f32.mrf.mxu0
      %v7500 = vadd.f32 %v7451, %v7499
      %v7501 = vpop.f32.mrf.mxu0
      %v7502 = vadd.f32 %v7453, %v7501
      %7503 = vmatmul.bf16.gmra.mxu0 %v7284
      %v7504 = vpop.f32.mrf.mxu0
      %v7505 = vadd.f32 %v7456, %v7504
      %v7506 = vpop.f32.mrf.mxu0
      %v7507 = vadd.f32 %v7458, %v7506
      %7508 = vmatmul.bf16.gmra.mxu0 %v7286
      %v7509 = vpop.f32.mrf.mxu0
      %v7510 = vadd.f32 %v7461, %v7509
      %v7511 = vpop.f32.mrf.mxu0
      %v7512 = vadd.f32 %v7463, %v7511
      %7513 = vmatmul.bf16.gmra.mxu0 %v7288
      %v7514 = vpop.f32.mrf.mxu0
      %v7515 = vadd.f32 %v7466, %v7514
      %v7516 = vpop.f32.mrf.mxu0
      %v7517 = vadd.f32 %v7468, %v7516
      %7518 = vdwg.mxu0
      %7519 = vmatpush.bf16.msra.mxu0 %v6995
      %7520 = vmatpush.bf16.msra.mxu0 %v6993
      %7521 = vmatpush.bf16.msra.mxu0 %v6991
      %7522 = vmatpush.bf16.msra.mxu0 %v6989
      %7523 = vmatpush.bf16.msra.mxu0 %v6987
      %7524 = vmatpush.bf16.msra.mxu0 %v6985
      %7525 = vmatpush.bf16.msra.mxu0 %v6983
      %7526 = vmatpush.bf16.msra.mxu0 %v6981
      %7527 = vmatmul.bf16.gmra.mxu0 %v6831
      %v7528 = vpop.f32.mrf.mxu0
      %v7529 = vadd.f32 %v6881, %v7528
      %v7530 = vpop.f32.mrf.mxu0
      %v7531 = vadd.f32 %v6881, %v7530
      %7532 = vmatmul.bf16.gmra.mxu0 %v6833
      %v7533 = vpop.f32.mrf.mxu0
      %v7534 = vadd.f32 %v6881, %v7533
      %v7535 = vpop.f32.mrf.mxu0
      %v7536 = vadd.f32 %v6881, %v7535
      %7537 = vmatmul.bf16.gmra.mxu0 %v6835
      %v7538 = vpop.f32.mrf.mxu0
      %v7539 = vadd.f32 %v6881, %v7538
      %v7540 = vpop.f32.mrf.mxu0
      %v7541 = vadd.f32 %v6881, %v7540
      %7542 = vmatmul.bf16.gmra.mxu0 %v6837
      %v7543 = vpop.f32.mrf.mxu0
      %v7544 = vadd.f32 %v6881, %v7543
      %v7545 = vpop.f32.mrf.mxu0
      %v7546 = vadd.f32 %v6881, %v7545
      %7547 = vmatmul.bf16.gmra.mxu0 %v6839
      %v7548 = vpop.f32.mrf.mxu0
      %v7549 = vadd.f32 %v6881, %v7548
      %v7550 = vpop.f32.mrf.mxu0
      %v7551 = vadd.f32 %v6881, %v7550
      %7552 = vmatmul.bf16.gmra.mxu0 %v6841
      %v7553 = vpop.f32.mrf.mxu0
      %v7554 = vadd.f32 %v6881, %v7553
      %v7555 = vpop.f32.mrf.mxu0
      %v7556 = vadd.f32 %v6881, %v7555
      %7557 = vmatmul.bf16.gmra.mxu0 %v6843
      %v7558 = vpop.f32.mrf.mxu0
      %v7559 = vadd.f32 %v6881, %v7558
      %v7560 = vpop.f32.mrf.mxu0
      %v7561 = vadd.f32 %v6881, %v7560
      %7562 = vmatmul.bf16.gmra.mxu0 %v6845
      %v7563 = vpop.f32.mrf.mxu0
      %v7564 = vadd.f32 %v6881, %v7563
      %v7565 = vpop.f32.mrf.mxu0
      %v7566 = vadd.f32 %v6881, %v7565
      %7567 = vdwg.mxu0
      %7568 = vmatpush.bf16.msra.mxu0 %v7011
      %7569 = vmatpush.bf16.msra.mxu0 %v7009
      %7570 = vmatpush.bf16.msra.mxu0 %v7007
      %7571 = vmatpush.bf16.msra.mxu0 %v7005
      %7572 = vmatpush.bf16.msra.mxu0 %v7003
      %7573 = vmatpush.bf16.msra.mxu0 %v7001
      %7574 = vmatpush.bf16.msra.mxu0 %v6999
      %7575 = vmatpush.bf16.msra.mxu0 %v6997
      %7576 = vmatmul.bf16.gmra.mxu0 %v6832
      %v7577 = vpop.f32.mrf.mxu0
      %v7578 = vadd.f32 %v7529, %v7577
      %v7579 = vpop.f32.mrf.mxu0
      %v7580 = vadd.f32 %v7531, %v7579
      %7581 = vmatmul.bf16.gmra.mxu0 %v6834
      %v7582 = vpop.f32.mrf.mxu0
      %v7583 = vadd.f32 %v7534, %v7582
      %v7584 = vpop.f32.mrf.mxu0
      %v7585 = vadd.f32 %v7536, %v7584
      %7586 = vmatmul.bf16.gmra.mxu0 %v6836
      %v7587 = vpop.f32.mrf.mxu0
      %v7588 = vadd.f32 %v7539, %v7587
      %v7589 = vpop.f32.mrf.mxu0
      %v7590 = vadd.f32 %v7541, %v7589
      %7591 = vmatmul.bf16.gmra.mxu0 %v6838
      %v7592 = vpop.f32.mrf.mxu0
      %v7593 = vadd.f32 %v7544, %v7592
      %v7594 = vpop.f32.mrf.mxu0
      %v7595 = vadd.f32 %v7546, %v7594
      %7596 = vmatmul.bf16.gmra.mxu0 %v6840
      %v7597 = vpop.f32.mrf.mxu0
      %v7598 = vadd.f32 %v7549, %v7597
      %v7599 = vpop.f32.mrf.mxu0
      %v7600 = vadd.f32 %v7551, %v7599
      %7601 = vmatmul.bf16.gmra.mxu0 %v6842
      %v7602 = vpop.f32.mrf.mxu0
      %v7603 = vadd.f32 %v7554, %v7602
      %v7604 = vpop.f32.mrf.mxu0
      %v7605 = vadd.f32 %v7556, %v7604
      %7606 = vmatmul.bf16.gmra.mxu0 %v6844
      %v7607 = vpop.f32.mrf.mxu0
      %v7608 = vadd.f32 %v7559, %v7607
      %v7609 = vpop.f32.mrf.mxu0
      %v7610 = vadd.f32 %v7561, %v7609
      %7611 = vmatmul.bf16.gmra.mxu0 %v6846
      %v7612 = vpop.f32.mrf.mxu0
      %v7613 = vadd.f32 %v7564, %v7612
      %v7614 = vpop.f32.mrf.mxu0
      %v7615 = vadd.f32 %v7566, %v7614
      %7616 = vdwg.mxu0
      %7617 = vmatpush.bf16.msra.mxu0 %v6996
      %7618 = vmatpush.bf16.msra.mxu0 %v6994
      %7619 = vmatpush.bf16.msra.mxu0 %v6992
      %7620 = vmatpush.bf16.msra.mxu0 %v6990
      %7621 = vmatpush.bf16.msra.mxu0 %v6988
      %7622 = vmatpush.bf16.msra.mxu0 %v6986
      %7623 = vmatpush.bf16.msra.mxu0 %v6984
      %7624 = vmatpush.bf16.msra.mxu0 %v6982
      %7625 = vmatmul.bf16.gmra.mxu0 %v6831
      %v7626 = vpop.f32.mrf.mxu0
      %v7627 = vadd.f32 %v6882, %v7626
      %v7628 = vpop.f32.mrf.mxu0
      %v7629 = vadd.f32 %v6882, %v7628
      %7630 = vmatmul.bf16.gmra.mxu0 %v6833
      %v7631 = vpop.f32.mrf.mxu0
      %v7632 = vadd.f32 %v6882, %v7631
      %v7633 = vpop.f32.mrf.mxu0
      %v7634 = vadd.f32 %v6882, %v7633
      %7635 = vmatmul.bf16.gmra.mxu0 %v6835
      %v7636 = vpop.f32.mrf.mxu0
      %v7637 = vadd.f32 %v6882, %v7636
      %v7638 = vpop.f32.mrf.mxu0
      %v7639 = vadd.f32 %v6882, %v7638
      %7640 = vmatmul.bf16.gmra.mxu0 %v6837
      %v7641 = vpop.f32.mrf.mxu0
      %v7642 = vadd.f32 %v6882, %v7641
      %v7643 = vpop.f32.mrf.mxu0
      %v7644 = vadd.f32 %v6882, %v7643
      %7645 = vmatmul.bf16.gmra.mxu0 %v6839
      %v7646 = vpop.f32.mrf.mxu0
      %v7647 = vadd.f32 %v6882, %v7646
      %v7648 = vpop.f32.mrf.mxu0
      %v7649 = vadd.f32 %v6882, %v7648
      %7650 = vmatmul.bf16.gmra.mxu0 %v6841
      %v7651 = vpop.f32.mrf.mxu0
      %v7652 = vadd.f32 %v6882, %v7651
      %v7653 = vpop.f32.mrf.mxu0
      %v7654 = vadd.f32 %v6882, %v7653
      %7655 = vmatmul.bf16.gmra.mxu0 %v6843
      %v7656 = vpop.f32.mrf.mxu0
      %v7657 = vadd.f32 %v6882, %v7656
      %v7658 = vpop.f32.mrf.mxu0
      %v7659 = vadd.f32 %v6882, %v7658
      %7660 = vmatmul.bf16.gmra.mxu0 %v6845
      %v7661 = vpop.f32.mrf.mxu0
      %v7662 = vadd.f32 %v6882, %v7661
      %v7663 = vpop.f32.mrf.mxu0
      %v7664 = vadd.f32 %v6882, %v7663
      %7665 = vdwg.mxu0
      %7666 = vmatpush.bf16.msra.mxu0 %v7012
      %7667 = vmatpush.bf16.msra.mxu0 %v7010
      %7668 = vmatpush.bf16.msra.mxu0 %v7008
      %7669 = vmatpush.bf16.msra.mxu0 %v7006
      %7670 = vmatpush.bf16.msra.mxu0 %v7004
      %7671 = vmatpush.bf16.msra.mxu0 %v7002
      %7672 = vmatpush.bf16.msra.mxu0 %v7000
      %7673 = vmatpush.bf16.msra.mxu0 %v6998
      %7674 = vmatmul.bf16.gmra.mxu0 %v6832
      %v7675 = vpop.f32.mrf.mxu0
      %v7676 = vadd.f32 %v7627, %v7675
      %v7677 = vpop.f32.mrf.mxu0
      %v7678 = vadd.f32 %v7629, %v7677
      %7679 = vmatmul.bf16.gmra.mxu0 %v6834
      %v7680 = vpop.f32.mrf.mxu0
      %v7681 = vadd.f32 %v7632, %v7680
      %v7682 = vpop.f32.mrf.mxu0
      %v7683 = vadd.f32 %v7634, %v7682
      %7684 = vmatmul.bf16.gmra.mxu0 %v6836
      %v7685 = vpop.f32.mrf.mxu0
      %v7686 = vadd.f32 %v7637, %v7685
      %v7687 = vpop.f32.mrf.mxu0
      %v7688 = vadd.f32 %v7639, %v7687
      %7689 = vmatmul.bf16.gmra.mxu0 %v6838
      %v7690 = vpop.f32.mrf.mxu0
      %v7691 = vadd.f32 %v7642, %v7690
      %v7692 = vpop.f32.mrf.mxu0
      %v7693 = vadd.f32 %v7644, %v7692
      %7694 = vmatmul.bf16.gmra.mxu0 %v6840
      %v7695 = vpop.f32.mrf.mxu0
      %v7696 = vadd.f32 %v7647, %v7695
      %v7697 = vpop.f32.mrf.mxu0
      %v7698 = vadd.f32 %v7649, %v7697
      %7699 = vmatmul.bf16.gmra.mxu0 %v6842
      %v7700 = vpop.f32.mrf.mxu0
      %v7701 = vadd.f32 %v7652, %v7700
      %v7702 = vpop.f32.mrf.mxu0
      %v7703 = vadd.f32 %v7654, %v7702
      %7704 = vmatmul.bf16.gmra.mxu0 %v6844
      %v7705 = vpop.f32.mrf.mxu0
      %v7706 = vadd.f32 %v7657, %v7705
      %v7707 = vpop.f32.mrf.mxu0
      %v7708 = vadd.f32 %v7659, %v7707
      %7709 = vmatmul.bf16.gmra.mxu0 %v6846
      %v7710 = vpop.f32.mrf.mxu0
      %v7711 = vadd.f32 %v7662, %v7710
      %v7712 = vpop.f32.mrf.mxu0
      %v7713 = vadd.f32 %v7664, %v7712
      %7714 = vdwg.mxu0
      %v7715 = vmax.f32 %v7578, 0.0
      %v7716 = vmax.f32 %v7676, 0.0
      %v7717 = vmax.f32 %v7580, 0.0
      %v7718 = vmax.f32 %v7678, 0.0
      %v7719 = vmax.f32 %v7583, 0.0
      %v7720 = vmax.f32 %v7681, 0.0
      %v7721 = vmax.f32 %v7585, 0.0
      %v7722 = vmax.f32 %v7683, 0.0
      %v7723 = vmax.f32 %v7588, 0.0
      %v7724 = vmax.f32 %v7686, 0.0
      %v7725 = vmax.f32 %v7590, 0.0
      %v7726 = vmax.f32 %v7688, 0.0
      %v7727 = vmax.f32 %v7593, 0.0
      %v7728 = vmax.f32 %v7691, 0.0
      %v7729 = vmax.f32 %v7595, 0.0
      %v7730 = vmax.f32 %v7693, 0.0
      %v7731 = vmax.f32 %v7598, 0.0
      %v7732 = vmax.f32 %v7696, 0.0
      %v7733 = vmax.f32 %v7600, 0.0
      %v7734 = vmax.f32 %v7698, 0.0
      %v7735 = vmax.f32 %v7603, 0.0
      %v7736 = vmax.f32 %v7701, 0.0
      %v7737 = vmax.f32 %v7605, 0.0
      %v7738 = vmax.f32 %v7703, 0.0
      %v7739 = vmax.f32 %v7608, 0.0
      %v7740 = vmax.f32 %v7706, 0.0
      %v7741 = vmax.f32 %v7610, 0.0
      %v7742 = vmax.f32 %v7708, 0.0
      %v7743 = vmax.f32 %v7613, 0.0
      %v7744 = vmax.f32 %v7711, 0.0
      %v7745 = vmax.f32 %v7615, 0.0
      %v7746 = vmax.f32 %v7713, 0.0
      %v7747 = vpack.c.bf16 %v7717, %v7715
      %v7748 = vpack.c.bf16 %v7718, %v7716
      %v7749 = vpack.c.bf16 %v7721, %v7719
      %v7750 = vpack.c.bf16 %v7722, %v7720
      %v7751 = vpack.c.bf16 %v7725, %v7723
      %v7752 = vpack.c.bf16 %v7726, %v7724
      %v7753 = vpack.c.bf16 %v7729, %v7727
      %v7754 = vpack.c.bf16 %v7730, %v7728
      %v7755 = vpack.c.bf16 %v7733, %v7731
      %v7756 = vpack.c.bf16 %v7734, %v7732
      %v7757 = vpack.c.bf16 %v7737, %v7735
      %v7758 = vpack.c.bf16 %v7738, %v7736
      %v7759 = vpack.c.bf16 %v7741, %v7739
      %v7760 = vpack.c.bf16 %v7742, %v7740
      %v7761 = vpack.c.bf16 %v7745, %v7743
      %v7762 = vpack.c.bf16 %v7746, %v7744
      %7763 = vmatpush.bf16.msra.mxu0 %v7396
      %7764 = vmatpush.bf16.msra.mxu0 %v7395
      %7765 = vmatpush.bf16.msra.mxu0 %v7394
      %7766 = vmatpush.bf16.msra.mxu0 %v7393
      %7767 = vmatpush.bf16.msra.mxu0 %v7392
      %7768 = vmatpush.bf16.msra.mxu0 %v7391
      %7769 = vmatpush.bf16.msra.mxu0 %v7390
      %7770 = vmatpush.bf16.msra.mxu0 %v7389
      %7771 = vmatmul.bf16.gmra.mxu0 %v7747
      %v7772 = vpop.f32.mrf.mxu0
      %v7773 = vadd.f32 %v7323, %v7772
      %v7774 = vpop.f32.mrf.mxu0
      %v7775 = vadd.f32 %v7323, %v7774
      %7776 = vmatmul.bf16.gmra.mxu0 %v7749
      %v7777 = vpop.f32.mrf.mxu0
      %v7778 = vadd.f32 %v7323, %v7777
      %v7779 = vpop.f32.mrf.mxu0
      %v7780 = vadd.f32 %v7323, %v7779
      %7781 = vmatmul.bf16.gmra.mxu0 %v7751
      %v7782 = vpop.f32.mrf.mxu0
      %v7783 = vadd.f32 %v7323, %v7782
      %v7784 = vpop.f32.mrf.mxu0
      %v7785 = vadd.f32 %v7323, %v7784
      %7786 = vmatmul.bf16.gmra.mxu0 %v7753
      %v7787 = vpop.f32.mrf.mxu0
      %v7788 = vadd.f32 %v7323, %v7787
      %v7789 = vpop.f32.mrf.mxu0
      %v7790 = vadd.f32 %v7323, %v7789
      %7791 = vmatmul.bf16.gmra.mxu0 %v7755
      %v7792 = vpop.f32.mrf.mxu0
      %v7793 = vadd.f32 %v7323, %v7792
      %v7794 = vpop.f32.mrf.mxu0
      %v7795 = vadd.f32 %v7323, %v7794
      %7796 = vmatmul.bf16.gmra.mxu0 %v7757
      %v7797 = vpop.f32.mrf.mxu0
      %v7798 = vadd.f32 %v7323, %v7797
      %v7799 = vpop.f32.mrf.mxu0
      %v7800 = vadd.f32 %v7323, %v7799
      %7801 = vmatmul.bf16.gmra.mxu0 %v7759
      %v7802 = vpop.f32.mrf.mxu0
      %v7803 = vadd.f32 %v7323, %v7802
      %v7804 = vpop.f32.mrf.mxu0
      %v7805 = vadd.f32 %v7323, %v7804
      %7806 = vmatmul.bf16.gmra.mxu0 %v7761
      %v7807 = vpop.f32.mrf.mxu0
      %v7808 = vadd.f32 %v7323, %v7807
      %v7809 = vpop.f32.mrf.mxu0
      %v7810 = vadd.f32 %v7323, %v7809
      %7811 = vdwg.mxu0
      %7812 = vmatpush.bf16.msra.mxu0 %v7404
      %7813 = vmatpush.bf16.msra.mxu0 %v7403
      %7814 = vmatpush.bf16.msra.mxu0 %v7402
      %7815 = vmatpush.bf16.msra.mxu0 %v7401
      %7816 = vmatpush.bf16.msra.mxu0 %v7400
      %7817 = vmatpush.bf16.msra.mxu0 %v7399
      %7818 = vmatpush.bf16.msra.mxu0 %v7398
      %7819 = vmatpush.bf16.msra.mxu0 %v7397
      %7820 = vmatmul.bf16.gmra.mxu0 %v7748
      %v7821 = vpop.f32.mrf.mxu0
      %v7822 = vadd.f32 %v7773, %v7821
      %v7823 = vpop.f32.mrf.mxu0
      %v7824 = vadd.f32 %v7775, %v7823
      %7825 = vmatmul.bf16.gmra.mxu0 %v7750
      %v7826 = vpop.f32.mrf.mxu0
      %v7827 = vadd.f32 %v7778, %v7826
      %v7828 = vpop.f32.mrf.mxu0
      %v7829 = vadd.f32 %v7780, %v7828
      %7830 = vmatmul.bf16.gmra.mxu0 %v7752
      %v7831 = vpop.f32.mrf.mxu0
      %v7832 = vadd.f32 %v7783, %v7831
      %v7833 = vpop.f32.mrf.mxu0
      %v7834 = vadd.f32 %v7785, %v7833
      %7835 = vmatmul.bf16.gmra.mxu0 %v7754
      %v7836 = vpop.f32.mrf.mxu0
      %v7837 = vadd.f32 %v7788, %v7836
      %v7838 = vpop.f32.mrf.mxu0
      %v7839 = vadd.f32 %v7790, %v7838
      %7840 = vmatmul.bf16.gmra.mxu0 %v7756
      %v7841 = vpop.f32.mrf.mxu0
      %v7842 = vadd.f32 %v7793, %v7841
      %v7843 = vpop.f32.mrf.mxu0
      %v7844 = vadd.f32 %v7795, %v7843
      %7845 = vmatmul.bf16.gmra.mxu0 %v7758
      %v7846 = vpop.f32.mrf.mxu0
      %v7847 = vadd.f32 %v7798, %v7846
      %v7848 = vpop.f32.mrf.mxu0
      %v7849 = vadd.f32 %v7800, %v7848
      %7850 = vmatmul.bf16.gmra.mxu0 %v7760
      %v7851 = vpop.f32.mrf.mxu0
      %v7852 = vadd.f32 %v7803, %v7851
      %v7853 = vpop.f32.mrf.mxu0
      %v7854 = vadd.f32 %v7805, %v7853
      %7855 = vmatmul.bf16.gmra.mxu0 %v7762
      %v7856 = vpop.f32.mrf.mxu0
      %v7857 = vadd.f32 %v7808, %v7856
      %v7858 = vpop.f32.mrf.mxu0
      %v7859 = vadd.f32 %v7810, %v7858
      %7860 = vdwg.mxu0
      %vm7861 = vcmask 23552
      %7862 = vst.msk [vmem:[%s626] sm:$0xff] %vm7861, %v7480
      %7863 = vst.msk [vmem:[%s626 + $0x8] sm:$0xff] %vm7861, %v7482
      %7864 = vst.msk [vmem:[%s626 + $0x10] sm:$0xff] %vm7861, %v7485
      %7865 = vst.msk [vmem:[%s626 + $0x18] sm:$0xff] %vm7861, %v7487
      %7866 = vst.msk [vmem:[%s626 + $0x20] sm:$0xff] %vm7861, %v7490
      %7867 = vst.msk [vmem:[%s626 + $0x28] sm:$0xff] %vm7861, %v7492
      %7868 = vst.msk [vmem:[%s626 + $0x30] sm:$0xff] %vm7861, %v7495
      %7869 = vst.msk [vmem:[%s626 + $0x38] sm:$0xff] %vm7861, %v7497
      %7870 = vst.msk [vmem:[%s626 + $0x40] sm:$0xff] %vm7861, %v7500
      %7871 = vst.msk [vmem:[%s626 + $0x48] sm:$0xff] %vm7861, %v7502
      %7872 = vst.msk [vmem:[%s626 + $0x50] sm:$0xff] %vm7861, %v7505
      %7873 = vst.msk [vmem:[%s626 + $0x58] sm:$0xff] %vm7861, %v7507
      %7874 = vst.msk [vmem:[%s626 + $0x60] sm:$0xff] %vm7861, %v7510
      %7875 = vst.msk [vmem:[%s626 + $0x68] sm:$0xff] %vm7861, %v7512
      %7876 = vst.msk [vmem:[%s626 + $0x70] sm:$0xff] %vm7861, %v7515
      %7877 = vst.msk [vmem:[%s626 + $0x78] sm:$0xff] %vm7861, %v7517
      %7878 = vst.msk [vmem:[%s626 + $0x80] sm:$0xff] %vm7861, %v7822
      %7879 = vst.msk [vmem:[%s626 + $0x88] sm:$0xff] %vm7861, %v7824
      %7880 = vst.msk [vmem:[%s626 + $0x90] sm:$0xff] %vm7861, %v7827
      %7881 = vst.msk [vmem:[%s626 + $0x98] sm:$0xff] %vm7861, %v7829
      %7882 = vst.msk [vmem:[%s626 + $0xa0] sm:$0xff] %vm7861, %v7832
      %7883 = vst.msk [vmem:[%s626 + $0xa8] sm:$0xff] %vm7861, %v7834
      %7884 = vst.msk [vmem:[%s626 + $0xb0] sm:$0xff] %vm7861, %v7837
      %7885 = vst.msk [vmem:[%s626 + $0xb8] sm:$0xff] %vm7861, %v7839
      %7886 = vst.msk [vmem:[%s626 + $0xc0] sm:$0xff] %vm7861, %v7842
      %7887 = vst.msk [vmem:[%s626 + $0xc8] sm:$0xff] %vm7861, %v7844
      %7888 = vst.msk [vmem:[%s626 + $0xd0] sm:$0xff] %vm7861, %v7847
      %7889 = vst.msk [vmem:[%s626 + $0xd8] sm:$0xff] %vm7861, %v7849
      %7890 = vst.msk [vmem:[%s626 + $0xe0] sm:$0xff] %vm7861, %v7852
      %7891 = vst.msk [vmem:[%s626 + $0xe8] sm:$0xff] %vm7861, %v7854
      %7892 = vst.msk [vmem:[%s626 + $0xf0] sm:$0xff] %vm7861, %v7857
      %7893 = vst.msk [vmem:[%s626 + $0xf8] sm:$0xff] %vm7861, %v7859
      %s7894 = smul.u32 32, %s29
      %p7895 = scmp.lt.s32.totalorder %s28, 1
      %s7896 = scalar_select %p7895, %s28, 1
      %p7897 = scmp.lt.s32.totalorder %s7894, 31
      %s7898 = scalar_select %p7897, %s7894, 31
      %s7899 = smul.addr %s7896, 32
      %s7900 = sadd.s32 %s7898, %s7899
      %s7901 = smul.addr %s7900, 8
      %s7902 = scalar_lea.vmem %s13, %s7901
      // Predicated region
      $region73: #{sif_forward.1} parent=71 // pred_check
        %p7903 = pneg %p376
      $region74: #{sif_forward.1} parent=71 // pred_check_branch
        %7905 = sbr.rel (%p7903) target = $region76
      $region75: #{sif_forward.1} parent=71 // pred_region
        %s7906 = smul.u32 32, %s29
      $region76: #{sif_forward.1} parent=71 // pred_fallthru
        _
    $region72: #{sif_forward.1} parent=5 // pred_fallthru
      _
    %p7907 = scmp.le.s32.totalorder 2, %s19
    // Predicated region
    $region77: #{sif_forward.1} parent=5 // pred_check
      %p7908 = pneg %p7907
    $region78: #{sif_forward.1} parent=5 // pred_check_branch
      %7910 = sbr.rel (%p7908) target = $region80
    $region79: #{sif_forward.1} parent=5 // pred_region
      %s7911 = ssub.s32 %s19, 2
      // Predicated region
      $region81: #{sif_forward.1} parent=79 // pred_check
        %p7912 = pneg %p382
      $region82: #{sif_forward.1} parent=79 // pred_check_branch
        %7914 = sbr.rel (%p7912) target = $region84
      $region83: #{sif_forward.1} parent=79 // pred_region
        %s7915 = smul.u32 32, %s31
        %p7916 = scmp.lt.s32.totalorder %s30, 1
        %s7917 = scalar_select %p7916, %s30, 1
        %p7918 = scmp.lt.s32.totalorder %s7915, 31
        %s7919 = scalar_select %p7918, %s7915, 31
        %s7920 = smul.addr %s7917, 32
        %s7921 = sadd.s32 %s7919, %s7920
        %s7922 = smul.addr %s7921, 8
        %s7923 = scalar_lea.vmem %s13, %s7922
      $region84: #{sif_forward.1} parent=79 // pred_fallthru
        _
    $region80: #{sif_forward.1} parent=5 // pred_fallthru
      _
  $region6: #{sif_forward.1} parent=0 // loop_footer
    %s23 = sadd.s32 1, %s19
  $region7: #{sif_forward.1} parent=0 // loop_footer_branch
    %18 = sbr.rel target = $region3
  $region8: #{sif_forward.1} parent=0 // loop_exit
    _

</llo_original>
